<compile_context>
chip_gen: v7x
topology: tpu7x:2x2x1
jax: 0.10.0
libtpu: 0.0.40
codegen_flags: <defaults>
</compile_context>

<pallas_src>
import math
import jax
import jax.numpy as jnp
from jax.experimental import pallas as pl
from jax.experimental.pallas import tpu as pltpu

# ----------------------------- configuration -----------------------------
B, S, T, E_IN = 2, 3, 8, 16          # batch, seq, n_entities, entity feature dim
EMB = 32                             # args.emb_dim
N_HEADS = 4                          # args.n_heads
N_BLOCKS = 2                         # args.n_blocks
FF = EMB * 4
H = 32                               # args.rnn_hidden_dim
N_ACTIONS = 8                        # args.n_actions
N_AGENTS = 3                         # args.n_agents
HEAD_DIM = EMB // N_HEADS

PARAM_KEYS = ["W_emb", "b_emb", "Wq", "bq", "Wk", "bk", "Wv", "bv",
              "Wo", "bo", "Wf1", "bf1", "Wf2", "bf2",
              "ln1_g", "ln1_b", "ln2_g", "ln2_b", "W_fc1", "b_fc1",
              "W_ih", "b_ih", "W_hh", "b_hh", "W_fc2", "b_fc2"]


# ----------------------------- kernel helpers -----------------------------
def _layernorm(x, g, b, eps=1e-5):
    mu = jnp.mean(x, axis=-1, keepdims=True)
    var = jnp.mean((x - mu) ** 2, axis=-1, keepdims=True)
    return (x - mu) * jax.lax.rsqrt(var + eps) * g + b


def _softmax_last(x):
    x = x - jnp.max(x, axis=-1, keepdims=True)
    e = jnp.exp(x)
    return e / jnp.sum(e, axis=-1, keepdims=True)


# --------------------- fused kernel: embed + transformer + fc1 + GRU + fc2 ---------------------
def fused_kernel(ent_ref, omask_ref, emask_ref, amask_ref, h0_ref,
                 Wemb_ref, bemb_ref,
                 Wq_ref, bq_ref, Wk_ref, bk_ref, Wv_ref, bv_ref, Wo_ref, bo_ref,
                 Wf1_ref, bf1_ref, Wf2_ref, bf2_ref,
                 g1_ref, be1_ref, g2_ref, be2_ref,
                 Wfc1_ref, bfc1_ref,
                 Wih_ref, bih_ref, Whh_ref, bhh_ref, W2_ref, b2_ref,
                 out_ref):
    # ---- entity embedding over all S*T rows of this batch element ----
    x = ent_ref[0]                                                     # (S*T, E_IN)
    x = jnp.maximum(
        jnp.dot(x, Wemb_ref[...], preferred_element_type=jnp.float32) + bemb_ref[...],
        0.0)                                                           # (S*T, EMB)

    # hoisted additive attention bias (1.0 = masked)
    mbias = omask_ref[0] * jnp.float32(-1e9)                           # (S, T, T)
    scale = 1.0 / math.sqrt(HEAD_DIM)

    # ---- transformer blocks (statically unrolled, N_BLOCKS=2) ----
    for blk in range(N_BLOCKS):
        q = jnp.dot(x, Wq_ref[blk], preferred_element_type=jnp.float32) + bq_ref[blk]
        k = jnp.dot(x, Wk_ref[blk], preferred_element_type=jnp.float32) + bk_ref[blk]
        v = jnp.dot(x, Wv_ref[blk], preferred_element_type=jnp.float32) + bv_ref[blk]

        ctx_heads = []
        for hd in range(N_HEADS):
            lo, hi = hd * HEAD_DIM, (hd + 1) * HEAD_DIM
            qh = q[:, lo:hi].reshape(S, T, HEAD_DIM)
            kh = k[:, lo:hi].reshape(S, T, HEAD_DIM)
            vh = v[:, lo:hi].reshape(S, T, HEAD_DIM)
            # S-batched contraction, no explicit transpose of K
            sc = jnp.einsum("sqd,skd->sqk", qh, kh,
                            preferred_element_type=jnp.float32) * scale + mbias
            p = _softmax_last(sc)
            ctxh = jnp.einsum("sqk,skd->sqd", p, vh,
                              preferred_element_type=jnp.float32)      # (S, T, HEAD_DIM)
            ctx_heads.append(ctxh.reshape(S * T, HEAD_DIM))
        ctx = jnp.concatenate(ctx_heads, axis=-1)                      # (S*T, EMB)

        attn_out = jnp.dot(ctx, Wo_ref[blk], preferred_element_type=jnp.float32) + bo_ref[blk]
        x = _layernorm(x + attn_out, g1_ref[blk], be1_ref[blk])
        ff = jnp.maximum(
            jnp.dot(x, Wf1_ref[blk], preferred_element_type=jnp.float32) + bf1_ref[blk],
            0.0)
        ff = jnp.dot(ff, Wf2_ref[blk], preferred_element_type=jnp.float32) + bf2_ref[blk]
        x = _layernorm(x + ff, g2_ref[blk], be2_ref[blk])

    # ---- entity-mask fill + fc1 + GRU input projection on ALL rows ----
    # (non-agent rows are discarded below; computing them batched is cheaper
    #  than gathering agent rows first, and gives sublane-aligned slices later)
    x = jnp.where(emask_ref[0] > 0.5, 0.0, x)                          # (S*T, EMB)
    xr = jnp.maximum(
        jnp.dot(x, Wfc1_ref[...], preferred_element_type=jnp.float32) + bfc1_ref[...],
        0.0)                                                           # (S*T, H)
    gi_all = jnp.dot(xr, Wih_ref[...],
                     preferred_element_type=jnp.float32) + bih_ref[...]  # (S*T, 3H)

    # ---- GRU recurrence over time (only h @ W_hh remains inside the loop) ----
    h = h0_ref[0]                                                      # (N_AGENTS, H)
    h_steps = []
    for s in range(S):
        gi = gi_all[s * T: s * T + N_AGENTS, :]                        # agent rows of step s
        gh = jnp.dot(h, Whh_ref[...], preferred_element_type=jnp.float32) + bhh_ref[...]
        r = jax.nn.sigmoid(gi[:, :H] + gh[:, :H])
        z = jax.nn.sigmoid(gi[:, H:2 * H] + gh[:, H:2 * H])
        n = jnp.tanh(gi[:, 2 * H:] + r * gh[:, 2 * H:])
        h = (1.0 - z) * n + z * h
        h_steps.append(h)
    h_all = jnp.concatenate(h_steps, axis=0)                           # (S*N_AGENTS, H)

    # ---- fc2 (hoisted out of the recurrence) + agent mask ----
    q_all = jnp.dot(h_all, W2_ref[...], preferred_element_type=jnp.float32) + b2_ref[...]
    q_all = jnp.where(amask_ref[0] > 0.5, 0.0, q_all)                  # (S*N_AGENTS, A)

    # single packed write per grid step
    out_ref[0] = jnp.concatenate([h_all, q_all], axis=-1)              # (S*N_AGENTS, H+A)


def _full_spec(shape):
    n = len(shape)
    return pl.BlockSpec(shape, lambda i, _n=n: (0,) * _n)


def run_fused(ent, omask, emask, amask, h0, params):
    b = ent.shape[0]
    weights = [params[k] for k in PARAM_KEYS]
    in_specs = [
        pl.BlockSpec((1, S * T, E_IN), lambda i: (i, 0, 0)),
        pl.BlockSpec((1, S, T, T), lambda i: (i, 0, 0, 0)),
        pl.BlockSpec((1, S * T, 1), lambda i: (i, 0, 0)),
        pl.BlockSpec((1, S * N_AGENTS, 1), lambda i: (i, 0, 0)),
        pl.BlockSpec((1, N_AGENTS, H), lambda i: (i, 0, 0)),
    ] + [_full_spec(w.shape) for w in weights]
    out_specs = pl.BlockSpec((1, S * N_AGENTS, H + N_ACTIONS), lambda i: (i, 0, 0))
    return pl.pallas_call(
        fused_kernel,
        out_shape=jax.ShapeDtypeStruct((b, S * N_AGENTS, H + N_ACTIONS), jnp.float32),
        grid=(b,),
        in_specs=in_specs,
        out_specs=out_specs,
        compiler_params=pltpu.CompilerParams(dimension_semantics=("parallel",)),
    )(ent, omask, emask, amask, h0, *weights)


# ----------------------------- full forward wrapper -----------------------------
def forward(entities, obs_mask, entity_mask, hidden_state, params):
    b, s, t, e = entities.shape
    ent = entities.reshape(b, s * t, e).astype(jnp.float32)
    om = obs_mask.astype(jnp.float32)                                  # (b, s, t, t)
    emf = entity_mask.astype(jnp.float32).reshape(b, s * t, 1)
    am = entity_mask[:, :, :N_AGENTS].astype(jnp.float32).reshape(b, s * N_AGENTS, 1)
    h0 = hidden_state.reshape(b, N_AGENTS, H).astype(jnp.float32)

    packed = run_fused(ent, om, emf, am, h0, params)                   # (b, s*n_agents, H+A)
    packed = packed.reshape(b, s, N_AGENTS, H + N_ACTIONS)
    h = packed[..., :H]
    q = packed[..., H:]
    return q, h


# ----------------------------- pure-JAX reference -----------------------------
def forward_ref(entities, obs_mask, entity_mask, hidden_state, p):
    b, s, t, e = entities.shape
    bs = b * s
    x = entities.reshape(bs, t, e).astype(jnp.float32)
    om = obs_mask.reshape(bs, t, t).astype(jnp.float32)
    em = entity_mask.reshape(bs, t).astype(jnp.float32)
    am = em[:, :N_AGENTS]
    x = jnp.maximum(x @ p["W_emb"] + p["b_emb"], 0.0)
    scale = 1.0 / math.sqrt(HEAD_DIM)
    for blk in range(N_BLOCKS):
        q_ = x @ p["Wq"][blk] + p["bq"][blk]
        k_ = x @ p["Wk"][blk] + p["bk"][blk]
        v_ = x @ p["Wv"][blk] + p["bv"][blk]
        acc = jnp.zeros((bs, t, EMB), jnp.float32)
        for h_ in range(N_HEADS):
            lo, hi = h_ * HEAD_DIM, (h_ + 1) * HEAD_DIM
            sc = jnp.einsum("bqd,bkd->bqk", q_[..., lo:hi], k_[..., lo:hi]) * scale
            sc = jnp.where(om > 0.5, -1e9, sc)
            pr = jax.nn.softmax(sc, axis=-1)
            ctx = jnp.einsum("bqk,bkd->bqd", pr, v_[..., lo:hi])
            acc = acc + ctx @ p["Wo"][blk][lo:hi, :]
        attn_out = acc + p["bo"][blk]
        x = _layernorm(x + attn_out, p["ln1_g"][blk], p["ln1_b"][blk])
        ff = jnp.maximum(x @ p["Wf1"][blk] + p["bf1"][blk], 0.0) @ p["Wf2"][blk] + p["bf2"][blk]
        x = _layernorm(x + ff, p["ln2_g"][blk], p["ln2_b"][blk])
    x = x[:, :N_AGENTS]
    x = jnp.where(am[:, :, None] > 0.5, 0.0, x)
    x = jnp.maximum(x @ p["W_fc1"] + p["b_fc1"], 0.0)
    x = x.reshape(b, s, N_AGENTS, H)
    h_in = hidden_state.reshape(-1, H).astype(jnp.float32)
    hs = []
    for i in range(s):
        xi = x[:, i].reshape(-1, H)
        gi = xi @ p["W_ih"] + p["b_ih"]
        gh = h_in @ p["W_hh"] + p["b_hh"]
        r = jax.nn.sigmoid(gi[:, :H] + gh[:, :H])
        z = jax.nn.sigmoid(gi[:, H:2 * H] + gh[:, H:2 * H])
        n = jnp.tanh(gi[:, 2 * H:] + r * gh[:, 2 * H:])
        h_in = (1.0 - z) * n + z * h_in
        hs.append(h_in.reshape(b, N_AGENTS, H))
    h = jnp.stack(hs, axis=1)
    q = h @ p["W_fc2"] + p["b_fc2"]
    q = jnp.where(am.reshape(b, s, N_AGENTS, 1) > 0.5, 0.0, q)
    return q, h


# ----------------------------- parameter init -----------------------------
def init_params(key):
    ks = jax.random.split(key, 24)
    w = lambda k, shape, sc=0.1: jax.random.normal(k, shape, jnp.float32) * sc
    return {
        "W_emb": w(ks[0], (E_IN, EMB)),      "b_emb": w(ks[1], (1, EMB)),
        "Wq": w(ks[2], (N_BLOCKS, EMB, EMB)), "bq": w(ks[3], (N_BLOCKS, 1, EMB)),
        "Wk": w(ks[4], (N_BLOCKS, EMB, EMB)), "bk": w(ks[5], (N_BLOCKS, 1, EMB)),
        "Wv": w(ks[6], (N_BLOCKS, EMB, EMB)), "bv": w(ks[7], (N_BLOCKS, 1, EMB)),
        "Wo": w(ks[8], (N_BLOCKS, EMB, EMB)), "bo": w(ks[9], (N_BLOCKS, 1, EMB)),
        "Wf1": w(ks[10], (N_BLOCKS, EMB, FF)), "bf1": w(ks[11], (N_BLOCKS, 1, FF)),
        "Wf2": w(ks[12], (N_BLOCKS, FF, EMB)), "bf2": w(ks[13], (N_BLOCKS, 1, EMB)),
        "ln1_g": jnp.ones((N_BLOCKS, 1, EMB)), "ln1_b": jnp.zeros((N_BLOCKS, 1, EMB)),
        "ln2_g": jnp.ones((N_BLOCKS, 1, EMB)), "ln2_b": jnp.zeros((N_BLOCKS, 1, EMB)),
        "W_fc1": w(ks[14], (EMB, H)),          "b_fc1": w(ks[15], (1, H)),
        "W_ih": w(ks[16], (H, 3 * H)),         "b_ih": w(ks[17], (1, 3 * H)),
        "W_hh": w(ks[18], (H, 3 * H)),         "b_hh": w(ks[19], (1, 3 * H)),
        "W_fc2": w(ks[20], (H, N_ACTIONS)),    "b_fc2": w(ks[21], (1, N_ACTIONS)),
    }


# ----------------------------- main -----------------------------
if __name__ == "__main__":
    key = jax.random.PRNGKey(0)
    kp, k1, k2, k3 = jax.random.split(key, 4)
    params = init_params(kp)

    entities = jax.random.normal(k1, (B, S, T, E_IN), jnp.float32)
    obs_mask = (jax.random.uniform(k2, (B, S, T, T)) < 0.3).astype(jnp.float32)
    obs_mask = obs_mask * (1.0 - jnp.eye(T))          # entities always see themselves
    entity_mask = (jax.random.uniform(k3, (B, S, T)) < 0.2).astype(jnp.float32)
    hidden_state = jnp.zeros((B, N_AGENTS, H), jnp.float32)

    q, h = forward(entities, obs_mask, entity_mask, hidden_state, params)
    q = jax.block_until_ready(q)
    h = jax.block_until_ready(h)

    q_ref, h_ref = forward_ref(entities, obs_mask, entity_mask, hidden_state, params)
    assert q.shape == (B, S, N_AGENTS, N_ACTIONS) and h.shape == (B, S, N_AGENTS, H)
    assert jnp.allclose(q, q_ref, rtol=1e-3, atol=1e-3)
    assert jnp.allclose(h, h_ref, rtol=1e-3, atol=1e-3)
    print("KERNEL_OK")
</pallas_src>

<mosaic_0001>
module attributes {stable_mosaic.version = 11 : i64} {
  func.func @fused_kernel(%arg0: i32, %arg1: memref<1x24x16xf32, #tpu.memory_space<vmem>>, %arg2: memref<1x3x8x8xf32, #tpu.memory_space<vmem>>, %arg3: memref<1x24x1xf32, #tpu.memory_space<vmem>>, %arg4: memref<1x9x1xf32, #tpu.memory_space<vmem>>, %arg5: memref<1x3x32xf32, #tpu.memory_space<vmem>>, %arg6: memref<16x32xf32, #tpu.memory_space<vmem>>, %arg7: memref<1x32xf32, #tpu.memory_space<vmem>>, %arg8: memref<2x32x32xf32, #tpu.memory_space<vmem>>, %arg9: memref<2x1x32xf32, #tpu.memory_space<vmem>>, %arg10: memref<2x32x32xf32, #tpu.memory_space<vmem>>, %arg11: memref<2x1x32xf32, #tpu.memory_space<vmem>>, %arg12: memref<2x32x32xf32, #tpu.memory_space<vmem>>, %arg13: memref<2x1x32xf32, #tpu.memory_space<vmem>>, %arg14: memref<2x32x32xf32, #tpu.memory_space<vmem>>, %arg15: memref<2x1x32xf32, #tpu.memory_space<vmem>>, %arg16: memref<2x32x128xf32, #tpu.memory_space<vmem>>, %arg17: memref<2x1x128xf32, #tpu.memory_space<vmem>>, %arg18: memref<2x128x32xf32, #tpu.memory_space<vmem>>, %arg19: memref<2x1x32xf32, #tpu.memory_space<vmem>>, %arg20: memref<2x1x32xf32, #tpu.memory_space<vmem>>, %arg21: memref<2x1x32xf32, #tpu.memory_space<vmem>>, %arg22: memref<2x1x32xf32, #tpu.memory_space<vmem>>, %arg23: memref<2x1x32xf32, #tpu.memory_space<vmem>>, %arg24: memref<32x32xf32, #tpu.memory_space<vmem>>, %arg25: memref<1x32xf32, #tpu.memory_space<vmem>>, %arg26: memref<32x96xf32, #tpu.memory_space<vmem>>, %arg27: memref<1x96xf32, #tpu.memory_space<vmem>>, %arg28: memref<32x96xf32, #tpu.memory_space<vmem>>, %arg29: memref<1x96xf32, #tpu.memory_space<vmem>>, %arg30: memref<32x8xf32, #tpu.memory_space<vmem>>, %arg31: memref<1x8xf32, #tpu.memory_space<vmem>>, %arg32: memref<1x9x40xf32, #tpu.memory_space<vmem>>) attributes {dimension_semantics = [#tpu.dimension_semantics<parallel>], iteration_bounds = array<i64: 2>, scalar_prefetch = 0 : i64, scratch_operands = 0 : i64, tpu.core_type = #tpu.core_type<tc>, window_params = [{transform_indices = @transform_0, window_bounds = array<i64: 1, 24, 16>}, {transform_indices = @transform_1, window_bounds = array<i64: 1, 3, 8, 8>}, {transform_indices = @transform_2, window_bounds = array<i64: 1, 24, 1>}, {transform_indices = @transform_3, window_bounds = array<i64: 1, 9, 1>}, {transform_indices = @transform_4, window_bounds = array<i64: 1, 3, 32>}, {pipeline_mode = #tpu.pipeline_mode<synchronous>, transform_indices = @transform_5, window_bounds = array<i64: 16, 32>}, {pipeline_mode = #tpu.pipeline_mode<synchronous>, transform_indices = @transform_6, window_bounds = array<i64: 1, 32>}, {pipeline_mode = #tpu.pipeline_mode<synchronous>, transform_indices = @transform_7, window_bounds = array<i64: 2, 32, 32>}, {pipeline_mode = #tpu.pipeline_mode<synchronous>, transform_indices = @transform_8, window_bounds = array<i64: 2, 1, 32>}, {pipeline_mode = #tpu.pipeline_mode<synchronous>, transform_indices = @transform_9, window_bounds = array<i64: 2, 32, 32>}, {pipeline_mode = #tpu.pipeline_mode<synchronous>, transform_indices = @transform_10, window_bounds = array<i64: 2, 1, 32>}, {pipeline_mode = #tpu.pipeline_mode<synchronous>, transform_indices = @transform_11, window_bounds = array<i64: 2, 32, 32>}, {pipeline_mode = #tpu.pipeline_mode<synchronous>, transform_indices = @transform_12, window_bounds = array<i64: 2, 1, 32>}, {pipeline_mode = #tpu.pipeline_mode<synchronous>, transform_indices = @transform_13, window_bounds = array<i64: 2, 32, 32>}, {pipeline_mode = #tpu.pipeline_mode<synchronous>, transform_indices = @transform_14, window_bounds = array<i64: 2, 1, 32>}, {pipeline_mode = #tpu.pipeline_mode<synchronous>, transform_indices = @transform_15, window_bounds = array<i64: 2, 32, 128>}, {pipeline_mode = #tpu.pipeline_mode<synchronous>, transform_indices = @transform_16, window_bounds = array<i64: 2, 1, 128>}, {pipeline_mode = #tpu.pipeline_mode<synchronous>, transform_indices = @transform_17, window_bounds = array<i64: 2, 128, 32>}, {pipeline_mode = #tpu.pipeline_mode<synchronous>, transform_indices = @transform_18, window_bounds = array<i64: 2, 1, 32>}, {pipeline_mode = #tpu.pipeline_mode<synchronous>, transform_indices = @transform_19, window_bounds = array<i64: 2, 1, 32>}, {pipeline_mode = #tpu.pipeline_mode<synchronous>, transform_indices = @transform_20, window_bounds = array<i64: 2, 1, 32>}, {pipeline_mode = #tpu.pipeline_mode<synchronous>, transform_indices = @transform_21, window_bounds = array<i64: 2, 1, 32>}, {pipeline_mode = #tpu.pipeline_mode<synchronous>, transform_indices = @transform_22, window_bounds = array<i64: 2, 1, 32>}, {pipeline_mode = #tpu.pipeline_mode<synchronous>, transform_indices = @transform_23, window_bounds = array<i64: 32, 32>}, {pipeline_mode = #tpu.pipeline_mode<synchronous>, transform_indices = @transform_24, window_bounds = array<i64: 1, 32>}, {pipeline_mode = #tpu.pipeline_mode<synchronous>, transform_indices = @transform_25, window_bounds = array<i64: 32, 96>}, {pipeline_mode = #tpu.pipeline_mode<synchronous>, transform_indices = @transform_26, window_bounds = array<i64: 1, 96>}, {pipeline_mode = #tpu.pipeline_mode<synchronous>, transform_indices = @transform_27, window_bounds = array<i64: 32, 96>}, {pipeline_mode = #tpu.pipeline_mode<synchronous>, transform_indices = @transform_28, window_bounds = array<i64: 1, 96>}, {pipeline_mode = #tpu.pipeline_mode<synchronous>, transform_indices = @transform_29, window_bounds = array<i64: 32, 8>}, {pipeline_mode = #tpu.pipeline_mode<synchronous>, transform_indices = @transform_30, window_bounds = array<i64: 1, 8>}, {transform_indices = @transform_31, window_bounds = array<i64: 1, 9, 40>}]} {
    %c0 = arith.constant 0 : index
    %c0_0 = arith.constant 0 : index
    %c0_1 = arith.constant 0 : index
    %0 = vector.load %arg1[%c0, %c0_0, %c0_1] : memref<1x24x16xf32, #tpu.memory_space<vmem>>, vector<1x24x16xf32>
    %1 = vector.shape_cast %0 : vector<1x24x16xf32> to vector<24x16xf32>
    %c0_2 = arith.constant 0 : index
    %c0_3 = arith.constant 0 : index
    %2 = vector.load %arg6[%c0_2, %c0_3] : memref<16x32xf32, #tpu.memory_space<vmem>>, vector<16x32xf32>
    %cst = arith.constant dense<0.000000e+00> : vector<24x32xf32>
    %3 = tpu.matmul %1, %2, %cst {dimension_numbers = #tpu.dot_dimension_numbers<[1], [0], [0], [1], [0, 0, 1, 1], [], []>} : vector<24x16xf32>, vector<16x32xf32>, vector<24x32xf32> -> vector<24x32xf32>
    %c0_4 = arith.constant 0 : index
    %c0_5 = arith.constant 0 : index
    %4 = vector.load %arg7[%c0_4, %c0_5] : memref<1x32xf32, #tpu.memory_space<vmem>>, vector<1x32xf32>
    %5 = vector.broadcast %4 : vector<1x32xf32> to vector<24x32xf32>
    %6 = arith.addf %3, %5 : vector<24x32xf32>
    %cst_6 = arith.constant 0.000000e+00 : f32
    %7 = vector.broadcast %cst_6 : f32 to vector<24x32xf32>
    %8 = arith.maximumf %6, %7 : vector<24x32xf32>
    %c0_7 = arith.constant 0 : index
    %c0_8 = arith.constant 0 : index
    %c0_9 = arith.constant 0 : index
    %c0_10 = arith.constant 0 : index
    %9 = vector.load %arg2[%c0_7, %c0_8, %c0_9, %c0_10] : memref<1x3x8x8xf32, #tpu.memory_space<vmem>>, vector<1x3x8x8xf32>
    %10 = vector.shape_cast %9 : vector<1x3x8x8xf32> to vector<3x8x8xf32>
    %cst_11 = arith.constant -1.000000e+09 : f32
    %11 = vector.broadcast %cst_11 : f32 to vector<3x8x8xf32>
    %12 = arith.mulf %10, %11 : vector<3x8x8xf32>
    %c0_12 = arith.constant 0 : index
    %c0_13 = arith.constant 0 : index
    %c0_14 = arith.constant 0 : index
    %13 = vector.load %arg8[%c0_12, %c0_13, %c0_14] : memref<2x32x32xf32, #tpu.memory_space<vmem>>, vector<1x32x32xf32>
    %14 = vector.shape_cast %13 : vector<1x32x32xf32> to vector<32x32xf32>
    %cst_15 = arith.constant dense<0.000000e+00> : vector<24x32xf32>
    %15 = tpu.matmul %8, %14, %cst_15 {dimension_numbers = #tpu.dot_dimension_numbers<[1], [0], [0], [1], [0, 0, 1, 1], [], []>} : vector<24x32xf32>, vector<32x32xf32>, vector<24x32xf32> -> vector<24x32xf32>
    %c0_16 = arith.constant 0 : index
    %c0_17 = arith.constant 0 : index
    %c0_18 = arith.constant 0 : index
    %16 = vector.load %arg9[%c0_16, %c0_17, %c0_18] : memref<2x1x32xf32, #tpu.memory_space<vmem>>, vector<1x1x32xf32>
    %17 = vector.shape_cast %16 : vector<1x1x32xf32> to vector<1x32xf32>
    %18 = vector.broadcast %17 : vector<1x32xf32> to vector<24x32xf32>
    %19 = arith.addf %15, %18 : vector<24x32xf32>
    %c0_19 = arith.constant 0 : index
    %c0_20 = arith.constant 0 : index
    %c0_21 = arith.constant 0 : index
    %20 = vector.load %arg10[%c0_19, %c0_20, %c0_21] : memref<2x32x32xf32, #tpu.memory_space<vmem>>, vector<1x32x32xf32>
    %21 = vector.shape_cast %20 : vector<1x32x32xf32> to vector<32x32xf32>
    %cst_22 = arith.constant dense<0.000000e+00> : vector<24x32xf32>
    %22 = tpu.matmul %8, %21, %cst_22 {dimension_numbers = #tpu.dot_dimension_numbers<[1], [0], [0], [1], [0, 0, 1, 1], [], []>} : vector<24x32xf32>, vector<32x32xf32>, vector<24x32xf32> -> vector<24x32xf32>
    %c0_23 = arith.constant 0 : index
    %c0_24 = arith.constant 0 : index
    %c0_25 = arith.constant 0 : index
    %23 = vector.load %arg11[%c0_23, %c0_24, %c0_25] : memref<2x1x32xf32, #tpu.memory_space<vmem>>, vector<1x1x32xf32>
    %24 = vector.shape_cast %23 : vector<1x1x32xf32> to vector<1x32xf32>
    %25 = vector.broadcast %24 : vector<1x32xf32> to vector<24x32xf32>
    %26 = arith.addf %22, %25 : vector<24x32xf32>
    %c0_26 = arith.constant 0 : index
    %c0_27 = arith.constant 0 : index
    %c0_28 = arith.constant 0 : index
    %27 = vector.load %arg12[%c0_26, %c0_27, %c0_28] : memref<2x32x32xf32, #tpu.memory_space<vmem>>, vector<1x32x32xf32>
    %28 = vector.shape_cast %27 : vector<1x32x32xf32> to vector<32x32xf32>
    %cst_29 = arith.constant dense<0.000000e+00> : vector<24x32xf32>
    %29 = tpu.matmul %8, %28, %cst_29 {dimension_numbers = #tpu.dot_dimension_numbers<[1], [0], [0], [1], [0, 0, 1, 1], [], []>} : vector<24x32xf32>, vector<32x32xf32>, vector<24x32xf32> -> vector<24x32xf32>
    %c0_30 = arith.constant 0 : index
    %c0_31 = arith.constant 0 : index
    %c0_32 = arith.constant 0 : index
    %30 = vector.load %arg13[%c0_30, %c0_31, %c0_32] : memref<2x1x32xf32, #tpu.memory_space<vmem>>, vector<1x1x32xf32>
    %31 = vector.shape_cast %30 : vector<1x1x32xf32> to vector<1x32xf32>
    %32 = vector.broadcast %31 : vector<1x32xf32> to vector<24x32xf32>
    %33 = arith.addf %29, %32 : vector<24x32xf32>
    %34 = vector.extract_strided_slice %19 {offsets = [0, 0], sizes = [24, 8], strides = [1, 1]} : vector<24x32xf32> to vector<24x8xf32>
    %35 = vector.shape_cast %34 : vector<24x8xf32> to vector<3x8x8xf32>
    %36 = vector.extract_strided_slice %26 {offsets = [0, 0], sizes = [24, 8], strides = [1, 1]} : vector<24x32xf32> to vector<24x8xf32>
    %37 = vector.shape_cast %36 : vector<24x8xf32> to vector<3x8x8xf32>
    %38 = vector.extract_strided_slice %33 {offsets = [0, 0], sizes = [24, 8], strides = [1, 1]} : vector<24x32xf32> to vector<24x8xf32>
    %39 = vector.shape_cast %38 : vector<24x8xf32> to vector<3x8x8xf32>
    "tpu.trace_start"() <{level = 10 : i32, message = "sqd,skd->sqk"}> : () -> ()
    %cst_33 = arith.constant dense<0.000000e+00> : vector<3x8x8xf32>
    %40 = tpu.matmul %35, %37, %cst_33 {dimension_numbers = #tpu.dot_dimension_numbers<[2], [2], [1], [1], [0, 0, 0, 1, 1, 1], [0], [0]>} : vector<3x8x8xf32>, vector<3x8x8xf32>, vector<3x8x8xf32> -> vector<3x8x8xf32>
    "tpu.trace_stop"() : () -> ()
    %cst_34 = arith.constant 0.353553385 : f32
    %41 = vector.broadcast %cst_34 : f32 to vector<3x8x8xf32>
    %42 = arith.mulf %40, %41 : vector<3x8x8xf32>
    %43 = arith.addf %42, %12 : vector<3x8x8xf32>
    %cst_35 = arith.constant dense<0xFF800000> : vector<3x8xf32>
    %44 = vector.multi_reduction <maximumf>, %43, %cst_35 [2] : vector<3x8x8xf32> to vector<3x8xf32>
    %45 = vector.shape_cast %44 : vector<3x8xf32> to vector<3x8x1xf32>
    %46 = vector.broadcast %45 : vector<3x8x1xf32> to vector<3x8x8xf32>
    %47 = arith.subf %43, %46 : vector<3x8x8xf32>
    %48 = math.exp %47 : vector<3x8x8xf32>
    %cst_36 = arith.constant dense<0.000000e+00> : vector<3x8xf32>
    %49 = vector.multi_reduction <add>, %48, %cst_36 [2] : vector<3x8x8xf32> to vector<3x8xf32>
    %50 = vector.shape_cast %49 : vector<3x8xf32> to vector<3x8x1xf32>
    %51 = vector.broadcast %50 : vector<3x8x1xf32> to vector<3x8x8xf32>
    %52 = arith.divf %48, %51 : vector<3x8x8xf32>
    "tpu.trace_start"() <{level = 10 : i32, message = "sqk,skd->sqd"}> : () -> ()
    %cst_37 = arith.constant dense<0.000000e+00> : vector<3x8x8xf32>
    %53 = tpu.matmul %52, %39, %cst_37 {dimension_numbers = #tpu.dot_dimension_numbers<[2], [1], [1], [2], [0, 0, 0, 1, 1, 2], [0], [0]>} : vector<3x8x8xf32>, vector<3x8x8xf32>, vector<3x8x8xf32> -> vector<3x8x8xf32>
    "tpu.trace_stop"() : () -> ()
    %54 = vector.shape_cast %53 : vector<3x8x8xf32> to vector<24x8xf32>
    %55 = vector.extract_strided_slice %19 {offsets = [0, 8], sizes = [24, 8], strides = [1, 1]} : vector<24x32xf32> to vector<24x8xf32>
    %56 = vector.shape_cast %55 : vector<24x8xf32> to vector<3x8x8xf32>
    %57 = vector.extract_strided_slice %26 {offsets = [0, 8], sizes = [24, 8], strides = [1, 1]} : vector<24x32xf32> to vector<24x8xf32>
    %58 = vector.shape_cast %57 : vector<24x8xf32> to vector<3x8x8xf32>
    %59 = vector.extract_strided_slice %33 {offsets = [0, 8], sizes = [24, 8], strides = [1, 1]} : vector<24x32xf32> to vector<24x8xf32>
    %60 = vector.shape_cast %59 : vector<24x8xf32> to vector<3x8x8xf32>
    "tpu.trace_start"() <{level = 10 : i32, message = "sqd,skd->sqk"}> : () -> ()
    %cst_38 = arith.constant dense<0.000000e+00> : vector<3x8x8xf32>
    %61 = tpu.matmul %56, %58, %cst_38 {dimension_numbers = #tpu.dot_dimension_numbers<[2], [2], [1], [1], [0, 0, 0, 1, 1, 1], [0], [0]>} : vector<3x8x8xf32>, vector<3x8x8xf32>, vector<3x8x8xf32> -> vector<3x8x8xf32>
    "tpu.trace_stop"() : () -> ()
    %cst_39 = arith.constant 0.353553385 : f32
    %62 = vector.broadcast %cst_39 : f32 to vector<3x8x8xf32>
    %63 = arith.mulf %61, %62 : vector<3x8x8xf32>
    %64 = arith.addf %63, %12 : vector<3x8x8xf32>
    %cst_40 = arith.constant dense<0xFF800000> : vector<3x8xf32>
    %65 = vector.multi_reduction <maximumf>, %64, %cst_40 [2] : vector<3x8x8xf32> to vector<3x8xf32>
    %66 = vector.shape_cast %65 : vector<3x8xf32> to vector<3x8x1xf32>
    %67 = vector.broadcast %66 : vector<3x8x1xf32> to vector<3x8x8xf32>
    %68 = arith.subf %64, %67 : vector<3x8x8xf32>
    %69 = math.exp %68 : vector<3x8x8xf32>
    %cst_41 = arith.constant dense<0.000000e+00> : vector<3x8xf32>
    %70 = vector.multi_reduction <add>, %69, %cst_41 [2] : vector<3x8x8xf32> to vector<3x8xf32>
    %71 = vector.shape_cast %70 : vector<3x8xf32> to vector<3x8x1xf32>
    %72 = vector.broadcast %71 : vector<3x8x1xf32> to vector<3x8x8xf32>
    %73 = arith.divf %69, %72 : vector<3x8x8xf32>
    "tpu.trace_start"() <{level = 10 : i32, message = "sqk,skd->sqd"}> : () -> ()
    %cst_42 = arith.constant dense<0.000000e+00> : vector<3x8x8xf32>
    %74 = tpu.matmul %73, %60, %cst_42 {dimension_numbers = #tpu.dot_dimension_numbers<[2], [1], [1], [2], [0, 0, 0, 1, 1, 2], [0], [0]>} : vector<3x8x8xf32>, vector<3x8x8xf32>, vector<3x8x8xf32> -> vector<3x8x8xf32>
    "tpu.trace_stop"() : () -> ()
    %75 = vector.shape_cast %74 : vector<3x8x8xf32> to vector<24x8xf32>
    %76 = vector.extract_strided_slice %19 {offsets = [0, 16], sizes = [24, 8], strides = [1, 1]} : vector<24x32xf32> to vector<24x8xf32>
    %77 = vector.shape_cast %76 : vector<24x8xf32> to vector<3x8x8xf32>
    %78 = vector.extract_strided_slice %26 {offsets = [0, 16], sizes = [24, 8], strides = [1, 1]} : vector<24x32xf32> to vector<24x8xf32>
    %79 = vector.shape_cast %78 : vector<24x8xf32> to vector<3x8x8xf32>
    %80 = vector.extract_strided_slice %33 {offsets = [0, 16], sizes = [24, 8], strides = [1, 1]} : vector<24x32xf32> to vector<24x8xf32>
    %81 = vector.shape_cast %80 : vector<24x8xf32> to vector<3x8x8xf32>
    "tpu.trace_start"() <{level = 10 : i32, message = "sqd,skd->sqk"}> : () -> ()
    %cst_43 = arith.constant dense<0.000000e+00> : vector<3x8x8xf32>
    %82 = tpu.matmul %77, %79, %cst_43 {dimension_numbers = #tpu.dot_dimension_numbers<[2], [2], [1], [1], [0, 0, 0, 1, 1, 1], [0], [0]>} : vector<3x8x8xf32>, vector<3x8x8xf32>, vector<3x8x8xf32> -> vector<3x8x8xf32>
    "tpu.trace_stop"() : () -> ()
    %cst_44 = arith.constant 0.353553385 : f32
    %83 = vector.broadcast %cst_44 : f32 to vector<3x8x8xf32>
    %84 = arith.mulf %82, %83 : vector<3x8x8xf32>
    %85 = arith.addf %84, %12 : vector<3x8x8xf32>
    %cst_45 = arith.constant dense<0xFF800000> : vector<3x8xf32>
    %86 = vector.multi_reduction <maximumf>, %85, %cst_45 [2] : vector<3x8x8xf32> to vector<3x8xf32>
    %87 = vector.shape_cast %86 : vector<3x8xf32> to vector<3x8x1xf32>
    %88 = vector.broadcast %87 : vector<3x8x1xf32> to vector<3x8x8xf32>
    %89 = arith.subf %85, %88 : vector<3x8x8xf32>
    %90 = math.exp %89 : vector<3x8x8xf32>
    %cst_46 = arith.constant dense<0.000000e+00> : vector<3x8xf32>
    %91 = vector.multi_reduction <add>, %90, %cst_46 [2] : vector<3x8x8xf32> to vector<3x8xf32>
    %92 = vector.shape_cast %91 : vector<3x8xf32> to vector<3x8x1xf32>
    %93 = vector.broadcast %92 : vector<3x8x1xf32> to vector<3x8x8xf32>
    %94 = arith.divf %90, %93 : vector<3x8x8xf32>
    "tpu.trace_start"() <{level = 10 : i32, message = "sqk,skd->sqd"}> : () -> ()
    %cst_47 = arith.constant dense<0.000000e+00> : vector<3x8x8xf32>
    %95 = tpu.matmul %94, %81, %cst_47 {dimension_numbers = #tpu.dot_dimension_numbers<[2], [1], [1], [2], [0, 0, 0, 1, 1, 2], [0], [0]>} : vector<3x8x8xf32>, vector<3x8x8xf32>, vector<3x8x8xf32> -> vector<3x8x8xf32>
    "tpu.trace_stop"() : () -> ()
    %96 = vector.shape_cast %95 : vector<3x8x8xf32> to vector<24x8xf32>
    %97 = vector.extract_strided_slice %19 {offsets = [0, 24], sizes = [24, 8], strides = [1, 1]} : vector<24x32xf32> to vector<24x8xf32>
    %98 = vector.shape_cast %97 : vector<24x8xf32> to vector<3x8x8xf32>
    %99 = vector.extract_strided_slice %26 {offsets = [0, 24], sizes = [24, 8], strides = [1, 1]} : vector<24x32xf32> to vector<24x8xf32>
    %100 = vector.shape_cast %99 : vector<24x8xf32> to vector<3x8x8xf32>
    %101 = vector.extract_strided_slice %33 {offsets = [0, 24], sizes = [24, 8], strides = [1, 1]} : vector<24x32xf32> to vector<24x8xf32>
    %102 = vector.shape_cast %101 : vector<24x8xf32> to vector<3x8x8xf32>
    "tpu.trace_start"() <{level = 10 : i32, message = "sqd,skd->sqk"}> : () -> ()
    %cst_48 = arith.constant dense<0.000000e+00> : vector<3x8x8xf32>
    %103 = tpu.matmul %98, %100, %cst_48 {dimension_numbers = #tpu.dot_dimension_numbers<[2], [2], [1], [1], [0, 0, 0, 1, 1, 1], [0], [0]>} : vector<3x8x8xf32>, vector<3x8x8xf32>, vector<3x8x8xf32> -> vector<3x8x8xf32>
    "tpu.trace_stop"() : () -> ()
    %cst_49 = arith.constant 0.353553385 : f32
    %104 = vector.broadcast %cst_49 : f32 to vector<3x8x8xf32>
    %105 = arith.mulf %103, %104 : vector<3x8x8xf32>
    %106 = arith.addf %105, %12 : vector<3x8x8xf32>
    %cst_50 = arith.constant dense<0xFF800000> : vector<3x8xf32>
    %107 = vector.multi_reduction <maximumf>, %106, %cst_50 [2] : vector<3x8x8xf32> to vector<3x8xf32>
    %108 = vector.shape_cast %107 : vector<3x8xf32> to vector<3x8x1xf32>
    %109 = vector.broadcast %108 : vector<3x8x1xf32> to vector<3x8x8xf32>
    %110 = arith.subf %106, %109 : vector<3x8x8xf32>
    %111 = math.exp %110 : vector<3x8x8xf32>
    %cst_51 = arith.constant dense<0.000000e+00> : vector<3x8xf32>
    %112 = vector.multi_reduction <add>, %111, %cst_51 [2] : vector<3x8x8xf32> to vector<3x8xf32>
    %113 = vector.shape_cast %112 : vector<3x8xf32> to vector<3x8x1xf32>
    %114 = vector.broadcast %113 : vector<3x8x1xf32> to vector<3x8x8xf32>
    %115 = arith.divf %111, %114 : vector<3x8x8xf32>
    "tpu.trace_start"() <{level = 10 : i32, message = "sqk,skd->sqd"}> : () -> ()
    %cst_52 = arith.constant dense<0.000000e+00> : vector<3x8x8xf32>
    %116 = tpu.matmul %115, %102, %cst_52 {dimension_numbers = #tpu.dot_dimension_numbers<[2], [1], [1], [2], [0, 0, 0, 1, 1, 2], [0], [0]>} : vector<3x8x8xf32>, vector<3x8x8xf32>, vector<3x8x8xf32> -> vector<3x8x8xf32>
    "tpu.trace_stop"() : () -> ()
    %117 = vector.shape_cast %116 : vector<3x8x8xf32> to vector<24x8xf32>
    %118 = tpu.concatenate %54, %75, %96, %117 in 1 : vector<24x8xf32>, vector<24x8xf32>, vector<24x8xf32>, vector<24x8xf32> -> vector<24x32xf32>
    %c0_53 = arith.constant 0 : index
    %c0_54 = arith.constant 0 : index
    %c0_55 = arith.constant 0 : index
    %119 = vector.load %arg14[%c0_53, %c0_54, %c0_55] : memref<2x32x32xf32, #tpu.memory_space<vmem>>, vector<1x32x32xf32>
    %120 = vector.shape_cast %119 : vector<1x32x32xf32> to vector<32x32xf32>
    %cst_56 = arith.constant dense<0.000000e+00> : vector<24x32xf32>
    %121 = tpu.matmul %118, %120, %cst_56 {dimension_numbers = #tpu.dot_dimension_numbers<[1], [0], [0], [1], [0, 0, 1, 1], [], []>} : vector<24x32xf32>, vector<32x32xf32>, vector<24x32xf32> -> vector<24x32xf32>
    %c0_57 = arith.constant 0 : index
    %c0_58 = arith.constant 0 : index
    %c0_59 = arith.constant 0 : index
    %122 = vector.load %arg15[%c0_57, %c0_58, %c0_59] : memref<2x1x32xf32, #tpu.memory_space<vmem>>, vector<1x1x32xf32>
    %123 = vector.shape_cast %122 : vector<1x1x32xf32> to vector<1x32xf32>
    %124 = vector.broadcast %123 : vector<1x32xf32> to vector<24x32xf32>
    %125 = arith.addf %121, %124 : vector<24x32xf32>
    %126 = arith.addf %8, %125 : vector<24x32xf32>
    %c0_60 = arith.constant 0 : index
    %c0_61 = arith.constant 0 : index
    %c0_62 = arith.constant 0 : index
    %127 = vector.load %arg20[%c0_60, %c0_61, %c0_62] : memref<2x1x32xf32, #tpu.memory_space<vmem>>, vector<1x1x32xf32>
    %128 = vector.shape_cast %127 : vector<1x1x32xf32> to vector<1x32xf32>
    %c0_63 = arith.constant 0 : index
    %c0_64 = arith.constant 0 : index
    %c0_65 = arith.constant 0 : index
    %129 = vector.load %arg21[%c0_63, %c0_64, %c0_65] : memref<2x1x32xf32, #tpu.memory_space<vmem>>, vector<1x1x32xf32>
    %130 = vector.shape_cast %129 : vector<1x1x32xf32> to vector<1x32xf32>
    %cst_66 = arith.constant dense<0.000000e+00> : vector<24xf32>
    %131 = vector.multi_reduction <add>, %126, %cst_66 [1] : vector<24x32xf32> to vector<24xf32>
    %132 = vector.shape_cast %131 : vector<24xf32> to vector<24x1xf32>
    %cst_67 = arith.constant 3.200000e+01 : f32
    %133 = vector.broadcast %cst_67 : f32 to vector<24x1xf32>
    %134 = arith.divf %132, %133 : vector<24x1xf32>
    %135 = vector.broadcast %134 : vector<24x1xf32> to vector<24x32xf32>
    %136 = arith.subf %126, %135 : vector<24x32xf32>
    %137 = arith.mulf %136, %136 : vector<24x32xf32>
    %cst_68 = arith.constant dense<0.000000e+00> : vector<24xf32>
    %138 = vector.multi_reduction <add>, %137, %cst_68 [1] : vector<24x32xf32> to vector<24xf32>
    %139 = vector.shape_cast %138 : vector<24xf32> to vector<24x1xf32>
    %cst_69 = arith.constant 3.200000e+01 : f32
    %140 = vector.broadcast %cst_69 : f32 to vector<24x1xf32>
    %141 = arith.divf %139, %140 : vector<24x1xf32>
    %142 = vector.broadcast %134 : vector<24x1xf32> to vector<24x32xf32>
    %143 = arith.subf %126, %142 : vector<24x32xf32>
    %cst_70 = arith.constant 9.99999974E-6 : f32
    %144 = vector.broadcast %cst_70 : f32 to vector<24x1xf32>
    %145 = arith.addf %141, %144 : vector<24x1xf32>
    %146 = math.rsqrt %145 : vector<24x1xf32>
    %147 = vector.broadcast %146 : vector<24x1xf32> to vector<24x32xf32>
    %148 = arith.mulf %143, %147 : vector<24x32xf32>
    %149 = vector.broadcast %128 : vector<1x32xf32> to vector<24x32xf32>
    %150 = arith.mulf %148, %149 : vector<24x32xf32>
    %151 = vector.broadcast %130 : vector<1x32xf32> to vector<24x32xf32>
    %152 = arith.addf %150, %151 : vector<24x32xf32>
    %c0_71 = arith.constant 0 : index
    %c0_72 = arith.constant 0 : index
    %c0_73 = arith.constant 0 : index
    %153 = vector.load %arg16[%c0_71, %c0_72, %c0_73] : memref<2x32x128xf32, #tpu.memory_space<vmem>>, vector<1x32x128xf32>
    %154 = vector.shape_cast %153 : vector<1x32x128xf32> to vector<32x128xf32>
    %cst_74 = arith.constant dense<0.000000e+00> : vector<24x128xf32>
    %155 = tpu.matmul %152, %154, %cst_74 {dimension_numbers = #tpu.dot_dimension_numbers<[1], [0], [0], [1], [0, 0, 1, 1], [], []>} : vector<24x32xf32>, vector<32x128xf32>, vector<24x128xf32> -> vector<24x128xf32>
    %c0_75 = arith.constant 0 : index
    %c0_76 = arith.constant 0 : index
    %c0_77 = arith.constant 0 : index
    %156 = vector.load %arg17[%c0_75, %c0_76, %c0_77] : memref<2x1x128xf32, #tpu.memory_space<vmem>>, vector<1x1x128xf32>
    %157 = vector.shape_cast %156 : vector<1x1x128xf32> to vector<1x128xf32>
    %158 = vector.broadcast %157 : vector<1x128xf32> to vector<24x128xf32>
    %159 = arith.addf %155, %158 : vector<24x128xf32>
    %cst_78 = arith.constant 0.000000e+00 : f32
    %160 = vector.broadcast %cst_78 : f32 to vector<24x128xf32>
    %161 = arith.maximumf %159, %160 : vector<24x128xf32>
    %c0_79 = arith.constant 0 : index
    %c0_80 = arith.constant 0 : index
    %c0_81 = arith.constant 0 : index
    %162 = vector.load %arg18[%c0_79, %c0_80, %c0_81] : memref<2x128x32xf32, #tpu.memory_space<vmem>>, vector<1x128x32xf32>
    %163 = vector.shape_cast %162 : vector<1x128x32xf32> to vector<128x32xf32>
    %cst_82 = arith.constant dense<0.000000e+00> : vector<24x32xf32>
    %164 = tpu.matmul %161, %163, %cst_82 {dimension_numbers = #tpu.dot_dimension_numbers<[1], [0], [0], [1], [0, 0, 1, 1], [], []>} : vector<24x128xf32>, vector<128x32xf32>, vector<24x32xf32> -> vector<24x32xf32>
    %c0_83 = arith.constant 0 : index
    %c0_84 = arith.constant 0 : index
    %c0_85 = arith.constant 0 : index
    %165 = vector.load %arg19[%c0_83, %c0_84, %c0_85] : memref<2x1x32xf32, #tpu.memory_space<vmem>>, vector<1x1x32xf32>
    %166 = vector.shape_cast %165 : vector<1x1x32xf32> to vector<1x32xf32>
    %167 = vector.broadcast %166 : vector<1x32xf32> to vector<24x32xf32>
    %168 = arith.addf %164, %167 : vector<24x32xf32>
    %169 = arith.addf %152, %168 : vector<24x32xf32>
    %c0_86 = arith.constant 0 : index
    %c0_87 = arith.constant 0 : index
    %c0_88 = arith.constant 0 : index
    %170 = vector.load %arg22[%c0_86, %c0_87, %c0_88] : memref<2x1x32xf32, #tpu.memory_space<vmem>>, vector<1x1x32xf32>
    %171 = vector.shape_cast %170 : vector<1x1x32xf32> to vector<1x32xf32>
    %c0_89 = arith.constant 0 : index
    %c0_90 = arith.constant 0 : index
    %c0_91 = arith.constant 0 : index
    %172 = vector.load %arg23[%c0_89, %c0_90, %c0_91] : memref<2x1x32xf32, #tpu.memory_space<vmem>>, vector<1x1x32xf32>
    %173 = vector.shape_cast %172 : vector<1x1x32xf32> to vector<1x32xf32>
    %cst_92 = arith.constant dense<0.000000e+00> : vector<24xf32>
    %174 = vector.multi_reduction <add>, %169, %cst_92 [1] : vector<24x32xf32> to vector<24xf32>
    %175 = vector.shape_cast %174 : vector<24xf32> to vector<24x1xf32>
    %cst_93 = arith.constant 3.200000e+01 : f32
    %176 = vector.broadcast %cst_93 : f32 to vector<24x1xf32>
    %177 = arith.divf %175, %176 : vector<24x1xf32>
    %178 = vector.broadcast %177 : vector<24x1xf32> to vector<24x32xf32>
    %179 = arith.subf %169, %178 : vector<24x32xf32>
    %180 = arith.mulf %179, %179 : vector<24x32xf32>
    %cst_94 = arith.constant dense<0.000000e+00> : vector<24xf32>
    %181 = vector.multi_reduction <add>, %180, %cst_94 [1] : vector<24x32xf32> to vector<24xf32>
    %182 = vector.shape_cast %181 : vector<24xf32> to vector<24x1xf32>
    %cst_95 = arith.constant 3.200000e+01 : f32
    %183 = vector.broadcast %cst_95 : f32 to vector<24x1xf32>
    %184 = arith.divf %182, %183 : vector<24x1xf32>
    %185 = vector.broadcast %177 : vector<24x1xf32> to vector<24x32xf32>
    %186 = arith.subf %169, %185 : vector<24x32xf32>
    %cst_96 = arith.constant 9.99999974E-6 : f32
    %187 = vector.broadcast %cst_96 : f32 to vector<24x1xf32>
    %188 = arith.addf %184, %187 : vector<24x1xf32>
    %189 = math.rsqrt %188 : vector<24x1xf32>
    %190 = vector.broadcast %189 : vector<24x1xf32> to vector<24x32xf32>
    %191 = arith.mulf %186, %190 : vector<24x32xf32>
    %192 = vector.broadcast %171 : vector<1x32xf32> to vector<24x32xf32>
    %193 = arith.mulf %191, %192 : vector<24x32xf32>
    %194 = vector.broadcast %173 : vector<1x32xf32> to vector<24x32xf32>
    %195 = arith.addf %193, %194 : vector<24x32xf32>
    %c1 = arith.constant 1 : index
    %c0_97 = arith.constant 0 : index
    %c0_98 = arith.constant 0 : index
    %196 = vector.load %arg8[%c1, %c0_97, %c0_98] : memref<2x32x32xf32, #tpu.memory_space<vmem>>, vector<1x32x32xf32>
    %197 = vector.shape_cast %196 : vector<1x32x32xf32> to vector<32x32xf32>
    %cst_99 = arith.constant dense<0.000000e+00> : vector<24x32xf32>
    %198 = tpu.matmul %195, %197, %cst_99 {dimension_numbers = #tpu.dot_dimension_numbers<[1], [0], [0], [1], [0, 0, 1, 1], [], []>} : vector<24x32xf32>, vector<32x32xf32>, vector<24x32xf32> -> vector<24x32xf32>
    %c1_100 = arith.constant 1 : index
    %c0_101 = arith.constant 0 : index
    %c0_102 = arith.constant 0 : index
    %199 = vector.load %arg9[%c1_100, %c0_101, %c0_102] : memref<2x1x32xf32, #tpu.memory_space<vmem>>, vector<1x1x32xf32>
    %200 = vector.shape_cast %199 : vector<1x1x32xf32> to vector<1x32xf32>
    %201 = vector.broadcast %200 : vector<1x32xf32> to vector<24x32xf32>
    %202 = arith.addf %198, %201 : vector<24x32xf32>
    %c1_103 = arith.constant 1 : index
    %c0_104 = arith.constant 0 : index
    %c0_105 = arith.constant 0 : index
    %203 = vector.load %arg10[%c1_103, %c0_104, %c0_105] : memref<2x32x32xf32, #tpu.memory_space<vmem>>, vector<1x32x32xf32>
    %204 = vector.shape_cast %203 : vector<1x32x32xf32> to vector<32x32xf32>
    %cst_106 = arith.constant dense<0.000000e+00> : vector<24x32xf32>
    %205 = tpu.matmul %195, %204, %cst_106 {dimension_numbers = #tpu.dot_dimension_numbers<[1], [0], [0], [1], [0, 0, 1, 1], [], []>} : vector<24x32xf32>, vector<32x32xf32>, vector<24x32xf32> -> vector<24x32xf32>
    %c1_107 = arith.constant 1 : index
    %c0_108 = arith.constant 0 : index
    %c0_109 = arith.constant 0 : index
    %206 = vector.load %arg11[%c1_107, %c0_108, %c0_109] : memref<2x1x32xf32, #tpu.memory_space<vmem>>, vector<1x1x32xf32>
    %207 = vector.shape_cast %206 : vector<1x1x32xf32> to vector<1x32xf32>
    %208 = vector.broadcast %207 : vector<1x32xf32> to vector<24x32xf32>
    %209 = arith.addf %205, %208 : vector<24x32xf32>
    %c1_110 = arith.constant 1 : index
    %c0_111 = arith.constant 0 : index
    %c0_112 = arith.constant 0 : index
    %210 = vector.load %arg12[%c1_110, %c0_111, %c0_112] : memref<2x32x32xf32, #tpu.memory_space<vmem>>, vector<1x32x32xf32>
    %211 = vector.shape_cast %210 : vector<1x32x32xf32> to vector<32x32xf32>
    %cst_113 = arith.constant dense<0.000000e+00> : vector<24x32xf32>
    %212 = tpu.matmul %195, %211, %cst_113 {dimension_numbers = #tpu.dot_dimension_numbers<[1], [0], [0], [1], [0, 0, 1, 1], [], []>} : vector<24x32xf32>, vector<32x32xf32>, vector<24x32xf32> -> vector<24x32xf32>
    %c1_114 = arith.constant 1 : index
    %c0_115 = arith.constant 0 : index
    %c0_116 = arith.constant 0 : index
    %213 = vector.load %arg13[%c1_114, %c0_115, %c0_116] : memref<2x1x32xf32, #tpu.memory_space<vmem>>, vector<1x1x32xf32>
    %214 = vector.shape_cast %213 : vector<1x1x32xf32> to vector<1x32xf32>
    %215 = vector.broadcast %214 : vector<1x32xf32> to vector<24x32xf32>
    %216 = arith.addf %212, %215 : vector<24x32xf32>
    %217 = vector.extract_strided_slice %202 {offsets = [0, 0], sizes = [24, 8], strides = [1, 1]} : vector<24x32xf32> to vector<24x8xf32>
    %218 = vector.shape_cast %217 : vector<24x8xf32> to vector<3x8x8xf32>
    %219 = vector.extract_strided_slice %209 {offsets = [0, 0], sizes = [24, 8], strides = [1, 1]} : vector<24x32xf32> to vector<24x8xf32>
    %220 = vector.shape_cast %219 : vector<24x8xf32> to vector<3x8x8xf32>
    %221 = vector.extract_strided_slice %216 {offsets = [0, 0], sizes = [24, 8], strides = [1, 1]} : vector<24x32xf32> to vector<24x8xf32>
    %222 = vector.shape_cast %221 : vector<24x8xf32> to vector<3x8x8xf32>
    "tpu.trace_start"() <{level = 10 : i32, message = "sqd,skd->sqk"}> : () -> ()
    %cst_117 = arith.constant dense<0.000000e+00> : vector<3x8x8xf32>
    %223 = tpu.matmul %218, %220, %cst_117 {dimension_numbers = #tpu.dot_dimension_numbers<[2], [2], [1], [1], [0, 0, 0, 1, 1, 1], [0], [0]>} : vector<3x8x8xf32>, vector<3x8x8xf32>, vector<3x8x8xf32> -> vector<3x8x8xf32>
    "tpu.trace_stop"() : () -> ()
    %cst_118 = arith.constant 0.353553385 : f32
    %224 = vector.broadcast %cst_118 : f32 to vector<3x8x8xf32>
    %225 = arith.mulf %223, %224 : vector<3x8x8xf32>
    %226 = arith.addf %225, %12 : vector<3x8x8xf32>
    %cst_119 = arith.constant dense<0xFF800000> : vector<3x8xf32>
    %227 = vector.multi_reduction <maximumf>, %226, %cst_119 [2] : vector<3x8x8xf32> to vector<3x8xf32>
    %228 = vector.shape_cast %227 : vector<3x8xf32> to vector<3x8x1xf32>
    %229 = vector.broadcast %228 : vector<3x8x1xf32> to vector<3x8x8xf32>
    %230 = arith.subf %226, %229 : vector<3x8x8xf32>
    %231 = math.exp %230 : vector<3x8x8xf32>
    %cst_120 = arith.constant dense<0.000000e+00> : vector<3x8xf32>
    %232 = vector.multi_reduction <add>, %231, %cst_120 [2] : vector<3x8x8xf32> to vector<3x8xf32>
    %233 = vector.shape_cast %232 : vector<3x8xf32> to vector<3x8x1xf32>
    %234 = vector.broadcast %233 : vector<3x8x1xf32> to vector<3x8x8xf32>
    %235 = arith.divf %231, %234 : vector<3x8x8xf32>
    "tpu.trace_start"() <{level = 10 : i32, message = "sqk,skd->sqd"}> : () -> ()
    %cst_121 = arith.constant dense<0.000000e+00> : vector<3x8x8xf32>
    %236 = tpu.matmul %235, %222, %cst_121 {dimension_numbers = #tpu.dot_dimension_numbers<[2], [1], [1], [2], [0, 0, 0, 1, 1, 2], [0], [0]>} : vector<3x8x8xf32>, vector<3x8x8xf32>, vector<3x8x8xf32> -> vector<3x8x8xf32>
    "tpu.trace_stop"() : () -> ()
    %237 = vector.shape_cast %236 : vector<3x8x8xf32> to vector<24x8xf32>
    %238 = vector.extract_strided_slice %202 {offsets = [0, 8], sizes = [24, 8], strides = [1, 1]} : vector<24x32xf32> to vector<24x8xf32>
    %239 = vector.shape_cast %238 : vector<24x8xf32> to vector<3x8x8xf32>
    %240 = vector.extract_strided_slice %209 {offsets = [0, 8], sizes = [24, 8], strides = [1, 1]} : vector<24x32xf32> to vector<24x8xf32>
    %241 = vector.shape_cast %240 : vector<24x8xf32> to vector<3x8x8xf32>
    %242 = vector.extract_strided_slice %216 {offsets = [0, 8], sizes = [24, 8], strides = [1, 1]} : vector<24x32xf32> to vector<24x8xf32>
    %243 = vector.shape_cast %242 : vector<24x8xf32> to vector<3x8x8xf32>
    "tpu.trace_start"() <{level = 10 : i32, message = "sqd,skd->sqk"}> : () -> ()
    %cst_122 = arith.constant dense<0.000000e+00> : vector<3x8x8xf32>
    %244 = tpu.matmul %239, %241, %cst_122 {dimension_numbers = #tpu.dot_dimension_numbers<[2], [2], [1], [1], [0, 0, 0, 1, 1, 1], [0], [0]>} : vector<3x8x8xf32>, vector<3x8x8xf32>, vector<3x8x8xf32> -> vector<3x8x8xf32>
    "tpu.trace_stop"() : () -> ()
    %cst_123 = arith.constant 0.353553385 : f32
    %245 = vector.broadcast %cst_123 : f32 to vector<3x8x8xf32>
    %246 = arith.mulf %244, %245 : vector<3x8x8xf32>
    %247 = arith.addf %246, %12 : vector<3x8x8xf32>
    %cst_124 = arith.constant dense<0xFF800000> : vector<3x8xf32>
    %248 = vector.multi_reduction <maximumf>, %247, %cst_124 [2] : vector<3x8x8xf32> to vector<3x8xf32>
    %249 = vector.shape_cast %248 : vector<3x8xf32> to vector<3x8x1xf32>
    %250 = vector.broadcast %249 : vector<3x8x1xf32> to vector<3x8x8xf32>
    %251 = arith.subf %247, %250 : vector<3x8x8xf32>
    %252 = math.exp %251 : vector<3x8x8xf32>
    %cst_125 = arith.constant dense<0.000000e+00> : vector<3x8xf32>
    %253 = vector.multi_reduction <add>, %252, %cst_125 [2] : vector<3x8x8xf32> to vector<3x8xf32>
    %254 = vector.shape_cast %253 : vector<3x8xf32> to vector<3x8x1xf32>
    %255 = vector.broadcast %254 : vector<3x8x1xf32> to vector<3x8x8xf32>
    %256 = arith.divf %252, %255 : vector<3x8x8xf32>
    "tpu.trace_start"() <{level = 10 : i32, message = "sqk,skd->sqd"}> : () -> ()
    %cst_126 = arith.constant dense<0.000000e+00> : vector<3x8x8xf32>
    %257 = tpu.matmul %256, %243, %cst_126 {dimension_numbers = #tpu.dot_dimension_numbers<[2], [1], [1], [2], [0, 0, 0, 1, 1, 2], [0], [0]>} : vector<3x8x8xf32>, vector<3x8x8xf32>, vector<3x8x8xf32> -> vector<3x8x8xf32>
    "tpu.trace_stop"() : () -> ()
    %258 = vector.shape_cast %257 : vector<3x8x8xf32> to vector<24x8xf32>
    %259 = vector.extract_strided_slice %202 {offsets = [0, 16], sizes = [24, 8], strides = [1, 1]} : vector<24x32xf32> to vector<24x8xf32>
    %260 = vector.shape_cast %259 : vector<24x8xf32> to vector<3x8x8xf32>
    %261 = vector.extract_strided_slice %209 {offsets = [0, 16], sizes = [24, 8], strides = [1, 1]} : vector<24x32xf32> to vector<24x8xf32>
    %262 = vector.shape_cast %261 : vector<24x8xf32> to vector<3x8x8xf32>
    %263 = vector.extract_strided_slice %216 {offsets = [0, 16], sizes = [24, 8], strides = [1, 1]} : vector<24x32xf32> to vector<24x8xf32>
    %264 = vector.shape_cast %263 : vector<24x8xf32> to vector<3x8x8xf32>
    "tpu.trace_start"() <{level = 10 : i32, message = "sqd,skd->sqk"}> : () -> ()
    %cst_127 = arith.constant dense<0.000000e+00> : vector<3x8x8xf32>
    %265 = tpu.matmul %260, %262, %cst_127 {dimension_numbers = #tpu.dot_dimension_numbers<[2], [2], [1], [1], [0, 0, 0, 1, 1, 1], [0], [0]>} : vector<3x8x8xf32>, vector<3x8x8xf32>, vector<3x8x8xf32> -> vector<3x8x8xf32>
    "tpu.trace_stop"() : () -> ()
    %cst_128 = arith.constant 0.353553385 : f32
    %266 = vector.broadcast %cst_128 : f32 to vector<3x8x8xf32>
    %267 = arith.mulf %265, %266 : vector<3x8x8xf32>
    %268 = arith.addf %267, %12 : vector<3x8x8xf32>
    %cst_129 = arith.constant dense<0xFF800000> : vector<3x8xf32>
    %269 = vector.multi_reduction <maximumf>, %268, %cst_129 [2] : vector<3x8x8xf32> to vector<3x8xf32>
    %270 = vector.shape_cast %269 : vector<3x8xf32> to vector<3x8x1xf32>
    %271 = vector.broadcast %270 : vector<3x8x1xf32> to vector<3x8x8xf32>
    %272 = arith.subf %268, %271 : vector<3x8x8xf32>
    %273 = math.exp %272 : vector<3x8x8xf32>
    %cst_130 = arith.constant dense<0.000000e+00> : vector<3x8xf32>
    %274 = vector.multi_reduction <add>, %273, %cst_130 [2] : vector<3x8x8xf32> to vector<3x8xf32>
    %275 = vector.shape_cast %274 : vector<3x8xf32> to vector<3x8x1xf32>
    %276 = vector.broadcast %275 : vector<3x8x1xf32> to vector<3x8x8xf32>
    %277 = arith.divf %273, %276 : vector<3x8x8xf32>
    "tpu.trace_start"() <{level = 10 : i32, message = "sqk,skd->sqd"}> : () -> ()
    %cst_131 = arith.constant dense<0.000000e+00> : vector<3x8x8xf32>
    %278 = tpu.matmul %277, %264, %cst_131 {dimension_numbers = #tpu.dot_dimension_numbers<[2], [1], [1], [2], [0, 0, 0, 1, 1, 2], [0], [0]>} : vector<3x8x8xf32>, vector<3x8x8xf32>, vector<3x8x8xf32> -> vector<3x8x8xf32>
    "tpu.trace_stop"() : () -> ()
    %279 = vector.shape_cast %278 : vector<3x8x8xf32> to vector<24x8xf32>
    %280 = vector.extract_strided_slice %202 {offsets = [0, 24], sizes = [24, 8], strides = [1, 1]} : vector<24x32xf32> to vector<24x8xf32>
    %281 = vector.shape_cast %280 : vector<24x8xf32> to vector<3x8x8xf32>
    %282 = vector.extract_strided_slice %209 {offsets = [0, 24], sizes = [24, 8], strides = [1, 1]} : vector<24x32xf32> to vector<24x8xf32>
    %283 = vector.shape_cast %282 : vector<24x8xf32> to vector<3x8x8xf32>
    %284 = vector.extract_strided_slice %216 {offsets = [0, 24], sizes = [24, 8], strides = [1, 1]} : vector<24x32xf32> to vector<24x8xf32>
    %285 = vector.shape_cast %284 : vector<24x8xf32> to vector<3x8x8xf32>
    "tpu.trace_start"() <{level = 10 : i32, message = "sqd,skd->sqk"}> : () -> ()
    %cst_132 = arith.constant dense<0.000000e+00> : vector<3x8x8xf32>
    %286 = tpu.matmul %281, %283, %cst_132 {dimension_numbers = #tpu.dot_dimension_numbers<[2], [2], [1], [1], [0, 0, 0, 1, 1, 1], [0], [0]>} : vector<3x8x8xf32>, vector<3x8x8xf32>, vector<3x8x8xf32> -> vector<3x8x8xf32>
    "tpu.trace_stop"() : () -> ()
    %cst_133 = arith.constant 0.353553385 : f32
    %287 = vector.broadcast %cst_133 : f32 to vector<3x8x8xf32>
    %288 = arith.mulf %286, %287 : vector<3x8x8xf32>
    %289 = arith.addf %288, %12 : vector<3x8x8xf32>
    %cst_134 = arith.constant dense<0xFF800000> : vector<3x8xf32>
    %290 = vector.multi_reduction <maximumf>, %289, %cst_134 [2] : vector<3x8x8xf32> to vector<3x8xf32>
    %291 = vector.shape_cast %290 : vector<3x8xf32> to vector<3x8x1xf32>
    %292 = vector.broadcast %291 : vector<3x8x1xf32> to vector<3x8x8xf32>
    %293 = arith.subf %289, %292 : vector<3x8x8xf32>
    %294 = math.exp %293 : vector<3x8x8xf32>
    %cst_135 = arith.constant dense<0.000000e+00> : vector<3x8xf32>
    %295 = vector.multi_reduction <add>, %294, %cst_135 [2] : vector<3x8x8xf32> to vector<3x8xf32>
    %296 = vector.shape_cast %295 : vector<3x8xf32> to vector<3x8x1xf32>
    %297 = vector.broadcast %296 : vector<3x8x1xf32> to vector<3x8x8xf32>
    %298 = arith.divf %294, %297 : vector<3x8x8xf32>
    "tpu.trace_start"() <{level = 10 : i32, message = "sqk,skd->sqd"}> : () -> ()
    %cst_136 = arith.constant dense<0.000000e+00> : vector<3x8x8xf32>
    %299 = tpu.matmul %298, %285, %cst_136 {dimension_numbers = #tpu.dot_dimension_numbers<[2], [1], [1], [2], [0, 0, 0, 1, 1, 2], [0], [0]>} : vector<3x8x8xf32>, vector<3x8x8xf32>, vector<3x8x8xf32> -> vector<3x8x8xf32>
    "tpu.trace_stop"() : () -> ()
    %300 = vector.shape_cast %299 : vector<3x8x8xf32> to vector<24x8xf32>
    %301 = tpu.concatenate %237, %258, %279, %300 in 1 : vector<24x8xf32>, vector<24x8xf32>, vector<24x8xf32>, vector<24x8xf32> -> vector<24x32xf32>
    %c1_137 = arith.constant 1 : index
    %c0_138 = arith.constant 0 : index
    %c0_139 = arith.constant 0 : index
    %302 = vector.load %arg14[%c1_137, %c0_138, %c0_139] : memref<2x32x32xf32, #tpu.memory_space<vmem>>, vector<1x32x32xf32>
    %303 = vector.shape_cast %302 : vector<1x32x32xf32> to vector<32x32xf32>
    %cst_140 = arith.constant dense<0.000000e+00> : vector<24x32xf32>
    %304 = tpu.matmul %301, %303, %cst_140 {dimension_numbers = #tpu.dot_dimension_numbers<[1], [0], [0], [1], [0, 0, 1, 1], [], []>} : vector<24x32xf32>, vector<32x32xf32>, vector<24x32xf32> -> vector<24x32xf32>
    %c1_141 = arith.constant 1 : index
    %c0_142 = arith.constant 0 : index
    %c0_143 = arith.constant 0 : index
    %305 = vector.load %arg15[%c1_141, %c0_142, %c0_143] : memref<2x1x32xf32, #tpu.memory_space<vmem>>, vector<1x1x32xf32>
    %306 = vector.shape_cast %305 : vector<1x1x32xf32> to vector<1x32xf32>
    %307 = vector.broadcast %306 : vector<1x32xf32> to vector<24x32xf32>
    %308 = arith.addf %304, %307 : vector<24x32xf32>
    %309 = arith.addf %195, %308 : vector<24x32xf32>
    %c1_144 = arith.constant 1 : index
    %c0_145 = arith.constant 0 : index
    %c0_146 = arith.constant 0 : index
    %310 = vector.load %arg20[%c1_144, %c0_145, %c0_146] : memref<2x1x32xf32, #tpu.memory_space<vmem>>, vector<1x1x32xf32>
    %311 = vector.shape_cast %310 : vector<1x1x32xf32> to vector<1x32xf32>
    %c1_147 = arith.constant 1 : index
    %c0_148 = arith.constant 0 : index
    %c0_149 = arith.constant 0 : index
    %312 = vector.load %arg21[%c1_147, %c0_148, %c0_149] : memref<2x1x32xf32, #tpu.memory_space<vmem>>, vector<1x1x32xf32>
    %313 = vector.shape_cast %312 : vector<1x1x32xf32> to vector<1x32xf32>
    %cst_150 = arith.constant dense<0.000000e+00> : vector<24xf32>
    %314 = vector.multi_reduction <add>, %309, %cst_150 [1] : vector<24x32xf32> to vector<24xf32>
    %315 = vector.shape_cast %314 : vector<24xf32> to vector<24x1xf32>
    %cst_151 = arith.constant 3.200000e+01 : f32
    %316 = vector.broadcast %cst_151 : f32 to vector<24x1xf32>
    %317 = arith.divf %315, %316 : vector<24x1xf32>
    %318 = vector.broadcast %317 : vector<24x1xf32> to vector<24x32xf32>
    %319 = arith.subf %309, %318 : vector<24x32xf32>
    %320 = arith.mulf %319, %319 : vector<24x32xf32>
    %cst_152 = arith.constant dense<0.000000e+00> : vector<24xf32>
    %321 = vector.multi_reduction <add>, %320, %cst_152 [1] : vector<24x32xf32> to vector<24xf32>
    %322 = vector.shape_cast %321 : vector<24xf32> to vector<24x1xf32>
    %cst_153 = arith.constant 3.200000e+01 : f32
    %323 = vector.broadcast %cst_153 : f32 to vector<24x1xf32>
    %324 = arith.divf %322, %323 : vector<24x1xf32>
    %325 = vector.broadcast %317 : vector<24x1xf32> to vector<24x32xf32>
    %326 = arith.subf %309, %325 : vector<24x32xf32>
    %cst_154 = arith.constant 9.99999974E-6 : f32
    %327 = vector.broadcast %cst_154 : f32 to vector<24x1xf32>
    %328 = arith.addf %324, %327 : vector<24x1xf32>
    %329 = math.rsqrt %328 : vector<24x1xf32>
    %330 = vector.broadcast %329 : vector<24x1xf32> to vector<24x32xf32>
    %331 = arith.mulf %326, %330 : vector<24x32xf32>
    %332 = vector.broadcast %311 : vector<1x32xf32> to vector<24x32xf32>
    %333 = arith.mulf %331, %332 : vector<24x32xf32>
    %334 = vector.broadcast %313 : vector<1x32xf32> to vector<24x32xf32>
    %335 = arith.addf %333, %334 : vector<24x32xf32>
    %c1_155 = arith.constant 1 : index
    %c0_156 = arith.constant 0 : index
    %c0_157 = arith.constant 0 : index
    %336 = vector.load %arg16[%c1_155, %c0_156, %c0_157] : memref<2x32x128xf32, #tpu.memory_space<vmem>>, vector<1x32x128xf32>
    %337 = vector.shape_cast %336 : vector<1x32x128xf32> to vector<32x128xf32>
    %cst_158 = arith.constant dense<0.000000e+00> : vector<24x128xf32>
    %338 = tpu.matmul %335, %337, %cst_158 {dimension_numbers = #tpu.dot_dimension_numbers<[1], [0], [0], [1], [0, 0, 1, 1], [], []>} : vector<24x32xf32>, vector<32x128xf32>, vector<24x128xf32> -> vector<24x128xf32>
    %c1_159 = arith.constant 1 : index
    %c0_160 = arith.constant 0 : index
    %c0_161 = arith.constant 0 : index
    %339 = vector.load %arg17[%c1_159, %c0_160, %c0_161] : memref<2x1x128xf32, #tpu.memory_space<vmem>>, vector<1x1x128xf32>
    %340 = vector.shape_cast %339 : vector<1x1x128xf32> to vector<1x128xf32>
    %341 = vector.broadcast %340 : vector<1x128xf32> to vector<24x128xf32>
    %342 = arith.addf %338, %341 : vector<24x128xf32>
    %cst_162 = arith.constant 0.000000e+00 : f32
    %343 = vector.broadcast %cst_162 : f32 to vector<24x128xf32>
    %344 = arith.maximumf %342, %343 : vector<24x128xf32>
    %c1_163 = arith.constant 1 : index
    %c0_164 = arith.constant 0 : index
    %c0_165 = arith.constant 0 : index
    %345 = vector.load %arg18[%c1_163, %c0_164, %c0_165] : memref<2x128x32xf32, #tpu.memory_space<vmem>>, vector<1x128x32xf32>
    %346 = vector.shape_cast %345 : vector<1x128x32xf32> to vector<128x32xf32>
    %cst_166 = arith.constant dense<0.000000e+00> : vector<24x32xf32>
    %347 = tpu.matmul %344, %346, %cst_166 {dimension_numbers = #tpu.dot_dimension_numbers<[1], [0], [0], [1], [0, 0, 1, 1], [], []>} : vector<24x128xf32>, vector<128x32xf32>, vector<24x32xf32> -> vector<24x32xf32>
    %c1_167 = arith.constant 1 : index
    %c0_168 = arith.constant 0 : index
    %c0_169 = arith.constant 0 : index
    %348 = vector.load %arg19[%c1_167, %c0_168, %c0_169] : memref<2x1x32xf32, #tpu.memory_space<vmem>>, vector<1x1x32xf32>
    %349 = vector.shape_cast %348 : vector<1x1x32xf32> to vector<1x32xf32>
    %350 = vector.broadcast %349 : vector<1x32xf32> to vector<24x32xf32>
    %351 = arith.addf %347, %350 : vector<24x32xf32>
    %352 = arith.addf %335, %351 : vector<24x32xf32>
    %c1_170 = arith.constant 1 : index
    %c0_171 = arith.constant 0 : index
    %c0_172 = arith.constant 0 : index
    %353 = vector.load %arg22[%c1_170, %c0_171, %c0_172] : memref<2x1x32xf32, #tpu.memory_space<vmem>>, vector<1x1x32xf32>
    %354 = vector.shape_cast %353 : vector<1x1x32xf32> to vector<1x32xf32>
    %c1_173 = arith.constant 1 : index
    %c0_174 = arith.constant 0 : index
    %c0_175 = arith.constant 0 : index
    %355 = vector.load %arg23[%c1_173, %c0_174, %c0_175] : memref<2x1x32xf32, #tpu.memory_space<vmem>>, vector<1x1x32xf32>
    %356 = vector.shape_cast %355 : vector<1x1x32xf32> to vector<1x32xf32>
    %cst_176 = arith.constant dense<0.000000e+00> : vector<24xf32>
    %357 = vector.multi_reduction <add>, %352, %cst_176 [1] : vector<24x32xf32> to vector<24xf32>
    %358 = vector.shape_cast %357 : vector<24xf32> to vector<24x1xf32>
    %cst_177 = arith.constant 3.200000e+01 : f32
    %359 = vector.broadcast %cst_177 : f32 to vector<24x1xf32>
    %360 = arith.divf %358, %359 : vector<24x1xf32>
    %361 = vector.broadcast %360 : vector<24x1xf32> to vector<24x32xf32>
    %362 = arith.subf %352, %361 : vector<24x32xf32>
    %363 = arith.mulf %362, %362 : vector<24x32xf32>
    %cst_178 = arith.constant dense<0.000000e+00> : vector<24xf32>
    %364 = vector.multi_reduction <add>, %363, %cst_178 [1] : vector<24x32xf32> to vector<24xf32>
    %365 = vector.shape_cast %364 : vector<24xf32> to vector<24x1xf32>
    %cst_179 = arith.constant 3.200000e+01 : f32
    %366 = vector.broadcast %cst_179 : f32 to vector<24x1xf32>
    %367 = arith.divf %365, %366 : vector<24x1xf32>
    %368 = vector.broadcast %360 : vector<24x1xf32> to vector<24x32xf32>
    %369 = arith.subf %352, %368 : vector<24x32xf32>
    %cst_180 = arith.constant 9.99999974E-6 : f32
    %370 = vector.broadcast %cst_180 : f32 to vector<24x1xf32>
    %371 = arith.addf %367, %370 : vector<24x1xf32>
    %372 = math.rsqrt %371 : vector<24x1xf32>
    %373 = vector.broadcast %372 : vector<24x1xf32> to vector<24x32xf32>
    %374 = arith.mulf %369, %373 : vector<24x32xf32>
    %375 = vector.broadcast %354 : vector<1x32xf32> to vector<24x32xf32>
    %376 = arith.mulf %374, %375 : vector<24x32xf32>
    %377 = vector.broadcast %356 : vector<1x32xf32> to vector<24x32xf32>
    %378 = arith.addf %376, %377 : vector<24x32xf32>
    %c0_181 = arith.constant 0 : index
    %c0_182 = arith.constant 0 : index
    %c0_183 = arith.constant 0 : index
    %379 = vector.load %arg3[%c0_181, %c0_182, %c0_183] : memref<1x24x1xf32, #tpu.memory_space<vmem>>, vector<1x24x1xf32>
    %380 = vector.shape_cast %379 : vector<1x24x1xf32> to vector<24x1xf32>
    %cst_184 = arith.constant 5.000000e-01 : f32
    %381 = vector.broadcast %cst_184 : f32 to vector<24x1xf32>
    %382 = arith.cmpf ogt, %380, %381 : vector<24x1xf32>
    %cst_185 = arith.constant 0.000000e+00 : f32
    %383 = vector.shape_cast %382 : vector<24x1xi1> to vector<24x1xi1>
    %384 = vector.broadcast %383 : vector<24x1xi1> to vector<24x32xi1>
    %385 = vector.broadcast %cst_185 : f32 to vector<24x32xf32>
    %386 = arith.select %384, %385, %378 : vector<24x32xi1>, vector<24x32xf32>
    %c0_186 = arith.constant 0 : index
    %c0_187 = arith.constant 0 : index
    %387 = vector.load %arg24[%c0_186, %c0_187] : memref<32x32xf32, #tpu.memory_space<vmem>>, vector<32x32xf32>
    %cst_188 = arith.constant dense<0.000000e+00> : vector<24x32xf32>
    %388 = tpu.matmul %386, %387, %cst_188 {dimension_numbers = #tpu.dot_dimension_numbers<[1], [0], [0], [1], [0, 0, 1, 1], [], []>} : vector<24x32xf32>, vector<32x32xf32>, vector<24x32xf32> -> vector<24x32xf32>
    %c0_189 = arith.constant 0 : index
    %c0_190 = arith.constant 0 : index
    %389 = vector.load %arg25[%c0_189, %c0_190] : memref<1x32xf32, #tpu.memory_space<vmem>>, vector<1x32xf32>
    %390 = vector.broadcast %389 : vector<1x32xf32> to vector<24x32xf32>
    %391 = arith.addf %388, %390 : vector<24x32xf32>
    %cst_191 = arith.constant 0.000000e+00 : f32
    %392 = vector.broadcast %cst_191 : f32 to vector<24x32xf32>
    %393 = arith.maximumf %391, %392 : vector<24x32xf32>
    %c0_192 = arith.constant 0 : index
    %c0_193 = arith.constant 0 : index
    %394 = vector.load %arg26[%c0_192, %c0_193] : memref<32x96xf32, #tpu.memory_space<vmem>>, vector<32x96xf32>
    %cst_194 = arith.constant dense<0.000000e+00> : vector<24x96xf32>
    %395 = tpu.matmul %393, %394, %cst_194 {dimension_numbers = #tpu.dot_dimension_numbers<[1], [0], [0], [1], [0, 0, 1, 1], [], []>} : vector<24x32xf32>, vector<32x96xf32>, vector<24x96xf32> -> vector<24x96xf32>
    %c0_195 = arith.constant 0 : index
    %c0_196 = arith.constant 0 : index
    %396 = vector.load %arg27[%c0_195, %c0_196] : memref<1x96xf32, #tpu.memory_space<vmem>>, vector<1x96xf32>
    %397 = vector.broadcast %396 : vector<1x96xf32> to vector<24x96xf32>
    %398 = arith.addf %395, %397 : vector<24x96xf32>
    %c0_197 = arith.constant 0 : index
    %c0_198 = arith.constant 0 : index
    %c0_199 = arith.constant 0 : index
    %399 = vector.load %arg5[%c0_197, %c0_198, %c0_199] : memref<1x3x32xf32, #tpu.memory_space<vmem>>, vector<1x3x32xf32>
    %400 = vector.shape_cast %399 : vector<1x3x32xf32> to vector<3x32xf32>
    %401 = vector.extract_strided_slice %398 {offsets = [0, 0], sizes = [3, 96], strides = [1, 1]} : vector<24x96xf32> to vector<3x96xf32>
    %c0_200 = arith.constant 0 : index
    %c0_201 = arith.constant 0 : index
    %402 = vector.load %arg28[%c0_200, %c0_201] : memref<32x96xf32, #tpu.memory_space<vmem>>, vector<32x96xf32>
    %cst_202 = arith.constant dense<0.000000e+00> : vector<3x96xf32>
    %403 = tpu.matmul %400, %402, %cst_202 {dimension_numbers = #tpu.dot_dimension_numbers<[1], [0], [0], [1], [0, 0, 1, 1], [], []>} : vector<3x32xf32>, vector<32x96xf32>, vector<3x96xf32> -> vector<3x96xf32>
    %c0_203 = arith.constant 0 : index
    %c0_204 = arith.constant 0 : index
    %404 = vector.load %arg29[%c0_203, %c0_204] : memref<1x96xf32, #tpu.memory_space<vmem>>, vector<1x96xf32>
    %405 = vector.broadcast %404 : vector<1x96xf32> to vector<3x96xf32>
    %406 = arith.addf %403, %405 : vector<3x96xf32>
    %407 = vector.extract_strided_slice %401 {offsets = [0, 0], sizes = [3, 32], strides = [1, 1]} : vector<3x96xf32> to vector<3x32xf32>
    %408 = vector.extract_strided_slice %406 {offsets = [0, 0], sizes = [3, 32], strides = [1, 1]} : vector<3x96xf32> to vector<3x32xf32>
    %409 = arith.addf %407, %408 : vector<3x32xf32>
    %410 = arith.negf %409 : vector<3x32xf32>
    %411 = math.exp %410 : vector<3x32xf32>
    %cst_205 = arith.constant 1.000000e+00 : f32
    %412 = vector.broadcast %cst_205 : f32 to vector<3x32xf32>
    %413 = arith.addf %412, %411 : vector<3x32xf32>
    %414 = arith.divf %412, %413 : vector<3x32xf32>
    %415 = vector.extract_strided_slice %401 {offsets = [0, 32], sizes = [3, 32], strides = [1, 1]} : vector<3x96xf32> to vector<3x32xf32>
    %416 = vector.extract_strided_slice %406 {offsets = [0, 32], sizes = [3, 32], strides = [1, 1]} : vector<3x96xf32> to vector<3x32xf32>
    %417 = arith.addf %415, %416 : vector<3x32xf32>
    %418 = arith.negf %417 : vector<3x32xf32>
    %419 = math.exp %418 : vector<3x32xf32>
    %cst_206 = arith.constant 1.000000e+00 : f32
    %420 = vector.broadcast %cst_206 : f32 to vector<3x32xf32>
    %421 = arith.addf %420, %419 : vector<3x32xf32>
    %422 = arith.divf %420, %421 : vector<3x32xf32>
    %423 = vector.extract_strided_slice %401 {offsets = [0, 64], sizes = [3, 32], strides = [1, 1]} : vector<3x96xf32> to vector<3x32xf32>
    %424 = vector.extract_strided_slice %406 {offsets = [0, 64], sizes = [3, 32], strides = [1, 1]} : vector<3x96xf32> to vector<3x32xf32>
    %425 = arith.mulf %414, %424 : vector<3x32xf32>
    %426 = arith.addf %423, %425 : vector<3x32xf32>
    %427 = math.tanh %426 : vector<3x32xf32>
    %cst_207 = arith.constant 1.000000e+00 : f32
    %428 = vector.broadcast %cst_207 : f32 to vector<3x32xf32>
    %429 = arith.subf %428, %422 : vector<3x32xf32>
    %430 = arith.mulf %429, %427 : vector<3x32xf32>
    %431 = arith.mulf %422, %400 : vector<3x32xf32>
    %432 = arith.addf %430, %431 : vector<3x32xf32>
    %433 = vector.extract_strided_slice %398 {offsets = [8, 0], sizes = [3, 96], strides = [1, 1]} : vector<24x96xf32> to vector<3x96xf32>
    %c0_208 = arith.constant 0 : index
    %c0_209 = arith.constant 0 : index
    %434 = vector.load %arg28[%c0_208, %c0_209] : memref<32x96xf32, #tpu.memory_space<vmem>>, vector<32x96xf32>
    %cst_210 = arith.constant dense<0.000000e+00> : vector<3x96xf32>
    %435 = tpu.matmul %432, %434, %cst_210 {dimension_numbers = #tpu.dot_dimension_numbers<[1], [0], [0], [1], [0, 0, 1, 1], [], []>} : vector<3x32xf32>, vector<32x96xf32>, vector<3x96xf32> -> vector<3x96xf32>
    %c0_211 = arith.constant 0 : index
    %c0_212 = arith.constant 0 : index
    %436 = vector.load %arg29[%c0_211, %c0_212] : memref<1x96xf32, #tpu.memory_space<vmem>>, vector<1x96xf32>
    %437 = vector.broadcast %436 : vector<1x96xf32> to vector<3x96xf32>
    %438 = arith.addf %435, %437 : vector<3x96xf32>
    %439 = vector.extract_strided_slice %433 {offsets = [0, 0], sizes = [3, 32], strides = [1, 1]} : vector<3x96xf32> to vector<3x32xf32>
    %440 = vector.extract_strided_slice %438 {offsets = [0, 0], sizes = [3, 32], strides = [1, 1]} : vector<3x96xf32> to vector<3x32xf32>
    %441 = arith.addf %439, %440 : vector<3x32xf32>
    %442 = arith.negf %441 : vector<3x32xf32>
    %443 = math.exp %442 : vector<3x32xf32>
    %cst_213 = arith.constant 1.000000e+00 : f32
    %444 = vector.broadcast %cst_213 : f32 to vector<3x32xf32>
    %445 = arith.addf %444, %443 : vector<3x32xf32>
    %446 = arith.divf %444, %445 : vector<3x32xf32>
    %447 = vector.extract_strided_slice %433 {offsets = [0, 32], sizes = [3, 32], strides = [1, 1]} : vector<3x96xf32> to vector<3x32xf32>
    %448 = vector.extract_strided_slice %438 {offsets = [0, 32], sizes = [3, 32], strides = [1, 1]} : vector<3x96xf32> to vector<3x32xf32>
    %449 = arith.addf %447, %448 : vector<3x32xf32>
    %450 = arith.negf %449 : vector<3x32xf32>
    %451 = math.exp %450 : vector<3x32xf32>
    %cst_214 = arith.constant 1.000000e+00 : f32
    %452 = vector.broadcast %cst_214 : f32 to vector<3x32xf32>
    %453 = arith.addf %452, %451 : vector<3x32xf32>
    %454 = arith.divf %452, %453 : vector<3x32xf32>
    %455 = vector.extract_strided_slice %433 {offsets = [0, 64], sizes = [3, 32], strides = [1, 1]} : vector<3x96xf32> to vector<3x32xf32>
    %456 = vector.extract_strided_slice %438 {offsets = [0, 64], sizes = [3, 32], strides = [1, 1]} : vector<3x96xf32> to vector<3x32xf32>
    %457 = arith.mulf %446, %456 : vector<3x32xf32>
    %458 = arith.addf %455, %457 : vector<3x32xf32>
    %459 = math.tanh %458 : vector<3x32xf32>
    %cst_215 = arith.constant 1.000000e+00 : f32
    %460 = vector.broadcast %cst_215 : f32 to vector<3x32xf32>
    %461 = arith.subf %460, %454 : vector<3x32xf32>
    %462 = arith.mulf %461, %459 : vector<3x32xf32>
    %463 = arith.mulf %454, %432 : vector<3x32xf32>
    %464 = arith.addf %462, %463 : vector<3x32xf32>
    %465 = vector.extract_strided_slice %398 {offsets = [16, 0], sizes = [3, 96], strides = [1, 1]} : vector<24x96xf32> to vector<3x96xf32>
    %c0_216 = arith.constant 0 : index
    %c0_217 = arith.constant 0 : index
    %466 = vector.load %arg28[%c0_216, %c0_217] : memref<32x96xf32, #tpu.memory_space<vmem>>, vector<32x96xf32>
    %cst_218 = arith.constant dense<0.000000e+00> : vector<3x96xf32>
    %467 = tpu.matmul %464, %466, %cst_218 {dimension_numbers = #tpu.dot_dimension_numbers<[1], [0], [0], [1], [0, 0, 1, 1], [], []>} : vector<3x32xf32>, vector<32x96xf32>, vector<3x96xf32> -> vector<3x96xf32>
    %c0_219 = arith.constant 0 : index
    %c0_220 = arith.constant 0 : index
    %468 = vector.load %arg29[%c0_219, %c0_220] : memref<1x96xf32, #tpu.memory_space<vmem>>, vector<1x96xf32>
    %469 = vector.broadcast %468 : vector<1x96xf32> to vector<3x96xf32>
    %470 = arith.addf %467, %469 : vector<3x96xf32>
    %471 = vector.extract_strided_slice %465 {offsets = [0, 0], sizes = [3, 32], strides = [1, 1]} : vector<3x96xf32> to vector<3x32xf32>
    %472 = vector.extract_strided_slice %470 {offsets = [0, 0], sizes = [3, 32], strides = [1, 1]} : vector<3x96xf32> to vector<3x32xf32>
    %473 = arith.addf %471, %472 : vector<3x32xf32>
    %474 = arith.negf %473 : vector<3x32xf32>
    %475 = math.exp %474 : vector<3x32xf32>
    %cst_221 = arith.constant 1.000000e+00 : f32
    %476 = vector.broadcast %cst_221 : f32 to vector<3x32xf32>
    %477 = arith.addf %476, %475 : vector<3x32xf32>
    %478 = arith.divf %476, %477 : vector<3x32xf32>
    %479 = vector.extract_strided_slice %465 {offsets = [0, 32], sizes = [3, 32], strides = [1, 1]} : vector<3x96xf32> to vector<3x32xf32>
    %480 = vector.extract_strided_slice %470 {offsets = [0, 32], sizes = [3, 32], strides = [1, 1]} : vector<3x96xf32> to vector<3x32xf32>
    %481 = arith.addf %479, %480 : vector<3x32xf32>
    %482 = arith.negf %481 : vector<3x32xf32>
    %483 = math.exp %482 : vector<3x32xf32>
    %cst_222 = arith.constant 1.000000e+00 : f32
    %484 = vector.broadcast %cst_222 : f32 to vector<3x32xf32>
    %485 = arith.addf %484, %483 : vector<3x32xf32>
    %486 = arith.divf %484, %485 : vector<3x32xf32>
    %487 = vector.extract_strided_slice %465 {offsets = [0, 64], sizes = [3, 32], strides = [1, 1]} : vector<3x96xf32> to vector<3x32xf32>
    %488 = vector.extract_strided_slice %470 {offsets = [0, 64], sizes = [3, 32], strides = [1, 1]} : vector<3x96xf32> to vector<3x32xf32>
    %489 = arith.mulf %478, %488 : vector<3x32xf32>
    %490 = arith.addf %487, %489 : vector<3x32xf32>
    %491 = math.tanh %490 : vector<3x32xf32>
    %cst_223 = arith.constant 1.000000e+00 : f32
    %492 = vector.broadcast %cst_223 : f32 to vector<3x32xf32>
    %493 = arith.subf %492, %486 : vector<3x32xf32>
    %494 = arith.mulf %493, %491 : vector<3x32xf32>
    %495 = arith.mulf %486, %464 : vector<3x32xf32>
    %496 = arith.addf %494, %495 : vector<3x32xf32>
    %497 = tpu.concatenate %432, %464, %496 in 0 : vector<3x32xf32>, vector<3x32xf32>, vector<3x32xf32> -> vector<9x32xf32>
    %c0_224 = arith.constant 0 : index
    %c0_225 = arith.constant 0 : index
    %498 = vector.load %arg30[%c0_224, %c0_225] : memref<32x8xf32, #tpu.memory_space<vmem>>, vector<32x8xf32>
    %cst_226 = arith.constant dense<0.000000e+00> : vector<9x8xf32>
    %499 = tpu.matmul %497, %498, %cst_226 {dimension_numbers = #tpu.dot_dimension_numbers<[1], [0], [0], [1], [0, 0, 1, 1], [], []>} : vector<9x32xf32>, vector<32x8xf32>, vector<9x8xf32> -> vector<9x8xf32>
    %c0_227 = arith.constant 0 : index
    %c0_228 = arith.constant 0 : index
    %500 = vector.load %arg31[%c0_227, %c0_228] : memref<1x8xf32, #tpu.memory_space<vmem>>, vector<1x8xf32>
    %501 = vector.broadcast %500 : vector<1x8xf32> to vector<9x8xf32>
    %502 = arith.addf %499, %501 : vector<9x8xf32>
    %c0_229 = arith.constant 0 : index
    %c0_230 = arith.constant 0 : index
    %c0_231 = arith.constant 0 : index
    %503 = vector.load %arg4[%c0_229, %c0_230, %c0_231] : memref<1x9x1xf32, #tpu.memory_space<vmem>>, vector<1x9x1xf32>
    %504 = vector.shape_cast %503 : vector<1x9x1xf32> to vector<9x1xf32>
    %cst_232 = arith.constant 5.000000e-01 : f32
    %505 = vector.broadcast %cst_232 : f32 to vector<9x1xf32>
    %506 = arith.cmpf ogt, %504, %505 : vector<9x1xf32>
    %cst_233 = arith.constant 0.000000e+00 : f32
    %507 = vector.shape_cast %506 : vector<9x1xi1> to vector<9x1xi1>
    %508 = vector.broadcast %507 : vector<9x1xi1> to vector<9x8xi1>
    %509 = vector.broadcast %cst_233 : f32 to vector<9x8xf32>
    %510 = arith.select %508, %509, %502 : vector<9x8xi1>, vector<9x8xf32>
    %511 = tpu.concatenate %497, %510 in 1 : vector<9x32xf32>, vector<9x8xf32> -> vector<9x40xf32>
    %c0_234 = arith.constant 0 : index
    %c0_235 = arith.constant 0 : index
    %c0_236 = arith.constant 0 : index
    %512 = vector.load %arg32[%c0_234, %c0_235, %c0_236] : memref<1x9x40xf32, #tpu.memory_space<vmem>>, vector<1x9x40xf32>
    %513 = vector.shape_cast %512 : vector<1x9x40xf32> to vector<9x40xf32>
    %514 = vector.shape_cast %511 : vector<9x40xf32> to vector<1x9x40xf32>
    tpu.vector_store %arg32[%c0_234, %c0_235, %c0_236], %514 {strides = array<i32>} : memref<1x9x40xf32, #tpu.memory_space<vmem>>, vector<1x9x40xf32>,
    return
  }
  func.func @transform_0(%arg0: i32) -> (i32, i32, i32) {
    %c0_i32 = arith.constant 0 : i32
    %c0_i32_0 = arith.constant 0 : i32
    %c0_i32_1 = arith.constant 0 : i32
    return %arg0, %c0_i32, %c0_i32_0 : i32, i32, i32
  }
  func.func @transform_1(%arg0: i32) -> (i32, i32, i32, i32) {
    %c0_i32 = arith.constant 0 : i32
    %c0_i32_0 = arith.constant 0 : i32
    %c0_i32_1 = arith.constant 0 : i32
    %c0_i32_2 = arith.constant 0 : i32
    return %arg0, %c0_i32, %c0_i32_0, %c0_i32_1 : i32, i32, i32, i32
  }
  func.func @transform_2(%arg0: i32) -> (i32, i32, i32) {
    %c0_i32 = arith.constant 0 : i32
    %c0_i32_0 = arith.constant 0 : i32
    %c0_i32_1 = arith.constant 0 : i32
    return %arg0, %c0_i32, %c0_i32_0 : i32, i32, i32
  }
  func.func @transform_3(%arg0: i32) -> (i32, i32, i32) {
    %c0_i32 = arith.constant 0 : i32
    %c0_i32_0 = arith.constant 0 : i32
    %c0_i32_1 = arith.constant 0 : i32
    return %arg0, %c0_i32, %c0_i32_0 : i32, i32, i32
  }
  func.func @transform_4(%arg0: i32) -> (i32, i32, i32) {
    %c0_i32 = arith.constant 0 : i32
    %c0_i32_0 = arith.constant 0 : i32
    %c0_i32_1 = arith.constant 0 : i32
    return %arg0, %c0_i32, %c0_i32_0 : i32, i32, i32
  }
  func.func @transform_5(%arg0: i32) -> (i32, i32) {
    %c0_i32 = arith.constant 0 : i32
    %c0_i32_0 = arith.constant 0 : i32
    %c0_i32_1 = arith.constant 0 : i32
    return %c0_i32, %c0_i32_0 : i32, i32
  }
  func.func @transform_6(%arg0: i32) -> (i32, i32) {
    %c0_i32 = arith.constant 0 : i32
    %c0_i32_0 = arith.constant 0 : i32
    %c0_i32_1 = arith.constant 0 : i32
    return %c0_i32, %c0_i32_0 : i32, i32
  }
  func.func @transform_7(%arg0: i32) -> (i32, i32, i32) {
    %c0_i32 = arith.constant 0 : i32
    %c0_i32_0 = arith.constant 0 : i32
    %c0_i32_1 = arith.constant 0 : i32
    %c0_i32_2 = arith.constant 0 : i32
    return %c0_i32, %c0_i32_0, %c0_i32_1 : i32, i32, i32
  }
  func.func @transform_8(%arg0: i32) -> (i32, i32, i32) {
    %c0_i32 = arith.constant 0 : i32
    %c0_i32_0 = arith.constant 0 : i32
    %c0_i32_1 = arith.constant 0 : i32
    %c0_i32_2 = arith.constant 0 : i32
    return %c0_i32, %c0_i32_0, %c0_i32_1 : i32, i32, i32
  }
  func.func @transform_9(%arg0: i32) -> (i32, i32, i32) {
    %c0_i32 = arith.constant 0 : i32
    %c0_i32_0 = arith.constant 0 : i32
    %c0_i32_1 = arith.constant 0 : i32
    %c0_i32_2 = arith.constant 0 : i32
    return %c0_i32, %c0_i32_0, %c0_i32_1 : i32, i32, i32
  }
  func.func @transform_10(%arg0: i32) -> (i32, i32, i32) {
    %c0_i32 = arith.constant 0 : i32
    %c0_i32_0 = arith.constant 0 : i32
    %c0_i32_1 = arith.constant 0 : i32
    %c0_i32_2 = arith.constant 0 : i32
    return %c0_i32, %c0_i32_0, %c0_i32_1 : i32, i32, i32
  }
  func.func @transform_11(%arg0: i32) -> (i32, i32, i32) {
    %c0_i32 = arith.constant 0 : i32
    %c0_i32_0 = arith.constant 0 : i32
    %c0_i32_1 = arith.constant 0 : i32
    %c0_i32_2 = arith.constant 0 : i32
    return %c0_i32, %c0_i32_0, %c0_i32_1 : i32, i32, i32
  }
  func.func @transform_12(%arg0: i32) -> (i32, i32, i32) {
    %c0_i32 = arith.constant 0 : i32
    %c0_i32_0 = arith.constant 0 : i32
    %c0_i32_1 = arith.constant 0 : i32
    %c0_i32_2 = arith.constant 0 : i32
    return %c0_i32, %c0_i32_0, %c0_i32_1 : i32, i32, i32
  }
  func.func @transform_13(%arg0: i32) -> (i32, i32, i32) {
    %c0_i32 = arith.constant 0 : i32
    %c0_i32_0 = arith.constant 0 : i32
    %c0_i32_1 = arith.constant 0 : i32
    %c0_i32_2 = arith.constant 0 : i32
    return %c0_i32, %c0_i32_0, %c0_i32_1 : i32, i32, i32
  }
  func.func @transform_14(%arg0: i32) -> (i32, i32, i32) {
    %c0_i32 = arith.constant 0 : i32
    %c0_i32_0 = arith.constant 0 : i32
    %c0_i32_1 = arith.constant 0 : i32
    %c0_i32_2 = arith.constant 0 : i32
    return %c0_i32, %c0_i32_0, %c0_i32_1 : i32, i32, i32
  }
  func.func @transform_15(%arg0: i32) -> (i32, i32, i32) {
    %c0_i32 = arith.constant 0 : i32
    %c0_i32_0 = arith.constant 0 : i32
    %c0_i32_1 = arith.constant 0 : i32
    %c0_i32_2 = arith.constant 0 : i32
    return %c0_i32, %c0_i32_0, %c0_i32_1 : i32, i32, i32
  }
  func.func @transform_16(%arg0: i32) -> (i32, i32, i32) {
    %c0_i32 = arith.constant 0 : i32
    %c0_i32_0 = arith.constant 0 : i32
    %c0_i32_1 = arith.constant 0 : i32
    %c0_i32_2 = arith.constant 0 : i32
    return %c0_i32, %c0_i32_0, %c0_i32_1 : i32, i32, i32
  }
  func.func @transform_17(%arg0: i32) -> (i32, i32, i32) {
    %c0_i32 = arith.constant 0 : i32
    %c0_i32_0 = arith.constant 0 : i32
    %c0_i32_1 = arith.constant 0 : i32
    %c0_i32_2 = arith.constant 0 : i32
    return %c0_i32, %c0_i32_0, %c0_i32_1 : i32, i32, i32
  }
  func.func @transform_18(%arg0: i32) -> (i32, i32, i32) {
    %c0_i32 = arith.constant 0 : i32
    %c0_i32_0 = arith.constant 0 : i32
    %c0_i32_1 = arith.constant 0 : i32
    %c0_i32_2 = arith.constant 0 : i32
    return %c0_i32, %c0_i32_0, %c0_i32_1 : i32, i32, i32
  }
  func.func @transform_19(%arg0: i32) -> (i32, i32, i32) {
    %c0_i32 = arith.constant 0 : i32
    %c0_i32_0 = arith.constant 0 : i32
    %c0_i32_1 = arith.constant 0 : i32
    %c0_i32_2 = arith.constant 0 : i32
    return %c0_i32, %c0_i32_0, %c0_i32_1 : i32, i32, i32
  }
  func.func @transform_20(%arg0: i32) -> (i32, i32, i32) {
    %c0_i32 = arith.constant 0 : i32
    %c0_i32_0 = arith.constant 0 : i32
    %c0_i32_1 = arith.constant 0 : i32
    %c0_i32_2 = arith.constant 0 : i32
    return %c0_i32, %c0_i32_0, %c0_i32_1 : i32, i32, i32
  }
  func.func @transform_21(%arg0: i32) -> (i32, i32, i32) {
    %c0_i32 = arith.constant 0 : i32
    %c0_i32_0 = arith.constant 0 : i32
    %c0_i32_1 = arith.constant 0 : i32
    %c0_i32_2 = arith.constant 0 : i32
    return %c0_i32, %c0_i32_0, %c0_i32_1 : i32, i32, i32
  }
  func.func @transform_22(%arg0: i32) -> (i32, i32, i32) {
    %c0_i32 = arith.constant 0 : i32
    %c0_i32_0 = arith.constant 0 : i32
    %c0_i32_1 = arith.constant 0 : i32
    %c0_i32_2 = arith.constant 0 : i32
    return %c0_i32, %c0_i32_0, %c0_i32_1 : i32, i32, i32
  }
  func.func @transform_23(%arg0: i32) -> (i32, i32) {
    %c0_i32 = arith.constant 0 : i32
    %c0_i32_0 = arith.constant 0 : i32
    %c0_i32_1 = arith.constant 0 : i32
    return %c0_i32, %c0_i32_0 : i32, i32
  }
  func.func @transform_24(%arg0: i32) -> (i32, i32) {
    %c0_i32 = arith.constant 0 : i32
    %c0_i32_0 = arith.constant 0 : i32
    %c0_i32_1 = arith.constant 0 : i32
    return %c0_i32, %c0_i32_0 : i32, i32
  }
  func.func @transform_25(%arg0: i32) -> (i32, i32) {
    %c0_i32 = arith.constant 0 : i32
    %c0_i32_0 = arith.constant 0 : i32
    %c0_i32_1 = arith.constant 0 : i32
    return %c0_i32, %c0_i32_0 : i32, i32
  }
  func.func @transform_26(%arg0: i32) -> (i32, i32) {
    %c0_i32 = arith.constant 0 : i32
    %c0_i32_0 = arith.constant 0 : i32
    %c0_i32_1 = arith.constant 0 : i32
    return %c0_i32, %c0_i32_0 : i32, i32
  }
  func.func @transform_27(%arg0: i32) -> (i32, i32) {
    %c0_i32 = arith.constant 0 : i32
    %c0_i32_0 = arith.constant 0 : i32
    %c0_i32_1 = arith.constant 0 : i32
    return %c0_i32, %c0_i32_0 : i32, i32
  }
  func.func @transform_28(%arg0: i32) -> (i32, i32) {
    %c0_i32 = arith.constant 0 : i32
    %c0_i32_0 = arith.constant 0 : i32
    %c0_i32_1 = arith.constant 0 : i32
    return %c0_i32, %c0_i32_0 : i32, i32
  }
  func.func @transform_29(%arg0: i32) -> (i32, i32) {
    %c0_i32 = arith.constant 0 : i32
    %c0_i32_0 = arith.constant 0 : i32
    %c0_i32_1 = arith.constant 0 : i32
    return %c0_i32, %c0_i32_0 : i32, i32
  }
  func.func @transform_30(%arg0: i32) -> (i32, i32) {
    %c0_i32 = arith.constant 0 : i32
    %c0_i32_0 = arith.constant 0 : i32
    %c0_i32_1 = arith.constant 0 : i32
    return %c0_i32, %c0_i32_0 : i32, i32
  }
  func.func @transform_31(%arg0: i32) -> (i32, i32, i32) {
    %c0_i32 = arith.constant 0 : i32
    %c0_i32_0 = arith.constant 0 : i32
    %c0_i32_1 = arith.constant 0 : i32
    return %arg0, %c0_i32, %c0_i32_0 : i32, i32, i32
  }
}

</mosaic_0001>

<llo_original>
// kernel: tpu_custom_call.1
$region0: #{tpu_custom_call.1}
  #allocation0 [shape = 'u32[]', space=smem, size = 0x4, offset = 0x4, fixed_abs, tag = 'smem constant byte address 0x4 - core index']
  #allocation1 [shape = 'u32[144,128]{1,0:T(1,128)}', space=vmem, size = 0x12000, scoped, tag = 'internal scratch']
  %s0 = inlined_call_operand.smem [shape: u32[32], index: -1, kind: input, shape index: {}]
  %s1 = sld [smem:[%s0]]
  %s2 = scalar_lea.smem %s0, 1
  %s3 = sld [smem:[%s2]]
  %s4 = scalar_lea.smem %s0, 2
  %s5 = sld [smem:[%s4]]
  %s6 = scalar_lea.smem %s0, 3
  %s7 = sld [smem:[%s6]]
  %s8 = scalar_lea.smem %s0, 4
  %s9 = sld [smem:[%s8]]
  %s10 = scalar_lea.smem %s0, 5
  %s11 = sld [smem:[%s10]]
  %s12 = scalar_lea.smem %s0, 6
  %s13 = sld [smem:[%s12]]
  %s14 = scalar_lea.smem %s0, 7
  %s15 = sld [smem:[%s14]]
  %s16 = scalar_lea.smem %s0, 8
  %s17 = sld [smem:[%s16]]
  %s18 = scalar_lea.smem %s0, 9
  %s19 = sld [smem:[%s18]]
  %s20 = scalar_lea.smem %s0, 10
  %s21 = sld [smem:[%s20]]
  %s22 = scalar_lea.smem %s0, 11
  %s23 = sld [smem:[%s22]]
  %s24 = scalar_lea.smem %s0, 12
  %s25 = sld [smem:[%s24]]
  %s26 = scalar_lea.smem %s0, 13
  %s27 = sld [smem:[%s26]]
  %s28 = scalar_lea.smem %s0, 14
  %s29 = sld [smem:[%s28]]
  %s30 = scalar_lea.smem %s0, 15
  %s31 = sld [smem:[%s30]]
  %s32 = scalar_lea.smem %s0, 16
  %s33 = sld [smem:[%s32]]
  %s34 = scalar_lea.smem %s0, 17
  %s35 = sld [smem:[%s34]]
  %s36 = scalar_lea.smem %s0, 18
  %s37 = sld [smem:[%s36]]
  %s38 = scalar_lea.smem %s0, 19
  %s39 = sld [smem:[%s38]]
  %s40 = scalar_lea.smem %s0, 20
  %s41 = sld [smem:[%s40]]
  %s42 = scalar_lea.smem %s0, 21
  %s43 = sld [smem:[%s42]]
  %s44 = scalar_lea.smem %s0, 22
  %s45 = sld [smem:[%s44]]
  %s46 = scalar_lea.smem %s0, 23
  %s47 = sld [smem:[%s46]]
  %s48 = scalar_lea.smem %s0, 24
  %s49 = sld [smem:[%s48]]
  %s50 = scalar_lea.smem %s0, 25
  %s51 = sld [smem:[%s50]]
  %s52 = scalar_lea.smem %s0, 26
  %s53 = sld [smem:[%s52]]
  %s54 = scalar_lea.smem %s0, 27
  %s55 = sld [smem:[%s54]]
  %s56 = scalar_lea.smem %s0, 28
  %s57 = sld [smem:[%s56]]
  %s58 = scalar_lea.smem %s0, 29
  %s59 = sld [smem:[%s58]]
  %s60 = scalar_lea.smem %s0, 30
  %s61 = sld [smem:[%s60]]
  %s62 = scalar_lea.smem %s0, 31
  %s63 = sld [smem:[%s62]]
  %s64 = sld [smem:[#allocation0]]
  $region161: #{tpu_custom_call.1} parent=0
    _
  %s66 = ssub.s32 1, %s64
  %s67 = scalar_select 0, %s66, %s64
  $region1: #{tpu_custom_call.1} parent=0
    #allocation2 [shape = 'u8[512]{0}', space=vmem, size = 0x400, scoped, tag = 'input window, operand 6, single buffered']
    #allocation3 [shape = 's32[2]{0}', space=sflag, size = 0x8, scoped, tag = 'scoped memory for tpu_custom_call.1']
    %68 = vsyncpa [#allocation3], 0
    loop: start=0, step=1, limit=4
    $region2: #{tpu_custom_call.1} parent=1 // loop_pre_header
      _
    $region3: #{tpu_custom_call.1} parent=1 // loop_header
      %s70 = sphi 0, %s74
      %p71 = scmp.ge.s32.totalorder %s70, 4
      %s80 = sphi 0, %s82
      %s83 = sphi 0, %s80
      %s84 = sphi 0, %s83
      %s100 = sphi 0, %s84
      %s106 = sphi 0, %s108
      %s109 = sphi 0, %s106
      %s110 = sphi 0, %s109
      %s126 = sphi 0, %s110
      %s132 = sphi 0, %s134
      %s135 = sphi 0, %s132
      %s136 = sphi 0, %s135
      %s152 = sphi 0, %s136
      %s158 = sphi 0, %s160
      %s161 = sphi 0, %s158
      %s162 = sphi 0, %s161
      %s178 = sphi 0, %s162
      %s184 = sphi 0, %s186
      %s187 = sphi 0, %s184
      %s188 = sphi 0, %s187
      %s204 = sphi 0, %s188
      %s208 = sphi 0, %s208
      %s210 = sphi 0, %s208
      %s211 = sphi 0, %s210
      %s225 = sphi 0, %s211
      %s229 = sphi 0, %s229
      %s231 = sphi 0, %s229
      %s232 = sphi 0, %s231
      %s246 = sphi 0, %s232
      %s250 = sphi 0, %s250
      %s252 = sphi 0, %s250
      %s253 = sphi 0, %s252
      %s267 = sphi 0, %s253
      %s271 = sphi 0, %s271
      %s273 = sphi 0, %s271
      %s274 = sphi 0, %s273
      %s288 = sphi 0, %s274
      %s292 = sphi 0, %s292
      %s294 = sphi 0, %s292
      %s295 = sphi 0, %s294
      %s309 = sphi 0, %s295
      %s313 = sphi 0, %s313
      %s315 = sphi 0, %s313
      %s316 = sphi 0, %s315
      %s330 = sphi 0, %s316
      %s334 = sphi 0, %s334
      %s336 = sphi 0, %s334
      %s337 = sphi 0, %s336
      %s351 = sphi 0, %s337
      %s355 = sphi 0, %s355
      %s357 = sphi 0, %s355
      %s358 = sphi 0, %s357
      %s372 = sphi 0, %s358
      %s376 = sphi 0, %s376
      %s378 = sphi 0, %s376
      %s379 = sphi 0, %s378
      %s393 = sphi 0, %s379
      %s397 = sphi 0, %s397
      %s399 = sphi 0, %s397
      %s400 = sphi 0, %s399
      %s414 = sphi 0, %s400
      %s418 = sphi 0, %s418
      %s420 = sphi 0, %s418
      %s421 = sphi 0, %s420
      %s435 = sphi 0, %s421
      %s439 = sphi 0, %s439
      %s441 = sphi 0, %s439
      %s442 = sphi 0, %s441
      %s456 = sphi 0, %s442
      %s460 = sphi 0, %s460
      %s462 = sphi 0, %s460
      %s463 = sphi 0, %s462
      %s477 = sphi 0, %s463
      %s481 = sphi 0, %s481
      %s483 = sphi 0, %s481
      %s484 = sphi 0, %s483
      %s498 = sphi 0, %s484
      %s502 = sphi 0, %s502
      %s504 = sphi 0, %s502
      %s505 = sphi 0, %s504
      %s519 = sphi 0, %s505
      %s523 = sphi 0, %s523
      %s525 = sphi 0, %s523
      %s526 = sphi 0, %s525
      %s540 = sphi 0, %s526
      %s544 = sphi 0, %s544
      %s546 = sphi 0, %s544
      %s547 = sphi 0, %s546
      %s561 = sphi 0, %s547
      %s565 = sphi 0, %s565
      %s567 = sphi 0, %s565
      %s568 = sphi 0, %s567
      %s582 = sphi 0, %s568
      %s586 = sphi 0, %s586
      %s588 = sphi 0, %s586
      %s589 = sphi 0, %s588
      %s603 = sphi 0, %s589
      %s607 = sphi 0, %s607
      %s609 = sphi 0, %s607
      %s610 = sphi 0, %s609
      %s624 = sphi 0, %s610
      %s628 = sphi 0, %s628
      %s630 = sphi 0, %s628
      %s631 = sphi 0, %s630
      %s645 = sphi 0, %s631
      %s649 = sphi 0, %s649
      %s651 = sphi 0, %s649
      %s652 = sphi 0, %s651
      %s666 = sphi 0, %s652
      %s670 = sphi 0, %s670
      %s672 = sphi 0, %s670
      %s673 = sphi 0, %s672
      %s687 = sphi 0, %s673
      %s691 = sphi 0, %s691
      %s693 = sphi 0, %s691
      %s694 = sphi 0, %s693
      %s708 = sphi 0, %s694
      %s712 = sphi 0, %s712
      %s714 = sphi 0, %s712
      %s715 = sphi 0, %s714
      %s729 = sphi 0, %s715
      %s733 = sphi 0, %s733
      %s735 = sphi 0, %s733
      %s736 = sphi 0, %s735
      %s750 = sphi 0, %s736
      %s756 = sphi 0, %s758
      %s759 = sphi 0, %s756
      %s760 = sphi 0, %s759
      %s776 = sphi 0, %s760
    $region4: #{tpu_custom_call.1} parent=1 // loop_header_branch
      %73 = sbr.rel (%p71) target = $region8
    $region5: #{tpu_custom_call.1} parent=1 // loop_body
      %s75 = ssub.s32 %s70, 1
      %s76 = ssub.s32 %s70, 2
      %s77 = sadd.s32 %s70, 1
      %s78 = ssub.s32 %s70, %s77
      %p79 = scmp.eq.s32.totalorder %s78, 0
      %s81 = sadd.s32 %s80, 1
      %s82 = scalar_select %p79, %s80, %s81
      %p85 = pneg %p79
      %p86 = scmp.eq.s32.totalorder %s70, 1
      %p87 = por %p85, %p86
      %p88 = scmp.ne.s32.totalorder %s80, %s83
      %p89 = scmp.eq.s32.totalorder %s70, 0
      %p90 = por %p88, %p89
      %p91 = scmp.ne.s32.totalorder %s80, %s83
      %p92 = scmp.eq.s32.totalorder %s75, 1
      %p93 = por %p91, %p92
      %p94 = scmp.ne.s32.totalorder %s83, %s84
      %p95 = scmp.eq.s32.totalorder %s75, 0
      %p96 = por %p94, %p95
      %p97 = scmp.ne.s32.totalorder %s83, %s84
      %p98 = scmp.eq.s32.totalorder %s76, 1
      %p99 = por %p97, %p98
      %p101 = scmp.ne.s32.totalorder %s84, %s100
      %p102 = scmp.eq.s32.totalorder %s76, 0
      %p103 = por %p101, %p102
      %s104 = ssub.s32 %s70, %s77
      %p105 = scmp.eq.s32.totalorder %s104, 0
      %s107 = sadd.s32 %s106, 1
      %s108 = scalar_select %p105, %s106, %s107
      %p111 = pneg %p105
      %p112 = scmp.eq.s32.totalorder %s70, 1
      %p113 = por %p111, %p112
      %p114 = scmp.ne.s32.totalorder %s106, %s109
      %p115 = scmp.eq.s32.totalorder %s70, 0
      %p116 = por %p114, %p115
      %p117 = scmp.ne.s32.totalorder %s106, %s109
      %p118 = scmp.eq.s32.totalorder %s75, 1
      %p119 = por %p117, %p118
      %p120 = scmp.ne.s32.totalorder %s109, %s110
      %p121 = scmp.eq.s32.totalorder %s75, 0
      %p122 = por %p120, %p121
      %p123 = scmp.ne.s32.totalorder %s109, %s110
      %p124 = scmp.eq.s32.totalorder %s76, 1
      %p125 = por %p123, %p124
      %p127 = scmp.ne.s32.totalorder %s110, %s126
      %p128 = scmp.eq.s32.totalorder %s76, 0
      %p129 = por %p127, %p128
      %s130 = ssub.s32 %s70, %s77
      %p131 = scmp.eq.s32.totalorder %s130, 0
      %s133 = sadd.s32 %s132, 1
      %s134 = scalar_select %p131, %s132, %s133
      %p137 = pneg %p131
      %p138 = scmp.eq.s32.totalorder %s70, 1
      %p139 = por %p137, %p138
      %p140 = scmp.ne.s32.totalorder %s132, %s135
      %p141 = scmp.eq.s32.totalorder %s70, 0
      %p142 = por %p140, %p141
      %p143 = scmp.ne.s32.totalorder %s132, %s135
      %p144 = scmp.eq.s32.totalorder %s75, 1
      %p145 = por %p143, %p144
      %p146 = scmp.ne.s32.totalorder %s135, %s136
      %p147 = scmp.eq.s32.totalorder %s75, 0
      %p148 = por %p146, %p147
      %p149 = scmp.ne.s32.totalorder %s135, %s136
      %p150 = scmp.eq.s32.totalorder %s76, 1
      %p151 = por %p149, %p150
      %p153 = scmp.ne.s32.totalorder %s136, %s152
      %p154 = scmp.eq.s32.totalorder %s76, 0
      %p155 = por %p153, %p154
      %s156 = ssub.s32 %s70, %s77
      %p157 = scmp.eq.s32.totalorder %s156, 0
      %s159 = sadd.s32 %s158, 1
      %s160 = scalar_select %p157, %s158, %s159
      %p163 = pneg %p157
      %p164 = scmp.eq.s32.totalorder %s70, 1
      %p165 = por %p163, %p164
      %p166 = scmp.ne.s32.totalorder %s158, %s161
      %p167 = scmp.eq.s32.totalorder %s70, 0
      %p168 = por %p166, %p167
      %p169 = scmp.ne.s32.totalorder %s158, %s161
      %p170 = scmp.eq.s32.totalorder %s75, 1
      %p171 = por %p169, %p170
      %p172 = scmp.ne.s32.totalorder %s161, %s162
      %p173 = scmp.eq.s32.totalorder %s75, 0
      %p174 = por %p172, %p173
      %p175 = scmp.ne.s32.totalorder %s161, %s162
      %p176 = scmp.eq.s32.totalorder %s76, 1
      %p177 = por %p175, %p176
      %p179 = scmp.ne.s32.totalorder %s162, %s178
      %p180 = scmp.eq.s32.totalorder %s76, 0
      %p181 = por %p179, %p180
      %s182 = ssub.s32 %s70, %s77
      %p183 = scmp.eq.s32.totalorder %s182, 0
      %s185 = sadd.s32 %s184, 1
      %s186 = scalar_select %p183, %s184, %s185
      %p189 = pneg %p183
      %p190 = scmp.eq.s32.totalorder %s70, 1
      %p191 = por %p189, %p190
      %p192 = scmp.ne.s32.totalorder %s184, %s187
      %p193 = scmp.eq.s32.totalorder %s70, 0
      %p194 = por %p192, %p193
      %p195 = scmp.ne.s32.totalorder %s184, %s187
      %p196 = scmp.eq.s32.totalorder %s75, 1
      %p197 = por %p195, %p196
      %p198 = scmp.ne.s32.totalorder %s187, %s188
      %p199 = scmp.eq.s32.totalorder %s75, 0
      %p200 = por %p198, %p199
      %p201 = scmp.ne.s32.totalorder %s187, %s188
      %p202 = scmp.eq.s32.totalorder %s76, 1
      %p203 = por %p201, %p202
      %p205 = scmp.ne.s32.totalorder %s188, %s204
      %p206 = scmp.eq.s32.totalorder %s76, 0
      %p207 = por %p205, %p206
      %s209 = sadd.s32 %s208, 1
      %p212 = scmp.eq.s32.totalorder %s70, 1
      %p213 = scmp.ne.s32.totalorder %s208, %s210
      %p214 = scmp.eq.s32.totalorder %s70, 0
      %p215 = por %p213, %p214
      %p216 = scmp.ne.s32.totalorder %s208, %s210
      %p217 = scmp.eq.s32.totalorder %s75, 1
      %p218 = por %p216, %p217
      %p219 = scmp.ne.s32.totalorder %s210, %s211
      %p220 = scmp.eq.s32.totalorder %s75, 0
      %p221 = por %p219, %p220
      %p222 = scmp.ne.s32.totalorder %s210, %s211
      %p223 = scmp.eq.s32.totalorder %s76, 1
      %p224 = por %p222, %p223
      %p226 = scmp.ne.s32.totalorder %s211, %s225
      %p227 = scmp.eq.s32.totalorder %s76, 0
      %p228 = por %p226, %p227
      %s230 = sadd.s32 %s229, 1
      %p233 = scmp.eq.s32.totalorder %s70, 1
      %p234 = scmp.ne.s32.totalorder %s229, %s231
      %p235 = scmp.eq.s32.totalorder %s70, 0
      %p236 = por %p234, %p235
      %p237 = scmp.ne.s32.totalorder %s229, %s231
      %p238 = scmp.eq.s32.totalorder %s75, 1
      %p239 = por %p237, %p238
      %p240 = scmp.ne.s32.totalorder %s231, %s232
      %p241 = scmp.eq.s32.totalorder %s75, 0
      %p242 = por %p240, %p241
      %p243 = scmp.ne.s32.totalorder %s231, %s232
      %p244 = scmp.eq.s32.totalorder %s76, 1
      %p245 = por %p243, %p244
      %p247 = scmp.ne.s32.totalorder %s232, %s246
      %p248 = scmp.eq.s32.totalorder %s76, 0
      %p249 = por %p247, %p248
      %s251 = sadd.s32 %s250, 1
      %p254 = scmp.eq.s32.totalorder %s70, 1
      %p255 = scmp.ne.s32.totalorder %s250, %s252
      %p256 = scmp.eq.s32.totalorder %s70, 0
      %p257 = por %p255, %p256
      %p258 = scmp.ne.s32.totalorder %s250, %s252
      %p259 = scmp.eq.s32.totalorder %s75, 1
      %p260 = por %p258, %p259
      %p261 = scmp.ne.s32.totalorder %s252, %s253
      %p262 = scmp.eq.s32.totalorder %s75, 0
      %p263 = por %p261, %p262
      %p264 = scmp.ne.s32.totalorder %s252, %s253
      %p265 = scmp.eq.s32.totalorder %s76, 1
      %p266 = por %p264, %p265
      %p268 = scmp.ne.s32.totalorder %s253, %s267
      %p269 = scmp.eq.s32.totalorder %s76, 0
      %p270 = por %p268, %p269
      %s272 = sadd.s32 %s271, 1
      %p275 = scmp.eq.s32.totalorder %s70, 1
      %p276 = scmp.ne.s32.totalorder %s271, %s273
      %p277 = scmp.eq.s32.totalorder %s70, 0
      %p278 = por %p276, %p277
      %p279 = scmp.ne.s32.totalorder %s271, %s273
      %p280 = scmp.eq.s32.totalorder %s75, 1
      %p281 = por %p279, %p280
      %p282 = scmp.ne.s32.totalorder %s273, %s274
      %p283 = scmp.eq.s32.totalorder %s75, 0
      %p284 = por %p282, %p283
      %p285 = scmp.ne.s32.totalorder %s273, %s274
      %p286 = scmp.eq.s32.totalorder %s76, 1
      %p287 = por %p285, %p286
      %p289 = scmp.ne.s32.totalorder %s274, %s288
      %p290 = scmp.eq.s32.totalorder %s76, 0
      %p291 = por %p289, %p290
      %s293 = sadd.s32 %s292, 1
      %p296 = scmp.eq.s32.totalorder %s70, 1
      %p297 = scmp.ne.s32.totalorder %s292, %s294
      %p298 = scmp.eq.s32.totalorder %s70, 0
      %p299 = por %p297, %p298
      %p300 = scmp.ne.s32.totalorder %s292, %s294
      %p301 = scmp.eq.s32.totalorder %s75, 1
      %p302 = por %p300, %p301
      %p303 = scmp.ne.s32.totalorder %s294, %s295
      %p304 = scmp.eq.s32.totalorder %s75, 0
      %p305 = por %p303, %p304
      %p306 = scmp.ne.s32.totalorder %s294, %s295
      %p307 = scmp.eq.s32.totalorder %s76, 1
      %p308 = por %p306, %p307
      %p310 = scmp.ne.s32.totalorder %s295, %s309
      %p311 = scmp.eq.s32.totalorder %s76, 0
      %p312 = por %p310, %p311
      %s314 = sadd.s32 %s313, 1
      %p317 = scmp.eq.s32.totalorder %s70, 1
      %p318 = scmp.ne.s32.totalorder %s313, %s315
      %p319 = scmp.eq.s32.totalorder %s70, 0
      %p320 = por %p318, %p319
      %p321 = scmp.ne.s32.totalorder %s313, %s315
      %p322 = scmp.eq.s32.totalorder %s75, 1
      %p323 = por %p321, %p322
      %p324 = scmp.ne.s32.totalorder %s315, %s316
      %p325 = scmp.eq.s32.totalorder %s75, 0
      %p326 = por %p324, %p325
      %p327 = scmp.ne.s32.totalorder %s315, %s316
      %p328 = scmp.eq.s32.totalorder %s76, 1
      %p329 = por %p327, %p328
      %p331 = scmp.ne.s32.totalorder %s316, %s330
      %p332 = scmp.eq.s32.totalorder %s76, 0
      %p333 = por %p331, %p332
      %s335 = sadd.s32 %s334, 1
      %p338 = scmp.eq.s32.totalorder %s70, 1
      %p339 = scmp.ne.s32.totalorder %s334, %s336
      %p340 = scmp.eq.s32.totalorder %s70, 0
      %p341 = por %p339, %p340
      %p342 = scmp.ne.s32.totalorder %s334, %s336
      %p343 = scmp.eq.s32.totalorder %s75, 1
      %p344 = por %p342, %p343
      %p345 = scmp.ne.s32.totalorder %s336, %s337
      %p346 = scmp.eq.s32.totalorder %s75, 0
      %p347 = por %p345, %p346
      %p348 = scmp.ne.s32.totalorder %s336, %s337
      %p349 = scmp.eq.s32.totalorder %s76, 1
      %p350 = por %p348, %p349
      %p352 = scmp.ne.s32.totalorder %s337, %s351
      %p353 = scmp.eq.s32.totalorder %s76, 0
      %p354 = por %p352, %p353
      %s356 = sadd.s32 %s355, 1
      %p359 = scmp.eq.s32.totalorder %s70, 1
      %p360 = scmp.ne.s32.totalorder %s355, %s357
      %p361 = scmp.eq.s32.totalorder %s70, 0
      %p362 = por %p360, %p361
      %p363 = scmp.ne.s32.totalorder %s355, %s357
      %p364 = scmp.eq.s32.totalorder %s75, 1
      %p365 = por %p363, %p364
      %p366 = scmp.ne.s32.totalorder %s357, %s358
      %p367 = scmp.eq.s32.totalorder %s75, 0
      %p368 = por %p366, %p367
      %p369 = scmp.ne.s32.totalorder %s357, %s358
      %p370 = scmp.eq.s32.totalorder %s76, 1
      %p371 = por %p369, %p370
      %p373 = scmp.ne.s32.totalorder %s358, %s372
      %p374 = scmp.eq.s32.totalorder %s76, 0
      %p375 = por %p373, %p374
      %s377 = sadd.s32 %s376, 1
      %p380 = scmp.eq.s32.totalorder %s70, 1
      %p381 = scmp.ne.s32.totalorder %s376, %s378
      %p382 = scmp.eq.s32.totalorder %s70, 0
      %p383 = por %p381, %p382
      %p384 = scmp.ne.s32.totalorder %s376, %s378
      %p385 = scmp.eq.s32.totalorder %s75, 1
      %p386 = por %p384, %p385
      %p387 = scmp.ne.s32.totalorder %s378, %s379
      %p388 = scmp.eq.s32.totalorder %s75, 0
      %p389 = por %p387, %p388
      %p390 = scmp.ne.s32.totalorder %s378, %s379
      %p391 = scmp.eq.s32.totalorder %s76, 1
      %p392 = por %p390, %p391
      %p394 = scmp.ne.s32.totalorder %s379, %s393
      %p395 = scmp.eq.s32.totalorder %s76, 0
      %p396 = por %p394, %p395
      %s398 = sadd.s32 %s397, 1
      %p401 = scmp.eq.s32.totalorder %s70, 1
      %p402 = scmp.ne.s32.totalorder %s397, %s399
      %p403 = scmp.eq.s32.totalorder %s70, 0
      %p404 = por %p402, %p403
      %p405 = scmp.ne.s32.totalorder %s397, %s399
      %p406 = scmp.eq.s32.totalorder %s75, 1
      %p407 = por %p405, %p406
      %p408 = scmp.ne.s32.totalorder %s399, %s400
      %p409 = scmp.eq.s32.totalorder %s75, 0
      %p410 = por %p408, %p409
      %p411 = scmp.ne.s32.totalorder %s399, %s400
      %p412 = scmp.eq.s32.totalorder %s76, 1
      %p413 = por %p411, %p412
      %p415 = scmp.ne.s32.totalorder %s400, %s414
      %p416 = scmp.eq.s32.totalorder %s76, 0
      %p417 = por %p415, %p416
      %s419 = sadd.s32 %s418, 1
      %p422 = scmp.eq.s32.totalorder %s70, 1
      %p423 = scmp.ne.s32.totalorder %s418, %s420
      %p424 = scmp.eq.s32.totalorder %s70, 0
      %p425 = por %p423, %p424
      %p426 = scmp.ne.s32.totalorder %s418, %s420
      %p427 = scmp.eq.s32.totalorder %s75, 1
      %p428 = por %p426, %p427
      %p429 = scmp.ne.s32.totalorder %s420, %s421
      %p430 = scmp.eq.s32.totalorder %s75, 0
      %p431 = por %p429, %p430
      %p432 = scmp.ne.s32.totalorder %s420, %s421
      %p433 = scmp.eq.s32.totalorder %s76, 1
      %p434 = por %p432, %p433
      %p436 = scmp.ne.s32.totalorder %s421, %s435
      %p437 = scmp.eq.s32.totalorder %s76, 0
      %p438 = por %p436, %p437
      %s440 = sadd.s32 %s439, 1
      %p443 = scmp.eq.s32.totalorder %s70, 1
      %p444 = scmp.ne.s32.totalorder %s439, %s441
      %p445 = scmp.eq.s32.totalorder %s70, 0
      %p446 = por %p444, %p445
      %p447 = scmp.ne.s32.totalorder %s439, %s441
      %p448 = scmp.eq.s32.totalorder %s75, 1
      %p449 = por %p447, %p448
      %p450 = scmp.ne.s32.totalorder %s441, %s442
      %p451 = scmp.eq.s32.totalorder %s75, 0
      %p452 = por %p450, %p451
      %p453 = scmp.ne.s32.totalorder %s441, %s442
      %p454 = scmp.eq.s32.totalorder %s76, 1
      %p455 = por %p453, %p454
      %p457 = scmp.ne.s32.totalorder %s442, %s456
      %p458 = scmp.eq.s32.totalorder %s76, 0
      %p459 = por %p457, %p458
      %s461 = sadd.s32 %s460, 1
      %p464 = scmp.eq.s32.totalorder %s70, 1
      %p465 = scmp.ne.s32.totalorder %s460, %s462
      %p466 = scmp.eq.s32.totalorder %s70, 0
      %p467 = por %p465, %p466
      %p468 = scmp.ne.s32.totalorder %s460, %s462
      %p469 = scmp.eq.s32.totalorder %s75, 1
      %p470 = por %p468, %p469
      %p471 = scmp.ne.s32.totalorder %s462, %s463
      %p472 = scmp.eq.s32.totalorder %s75, 0
      %p473 = por %p471, %p472
      %p474 = scmp.ne.s32.totalorder %s462, %s463
      %p475 = scmp.eq.s32.totalorder %s76, 1
      %p476 = por %p474, %p475
      %p478 = scmp.ne.s32.totalorder %s463, %s477
      %p479 = scmp.eq.s32.totalorder %s76, 0
      %p480 = por %p478, %p479
      %s482 = sadd.s32 %s481, 1
      %p485 = scmp.eq.s32.totalorder %s70, 1
      %p486 = scmp.ne.s32.totalorder %s481, %s483
      %p487 = scmp.eq.s32.totalorder %s70, 0
      %p488 = por %p486, %p487
      %p489 = scmp.ne.s32.totalorder %s481, %s483
      %p490 = scmp.eq.s32.totalorder %s75, 1
      %p491 = por %p489, %p490
      %p492 = scmp.ne.s32.totalorder %s483, %s484
      %p493 = scmp.eq.s32.totalorder %s75, 0
      %p494 = por %p492, %p493
      %p495 = scmp.ne.s32.totalorder %s483, %s484
      %p496 = scmp.eq.s32.totalorder %s76, 1
      %p497 = por %p495, %p496
      %p499 = scmp.ne.s32.totalorder %s484, %s498
      %p500 = scmp.eq.s32.totalorder %s76, 0
      %p501 = por %p499, %p500
      %s503 = sadd.s32 %s502, 1
      %p506 = scmp.eq.s32.totalorder %s70, 1
      %p507 = scmp.ne.s32.totalorder %s502, %s504
      %p508 = scmp.eq.s32.totalorder %s70, 0
      %p509 = por %p507, %p508
      %p510 = scmp.ne.s32.totalorder %s502, %s504
      %p511 = scmp.eq.s32.totalorder %s75, 1
      %p512 = por %p510, %p511
      %p513 = scmp.ne.s32.totalorder %s504, %s505
      %p514 = scmp.eq.s32.totalorder %s75, 0
      %p515 = por %p513, %p514
      %p516 = scmp.ne.s32.totalorder %s504, %s505
      %p517 = scmp.eq.s32.totalorder %s76, 1
      %p518 = por %p516, %p517
      %p520 = scmp.ne.s32.totalorder %s505, %s519
      %p521 = scmp.eq.s32.totalorder %s76, 0
      %p522 = por %p520, %p521
      %s524 = sadd.s32 %s523, 1
      %p527 = scmp.eq.s32.totalorder %s70, 1
      %p528 = scmp.ne.s32.totalorder %s523, %s525
      %p529 = scmp.eq.s32.totalorder %s70, 0
      %p530 = por %p528, %p529
      %p531 = scmp.ne.s32.totalorder %s523, %s525
      %p532 = scmp.eq.s32.totalorder %s75, 1
      %p533 = por %p531, %p532
      %p534 = scmp.ne.s32.totalorder %s525, %s526
      %p535 = scmp.eq.s32.totalorder %s75, 0
      %p536 = por %p534, %p535
      %p537 = scmp.ne.s32.totalorder %s525, %s526
      %p538 = scmp.eq.s32.totalorder %s76, 1
      %p539 = por %p537, %p538
      %p541 = scmp.ne.s32.totalorder %s526, %s540
      %p542 = scmp.eq.s32.totalorder %s76, 0
      %p543 = por %p541, %p542
      %s545 = sadd.s32 %s544, 1
      %p548 = scmp.eq.s32.totalorder %s70, 1
      %p549 = scmp.ne.s32.totalorder %s544, %s546
      %p550 = scmp.eq.s32.totalorder %s70, 0
      %p551 = por %p549, %p550
      %p552 = scmp.ne.s32.totalorder %s544, %s546
      %p553 = scmp.eq.s32.totalorder %s75, 1
      %p554 = por %p552, %p553
      %p555 = scmp.ne.s32.totalorder %s546, %s547
      %p556 = scmp.eq.s32.totalorder %s75, 0
      %p557 = por %p555, %p556
      %p558 = scmp.ne.s32.totalorder %s546, %s547
      %p559 = scmp.eq.s32.totalorder %s76, 1
      %p560 = por %p558, %p559
      %p562 = scmp.ne.s32.totalorder %s547, %s561
      %p563 = scmp.eq.s32.totalorder %s76, 0
      %p564 = por %p562, %p563
      %s566 = sadd.s32 %s565, 1
      %p569 = scmp.eq.s32.totalorder %s70, 1
      %p570 = scmp.ne.s32.totalorder %s565, %s567
      %p571 = scmp.eq.s32.totalorder %s70, 0
      %p572 = por %p570, %p571
      %p573 = scmp.ne.s32.totalorder %s565, %s567
      %p574 = scmp.eq.s32.totalorder %s75, 1
      %p575 = por %p573, %p574
      %p576 = scmp.ne.s32.totalorder %s567, %s568
      %p577 = scmp.eq.s32.totalorder %s75, 0
      %p578 = por %p576, %p577
      %p579 = scmp.ne.s32.totalorder %s567, %s568
      %p580 = scmp.eq.s32.totalorder %s76, 1
      %p581 = por %p579, %p580
      %p583 = scmp.ne.s32.totalorder %s568, %s582
      %p584 = scmp.eq.s32.totalorder %s76, 0
      %p585 = por %p583, %p584
      %s587 = sadd.s32 %s586, 1
      %p590 = scmp.eq.s32.totalorder %s70, 1
      %p591 = scmp.ne.s32.totalorder %s586, %s588
      %p592 = scmp.eq.s32.totalorder %s70, 0
      %p593 = por %p591, %p592
      %p594 = scmp.ne.s32.totalorder %s586, %s588
      %p595 = scmp.eq.s32.totalorder %s75, 1
      %p596 = por %p594, %p595
      %p597 = scmp.ne.s32.totalorder %s588, %s589
      %p598 = scmp.eq.s32.totalorder %s75, 0
      %p599 = por %p597, %p598
      %p600 = scmp.ne.s32.totalorder %s588, %s589
      %p601 = scmp.eq.s32.totalorder %s76, 1
      %p602 = por %p600, %p601
      %p604 = scmp.ne.s32.totalorder %s589, %s603
      %p605 = scmp.eq.s32.totalorder %s76, 0
      %p606 = por %p604, %p605
      %s608 = sadd.s32 %s607, 1
      %p611 = scmp.eq.s32.totalorder %s70, 1
      %p612 = scmp.ne.s32.totalorder %s607, %s609
      %p613 = scmp.eq.s32.totalorder %s70, 0
      %p614 = por %p612, %p613
      %p615 = scmp.ne.s32.totalorder %s607, %s609
      %p616 = scmp.eq.s32.totalorder %s75, 1
      %p617 = por %p615, %p616
      %p618 = scmp.ne.s32.totalorder %s609, %s610
      %p619 = scmp.eq.s32.totalorder %s75, 0
      %p620 = por %p618, %p619
      %p621 = scmp.ne.s32.totalorder %s609, %s610
      %p622 = scmp.eq.s32.totalorder %s76, 1
      %p623 = por %p621, %p622
      %p625 = scmp.ne.s32.totalorder %s610, %s624
      %p626 = scmp.eq.s32.totalorder %s76, 0
      %p627 = por %p625, %p626
      %s629 = sadd.s32 %s628, 1
      %p632 = scmp.eq.s32.totalorder %s70, 1
      %p633 = scmp.ne.s32.totalorder %s628, %s630
      %p634 = scmp.eq.s32.totalorder %s70, 0
      %p635 = por %p633, %p634
      %p636 = scmp.ne.s32.totalorder %s628, %s630
      %p637 = scmp.eq.s32.totalorder %s75, 1
      %p638 = por %p636, %p637
      %p639 = scmp.ne.s32.totalorder %s630, %s631
      %p640 = scmp.eq.s32.totalorder %s75, 0
      %p641 = por %p639, %p640
      %p642 = scmp.ne.s32.totalorder %s630, %s631
      %p643 = scmp.eq.s32.totalorder %s76, 1
      %p644 = por %p642, %p643
      %p646 = scmp.ne.s32.totalorder %s631, %s645
      %p647 = scmp.eq.s32.totalorder %s76, 0
      %p648 = por %p646, %p647
      %s650 = sadd.s32 %s649, 1
      %p653 = scmp.eq.s32.totalorder %s70, 1
      %p654 = scmp.ne.s32.totalorder %s649, %s651
      %p655 = scmp.eq.s32.totalorder %s70, 0
      %p656 = por %p654, %p655
      %p657 = scmp.ne.s32.totalorder %s649, %s651
      %p658 = scmp.eq.s32.totalorder %s75, 1
      %p659 = por %p657, %p658
      %p660 = scmp.ne.s32.totalorder %s651, %s652
      %p661 = scmp.eq.s32.totalorder %s75, 0
      %p662 = por %p660, %p661
      %p663 = scmp.ne.s32.totalorder %s651, %s652
      %p664 = scmp.eq.s32.totalorder %s76, 1
      %p665 = por %p663, %p664
      %p667 = scmp.ne.s32.totalorder %s652, %s666
      %p668 = scmp.eq.s32.totalorder %s76, 0
      %p669 = por %p667, %p668
      %s671 = sadd.s32 %s670, 1
      %p674 = scmp.eq.s32.totalorder %s70, 1
      %p675 = scmp.ne.s32.totalorder %s670, %s672
      %p676 = scmp.eq.s32.totalorder %s70, 0
      %p677 = por %p675, %p676
      %p678 = scmp.ne.s32.totalorder %s670, %s672
      %p679 = scmp.eq.s32.totalorder %s75, 1
      %p680 = por %p678, %p679
      %p681 = scmp.ne.s32.totalorder %s672, %s673
      %p682 = scmp.eq.s32.totalorder %s75, 0
      %p683 = por %p681, %p682
      %p684 = scmp.ne.s32.totalorder %s672, %s673
      %p685 = scmp.eq.s32.totalorder %s76, 1
      %p686 = por %p684, %p685
      %p688 = scmp.ne.s32.totalorder %s673, %s687
      %p689 = scmp.eq.s32.totalorder %s76, 0
      %p690 = por %p688, %p689
      %s692 = sadd.s32 %s691, 1
      %p695 = scmp.eq.s32.totalorder %s70, 1
      %p696 = scmp.ne.s32.totalorder %s691, %s693
      %p697 = scmp.eq.s32.totalorder %s70, 0
      %p698 = por %p696, %p697
      %p699 = scmp.ne.s32.totalorder %s691, %s693
      %p700 = scmp.eq.s32.totalorder %s75, 1
      %p701 = por %p699, %p700
      %p702 = scmp.ne.s32.totalorder %s693, %s694
      %p703 = scmp.eq.s32.totalorder %s75, 0
      %p704 = por %p702, %p703
      %p705 = scmp.ne.s32.totalorder %s693, %s694
      %p706 = scmp.eq.s32.totalorder %s76, 1
      %p707 = por %p705, %p706
      %p709 = scmp.ne.s32.totalorder %s694, %s708
      %p710 = scmp.eq.s32.totalorder %s76, 0
      %p711 = por %p709, %p710
      %s713 = sadd.s32 %s712, 1
      %p716 = scmp.eq.s32.totalorder %s70, 1
      %p717 = scmp.ne.s32.totalorder %s712, %s714
      %p718 = scmp.eq.s32.totalorder %s70, 0
      %p719 = por %p717, %p718
      %p720 = scmp.ne.s32.totalorder %s712, %s714
      %p721 = scmp.eq.s32.totalorder %s75, 1
      %p722 = por %p720, %p721
      %p723 = scmp.ne.s32.totalorder %s714, %s715
      %p724 = scmp.eq.s32.totalorder %s75, 0
      %p725 = por %p723, %p724
      %p726 = scmp.ne.s32.totalorder %s714, %s715
      %p727 = scmp.eq.s32.totalorder %s76, 1
      %p728 = por %p726, %p727
      %p730 = scmp.ne.s32.totalorder %s715, %s729
      %p731 = scmp.eq.s32.totalorder %s76, 0
      %p732 = por %p730, %p731
      %s734 = sadd.s32 %s733, 1
      %p737 = scmp.eq.s32.totalorder %s70, 1
      %p738 = scmp.ne.s32.totalorder %s733, %s735
      %p739 = scmp.eq.s32.totalorder %s70, 0
      %p740 = por %p738, %p739
      %p741 = scmp.ne.s32.totalorder %s733, %s735
      %p742 = scmp.eq.s32.totalorder %s75, 1
      %p743 = por %p741, %p742
      %p744 = scmp.ne.s32.totalorder %s735, %s736
      %p745 = scmp.eq.s32.totalorder %s75, 0
      %p746 = por %p744, %p745
      %p747 = scmp.ne.s32.totalorder %s735, %s736
      %p748 = scmp.eq.s32.totalorder %s76, 1
      %p749 = por %p747, %p748
      %p751 = scmp.ne.s32.totalorder %s736, %s750
      %p752 = scmp.eq.s32.totalorder %s76, 0
      %p753 = por %p751, %p752
      %s754 = ssub.s32 %s70, %s77
      %p755 = scmp.eq.s32.totalorder %s754, 0
      %s757 = sadd.s32 %s756, 1
      %s758 = scalar_select %p755, %s756, %s757
      %p761 = pneg %p755
      %p762 = scmp.eq.s32.totalorder %s70, 1
      %p763 = por %p761, %p762
      %p764 = scmp.ne.s32.totalorder %s756, %s759
      %p765 = scmp.eq.s32.totalorder %s70, 0
      %p766 = por %p764, %p765
      %p767 = scmp.ne.s32.totalorder %s756, %s759
      %p768 = scmp.eq.s32.totalorder %s75, 1
      %p769 = por %p767, %p768
      %p770 = scmp.ne.s32.totalorder %s759, %s760
      %p771 = scmp.eq.s32.totalorder %s75, 0
      %p772 = por %p770, %p771
      %p773 = scmp.ne.s32.totalorder %s759, %s760
      %p774 = scmp.eq.s32.totalorder %s76, 1
      %p775 = por %p773, %p774
      %p777 = scmp.ne.s32.totalorder %s760, %s776
      %p778 = scmp.eq.s32.totalorder %s76, 0
      %p779 = por %p777, %p778
      %p780 = scmp.le.s32.totalorder 1, %s70
      %p781 = scmp.lt.s32.totalorder %s70, 3
      %p782 = pnand %p780, %p781
      %p783 = pneg %p782
      // Predicated region
      $region9: #{tpu_custom_call.1} parent=5 // pred_check
        _
      $region10: #{tpu_custom_call.1} parent=5 // pred_check_branch
        %785 = sbr.rel (%p782) target = $region12
      $region11: #{tpu_custom_call.1} parent=5 // pred_region
        %s786 = ssub.s32 %s70, 1
        // Predicated region
        $region13: #{tpu_custom_call.1} parent=11 // pred_check
          %p787 = pneg %p221
        $region14: #{tpu_custom_call.1} parent=11 // pred_check_branch
          %789 = sbr.rel (%p787) target = $region16
        $region15: #{tpu_custom_call.1} parent=11 // pred_region
          _
        $region16: #{tpu_custom_call.1} parent=11 // pred_fallthru
          _
        // Predicated region
        $region17: #{tpu_custom_call.1} parent=11 // pred_check
          %p790 = pneg %p242
        $region18: #{tpu_custom_call.1} parent=11 // pred_check_branch
          %792 = sbr.rel (%p790) target = $region20
        $region19: #{tpu_custom_call.1} parent=11 // pred_region
          %s794 = ssub.s32 16, 16
          %795 = vsyncadd [#allocation3], %s794
          %s797 = sshll.u32 [#allocation2], 4
          %s798 = int_to_ptr.vmem [resolvable:$true] %s797
          %800 = dma.hbm_to_vmem [thread:$0]  %s13, 16, %s798, [#allocation3]
        $region20: #{tpu_custom_call.1} parent=11 // pred_fallthru
          _
        // Predicated region
        $region21: #{tpu_custom_call.1} parent=11 // pred_check
          %p801 = pneg %p263
        $region22: #{tpu_custom_call.1} parent=11 // pred_check_branch
          %803 = sbr.rel (%p801) target = $region24
        $region23: #{tpu_custom_call.1} parent=11 // pred_region
          _
        $region24: #{tpu_custom_call.1} parent=11 // pred_fallthru
          _
        // Predicated region
        $region25: #{tpu_custom_call.1} parent=11 // pred_check
          %p804 = pneg %p284
        $region26: #{tpu_custom_call.1} parent=11 // pred_check_branch
          %806 = sbr.rel (%p804) target = $region28
        $region27: #{tpu_custom_call.1} parent=11 // pred_region
          _
        $region28: #{tpu_custom_call.1} parent=11 // pred_fallthru
          _
        // Predicated region
        $region29: #{tpu_custom_call.1} parent=11 // pred_check
          %p807 = pneg %p305
        $region30: #{tpu_custom_call.1} parent=11 // pred_check_branch
          %809 = sbr.rel (%p807) target = $region32
        $region31: #{tpu_custom_call.1} parent=11 // pred_region
          _
        $region32: #{tpu_custom_call.1} parent=11 // pred_fallthru
          _
        // Predicated region
        $region33: #{tpu_custom_call.1} parent=11 // pred_check
          %p810 = pneg %p326
        $region34: #{tpu_custom_call.1} parent=11 // pred_check_branch
          %812 = sbr.rel (%p810) target = $region36
        $region35: #{tpu_custom_call.1} parent=11 // pred_region
          _
        $region36: #{tpu_custom_call.1} parent=11 // pred_fallthru
          _
        // Predicated region
        $region37: #{tpu_custom_call.1} parent=11 // pred_check
          %p813 = pneg %p347
        $region38: #{tpu_custom_call.1} parent=11 // pred_check_branch
          %815 = sbr.rel (%p813) target = $region40
        $region39: #{tpu_custom_call.1} parent=11 // pred_region
          _
        $region40: #{tpu_custom_call.1} parent=11 // pred_fallthru
          _
        // Predicated region
        $region41: #{tpu_custom_call.1} parent=11 // pred_check
          %p816 = pneg %p368
        $region42: #{tpu_custom_call.1} parent=11 // pred_check_branch
          %818 = sbr.rel (%p816) target = $region44
        $region43: #{tpu_custom_call.1} parent=11 // pred_region
          _
        $region44: #{tpu_custom_call.1} parent=11 // pred_fallthru
          _
        // Predicated region
        $region45: #{tpu_custom_call.1} parent=11 // pred_check
          %p819 = pneg %p389
        $region46: #{tpu_custom_call.1} parent=11 // pred_check_branch
          %821 = sbr.rel (%p819) target = $region48
        $region47: #{tpu_custom_call.1} parent=11 // pred_region
          _
        $region48: #{tpu_custom_call.1} parent=11 // pred_fallthru
          _
        // Predicated region
        $region49: #{tpu_custom_call.1} parent=11 // pred_check
          %p822 = pneg %p410
        $region50: #{tpu_custom_call.1} parent=11 // pred_check_branch
          %824 = sbr.rel (%p822) target = $region52
        $region51: #{tpu_custom_call.1} parent=11 // pred_region
          _
        $region52: #{tpu_custom_call.1} parent=11 // pred_fallthru
          _
        // Predicated region
        $region53: #{tpu_custom_call.1} parent=11 // pred_check
          %p825 = pneg %p431
        $region54: #{tpu_custom_call.1} parent=11 // pred_check_branch
          %827 = sbr.rel (%p825) target = $region56
        $region55: #{tpu_custom_call.1} parent=11 // pred_region
          _
        $region56: #{tpu_custom_call.1} parent=11 // pred_fallthru
          _
        // Predicated region
        $region57: #{tpu_custom_call.1} parent=11 // pred_check
          %p828 = pneg %p452
        $region58: #{tpu_custom_call.1} parent=11 // pred_check_branch
          %830 = sbr.rel (%p828) target = $region60
        $region59: #{tpu_custom_call.1} parent=11 // pred_region
          _
        $region60: #{tpu_custom_call.1} parent=11 // pred_fallthru
          _
        // Predicated region
        $region61: #{tpu_custom_call.1} parent=11 // pred_check
          %p831 = pneg %p473
        $region62: #{tpu_custom_call.1} parent=11 // pred_check_branch
          %833 = sbr.rel (%p831) target = $region64
        $region63: #{tpu_custom_call.1} parent=11 // pred_region
          _
        $region64: #{tpu_custom_call.1} parent=11 // pred_fallthru
          _
        // Predicated region
        $region65: #{tpu_custom_call.1} parent=11 // pred_check
          %p834 = pneg %p494
        $region66: #{tpu_custom_call.1} parent=11 // pred_check_branch
          %836 = sbr.rel (%p834) target = $region68
        $region67: #{tpu_custom_call.1} parent=11 // pred_region
          _
        $region68: #{tpu_custom_call.1} parent=11 // pred_fallthru
          _
        // Predicated region
        $region69: #{tpu_custom_call.1} parent=11 // pred_check
          %p837 = pneg %p515
        $region70: #{tpu_custom_call.1} parent=11 // pred_check_branch
          %839 = sbr.rel (%p837) target = $region72
        $region71: #{tpu_custom_call.1} parent=11 // pred_region
          _
        $region72: #{tpu_custom_call.1} parent=11 // pred_fallthru
          _
        // Predicated region
        $region73: #{tpu_custom_call.1} parent=11 // pred_check
          %p840 = pneg %p536
        $region74: #{tpu_custom_call.1} parent=11 // pred_check_branch
          %842 = sbr.rel (%p840) target = $region76
        $region75: #{tpu_custom_call.1} parent=11 // pred_region
          _
        $region76: #{tpu_custom_call.1} parent=11 // pred_fallthru
          _
        // Predicated region
        $region77: #{tpu_custom_call.1} parent=11 // pred_check
          %p843 = pneg %p557
        $region78: #{tpu_custom_call.1} parent=11 // pred_check_branch
          %845 = sbr.rel (%p843) target = $region80
        $region79: #{tpu_custom_call.1} parent=11 // pred_region
          _
        $region80: #{tpu_custom_call.1} parent=11 // pred_fallthru
          _
        // Predicated region
        $region81: #{tpu_custom_call.1} parent=11 // pred_check
          %p846 = pneg %p578
        $region82: #{tpu_custom_call.1} parent=11 // pred_check_branch
          %848 = sbr.rel (%p846) target = $region84
        $region83: #{tpu_custom_call.1} parent=11 // pred_region
          _
        $region84: #{tpu_custom_call.1} parent=11 // pred_fallthru
          _
        // Predicated region
        $region85: #{tpu_custom_call.1} parent=11 // pred_check
          %p849 = pneg %p599
        $region86: #{tpu_custom_call.1} parent=11 // pred_check_branch
          %851 = sbr.rel (%p849) target = $region88
        $region87: #{tpu_custom_call.1} parent=11 // pred_region
          _
        $region88: #{tpu_custom_call.1} parent=11 // pred_fallthru
          _
        // Predicated region
        $region89: #{tpu_custom_call.1} parent=11 // pred_check
          %p852 = pneg %p620
        $region90: #{tpu_custom_call.1} parent=11 // pred_check_branch
          %854 = sbr.rel (%p852) target = $region92
        $region91: #{tpu_custom_call.1} parent=11 // pred_region
          _
        $region92: #{tpu_custom_call.1} parent=11 // pred_fallthru
          _
        // Predicated region
        $region93: #{tpu_custom_call.1} parent=11 // pred_check
          %p855 = pneg %p641
        $region94: #{tpu_custom_call.1} parent=11 // pred_check_branch
          %857 = sbr.rel (%p855) target = $region96
        $region95: #{tpu_custom_call.1} parent=11 // pred_region
          _
        $region96: #{tpu_custom_call.1} parent=11 // pred_fallthru
          _
        // Predicated region
        $region97: #{tpu_custom_call.1} parent=11 // pred_check
          %p858 = pneg %p662
        $region98: #{tpu_custom_call.1} parent=11 // pred_check_branch
          %860 = sbr.rel (%p858) target = $region100
        $region99: #{tpu_custom_call.1} parent=11 // pred_region
          _
        $region100: #{tpu_custom_call.1} parent=11 // pred_fallthru
          _
        // Predicated region
        $region101: #{tpu_custom_call.1} parent=11 // pred_check
          %p861 = pneg %p683
        $region102: #{tpu_custom_call.1} parent=11 // pred_check_branch
          %863 = sbr.rel (%p861) target = $region104
        $region103: #{tpu_custom_call.1} parent=11 // pred_region
          _
        $region104: #{tpu_custom_call.1} parent=11 // pred_fallthru
          _
        // Predicated region
        $region105: #{tpu_custom_call.1} parent=11 // pred_check
          %p864 = pneg %p704
        $region106: #{tpu_custom_call.1} parent=11 // pred_check_branch
          %866 = sbr.rel (%p864) target = $region108
        $region107: #{tpu_custom_call.1} parent=11 // pred_region
          _
        $region108: #{tpu_custom_call.1} parent=11 // pred_fallthru
          _
        // Predicated region
        $region109: #{tpu_custom_call.1} parent=11 // pred_check
          %p867 = pneg %p725
        $region110: #{tpu_custom_call.1} parent=11 // pred_check_branch
          %869 = sbr.rel (%p867) target = $region112
        $region111: #{tpu_custom_call.1} parent=11 // pred_region
          _
        $region112: #{tpu_custom_call.1} parent=11 // pred_fallthru
          _
        // Predicated region
        $region113: #{tpu_custom_call.1} parent=11 // pred_check
          %p870 = pneg %p746
        $region114: #{tpu_custom_call.1} parent=11 // pred_check_branch
          %872 = sbr.rel (%p870) target = $region116
        $region115: #{tpu_custom_call.1} parent=11 // pred_region
          _
        $region116: #{tpu_custom_call.1} parent=11 // pred_fallthru
          _
      $region12: #{tpu_custom_call.1} parent=5 // pred_fallthru
        _
      %p873 = scmp.lt.s32.totalorder %s70, 2
      // Predicated region
      $region117: #{tpu_custom_call.1} parent=5 // pred_check
        %p874 = pneg %p873
      $region118: #{tpu_custom_call.1} parent=5 // pred_check_branch
        %876 = sbr.rel (%p874) target = $region120
      $region119: #{tpu_custom_call.1} parent=5 // pred_region
        // Predicated region
        $region121: #{tpu_custom_call.1} parent=119 // pred_check
          %p877 = pneg %p90
        $region122: #{tpu_custom_call.1} parent=119 // pred_check_branch
          %879 = sbr.rel (%p877) target = $region124
        $region123: #{tpu_custom_call.1} parent=119 // pred_region
          %p880 = scmp.lt.s32.totalorder %s70, 1
          %s881 = scalar_select %p880, %s70, 1
          %s882 = smul.addr %s881, 3
          %s883 = smul.addr %s882, 8
          %s884 = scalar_lea.vmem %s1, %s883
        $region124: #{tpu_custom_call.1} parent=119 // pred_fallthru
          _
        // Predicated region
        $region125: #{tpu_custom_call.1} parent=119 // pred_check
          %p885 = pneg %p116
        $region126: #{tpu_custom_call.1} parent=119 // pred_check_branch
          %887 = sbr.rel (%p885) target = $region128
        $region127: #{tpu_custom_call.1} parent=119 // pred_region
          %p888 = scmp.lt.s32.totalorder %s70, 1
          %s889 = scalar_select %p888, %s70, 1
          %s890 = smul.addr %s889, 3
          %s891 = smul.addr %s890, 8
          %s892 = scalar_lea.vmem %s3, %s891
        $region128: #{tpu_custom_call.1} parent=119 // pred_fallthru
          _
        // Predicated region
        $region129: #{tpu_custom_call.1} parent=119 // pred_check
          %p893 = pneg %p142
        $region130: #{tpu_custom_call.1} parent=119 // pred_check_branch
          %895 = sbr.rel (%p893) target = $region132
        $region131: #{tpu_custom_call.1} parent=119 // pred_region
          %p896 = scmp.lt.s32.totalorder %s70, 1
          %s897 = scalar_select %p896, %s70, 1
          %s898 = smul.addr %s897, 3
          %s899 = smul.addr %s898, 8
          %s900 = scalar_lea.vmem %s5, %s899
        $region132: #{tpu_custom_call.1} parent=119 // pred_fallthru
          _
        // Predicated region
        $region133: #{tpu_custom_call.1} parent=119 // pred_check
          %p901 = pneg %p168
        $region134: #{tpu_custom_call.1} parent=119 // pred_check_branch
          %903 = sbr.rel (%p901) target = $region136
        $region135: #{tpu_custom_call.1} parent=119 // pred_region
          %p904 = scmp.lt.s32.totalorder %s70, 1
          %s905 = scalar_select %p904, %s70, 1
          %s906 = smul.addr %s905, 2
          %s907 = smul.addr %s906, 8
          %s908 = scalar_lea.vmem %s7, %s907
        $region136: #{tpu_custom_call.1} parent=119 // pred_fallthru
          _
        // Predicated region
        $region137: #{tpu_custom_call.1} parent=119 // pred_check
          %p909 = pneg %p194
        $region138: #{tpu_custom_call.1} parent=119 // pred_check_branch
          %911 = sbr.rel (%p909) target = $region140
        $region139: #{tpu_custom_call.1} parent=119 // pred_region
          %p912 = scmp.lt.s32.totalorder %s70, 1
          %s913 = scalar_select %p912, %s70, 1
          %s914 = smul.addr %s913, 4
          %s915 = scalar_lea.vmem %s9, %s914
        $region140: #{tpu_custom_call.1} parent=119 // pred_fallthru
          _
      $region120: #{tpu_custom_call.1} parent=5 // pred_fallthru
        _
      %p916 = scmp.le.s32.totalorder 1, %s70
      %p917 = scmp.lt.s32.totalorder %s70, 3
      %p918 = pnand %p916, %p917
      %p919 = pneg %p918
      // Predicated region
      $region141: #{tpu_custom_call.1} parent=5 // pred_check
        _
      $region142: #{tpu_custom_call.1} parent=5 // pred_check_branch
        %921 = sbr.rel (%p918) target = $region144
      $region143: #{tpu_custom_call.1} parent=5 // pred_region
        %s922 = ssub.s32 %s70, 1
        // Predicated region
        $region145: #{tpu_custom_call.1} parent=143 // pred_check
          %p923 = pneg %p242
        $region146: #{tpu_custom_call.1} parent=143 // pred_check_branch
          %925 = sbr.rel (%p923) target = $region148
        $region147: #{tpu_custom_call.1} parent=143 // pred_region
          %926 = dma.done [#allocation3], 16
        $region148: #{tpu_custom_call.1} parent=143 // pred_fallthru
          _
        %p927 = scmp.lt.s32.totalorder %s75, 1
        %s928 = scalar_select %p927, %s75, 1
        %s929 = smul.addr %s928, 3
        %s930 = smul.addr %s929, 8
        %s931 = scalar_lea.vmem %s1, %s930
        %p932 = pneg %p96
        %p933 = pneg %p93
        %p934 = scmp.lt.s32.totalorder %s75, 1
        %s935 = scalar_select %p934, %s75, 1
        %s936 = smul.addr %s935, 3
        %s937 = smul.addr %s936, 8
        %s938 = scalar_lea.vmem %s3, %s937
        %p939 = pneg %p122
        %p940 = pneg %p119
        %p941 = scmp.lt.s32.totalorder %s75, 1
        %s942 = scalar_select %p941, %s75, 1
        %s943 = smul.addr %s942, 3
        %s944 = smul.addr %s943, 8
        %s945 = scalar_lea.vmem %s5, %s944
        %p946 = pneg %p148
        %p947 = pneg %p145
        %p948 = scmp.lt.s32.totalorder %s75, 1
        %s949 = scalar_select %p948, %s75, 1
        %s950 = smul.addr %s949, 2
        %s951 = smul.addr %s950, 8
        %s952 = scalar_lea.vmem %s7, %s951
        %p953 = pneg %p174
        %p954 = pneg %p171
        %p955 = scmp.lt.s32.totalorder %s75, 1
        %s956 = scalar_select %p955, %s75, 1
        %s957 = smul.addr %s956, 4
        %s958 = scalar_lea.vmem %s9, %s957
        %p959 = pneg %p200
        %p960 = pneg %p197
        %p961 = pneg %p221
        %p962 = pneg %p218
        %p963 = pneg %p242
        %p964 = pneg %p239
        %p965 = pneg %p263
        %p966 = pneg %p260
        %p967 = pneg %p284
        %p968 = pneg %p281
        %p969 = pneg %p305
        %p970 = pneg %p302
        %p971 = pneg %p326
        %p972 = pneg %p323
        %p973 = pneg %p347
        %p974 = pneg %p344
        %p975 = pneg %p368
        %p976 = pneg %p365
        %p977 = pneg %p389
        %p978 = pneg %p386
        %p979 = pneg %p410
        %p980 = pneg %p407
        %p981 = pneg %p431
        %p982 = pneg %p428
        %p983 = pneg %p452
        %p984 = pneg %p449
        %p985 = pneg %p473
        %p986 = pneg %p470
        %p987 = pneg %p494
        %p988 = pneg %p491
        %p989 = pneg %p515
        %p990 = pneg %p512
        %p991 = pneg %p536
        %p992 = pneg %p533
        %p993 = pneg %p557
        %p994 = pneg %p554
        %p995 = pneg %p578
        %p996 = pneg %p575
        %p997 = pneg %p599
        %p998 = pneg %p596
        %p999 = pneg %p620
        %p1000 = pneg %p617
        %p1001 = pneg %p641
        %p1002 = pneg %p638
        %p1003 = pneg %p662
        %p1004 = pneg %p659
        %p1005 = pneg %p683
        %p1006 = pneg %p680
        %p1007 = pneg %p704
        %p1008 = pneg %p701
        %p1009 = pneg %p725
        %p1010 = pneg %p722
        %p1011 = pneg %p746
        %p1012 = pneg %p743
        %p1013 = pneg %p772
        %p1014 = pneg %p769
        %p1015 = scmp.lt.s32.totalorder %s75, 1
        %s1016 = scalar_select %p1015, %s75, 1
        %s1017 = smul.addr %s1016, 2
        %s1018 = smul.addr %s1017, 8
        %s1019 = scalar_lea.vmem %s63, %s1018
        %p1020 = scmp.lt.s32.totalorder %s75, 1
        %s1021 = scalar_select %p1020, %s75, 1
        %s1022 = smul.addr %s1021, 3
        %s1023 = smul.addr %s1022, 8
        %s1024 = scalar_lea.vmem %s1, %s1023
        %p1025 = scmp.lt.s32.totalorder %s75, 1
        %s1026 = scalar_select %p1025, %s75, 1
        %s1027 = smul.addr %s1026, 3
        %s1028 = smul.addr %s1027, 8
        %s1029 = scalar_lea.vmem %s3, %s1028
        %p1030 = scmp.lt.s32.totalorder %s75, 1
        %s1031 = scalar_select %p1030, %s75, 1
        %s1032 = smul.addr %s1031, 3
        %s1033 = smul.addr %s1032, 8
        %s1034 = scalar_lea.vmem %s5, %s1033
        %p1035 = scmp.lt.s32.totalorder %s75, 1
        %s1036 = scalar_select %p1035, %s75, 1
        %s1037 = smul.addr %s1036, 2
        %s1038 = smul.addr %s1037, 8
        %s1039 = scalar_lea.vmem %s7, %s1038
        %p1040 = scmp.lt.s32.totalorder %s75, 1
        %s1041 = scalar_select %p1040, %s75, 1
        %s1042 = smul.addr %s1041, 4
        %s1043 = scalar_lea.vmem %s9, %s1042
        %p1044 = scmp.lt.s32.totalorder %s75, 1
        %s1045 = scalar_select %p1044, %s75, 1
        %s1046 = smul.addr %s1045, 2
        %s1047 = smul.addr %s1046, 8
        %s1048 = scalar_lea.vmem %s63, %s1047
        %v1049 = vld [vmem:[%s1024] sm:$0xff]
        %v1050 = vld [vmem:[%s1024 + $0x8] sm:$0xff]
        %v1051 = vld [vmem:[%s1024 + $0x10] sm:$0xff]
        %v1052 = vld [vmem:[%s11] sm:$0xff]
        %v1053 = vld [vmem:[%s11 + $0x8] sm:$0xff]
        %v1054 = vld [vmem:[#allocation2] sm:$0x1]
        %v1056 = vlaneseq
        %v1057 = vshrl.u32 %v1056, 7
        %v1058 = vsub.s32 0, %v1057
        %v1059 = vrot.slane %v1054, %v1058
        %vm1061 = vcmask 130048
        %v1063 = vsel %vm1061, %v1049, 0
        %v1066 = vsel %vm1061, %v1050, 0
        %v1069 = vsel %vm1061, %v1051, 0
        %1071 = vmatprep.subr.mxu0 0.0
        %1072 = vmatpush1.msra.mxu0 %v1052
        %1073 = vmatprep.subr.mxu0 0.0
        %1074 = vmatpush1.msra.mxu0 %v1053
        %1075 = vmatprep.subr.mxu0 0.0
        %1076 = vmatpush1.msra.mxu0 0.0
        %1077 = vmatprep.subr.mxu0 0.0
        %1078 = vmatpush1.msra.mxu0 0.0
        %1079 = vmatprep.subr.mxu0 0.0
        %1080 = vmatpush1.msra.mxu0 0.0
        %1081 = vmatprep.subr.mxu0 0.0
        %1082 = vmatpush1.msra.mxu0 0.0
        %1083 = vmatprep.subr.mxu0 0.0
        %1084 = vmatpush1.msra.mxu0 0.0
        %1085 = vmatprep.subr.mxu0 0.0
        %1086 = vmatpush1.msra.mxu0 0.0
        %1087 = vmatprep.subr.mxu0 0.0
        %1088 = vmatpush1.msra.mxu0 0.0
        %1089 = vmatprep.subr.mxu0 0.0
        %1090 = vmatpush1.msra.mxu0 0.0
        %1091 = vmatprep.subr.mxu0 0.0
        %1092 = vmatpush1.msra.mxu0 0.0
        %1093 = vmatprep.subr.mxu0 0.0
        %1094 = vmatpush1.msra.mxu0 0.0
        %1095 = vmatprep.subr.mxu0 0.0
        %1096 = vmatpush1.msra.mxu0 0.0
        %1097 = vmatprep.subr.mxu0 0.0
        %1098 = vmatpush1.msra.mxu0 0.0
        %1099 = vmatprep.subr.mxu0 0.0
        %1100 = vmatpush1.msra.mxu0 0.0
        %1101 = vmatprep.subr.mxu0 0.0
        %1102 = vmatpush1.msra.mxu0 0.0
        %1103 = vmatprep.subr.mxu0 0.0
        %1104 = vmatpush1.msra.mxu0 0.0
        %1105 = vmatprep.subr.mxu0 0.0
        %1106 = vmatpush1.msra.mxu0 0.0
        %1107 = vmatprep.subr.mxu0 0.0
        %1108 = vmatpush1.msra.mxu0 0.0
        %1109 = vmatprep.subr.mxu0 0.0
        %1110 = vmatpush1.msra.mxu0 0.0
        %1111 = vmatprep.subr.mxu0 0.0
        %1112 = vmatpush1.msra.mxu0 0.0
        %1113 = vmatprep.subr.mxu0 0.0
        %1114 = vmatpush1.msra.mxu0 0.0
        %1115 = vmatprep.subr.mxu0 0.0
        %1116 = vmatpush1.msra.mxu0 0.0
        %1117 = vmatprep.subr.mxu0 0.0
        %1118 = vmatpush1.msra.mxu0 0.0
        %1119 = vmatprep.subr.mxu0 0.0
        %1120 = vmatpush1.msra.mxu0 0.0
        %1121 = vmatprep.subr.mxu0 0.0
        %1122 = vmatpush1.msra.mxu0 0.0
        %1123 = vmatprep.subr.mxu0 0.0
        %1124 = vmatpush1.msra.mxu0 0.0
        %1125 = vmatprep.subr.mxu0 0.0
        %1126 = vmatpush1.msra.mxu0 0.0
        %1127 = vmatprep.subr.mxu0 0.0
        %1128 = vmatpush1.msra.mxu0 0.0
        %1129 = vmatprep.subr.mxu0 0.0
        %1130 = vmatpush1.msra.mxu0 0.0
        %1131 = vmatprep.subr.mxu0 0.0
        %1132 = vmatpush1.msra.mxu0 0.0
        %1133 = vmatprep.subr.mxu0 0.0
        %1134 = vmatpush1.msra.mxu0 0.0
        %1135 = vmatprep.mubr.f32.mxu0 0.0
        %1136 = vmatmul.mubr.f32.gmra.mrb[0].mxu0 %v1063
        %v1137 = vpop.f32.mrb[0].mxu0
        %v1138 = vadd.f32 %v1059, %v1137
        %v1139 = vpop.f32.mrb[0].mxu0
        %1140 = vmatprep.mubr.f32.mxu0 0.0
        %1141 = vmatmul.mubr.f32.gmra.mrb[0].mxu0 %v1066
        %v1142 = vpop.f32.mrb[0].mxu0
        %v1143 = vadd.f32 %v1059, %v1142
        %v1144 = vpop.f32.mrb[0].mxu0
        %1145 = vmatprep.mubr.f32.mxu0 0.0
        %1146 = vmatmul.mubr.f32.gmra.mrb[0].mxu0 %v1069
        %v1147 = vpop.f32.mrb[0].mxu0
        %v1148 = vadd.f32 %v1059, %v1147
        %v1149 = vpop.f32.mrb[0].mxu0
        %1150 = vdwg.mxu0
        %v1151 = vmax.f32 %v1138, 0.0
        %v1152 = vmax.f32 %v1143, 0.0
        %v1153 = vmax.f32 %v1148, 0.0
        %v1154 = vld [vmem:[%s1029] sm:$0xff]
        %v1155 = vld [vmem:[%s1029 + $0x8] sm:$0xff]
        %v1156 = vld [vmem:[%s1029 + $0x10] sm:$0xff]
        %v1157 = vmul.f32 %v1154, -1e+09
        %v1158 = vmul.f32 %v1155, -1e+09
        %v1159 = vmul.f32 %v1156, -1e+09
        %v1160 = vld [vmem:[%s15] sm:$0xff]
        %v1161 = vld [vmem:[%s15 + $0x8] sm:$0xff]
        %v1162 = vld [vmem:[%s15 + $0x10] sm:$0xff]
        %v1163 = vld [vmem:[%s15 + $0x18] sm:$0xff]
        %v1164 = vld [vmem:[%s17] sm:$0x1]
        %v1166 = vlaneseq
        %v1167 = vshrl.u32 %v1166, 7
        %v1168 = vsub.s32 0, %v1167
        %v1169 = vrot.slane %v1164, %v1168
        %vm1171 = vcmask 261120
        %v1173 = vsel %vm1171, %v1151, 0
        %v1176 = vsel %vm1171, %v1152, 0
        %v1179 = vsel %vm1171, %v1153, 0
        %1181 = vmatprep.subr.mxu0 0.0
        %1182 = vmatpush1.msra.mxu0 %v1160
        %1183 = vmatprep.subr.mxu0 0.0
        %1184 = vmatpush1.msra.mxu0 %v1161
        %1185 = vmatprep.subr.mxu0 0.0
        %1186 = vmatpush1.msra.mxu0 %v1162
        %1187 = vmatprep.subr.mxu0 0.0
        %1188 = vmatpush1.msra.mxu0 %v1163
        %1189 = vmatprep.subr.mxu0 0.0
        %1190 = vmatpush1.msra.mxu0 0.0
        %1191 = vmatprep.subr.mxu0 0.0
        %1192 = vmatpush1.msra.mxu0 0.0
        %1193 = vmatprep.subr.mxu0 0.0
        %1194 = vmatpush1.msra.mxu0 0.0
        %1195 = vmatprep.subr.mxu0 0.0
        %1196 = vmatpush1.msra.mxu0 0.0
        %1197 = vmatprep.subr.mxu0 0.0
        %1198 = vmatpush1.msra.mxu0 0.0
        %1199 = vmatprep.subr.mxu0 0.0
        %1200 = vmatpush1.msra.mxu0 0.0
        %1201 = vmatprep.subr.mxu0 0.0
        %1202 = vmatpush1.msra.mxu0 0.0
        %1203 = vmatprep.subr.mxu0 0.0
        %1204 = vmatpush1.msra.mxu0 0.0
        %1205 = vmatprep.subr.mxu0 0.0
        %1206 = vmatpush1.msra.mxu0 0.0
        %1207 = vmatprep.subr.mxu0 0.0
        %1208 = vmatpush1.msra.mxu0 0.0
        %1209 = vmatprep.subr.mxu0 0.0
        %1210 = vmatpush1.msra.mxu0 0.0
        %1211 = vmatprep.subr.mxu0 0.0
        %1212 = vmatpush1.msra.mxu0 0.0
        %1213 = vmatprep.subr.mxu0 0.0
        %1214 = vmatpush1.msra.mxu0 0.0
        %1215 = vmatprep.subr.mxu0 0.0
        %1216 = vmatpush1.msra.mxu0 0.0
        %1217 = vmatprep.subr.mxu0 0.0
        %1218 = vmatpush1.msra.mxu0 0.0
        %1219 = vmatprep.subr.mxu0 0.0
        %1220 = vmatpush1.msra.mxu0 0.0
        %1221 = vmatprep.subr.mxu0 0.0
        %1222 = vmatpush1.msra.mxu0 0.0
        %1223 = vmatprep.subr.mxu0 0.0
        %1224 = vmatpush1.msra.mxu0 0.0
        %1225 = vmatprep.subr.mxu0 0.0
        %1226 = vmatpush1.msra.mxu0 0.0
        %1227 = vmatprep.subr.mxu0 0.0
        %1228 = vmatpush1.msra.mxu0 0.0
        %1229 = vmatprep.subr.mxu0 0.0
        %1230 = vmatpush1.msra.mxu0 0.0
        %1231 = vmatprep.subr.mxu0 0.0
        %1232 = vmatpush1.msra.mxu0 0.0
        %1233 = vmatprep.subr.mxu0 0.0
        %1234 = vmatpush1.msra.mxu0 0.0
        %1235 = vmatprep.subr.mxu0 0.0
        %1236 = vmatpush1.msra.mxu0 0.0
        %1237 = vmatprep.subr.mxu0 0.0
        %1238 = vmatpush1.msra.mxu0 0.0
        %1239 = vmatprep.subr.mxu0 0.0
        %1240 = vmatpush1.msra.mxu0 0.0
        %1241 = vmatprep.subr.mxu0 0.0
        %1242 = vmatpush1.msra.mxu0 0.0
        %1243 = vmatprep.subr.mxu0 0.0
        %1244 = vmatpush1.msra.mxu0 0.0
        %1245 = vmatprep.mubr.f32.mxu0 0.0
        %1246 = vmatmul.mubr.f32.gmra.mrb[0].mxu0 %v1173
        %v1247 = vpop.f32.mrb[0].mxu0
        %v1248 = vadd.f32 %v1169, %v1247
        %v1249 = vpop.f32.mrb[0].mxu0
        %1250 = vmatprep.mubr.f32.mxu0 0.0
        %1251 = vmatmul.mubr.f32.gmra.mrb[0].mxu0 %v1176
        %v1252 = vpop.f32.mrb[0].mxu0
        %v1253 = vadd.f32 %v1169, %v1252
        %v1254 = vpop.f32.mrb[0].mxu0
        %1255 = vmatprep.mubr.f32.mxu0 0.0
        %1256 = vmatmul.mubr.f32.gmra.mrb[0].mxu0 %v1179
        %v1257 = vpop.f32.mrb[0].mxu0
        %v1258 = vadd.f32 %v1169, %v1257
        %v1259 = vpop.f32.mrb[0].mxu0
        %1260 = vdwg.mxu0
        %v1261 = vld [vmem:[%s19] sm:$0xff]
        %v1262 = vld [vmem:[%s19 + $0x8] sm:$0xff]
        %v1263 = vld [vmem:[%s19 + $0x10] sm:$0xff]
        %v1264 = vld [vmem:[%s19 + $0x18] sm:$0xff]
        %v1265 = vld [vmem:[%s21] sm:$0x1]
        %v1267 = vlaneseq
        %v1268 = vshrl.u32 %v1267, 7
        %v1269 = vsub.s32 0, %v1268
        %v1270 = vrot.slane %v1265, %v1269
        %1272 = vmatprep.subr.mxu0 0.0
        %1273 = vmatpush1.msra.mxu0 %v1261
        %1274 = vmatprep.subr.mxu0 0.0
        %1275 = vmatpush1.msra.mxu0 %v1262
        %1276 = vmatprep.subr.mxu0 0.0
        %1277 = vmatpush1.msra.mxu0 %v1263
        %1278 = vmatprep.subr.mxu0 0.0
        %1279 = vmatpush1.msra.mxu0 %v1264
        %1280 = vmatprep.subr.mxu0 0.0
        %1281 = vmatpush1.msra.mxu0 0.0
        %1282 = vmatprep.subr.mxu0 0.0
        %1283 = vmatpush1.msra.mxu0 0.0
        %1284 = vmatprep.subr.mxu0 0.0
        %1285 = vmatpush1.msra.mxu0 0.0
        %1286 = vmatprep.subr.mxu0 0.0
        %1287 = vmatpush1.msra.mxu0 0.0
        %1288 = vmatprep.subr.mxu0 0.0
        %1289 = vmatpush1.msra.mxu0 0.0
        %1290 = vmatprep.subr.mxu0 0.0
        %1291 = vmatpush1.msra.mxu0 0.0
        %1292 = vmatprep.subr.mxu0 0.0
        %1293 = vmatpush1.msra.mxu0 0.0
        %1294 = vmatprep.subr.mxu0 0.0
        %1295 = vmatpush1.msra.mxu0 0.0
        %1296 = vmatprep.subr.mxu0 0.0
        %1297 = vmatpush1.msra.mxu0 0.0
        %1298 = vmatprep.subr.mxu0 0.0
        %1299 = vmatpush1.msra.mxu0 0.0
        %1300 = vmatprep.subr.mxu0 0.0
        %1301 = vmatpush1.msra.mxu0 0.0
        %1302 = vmatprep.subr.mxu0 0.0
        %1303 = vmatpush1.msra.mxu0 0.0
        %1304 = vmatprep.subr.mxu0 0.0
        %1305 = vmatpush1.msra.mxu0 0.0
        %1306 = vmatprep.subr.mxu0 0.0
        %1307 = vmatpush1.msra.mxu0 0.0
        %1308 = vmatprep.subr.mxu0 0.0
        %1309 = vmatpush1.msra.mxu0 0.0
        %1310 = vmatprep.subr.mxu0 0.0
        %1311 = vmatpush1.msra.mxu0 0.0
        %1312 = vmatprep.subr.mxu0 0.0
        %1313 = vmatpush1.msra.mxu0 0.0
        %1314 = vmatprep.subr.mxu0 0.0
        %1315 = vmatpush1.msra.mxu0 0.0
        %1316 = vmatprep.subr.mxu0 0.0
        %1317 = vmatpush1.msra.mxu0 0.0
        %1318 = vmatprep.subr.mxu0 0.0
        %1319 = vmatpush1.msra.mxu0 0.0
        %1320 = vmatprep.subr.mxu0 0.0
        %1321 = vmatpush1.msra.mxu0 0.0
        %1322 = vmatprep.subr.mxu0 0.0
        %1323 = vmatpush1.msra.mxu0 0.0
        %1324 = vmatprep.subr.mxu0 0.0
        %1325 = vmatpush1.msra.mxu0 0.0
        %1326 = vmatprep.subr.mxu0 0.0
        %1327 = vmatpush1.msra.mxu0 0.0
        %1328 = vmatprep.subr.mxu0 0.0
        %1329 = vmatpush1.msra.mxu0 0.0
        %1330 = vmatprep.subr.mxu0 0.0
        %1331 = vmatpush1.msra.mxu0 0.0
        %1332 = vmatprep.subr.mxu0 0.0
        %1333 = vmatpush1.msra.mxu0 0.0
        %1334 = vmatprep.subr.mxu0 0.0
        %1335 = vmatpush1.msra.mxu0 0.0
        %1336 = vmatprep.mubr.f32.mxu0 0.0
        %1337 = vmatmul.mubr.f32.gmra.mrb[0].mxu0 %v1173
        %v1338 = vpop.f32.mrb[0].mxu0
        %v1339 = vadd.f32 %v1270, %v1338
        %v1340 = vpop.f32.mrb[0].mxu0
        %1341 = vmatprep.mubr.f32.mxu0 0.0
        %1342 = vmatmul.mubr.f32.gmra.mrb[0].mxu0 %v1176
        %v1343 = vpop.f32.mrb[0].mxu0
        %v1344 = vadd.f32 %v1270, %v1343
        %v1345 = vpop.f32.mrb[0].mxu0
        %1346 = vmatprep.mubr.f32.mxu0 0.0
        %1347 = vmatmul.mubr.f32.gmra.mrb[0].mxu0 %v1179
        %v1348 = vpop.f32.mrb[0].mxu0
        %v1349 = vadd.f32 %v1270, %v1348
        %v1350 = vpop.f32.mrb[0].mxu0
        %1351 = vdwg.mxu0
        %v1352 = vld [vmem:[%s23] sm:$0xff]
        %v1353 = vld [vmem:[%s23 + $0x8] sm:$0xff]
        %v1354 = vld [vmem:[%s23 + $0x10] sm:$0xff]
        %v1355 = vld [vmem:[%s23 + $0x18] sm:$0xff]
        %v1356 = vld [vmem:[%s25] sm:$0x1]
        %v1358 = vlaneseq
        %v1359 = vshrl.u32 %v1358, 7
        %v1360 = vsub.s32 0, %v1359
        %v1361 = vrot.slane %v1356, %v1360
        %1363 = vmatprep.subr.mxu0 0.0
        %1364 = vmatpush1.msra.mxu0 %v1352
        %1365 = vmatprep.subr.mxu0 0.0
        %1366 = vmatpush1.msra.mxu0 %v1353
        %1367 = vmatprep.subr.mxu0 0.0
        %1368 = vmatpush1.msra.mxu0 %v1354
        %1369 = vmatprep.subr.mxu0 0.0
        %1370 = vmatpush1.msra.mxu0 %v1355
        %1371 = vmatprep.subr.mxu0 0.0
        %1372 = vmatpush1.msra.mxu0 0.0
        %1373 = vmatprep.subr.mxu0 0.0
        %1374 = vmatpush1.msra.mxu0 0.0
        %1375 = vmatprep.subr.mxu0 0.0
        %1376 = vmatpush1.msra.mxu0 0.0
        %1377 = vmatprep.subr.mxu0 0.0
        %1378 = vmatpush1.msra.mxu0 0.0
        %1379 = vmatprep.subr.mxu0 0.0
        %1380 = vmatpush1.msra.mxu0 0.0
        %1381 = vmatprep.subr.mxu0 0.0
        %1382 = vmatpush1.msra.mxu0 0.0
        %1383 = vmatprep.subr.mxu0 0.0
        %1384 = vmatpush1.msra.mxu0 0.0
        %1385 = vmatprep.subr.mxu0 0.0
        %1386 = vmatpush1.msra.mxu0 0.0
        %1387 = vmatprep.subr.mxu0 0.0
        %1388 = vmatpush1.msra.mxu0 0.0
        %1389 = vmatprep.subr.mxu0 0.0
        %1390 = vmatpush1.msra.mxu0 0.0
        %1391 = vmatprep.subr.mxu0 0.0
        %1392 = vmatpush1.msra.mxu0 0.0
        %1393 = vmatprep.subr.mxu0 0.0
        %1394 = vmatpush1.msra.mxu0 0.0
        %1395 = vmatprep.subr.mxu0 0.0
        %1396 = vmatpush1.msra.mxu0 0.0
        %1397 = vmatprep.subr.mxu0 0.0
        %1398 = vmatpush1.msra.mxu0 0.0
        %1399 = vmatprep.subr.mxu0 0.0
        %1400 = vmatpush1.msra.mxu0 0.0
        %1401 = vmatprep.subr.mxu0 0.0
        %1402 = vmatpush1.msra.mxu0 0.0
        %1403 = vmatprep.subr.mxu0 0.0
        %1404 = vmatpush1.msra.mxu0 0.0
        %1405 = vmatprep.subr.mxu0 0.0
        %1406 = vmatpush1.msra.mxu0 0.0
        %1407 = vmatprep.subr.mxu0 0.0
        %1408 = vmatpush1.msra.mxu0 0.0
        %1409 = vmatprep.subr.mxu0 0.0
        %1410 = vmatpush1.msra.mxu0 0.0
        %1411 = vmatprep.subr.mxu0 0.0
        %1412 = vmatpush1.msra.mxu0 0.0
        %1413 = vmatprep.subr.mxu0 0.0
        %1414 = vmatpush1.msra.mxu0 0.0
        %1415 = vmatprep.subr.mxu0 0.0
        %1416 = vmatpush1.msra.mxu0 0.0
        %1417 = vmatprep.subr.mxu0 0.0
        %1418 = vmatpush1.msra.mxu0 0.0
        %1419 = vmatprep.subr.mxu0 0.0
        %1420 = vmatpush1.msra.mxu0 0.0
        %1421 = vmatprep.subr.mxu0 0.0
        %1422 = vmatpush1.msra.mxu0 0.0
        %1423 = vmatprep.subr.mxu0 0.0
        %1424 = vmatpush1.msra.mxu0 0.0
        %1425 = vmatprep.subr.mxu0 0.0
        %1426 = vmatpush1.msra.mxu0 0.0
        %1427 = vmatprep.mubr.f32.mxu0 0.0
        %1428 = vmatmul.mubr.f32.gmra.mrb[0].mxu0 %v1173
        %v1429 = vpop.f32.mrb[0].mxu0
        %v1430 = vadd.f32 %v1361, %v1429
        %v1431 = vpop.f32.mrb[0].mxu0
        %1432 = vmatprep.mubr.f32.mxu0 0.0
        %1433 = vmatmul.mubr.f32.gmra.mrb[0].mxu0 %v1176
        %v1434 = vpop.f32.mrb[0].mxu0
        %v1435 = vadd.f32 %v1361, %v1434
        %v1436 = vpop.f32.mrb[0].mxu0
        %1437 = vmatprep.mubr.f32.mxu0 0.0
        %1438 = vmatmul.mubr.f32.gmra.mrb[0].mxu0 %v1179
        %v1439 = vpop.f32.mrb[0].mxu0
        %v1440 = vadd.f32 %v1361, %v1439
        %v1441 = vpop.f32.mrb[0].mxu0
        %1442 = vdwg.mxu0
        %vm1443 = vcmask 64512
        %v1445 = vsel %vm1443, %v1248, 0
        %v1448 = vsel %vm1443, %v1339, 0
        %1450 = vmatprep.subr.mxu0 0.0
        %1451 = vmatpush1.xpose.msra.mxu0 %v1448
        %1452 = vmatprep.subr.mxu0 0.0
        %1453 = vmatpush1.xpose.msra.mxu0 0.0
        %1454 = vmatprep.subr.mxu0 0.0
        %1455 = vmatpush1.xpose.msra.mxu0 0.0
        %1456 = vmatprep.subr.mxu0 0.0
        %1457 = vmatpush1.xpose.msra.mxu0 0.0
        %1458 = vmatprep.subr.mxu0 0.0
        %1459 = vmatpush1.xpose.msra.mxu0 0.0
        %1460 = vmatprep.subr.mxu0 0.0
        %1461 = vmatpush1.xpose.msra.mxu0 0.0
        %1462 = vmatprep.subr.mxu0 0.0
        %1463 = vmatpush1.xpose.msra.mxu0 0.0
        %1464 = vmatprep.subr.mxu0 0.0
        %1465 = vmatpush1.xpose.msra.mxu0 0.0
        %1466 = vmatprep.subr.mxu0 0.0
        %1467 = vmatpush1.xpose.msra.mxu0 0.0
        %1468 = vmatprep.subr.mxu0 0.0
        %1469 = vmatpush1.xpose.msra.mxu0 0.0
        %1470 = vmatprep.subr.mxu0 0.0
        %1471 = vmatpush1.xpose.msra.mxu0 0.0
        %1472 = vmatprep.subr.mxu0 0.0
        %1473 = vmatpush1.xpose.msra.mxu0 0.0
        %1474 = vmatprep.subr.mxu0 0.0
        %1475 = vmatpush1.xpose.msra.mxu0 0.0
        %1476 = vmatprep.subr.mxu0 0.0
        %1477 = vmatpush1.xpose.msra.mxu0 0.0
        %1478 = vmatprep.subr.mxu0 0.0
        %1479 = vmatpush1.xpose.msra.mxu0 0.0
        %1480 = vmatprep.subr.mxu0 0.0
        %1481 = vmatpush1.xpose.msra.mxu0 0.0
        %1482 = vmatprep.subr.mxu0 0.0
        %1483 = vmatpush1.xpose.msra.mxu0 0.0
        %1484 = vmatprep.subr.mxu0 0.0
        %1485 = vmatpush1.xpose.msra.mxu0 0.0
        %1486 = vmatprep.subr.mxu0 0.0
        %1487 = vmatpush1.xpose.msra.mxu0 0.0
        %1488 = vmatprep.subr.mxu0 0.0
        %1489 = vmatpush1.xpose.msra.mxu0 0.0
        %1490 = vmatprep.subr.mxu0 0.0
        %1491 = vmatpush1.xpose.msra.mxu0 0.0
        %1492 = vmatprep.subr.mxu0 0.0
        %1493 = vmatpush1.xpose.msra.mxu0 0.0
        %1494 = vmatprep.subr.mxu0 0.0
        %1495 = vmatpush1.xpose.msra.mxu0 0.0
        %1496 = vmatprep.subr.mxu0 0.0
        %1497 = vmatpush1.xpose.msra.mxu0 0.0
        %1498 = vmatprep.subr.mxu0 0.0
        %1499 = vmatpush1.xpose.msra.mxu0 0.0
        %1500 = vmatprep.subr.mxu0 0.0
        %1501 = vmatpush1.xpose.msra.mxu0 0.0
        %1502 = vmatprep.subr.mxu0 0.0
        %1503 = vmatpush1.xpose.msra.mxu0 0.0
        %1504 = vmatprep.subr.mxu0 0.0
        %1505 = vmatpush1.xpose.msra.mxu0 0.0
        %1506 = vmatprep.subr.mxu0 0.0
        %1507 = vmatpush1.xpose.msra.mxu0 0.0
        %1508 = vmatprep.subr.mxu0 0.0
        %1509 = vmatpush1.xpose.msra.mxu0 0.0
        %1510 = vmatprep.subr.mxu0 0.0
        %1511 = vmatpush1.xpose.msra.mxu0 0.0
        %1512 = vmatprep.subr.mxu0 0.0
        %1513 = vmatpush1.xpose.msra.mxu0 0.0
        %1514 = vmatprep.mubr.f32.mxu0 0.0
        %1515 = vmatmul.mubr.f32.gmra.mrb[0].mxu0 %v1445
        %v1516 = vpop.f32.mrb[0].mxu0
        %v1517 = vadd.f32 0.0, %v1516
        %v1518 = vpop.f32.mrb[0].mxu0
        %1519 = vdwg.mxu0
        %v1521 = vsel %vm1443, %v1253, 0
        %v1524 = vsel %vm1443, %v1344, 0
        %1526 = vmatprep.subr.mxu0 0.0
        %1527 = vmatpush1.xpose.msra.mxu0 %v1524
        %1528 = vmatprep.subr.mxu0 0.0
        %1529 = vmatpush1.xpose.msra.mxu0 0.0
        %1530 = vmatprep.subr.mxu0 0.0
        %1531 = vmatpush1.xpose.msra.mxu0 0.0
        %1532 = vmatprep.subr.mxu0 0.0
        %1533 = vmatpush1.xpose.msra.mxu0 0.0
        %1534 = vmatprep.subr.mxu0 0.0
        %1535 = vmatpush1.xpose.msra.mxu0 0.0
        %1536 = vmatprep.subr.mxu0 0.0
        %1537 = vmatpush1.xpose.msra.mxu0 0.0
        %1538 = vmatprep.subr.mxu0 0.0
        %1539 = vmatpush1.xpose.msra.mxu0 0.0
        %1540 = vmatprep.subr.mxu0 0.0
        %1541 = vmatpush1.xpose.msra.mxu0 0.0
        %1542 = vmatprep.subr.mxu0 0.0
        %1543 = vmatpush1.xpose.msra.mxu0 0.0
        %1544 = vmatprep.subr.mxu0 0.0
        %1545 = vmatpush1.xpose.msra.mxu0 0.0
        %1546 = vmatprep.subr.mxu0 0.0
        %1547 = vmatpush1.xpose.msra.mxu0 0.0
        %1548 = vmatprep.subr.mxu0 0.0
        %1549 = vmatpush1.xpose.msra.mxu0 0.0
        %1550 = vmatprep.subr.mxu0 0.0
        %1551 = vmatpush1.xpose.msra.mxu0 0.0
        %1552 = vmatprep.subr.mxu0 0.0
        %1553 = vmatpush1.xpose.msra.mxu0 0.0
        %1554 = vmatprep.subr.mxu0 0.0
        %1555 = vmatpush1.xpose.msra.mxu0 0.0
        %1556 = vmatprep.subr.mxu0 0.0
        %1557 = vmatpush1.xpose.msra.mxu0 0.0
        %1558 = vmatprep.subr.mxu0 0.0
        %1559 = vmatpush1.xpose.msra.mxu0 0.0
        %1560 = vmatprep.subr.mxu0 0.0
        %1561 = vmatpush1.xpose.msra.mxu0 0.0
        %1562 = vmatprep.subr.mxu0 0.0
        %1563 = vmatpush1.xpose.msra.mxu0 0.0
        %1564 = vmatprep.subr.mxu0 0.0
        %1565 = vmatpush1.xpose.msra.mxu0 0.0
        %1566 = vmatprep.subr.mxu0 0.0
        %1567 = vmatpush1.xpose.msra.mxu0 0.0
        %1568 = vmatprep.subr.mxu0 0.0
        %1569 = vmatpush1.xpose.msra.mxu0 0.0
        %1570 = vmatprep.subr.mxu0 0.0
        %1571 = vmatpush1.xpose.msra.mxu0 0.0
        %1572 = vmatprep.subr.mxu0 0.0
        %1573 = vmatpush1.xpose.msra.mxu0 0.0
        %1574 = vmatprep.subr.mxu0 0.0
        %1575 = vmatpush1.xpose.msra.mxu0 0.0
        %1576 = vmatprep.subr.mxu0 0.0
        %1577 = vmatpush1.xpose.msra.mxu0 0.0
        %1578 = vmatprep.subr.mxu0 0.0
        %1579 = vmatpush1.xpose.msra.mxu0 0.0
        %1580 = vmatprep.subr.mxu0 0.0
        %1581 = vmatpush1.xpose.msra.mxu0 0.0
        %1582 = vmatprep.subr.mxu0 0.0
        %1583 = vmatpush1.xpose.msra.mxu0 0.0
        %1584 = vmatprep.subr.mxu0 0.0
        %1585 = vmatpush1.xpose.msra.mxu0 0.0
        %1586 = vmatprep.subr.mxu0 0.0
        %1587 = vmatpush1.xpose.msra.mxu0 0.0
        %1588 = vmatprep.subr.mxu0 0.0
        %1589 = vmatpush1.xpose.msra.mxu0 0.0
        %1590 = vmatprep.mubr.f32.mxu0 0.0
        %1591 = vmatmul.mubr.f32.gmra.mrb[0].mxu0 %v1521
        %v1592 = vpop.f32.mrb[0].mxu0
        %v1593 = vadd.f32 0.0, %v1592
        %v1594 = vpop.f32.mrb[0].mxu0
        %1595 = vdwg.mxu0
        %v1597 = vsel %vm1443, %v1258, 0
        %v1600 = vsel %vm1443, %v1349, 0
        %1602 = vmatprep.subr.mxu0 0.0
        %1603 = vmatpush1.xpose.msra.mxu0 %v1600
        %1604 = vmatprep.subr.mxu0 0.0
        %1605 = vmatpush1.xpose.msra.mxu0 0.0
        %1606 = vmatprep.subr.mxu0 0.0
        %1607 = vmatpush1.xpose.msra.mxu0 0.0
        %1608 = vmatprep.subr.mxu0 0.0
        %1609 = vmatpush1.xpose.msra.mxu0 0.0
        %1610 = vmatprep.subr.mxu0 0.0
        %1611 = vmatpush1.xpose.msra.mxu0 0.0
        %1612 = vmatprep.subr.mxu0 0.0
        %1613 = vmatpush1.xpose.msra.mxu0 0.0
        %1614 = vmatprep.subr.mxu0 0.0
        %1615 = vmatpush1.xpose.msra.mxu0 0.0
        %1616 = vmatprep.subr.mxu0 0.0
        %1617 = vmatpush1.xpose.msra.mxu0 0.0
        %1618 = vmatprep.subr.mxu0 0.0
        %1619 = vmatpush1.xpose.msra.mxu0 0.0
        %1620 = vmatprep.subr.mxu0 0.0
        %1621 = vmatpush1.xpose.msra.mxu0 0.0
        %1622 = vmatprep.subr.mxu0 0.0
        %1623 = vmatpush1.xpose.msra.mxu0 0.0
        %1624 = vmatprep.subr.mxu0 0.0
        %1625 = vmatpush1.xpose.msra.mxu0 0.0
        %1626 = vmatprep.subr.mxu0 0.0
        %1627 = vmatpush1.xpose.msra.mxu0 0.0
        %1628 = vmatprep.subr.mxu0 0.0
        %1629 = vmatpush1.xpose.msra.mxu0 0.0
        %1630 = vmatprep.subr.mxu0 0.0
        %1631 = vmatpush1.xpose.msra.mxu0 0.0
        %1632 = vmatprep.subr.mxu0 0.0
        %1633 = vmatpush1.xpose.msra.mxu0 0.0
        %1634 = vmatprep.subr.mxu0 0.0
        %1635 = vmatpush1.xpose.msra.mxu0 0.0
        %1636 = vmatprep.subr.mxu0 0.0
        %1637 = vmatpush1.xpose.msra.mxu0 0.0
        %1638 = vmatprep.subr.mxu0 0.0
        %1639 = vmatpush1.xpose.msra.mxu0 0.0
        %1640 = vmatprep.subr.mxu0 0.0
        %1641 = vmatpush1.xpose.msra.mxu0 0.0
        %1642 = vmatprep.subr.mxu0 0.0
        %1643 = vmatpush1.xpose.msra.mxu0 0.0
        %1644 = vmatprep.subr.mxu0 0.0
        %1645 = vmatpush1.xpose.msra.mxu0 0.0
        %1646 = vmatprep.subr.mxu0 0.0
        %1647 = vmatpush1.xpose.msra.mxu0 0.0
        %1648 = vmatprep.subr.mxu0 0.0
        %1649 = vmatpush1.xpose.msra.mxu0 0.0
        %1650 = vmatprep.subr.mxu0 0.0
        %1651 = vmatpush1.xpose.msra.mxu0 0.0
        %1652 = vmatprep.subr.mxu0 0.0
        %1653 = vmatpush1.xpose.msra.mxu0 0.0
        %1654 = vmatprep.subr.mxu0 0.0
        %1655 = vmatpush1.xpose.msra.mxu0 0.0
        %1656 = vmatprep.subr.mxu0 0.0
        %1657 = vmatpush1.xpose.msra.mxu0 0.0
        %1658 = vmatprep.subr.mxu0 0.0
        %1659 = vmatpush1.xpose.msra.mxu0 0.0
        %1660 = vmatprep.subr.mxu0 0.0
        %1661 = vmatpush1.xpose.msra.mxu0 0.0
        %1662 = vmatprep.subr.mxu0 0.0
        %1663 = vmatpush1.xpose.msra.mxu0 0.0
        %1664 = vmatprep.subr.mxu0 0.0
        %1665 = vmatpush1.xpose.msra.mxu0 0.0
        %1666 = vmatprep.mubr.f32.mxu0 0.0
        %1667 = vmatmul.mubr.f32.gmra.mrb[0].mxu0 %v1597
        %v1668 = vpop.f32.mrb[0].mxu0
        %v1669 = vadd.f32 0.0, %v1668
        %v1670 = vpop.f32.mrb[0].mxu0
        %1671 = vdwg.mxu0
        %v1672 = vmul.f32 %v1517, 0.35355338
        %v1673 = vmul.f32 %v1593, 0.35355338
        %v1674 = vmul.f32 %v1669, 0.35355338
        %v1675 = vadd.f32 %v1672, %v1157
        %v1676 = vadd.f32 %v1673, %v1158
        %v1677 = vadd.f32 %v1674, %v1159
        %v1678 = vsel %vm1443, %v1675, -inf
        %1679 = vmax.xlane.f32.xlu0 %v1678
        %v1680 = vpop.xlane.xlu0 %1679
        %v1681 = vsel %vm1443, %v1676, -inf
        %1682 = vmax.xlane.f32.xlu0 %v1681
        %v1683 = vpop.xlane.xlu0 %1682
        %v1684 = vsel %vm1443, %v1677, -inf
        %1685 = vmax.xlane.f32.xlu0 %v1684
        %v1686 = vpop.xlane.xlu0 %1685
        %v1687 = vsub.f32 %v1675, %v1680
        %v1688 = vsub.f32 %v1676, %v1683
        %v1689 = vsub.f32 %v1677, %v1686
        %v1690 = vmul.f32 %v1687, 1.442695
        %v1691 = vpow.pop %v1690
        %v1692 = vmul.f32 %v1688, 1.442695
        %v1693 = vpow.pop %v1692
        %v1694 = vmul.f32 %v1689, 1.442695
        %v1695 = vpow.pop %v1694
        %v1696 = vsel %vm1443, %v1691, 0.0
        %1697 = vadd.xlane.f32.xlu0 %v1696
        %v1698 = vpop.xlane.xlu0 %1697
        %v1699 = vsel %vm1443, %v1693, 0.0
        %1700 = vadd.xlane.f32.xlu0 %v1699
        %v1701 = vpop.xlane.xlu0 %1700
        %v1702 = vsel %vm1443, %v1695, 0.0
        %1703 = vadd.xlane.f32.xlu0 %v1702
        %v1704 = vpop.xlane.xlu0 %1703
        %v1705 = vrcp.pop %v1698
        %v1706 = vmul.f32 %v1691, %v1705
        %v1707 = vrcp.pop %v1701
        %v1708 = vmul.f32 %v1693, %v1707
        %v1709 = vrcp.pop %v1704
        %v1710 = vmul.f32 %v1695, %v1709
        %v1712 = vsel %vm1443, %v1706, 0
        %1714 = vmatprep.subr.mxu0 0.0
        %1715 = vmatpush1.msra.mxu0 %v1430
        %1716 = vmatprep.subr.mxu0 0.0
        %1717 = vmatpush1.msra.mxu0 0.0
        %1718 = vmatprep.subr.mxu0 0.0
        %1719 = vmatpush1.msra.mxu0 0.0
        %1720 = vmatprep.subr.mxu0 0.0
        %1721 = vmatpush1.msra.mxu0 0.0
        %1722 = vmatprep.subr.mxu0 0.0
        %1723 = vmatpush1.msra.mxu0 0.0
        %1724 = vmatprep.subr.mxu0 0.0
        %1725 = vmatpush1.msra.mxu0 0.0
        %1726 = vmatprep.subr.mxu0 0.0
        %1727 = vmatpush1.msra.mxu0 0.0
        %1728 = vmatprep.subr.mxu0 0.0
        %1729 = vmatpush1.msra.mxu0 0.0
        %1730 = vmatprep.subr.mxu0 0.0
        %1731 = vmatpush1.msra.mxu0 0.0
        %1732 = vmatprep.subr.mxu0 0.0
        %1733 = vmatpush1.msra.mxu0 0.0
        %1734 = vmatprep.subr.mxu0 0.0
        %1735 = vmatpush1.msra.mxu0 0.0
        %1736 = vmatprep.subr.mxu0 0.0
        %1737 = vmatpush1.msra.mxu0 0.0
        %1738 = vmatprep.subr.mxu0 0.0
        %1739 = vmatpush1.msra.mxu0 0.0
        %1740 = vmatprep.subr.mxu0 0.0
        %1741 = vmatpush1.msra.mxu0 0.0
        %1742 = vmatprep.subr.mxu0 0.0
        %1743 = vmatpush1.msra.mxu0 0.0
        %1744 = vmatprep.subr.mxu0 0.0
        %1745 = vmatpush1.msra.mxu0 0.0
        %1746 = vmatprep.subr.mxu0 0.0
        %1747 = vmatpush1.msra.mxu0 0.0
        %1748 = vmatprep.subr.mxu0 0.0
        %1749 = vmatpush1.msra.mxu0 0.0
        %1750 = vmatprep.subr.mxu0 0.0
        %1751 = vmatpush1.msra.mxu0 0.0
        %1752 = vmatprep.subr.mxu0 0.0
        %1753 = vmatpush1.msra.mxu0 0.0
        %1754 = vmatprep.subr.mxu0 0.0
        %1755 = vmatpush1.msra.mxu0 0.0
        %1756 = vmatprep.subr.mxu0 0.0
        %1757 = vmatpush1.msra.mxu0 0.0
        %1758 = vmatprep.subr.mxu0 0.0
        %1759 = vmatpush1.msra.mxu0 0.0
        %1760 = vmatprep.subr.mxu0 0.0
        %1761 = vmatpush1.msra.mxu0 0.0
        %1762 = vmatprep.subr.mxu0 0.0
        %1763 = vmatpush1.msra.mxu0 0.0
        %1764 = vmatprep.subr.mxu0 0.0
        %1765 = vmatpush1.msra.mxu0 0.0
        %1766 = vmatprep.subr.mxu0 0.0
        %1767 = vmatpush1.msra.mxu0 0.0
        %1768 = vmatprep.subr.mxu0 0.0
        %1769 = vmatpush1.msra.mxu0 0.0
        %1770 = vmatprep.subr.mxu0 0.0
        %1771 = vmatpush1.msra.mxu0 0.0
        %1772 = vmatprep.subr.mxu0 0.0
        %1773 = vmatpush1.msra.mxu0 0.0
        %1774 = vmatprep.subr.mxu0 0.0
        %1775 = vmatpush1.msra.mxu0 0.0
        %1776 = vmatprep.subr.mxu0 0.0
        %1777 = vmatpush1.msra.mxu0 0.0
        %1778 = vmatprep.mubr.f32.mxu0 0.0
        %1779 = vmatmul.mubr.f32.gmra.mrb[0].mxu0 %v1712
        %v1780 = vpop.f32.mrb[0].mxu0
        %v1781 = vadd.f32 0.0, %v1780
        %v1782 = vpop.f32.mrb[0].mxu0
        %1783 = vdwg.mxu0
        %v1785 = vsel %vm1443, %v1708, 0
        %1787 = vmatprep.subr.mxu0 0.0
        %1788 = vmatpush1.msra.mxu0 %v1435
        %1789 = vmatprep.subr.mxu0 0.0
        %1790 = vmatpush1.msra.mxu0 0.0
        %1791 = vmatprep.subr.mxu0 0.0
        %1792 = vmatpush1.msra.mxu0 0.0
        %1793 = vmatprep.subr.mxu0 0.0
        %1794 = vmatpush1.msra.mxu0 0.0
        %1795 = vmatprep.subr.mxu0 0.0
        %1796 = vmatpush1.msra.mxu0 0.0
        %1797 = vmatprep.subr.mxu0 0.0
        %1798 = vmatpush1.msra.mxu0 0.0
        %1799 = vmatprep.subr.mxu0 0.0
        %1800 = vmatpush1.msra.mxu0 0.0
        %1801 = vmatprep.subr.mxu0 0.0
        %1802 = vmatpush1.msra.mxu0 0.0
        %1803 = vmatprep.subr.mxu0 0.0
        %1804 = vmatpush1.msra.mxu0 0.0
        %1805 = vmatprep.subr.mxu0 0.0
        %1806 = vmatpush1.msra.mxu0 0.0
        %1807 = vmatprep.subr.mxu0 0.0
        %1808 = vmatpush1.msra.mxu0 0.0
        %1809 = vmatprep.subr.mxu0 0.0
        %1810 = vmatpush1.msra.mxu0 0.0
        %1811 = vmatprep.subr.mxu0 0.0
        %1812 = vmatpush1.msra.mxu0 0.0
        %1813 = vmatprep.subr.mxu0 0.0
        %1814 = vmatpush1.msra.mxu0 0.0
        %1815 = vmatprep.subr.mxu0 0.0
        %1816 = vmatpush1.msra.mxu0 0.0
        %1817 = vmatprep.subr.mxu0 0.0
        %1818 = vmatpush1.msra.mxu0 0.0
        %1819 = vmatprep.subr.mxu0 0.0
        %1820 = vmatpush1.msra.mxu0 0.0
        %1821 = vmatprep.subr.mxu0 0.0
        %1822 = vmatpush1.msra.mxu0 0.0
        %1823 = vmatprep.subr.mxu0 0.0
        %1824 = vmatpush1.msra.mxu0 0.0
        %1825 = vmatprep.subr.mxu0 0.0
        %1826 = vmatpush1.msra.mxu0 0.0
        %1827 = vmatprep.subr.mxu0 0.0
        %1828 = vmatpush1.msra.mxu0 0.0
        %1829 = vmatprep.subr.mxu0 0.0
        %1830 = vmatpush1.msra.mxu0 0.0
        %1831 = vmatprep.subr.mxu0 0.0
        %1832 = vmatpush1.msra.mxu0 0.0
        %1833 = vmatprep.subr.mxu0 0.0
        %1834 = vmatpush1.msra.mxu0 0.0
        %1835 = vmatprep.subr.mxu0 0.0
        %1836 = vmatpush1.msra.mxu0 0.0
        %1837 = vmatprep.subr.mxu0 0.0
        %1838 = vmatpush1.msra.mxu0 0.0
        %1839 = vmatprep.subr.mxu0 0.0
        %1840 = vmatpush1.msra.mxu0 0.0
        %1841 = vmatprep.subr.mxu0 0.0
        %1842 = vmatpush1.msra.mxu0 0.0
        %1843 = vmatprep.subr.mxu0 0.0
        %1844 = vmatpush1.msra.mxu0 0.0
        %1845 = vmatprep.subr.mxu0 0.0
        %1846 = vmatpush1.msra.mxu0 0.0
        %1847 = vmatprep.subr.mxu0 0.0
        %1848 = vmatpush1.msra.mxu0 0.0
        %1849 = vmatprep.subr.mxu0 0.0
        %1850 = vmatpush1.msra.mxu0 0.0
        %1851 = vmatprep.mubr.f32.mxu0 0.0
        %1852 = vmatmul.mubr.f32.gmra.mrb[0].mxu0 %v1785
        %v1853 = vpop.f32.mrb[0].mxu0
        %v1854 = vadd.f32 0.0, %v1853
        %v1855 = vpop.f32.mrb[0].mxu0
        %1856 = vdwg.mxu0
        %v1858 = vsel %vm1443, %v1710, 0
        %1860 = vmatprep.subr.mxu0 0.0
        %1861 = vmatpush1.msra.mxu0 %v1440
        %1862 = vmatprep.subr.mxu0 0.0
        %1863 = vmatpush1.msra.mxu0 0.0
        %1864 = vmatprep.subr.mxu0 0.0
        %1865 = vmatpush1.msra.mxu0 0.0
        %1866 = vmatprep.subr.mxu0 0.0
        %1867 = vmatpush1.msra.mxu0 0.0
        %1868 = vmatprep.subr.mxu0 0.0
        %1869 = vmatpush1.msra.mxu0 0.0
        %1870 = vmatprep.subr.mxu0 0.0
        %1871 = vmatpush1.msra.mxu0 0.0
        %1872 = vmatprep.subr.mxu0 0.0
        %1873 = vmatpush1.msra.mxu0 0.0
        %1874 = vmatprep.subr.mxu0 0.0
        %1875 = vmatpush1.msra.mxu0 0.0
        %1876 = vmatprep.subr.mxu0 0.0
        %1877 = vmatpush1.msra.mxu0 0.0
        %1878 = vmatprep.subr.mxu0 0.0
        %1879 = vmatpush1.msra.mxu0 0.0
        %1880 = vmatprep.subr.mxu0 0.0
        %1881 = vmatpush1.msra.mxu0 0.0
        %1882 = vmatprep.subr.mxu0 0.0
        %1883 = vmatpush1.msra.mxu0 0.0
        %1884 = vmatprep.subr.mxu0 0.0
        %1885 = vmatpush1.msra.mxu0 0.0
        %1886 = vmatprep.subr.mxu0 0.0
        %1887 = vmatpush1.msra.mxu0 0.0
        %1888 = vmatprep.subr.mxu0 0.0
        %1889 = vmatpush1.msra.mxu0 0.0
        %1890 = vmatprep.subr.mxu0 0.0
        %1891 = vmatpush1.msra.mxu0 0.0
        %1892 = vmatprep.subr.mxu0 0.0
        %1893 = vmatpush1.msra.mxu0 0.0
        %1894 = vmatprep.subr.mxu0 0.0
        %1895 = vmatpush1.msra.mxu0 0.0
        %1896 = vmatprep.subr.mxu0 0.0
        %1897 = vmatpush1.msra.mxu0 0.0
        %1898 = vmatprep.subr.mxu0 0.0
        %1899 = vmatpush1.msra.mxu0 0.0
        %1900 = vmatprep.subr.mxu0 0.0
        %1901 = vmatpush1.msra.mxu0 0.0
        %1902 = vmatprep.subr.mxu0 0.0
        %1903 = vmatpush1.msra.mxu0 0.0
        %1904 = vmatprep.subr.mxu0 0.0
        %1905 = vmatpush1.msra.mxu0 0.0
        %1906 = vmatprep.subr.mxu0 0.0
        %1907 = vmatpush1.msra.mxu0 0.0
        %1908 = vmatprep.subr.mxu0 0.0
        %1909 = vmatpush1.msra.mxu0 0.0
        %1910 = vmatprep.subr.mxu0 0.0
        %1911 = vmatpush1.msra.mxu0 0.0
        %1912 = vmatprep.subr.mxu0 0.0
        %1913 = vmatpush1.msra.mxu0 0.0
        %1914 = vmatprep.subr.mxu0 0.0
        %1915 = vmatpush1.msra.mxu0 0.0
        %1916 = vmatprep.subr.mxu0 0.0
        %1917 = vmatpush1.msra.mxu0 0.0
        %1918 = vmatprep.subr.mxu0 0.0
        %1919 = vmatpush1.msra.mxu0 0.0
        %1920 = vmatprep.subr.mxu0 0.0
        %1921 = vmatpush1.msra.mxu0 0.0
        %1922 = vmatprep.subr.mxu0 0.0
        %1923 = vmatpush1.msra.mxu0 0.0
        %1924 = vmatprep.mubr.f32.mxu0 0.0
        %1925 = vmatmul.mubr.f32.gmra.mrb[0].mxu0 %v1858
        %v1926 = vpop.f32.mrb[0].mxu0
        %v1927 = vadd.f32 0.0, %v1926
        %v1928 = vpop.f32.mrb[0].mxu0
        %1929 = vdwg.mxu0
        %1930 = vrot.lane.b32.xlu0 %v1248, 120
        %v1931 = vpop.permute.xlu0 %1930
        %1932 = vrot.lane.b32.xlu0 %v1339, 120
        %v1933 = vpop.permute.xlu0 %1932
        %v1934 = vsel %vm1443, %v1931, 0
        %v1936 = vsel %vm1443, %v1933, 0
        %1938 = vmatprep.subr.mxu0 0.0
        %1939 = vmatpush1.xpose.msra.mxu0 %v1936
        %1940 = vmatprep.subr.mxu0 0.0
        %1941 = vmatpush1.xpose.msra.mxu0 0.0
        %1942 = vmatprep.subr.mxu0 0.0
        %1943 = vmatpush1.xpose.msra.mxu0 0.0
        %1944 = vmatprep.subr.mxu0 0.0
        %1945 = vmatpush1.xpose.msra.mxu0 0.0
        %1946 = vmatprep.subr.mxu0 0.0
        %1947 = vmatpush1.xpose.msra.mxu0 0.0
        %1948 = vmatprep.subr.mxu0 0.0
        %1949 = vmatpush1.xpose.msra.mxu0 0.0
        %1950 = vmatprep.subr.mxu0 0.0
        %1951 = vmatpush1.xpose.msra.mxu0 0.0
        %1952 = vmatprep.subr.mxu0 0.0
        %1953 = vmatpush1.xpose.msra.mxu0 0.0
        %1954 = vmatprep.subr.mxu0 0.0
        %1955 = vmatpush1.xpose.msra.mxu0 0.0
        %1956 = vmatprep.subr.mxu0 0.0
        %1957 = vmatpush1.xpose.msra.mxu0 0.0
        %1958 = vmatprep.subr.mxu0 0.0
        %1959 = vmatpush1.xpose.msra.mxu0 0.0
        %1960 = vmatprep.subr.mxu0 0.0
        %1961 = vmatpush1.xpose.msra.mxu0 0.0
        %1962 = vmatprep.subr.mxu0 0.0
        %1963 = vmatpush1.xpose.msra.mxu0 0.0
        %1964 = vmatprep.subr.mxu0 0.0
        %1965 = vmatpush1.xpose.msra.mxu0 0.0
        %1966 = vmatprep.subr.mxu0 0.0
        %1967 = vmatpush1.xpose.msra.mxu0 0.0
        %1968 = vmatprep.subr.mxu0 0.0
        %1969 = vmatpush1.xpose.msra.mxu0 0.0
        %1970 = vmatprep.subr.mxu0 0.0
        %1971 = vmatpush1.xpose.msra.mxu0 0.0
        %1972 = vmatprep.subr.mxu0 0.0
        %1973 = vmatpush1.xpose.msra.mxu0 0.0
        %1974 = vmatprep.subr.mxu0 0.0
        %1975 = vmatpush1.xpose.msra.mxu0 0.0
        %1976 = vmatprep.subr.mxu0 0.0
        %1977 = vmatpush1.xpose.msra.mxu0 0.0
        %1978 = vmatprep.subr.mxu0 0.0
        %1979 = vmatpush1.xpose.msra.mxu0 0.0
        %1980 = vmatprep.subr.mxu0 0.0
        %1981 = vmatpush1.xpose.msra.mxu0 0.0
        %1982 = vmatprep.subr.mxu0 0.0
        %1983 = vmatpush1.xpose.msra.mxu0 0.0
        %1984 = vmatprep.subr.mxu0 0.0
        %1985 = vmatpush1.xpose.msra.mxu0 0.0
        %1986 = vmatprep.subr.mxu0 0.0
        %1987 = vmatpush1.xpose.msra.mxu0 0.0
        %1988 = vmatprep.subr.mxu0 0.0
        %1989 = vmatpush1.xpose.msra.mxu0 0.0
        %1990 = vmatprep.subr.mxu0 0.0
        %1991 = vmatpush1.xpose.msra.mxu0 0.0
        %1992 = vmatprep.subr.mxu0 0.0
        %1993 = vmatpush1.xpose.msra.mxu0 0.0
        %1994 = vmatprep.subr.mxu0 0.0
        %1995 = vmatpush1.xpose.msra.mxu0 0.0
        %1996 = vmatprep.subr.mxu0 0.0
        %1997 = vmatpush1.xpose.msra.mxu0 0.0
        %1998 = vmatprep.subr.mxu0 0.0
        %1999 = vmatpush1.xpose.msra.mxu0 0.0
        %2000 = vmatprep.subr.mxu0 0.0
        %2001 = vmatpush1.xpose.msra.mxu0 0.0
        %2002 = vmatprep.mubr.f32.mxu0 0.0
        %2003 = vmatmul.mubr.f32.gmra.mrb[0].mxu0 %v1934
        %v2004 = vpop.f32.mrb[0].mxu0
        %v2005 = vadd.f32 0.0, %v2004
        %v2006 = vpop.f32.mrb[0].mxu0
        %2007 = vdwg.mxu0
        %2008 = vrot.lane.b32.xlu0 %v1253, 120
        %v2009 = vpop.permute.xlu0 %2008
        %2010 = vrot.lane.b32.xlu0 %v1344, 120
        %v2011 = vpop.permute.xlu0 %2010
        %v2012 = vsel %vm1443, %v2009, 0
        %v2014 = vsel %vm1443, %v2011, 0
        %2016 = vmatprep.subr.mxu0 0.0
        %2017 = vmatpush1.xpose.msra.mxu0 %v2014
        %2018 = vmatprep.subr.mxu0 0.0
        %2019 = vmatpush1.xpose.msra.mxu0 0.0
        %2020 = vmatprep.subr.mxu0 0.0
        %2021 = vmatpush1.xpose.msra.mxu0 0.0
        %2022 = vmatprep.subr.mxu0 0.0
        %2023 = vmatpush1.xpose.msra.mxu0 0.0
        %2024 = vmatprep.subr.mxu0 0.0
        %2025 = vmatpush1.xpose.msra.mxu0 0.0
        %2026 = vmatprep.subr.mxu0 0.0
        %2027 = vmatpush1.xpose.msra.mxu0 0.0
        %2028 = vmatprep.subr.mxu0 0.0
        %2029 = vmatpush1.xpose.msra.mxu0 0.0
        %2030 = vmatprep.subr.mxu0 0.0
        %2031 = vmatpush1.xpose.msra.mxu0 0.0
        %2032 = vmatprep.subr.mxu0 0.0
        %2033 = vmatpush1.xpose.msra.mxu0 0.0
        %2034 = vmatprep.subr.mxu0 0.0
        %2035 = vmatpush1.xpose.msra.mxu0 0.0
        %2036 = vmatprep.subr.mxu0 0.0
        %2037 = vmatpush1.xpose.msra.mxu0 0.0
        %2038 = vmatprep.subr.mxu0 0.0
        %2039 = vmatpush1.xpose.msra.mxu0 0.0
        %2040 = vmatprep.subr.mxu0 0.0
        %2041 = vmatpush1.xpose.msra.mxu0 0.0
        %2042 = vmatprep.subr.mxu0 0.0
        %2043 = vmatpush1.xpose.msra.mxu0 0.0
        %2044 = vmatprep.subr.mxu0 0.0
        %2045 = vmatpush1.xpose.msra.mxu0 0.0
        %2046 = vmatprep.subr.mxu0 0.0
        %2047 = vmatpush1.xpose.msra.mxu0 0.0
        %2048 = vmatprep.subr.mxu0 0.0
        %2049 = vmatpush1.xpose.msra.mxu0 0.0
        %2050 = vmatprep.subr.mxu0 0.0
        %2051 = vmatpush1.xpose.msra.mxu0 0.0
        %2052 = vmatprep.subr.mxu0 0.0
        %2053 = vmatpush1.xpose.msra.mxu0 0.0
        %2054 = vmatprep.subr.mxu0 0.0
        %2055 = vmatpush1.xpose.msra.mxu0 0.0
        %2056 = vmatprep.subr.mxu0 0.0
        %2057 = vmatpush1.xpose.msra.mxu0 0.0
        %2058 = vmatprep.subr.mxu0 0.0
        %2059 = vmatpush1.xpose.msra.mxu0 0.0
        %2060 = vmatprep.subr.mxu0 0.0
        %2061 = vmatpush1.xpose.msra.mxu0 0.0
        %2062 = vmatprep.subr.mxu0 0.0
        %2063 = vmatpush1.xpose.msra.mxu0 0.0
        %2064 = vmatprep.subr.mxu0 0.0
        %2065 = vmatpush1.xpose.msra.mxu0 0.0
        %2066 = vmatprep.subr.mxu0 0.0
        %2067 = vmatpush1.xpose.msra.mxu0 0.0
        %2068 = vmatprep.subr.mxu0 0.0
        %2069 = vmatpush1.xpose.msra.mxu0 0.0
        %2070 = vmatprep.subr.mxu0 0.0
        %2071 = vmatpush1.xpose.msra.mxu0 0.0
        %2072 = vmatprep.subr.mxu0 0.0
        %2073 = vmatpush1.xpose.msra.mxu0 0.0
        %2074 = vmatprep.subr.mxu0 0.0
        %2075 = vmatpush1.xpose.msra.mxu0 0.0
        %2076 = vmatprep.subr.mxu0 0.0
        %2077 = vmatpush1.xpose.msra.mxu0 0.0
        %2078 = vmatprep.subr.mxu0 0.0
        %2079 = vmatpush1.xpose.msra.mxu0 0.0
        %2080 = vmatprep.mubr.f32.mxu0 0.0
        %2081 = vmatmul.mubr.f32.gmra.mrb[0].mxu0 %v2012
        %v2082 = vpop.f32.mrb[0].mxu0
        %v2083 = vadd.f32 0.0, %v2082
        %v2084 = vpop.f32.mrb[0].mxu0
        %2085 = vdwg.mxu0
        %2086 = vrot.lane.b32.xlu0 %v1258, 120
        %v2087 = vpop.permute.xlu0 %2086
        %2088 = vrot.lane.b32.xlu0 %v1349, 120
        %v2089 = vpop.permute.xlu0 %2088
        %v2090 = vsel %vm1443, %v2087, 0
        %v2092 = vsel %vm1443, %v2089, 0
        %2094 = vmatprep.subr.mxu0 0.0
        %2095 = vmatpush1.xpose.msra.mxu0 %v2092
        %2096 = vmatprep.subr.mxu0 0.0
        %2097 = vmatpush1.xpose.msra.mxu0 0.0
        %2098 = vmatprep.subr.mxu0 0.0
        %2099 = vmatpush1.xpose.msra.mxu0 0.0
        %2100 = vmatprep.subr.mxu0 0.0
        %2101 = vmatpush1.xpose.msra.mxu0 0.0
        %2102 = vmatprep.subr.mxu0 0.0
        %2103 = vmatpush1.xpose.msra.mxu0 0.0
        %2104 = vmatprep.subr.mxu0 0.0
        %2105 = vmatpush1.xpose.msra.mxu0 0.0
        %2106 = vmatprep.subr.mxu0 0.0
        %2107 = vmatpush1.xpose.msra.mxu0 0.0
        %2108 = vmatprep.subr.mxu0 0.0
        %2109 = vmatpush1.xpose.msra.mxu0 0.0
        %2110 = vmatprep.subr.mxu0 0.0
        %2111 = vmatpush1.xpose.msra.mxu0 0.0
        %2112 = vmatprep.subr.mxu0 0.0
        %2113 = vmatpush1.xpose.msra.mxu0 0.0
        %2114 = vmatprep.subr.mxu0 0.0
        %2115 = vmatpush1.xpose.msra.mxu0 0.0
        %2116 = vmatprep.subr.mxu0 0.0
        %2117 = vmatpush1.xpose.msra.mxu0 0.0
        %2118 = vmatprep.subr.mxu0 0.0
        %2119 = vmatpush1.xpose.msra.mxu0 0.0
        %2120 = vmatprep.subr.mxu0 0.0
        %2121 = vmatpush1.xpose.msra.mxu0 0.0
        %2122 = vmatprep.subr.mxu0 0.0
        %2123 = vmatpush1.xpose.msra.mxu0 0.0
        %2124 = vmatprep.subr.mxu0 0.0
        %2125 = vmatpush1.xpose.msra.mxu0 0.0
        %2126 = vmatprep.subr.mxu0 0.0
        %2127 = vmatpush1.xpose.msra.mxu0 0.0
        %2128 = vmatprep.subr.mxu0 0.0
        %2129 = vmatpush1.xpose.msra.mxu0 0.0
        %2130 = vmatprep.subr.mxu0 0.0
        %2131 = vmatpush1.xpose.msra.mxu0 0.0
        %2132 = vmatprep.subr.mxu0 0.0
        %2133 = vmatpush1.xpose.msra.mxu0 0.0
        %2134 = vmatprep.subr.mxu0 0.0
        %2135 = vmatpush1.xpose.msra.mxu0 0.0
        %2136 = vmatprep.subr.mxu0 0.0
        %2137 = vmatpush1.xpose.msra.mxu0 0.0
        %2138 = vmatprep.subr.mxu0 0.0
        %2139 = vmatpush1.xpose.msra.mxu0 0.0
        %2140 = vmatprep.subr.mxu0 0.0
        %2141 = vmatpush1.xpose.msra.mxu0 0.0
        %2142 = vmatprep.subr.mxu0 0.0
        %2143 = vmatpush1.xpose.msra.mxu0 0.0
        %2144 = vmatprep.subr.mxu0 0.0
        %2145 = vmatpush1.xpose.msra.mxu0 0.0
        %2146 = vmatprep.subr.mxu0 0.0
        %2147 = vmatpush1.xpose.msra.mxu0 0.0
        %2148 = vmatprep.subr.mxu0 0.0
        %2149 = vmatpush1.xpose.msra.mxu0 0.0
        %2150 = vmatprep.subr.mxu0 0.0
        %2151 = vmatpush1.xpose.msra.mxu0 0.0
        %2152 = vmatprep.subr.mxu0 0.0
        %2153 = vmatpush1.xpose.msra.mxu0 0.0
        %2154 = vmatprep.subr.mxu0 0.0
        %2155 = vmatpush1.xpose.msra.mxu0 0.0
        %2156 = vmatprep.subr.mxu0 0.0
        %2157 = vmatpush1.xpose.msra.mxu0 0.0
        %2158 = vmatprep.mubr.f32.mxu0 0.0
        %2159 = vmatmul.mubr.f32.gmra.mrb[0].mxu0 %v2090
        %v2160 = vpop.f32.mrb[0].mxu0
        %v2161 = vadd.f32 0.0, %v2160
        %v2162 = vpop.f32.mrb[0].mxu0
        %2163 = vdwg.mxu0
        %v2164 = vmul.f32 %v2005, 0.35355338
        %v2165 = vmul.f32 %v2083, 0.35355338
        %v2166 = vmul.f32 %v2161, 0.35355338
        %v2167 = vadd.f32 %v2164, %v1157
        %v2168 = vadd.f32 %v2165, %v1158
        %v2169 = vadd.f32 %v2166, %v1159
        %v2170 = vsel %vm1443, %v2167, -inf
        %2171 = vmax.xlane.f32.xlu0 %v2170
        %v2172 = vpop.xlane.xlu0 %2171
        %v2173 = vsel %vm1443, %v2168, -inf
        %2174 = vmax.xlane.f32.xlu0 %v2173
        %v2175 = vpop.xlane.xlu0 %2174
        %v2176 = vsel %vm1443, %v2169, -inf
        %2177 = vmax.xlane.f32.xlu0 %v2176
        %v2178 = vpop.xlane.xlu0 %2177
        %v2179 = vsub.f32 %v2167, %v2172
        %v2180 = vsub.f32 %v2168, %v2175
        %v2181 = vsub.f32 %v2169, %v2178
        %v2182 = vmul.f32 %v2179, 1.442695
        %v2183 = vpow.pop %v2182
        %v2184 = vmul.f32 %v2180, 1.442695
        %v2185 = vpow.pop %v2184
        %v2186 = vmul.f32 %v2181, 1.442695
        %v2187 = vpow.pop %v2186
        %v2188 = vsel %vm1443, %v2183, 0.0
        %2189 = vadd.xlane.f32.xlu0 %v2188
        %v2190 = vpop.xlane.xlu0 %2189
        %v2191 = vsel %vm1443, %v2185, 0.0
        %2192 = vadd.xlane.f32.xlu0 %v2191
        %v2193 = vpop.xlane.xlu0 %2192
        %v2194 = vsel %vm1443, %v2187, 0.0
        %2195 = vadd.xlane.f32.xlu0 %v2194
        %v2196 = vpop.xlane.xlu0 %2195
        %v2197 = vrcp.pop %v2190
        %v2198 = vmul.f32 %v2183, %v2197
        %v2199 = vrcp.pop %v2193
        %v2200 = vmul.f32 %v2185, %v2199
        %v2201 = vrcp.pop %v2196
        %v2202 = vmul.f32 %v2187, %v2201
        %2204 = vrot.lane.b32.xlu0 %v1430, 120
        %v2205 = vpop.permute.xlu0 %2204
        %v2208 = vsel %vm1443, %v2198, 0
        %2210 = vmatprep.subr.mxu0 0.0
        %2211 = vmatpush1.msra.mxu0 %v2205
        %2212 = vmatprep.subr.mxu0 0.0
        %2213 = vmatpush1.msra.mxu0 0.0
        %2214 = vmatprep.subr.mxu0 0.0
        %2215 = vmatpush1.msra.mxu0 0.0
        %2216 = vmatprep.subr.mxu0 0.0
        %2217 = vmatpush1.msra.mxu0 0.0
        %2218 = vmatprep.subr.mxu0 0.0
        %2219 = vmatpush1.msra.mxu0 0.0
        %2220 = vmatprep.subr.mxu0 0.0
        %2221 = vmatpush1.msra.mxu0 0.0
        %2222 = vmatprep.subr.mxu0 0.0
        %2223 = vmatpush1.msra.mxu0 0.0
        %2224 = vmatprep.subr.mxu0 0.0
        %2225 = vmatpush1.msra.mxu0 0.0
        %2226 = vmatprep.subr.mxu0 0.0
        %2227 = vmatpush1.msra.mxu0 0.0
        %2228 = vmatprep.subr.mxu0 0.0
        %2229 = vmatpush1.msra.mxu0 0.0
        %2230 = vmatprep.subr.mxu0 0.0
        %2231 = vmatpush1.msra.mxu0 0.0
        %2232 = vmatprep.subr.mxu0 0.0
        %2233 = vmatpush1.msra.mxu0 0.0
        %2234 = vmatprep.subr.mxu0 0.0
        %2235 = vmatpush1.msra.mxu0 0.0
        %2236 = vmatprep.subr.mxu0 0.0
        %2237 = vmatpush1.msra.mxu0 0.0
        %2238 = vmatprep.subr.mxu0 0.0
        %2239 = vmatpush1.msra.mxu0 0.0
        %2240 = vmatprep.subr.mxu0 0.0
        %2241 = vmatpush1.msra.mxu0 0.0
        %2242 = vmatprep.subr.mxu0 0.0
        %2243 = vmatpush1.msra.mxu0 0.0
        %2244 = vmatprep.subr.mxu0 0.0
        %2245 = vmatpush1.msra.mxu0 0.0
        %2246 = vmatprep.subr.mxu0 0.0
        %2247 = vmatpush1.msra.mxu0 0.0
        %2248 = vmatprep.subr.mxu0 0.0
        %2249 = vmatpush1.msra.mxu0 0.0
        %2250 = vmatprep.subr.mxu0 0.0
        %2251 = vmatpush1.msra.mxu0 0.0
        %2252 = vmatprep.subr.mxu0 0.0
        %2253 = vmatpush1.msra.mxu0 0.0
        %2254 = vmatprep.subr.mxu0 0.0
        %2255 = vmatpush1.msra.mxu0 0.0
        %2256 = vmatprep.subr.mxu0 0.0
        %2257 = vmatpush1.msra.mxu0 0.0
        %2258 = vmatprep.subr.mxu0 0.0
        %2259 = vmatpush1.msra.mxu0 0.0
        %2260 = vmatprep.subr.mxu0 0.0
        %2261 = vmatpush1.msra.mxu0 0.0
        %2262 = vmatprep.subr.mxu0 0.0
        %2263 = vmatpush1.msra.mxu0 0.0
        %2264 = vmatprep.subr.mxu0 0.0
        %2265 = vmatpush1.msra.mxu0 0.0
        %2266 = vmatprep.subr.mxu0 0.0
        %2267 = vmatpush1.msra.mxu0 0.0
        %2268 = vmatprep.subr.mxu0 0.0
        %2269 = vmatpush1.msra.mxu0 0.0
        %2270 = vmatprep.subr.mxu0 0.0
        %2271 = vmatpush1.msra.mxu0 0.0
        %2272 = vmatprep.subr.mxu0 0.0
        %2273 = vmatpush1.msra.mxu0 0.0
        %2274 = vmatprep.mubr.f32.mxu0 0.0
        %2275 = vmatmul.mubr.f32.gmra.mrb[0].mxu0 %v2208
        %v2276 = vpop.f32.mrb[0].mxu0
        %v2277 = vadd.f32 0.0, %v2276
        %v2278 = vpop.f32.mrb[0].mxu0
        %2279 = vdwg.mxu0
        %2281 = vrot.lane.b32.xlu0 %v1435, 120
        %v2282 = vpop.permute.xlu0 %2281
        %v2285 = vsel %vm1443, %v2200, 0
        %2287 = vmatprep.subr.mxu0 0.0
        %2288 = vmatpush1.msra.mxu0 %v2282
        %2289 = vmatprep.subr.mxu0 0.0
        %2290 = vmatpush1.msra.mxu0 0.0
        %2291 = vmatprep.subr.mxu0 0.0
        %2292 = vmatpush1.msra.mxu0 0.0
        %2293 = vmatprep.subr.mxu0 0.0
        %2294 = vmatpush1.msra.mxu0 0.0
        %2295 = vmatprep.subr.mxu0 0.0
        %2296 = vmatpush1.msra.mxu0 0.0
        %2297 = vmatprep.subr.mxu0 0.0
        %2298 = vmatpush1.msra.mxu0 0.0
        %2299 = vmatprep.subr.mxu0 0.0
        %2300 = vmatpush1.msra.mxu0 0.0
        %2301 = vmatprep.subr.mxu0 0.0
        %2302 = vmatpush1.msra.mxu0 0.0
        %2303 = vmatprep.subr.mxu0 0.0
        %2304 = vmatpush1.msra.mxu0 0.0
        %2305 = vmatprep.subr.mxu0 0.0
        %2306 = vmatpush1.msra.mxu0 0.0
        %2307 = vmatprep.subr.mxu0 0.0
        %2308 = vmatpush1.msra.mxu0 0.0
        %2309 = vmatprep.subr.mxu0 0.0
        %2310 = vmatpush1.msra.mxu0 0.0
        %2311 = vmatprep.subr.mxu0 0.0
        %2312 = vmatpush1.msra.mxu0 0.0
        %2313 = vmatprep.subr.mxu0 0.0
        %2314 = vmatpush1.msra.mxu0 0.0
        %2315 = vmatprep.subr.mxu0 0.0
        %2316 = vmatpush1.msra.mxu0 0.0
        %2317 = vmatprep.subr.mxu0 0.0
        %2318 = vmatpush1.msra.mxu0 0.0
        %2319 = vmatprep.subr.mxu0 0.0
        %2320 = vmatpush1.msra.mxu0 0.0
        %2321 = vmatprep.subr.mxu0 0.0
        %2322 = vmatpush1.msra.mxu0 0.0
        %2323 = vmatprep.subr.mxu0 0.0
        %2324 = vmatpush1.msra.mxu0 0.0
        %2325 = vmatprep.subr.mxu0 0.0
        %2326 = vmatpush1.msra.mxu0 0.0
        %2327 = vmatprep.subr.mxu0 0.0
        %2328 = vmatpush1.msra.mxu0 0.0
        %2329 = vmatprep.subr.mxu0 0.0
        %2330 = vmatpush1.msra.mxu0 0.0
        %2331 = vmatprep.subr.mxu0 0.0
        %2332 = vmatpush1.msra.mxu0 0.0
        %2333 = vmatprep.subr.mxu0 0.0
        %2334 = vmatpush1.msra.mxu0 0.0
        %2335 = vmatprep.subr.mxu0 0.0
        %2336 = vmatpush1.msra.mxu0 0.0
        %2337 = vmatprep.subr.mxu0 0.0
        %2338 = vmatpush1.msra.mxu0 0.0
        %2339 = vmatprep.subr.mxu0 0.0
        %2340 = vmatpush1.msra.mxu0 0.0
        %2341 = vmatprep.subr.mxu0 0.0
        %2342 = vmatpush1.msra.mxu0 0.0
        %2343 = vmatprep.subr.mxu0 0.0
        %2344 = vmatpush1.msra.mxu0 0.0
        %2345 = vmatprep.subr.mxu0 0.0
        %2346 = vmatpush1.msra.mxu0 0.0
        %2347 = vmatprep.subr.mxu0 0.0
        %2348 = vmatpush1.msra.mxu0 0.0
        %2349 = vmatprep.subr.mxu0 0.0
        %2350 = vmatpush1.msra.mxu0 0.0
        %2351 = vmatprep.mubr.f32.mxu0 0.0
        %2352 = vmatmul.mubr.f32.gmra.mrb[0].mxu0 %v2285
        %v2353 = vpop.f32.mrb[0].mxu0
        %v2354 = vadd.f32 0.0, %v2353
        %v2355 = vpop.f32.mrb[0].mxu0
        %2356 = vdwg.mxu0
        %2358 = vrot.lane.b32.xlu0 %v1440, 120
        %v2359 = vpop.permute.xlu0 %2358
        %v2362 = vsel %vm1443, %v2202, 0
        %2364 = vmatprep.subr.mxu0 0.0
        %2365 = vmatpush1.msra.mxu0 %v2359
        %2366 = vmatprep.subr.mxu0 0.0
        %2367 = vmatpush1.msra.mxu0 0.0
        %2368 = vmatprep.subr.mxu0 0.0
        %2369 = vmatpush1.msra.mxu0 0.0
        %2370 = vmatprep.subr.mxu0 0.0
        %2371 = vmatpush1.msra.mxu0 0.0
        %2372 = vmatprep.subr.mxu0 0.0
        %2373 = vmatpush1.msra.mxu0 0.0
        %2374 = vmatprep.subr.mxu0 0.0
        %2375 = vmatpush1.msra.mxu0 0.0
        %2376 = vmatprep.subr.mxu0 0.0
        %2377 = vmatpush1.msra.mxu0 0.0
        %2378 = vmatprep.subr.mxu0 0.0
        %2379 = vmatpush1.msra.mxu0 0.0
        %2380 = vmatprep.subr.mxu0 0.0
        %2381 = vmatpush1.msra.mxu0 0.0
        %2382 = vmatprep.subr.mxu0 0.0
        %2383 = vmatpush1.msra.mxu0 0.0
        %2384 = vmatprep.subr.mxu0 0.0
        %2385 = vmatpush1.msra.mxu0 0.0
        %2386 = vmatprep.subr.mxu0 0.0
        %2387 = vmatpush1.msra.mxu0 0.0
        %2388 = vmatprep.subr.mxu0 0.0
        %2389 = vmatpush1.msra.mxu0 0.0
        %2390 = vmatprep.subr.mxu0 0.0
        %2391 = vmatpush1.msra.mxu0 0.0
        %2392 = vmatprep.subr.mxu0 0.0
        %2393 = vmatpush1.msra.mxu0 0.0
        %2394 = vmatprep.subr.mxu0 0.0
        %2395 = vmatpush1.msra.mxu0 0.0
        %2396 = vmatprep.subr.mxu0 0.0
        %2397 = vmatpush1.msra.mxu0 0.0
        %2398 = vmatprep.subr.mxu0 0.0
        %2399 = vmatpush1.msra.mxu0 0.0
        %2400 = vmatprep.subr.mxu0 0.0
        %2401 = vmatpush1.msra.mxu0 0.0
        %2402 = vmatprep.subr.mxu0 0.0
        %2403 = vmatpush1.msra.mxu0 0.0
        %2404 = vmatprep.subr.mxu0 0.0
        %2405 = vmatpush1.msra.mxu0 0.0
        %2406 = vmatprep.subr.mxu0 0.0
        %2407 = vmatpush1.msra.mxu0 0.0
        %2408 = vmatprep.subr.mxu0 0.0
        %2409 = vmatpush1.msra.mxu0 0.0
        %2410 = vmatprep.subr.mxu0 0.0
        %2411 = vmatpush1.msra.mxu0 0.0
        %2412 = vmatprep.subr.mxu0 0.0
        %2413 = vmatpush1.msra.mxu0 0.0
        %2414 = vmatprep.subr.mxu0 0.0
        %2415 = vmatpush1.msra.mxu0 0.0
        %2416 = vmatprep.subr.mxu0 0.0
        %2417 = vmatpush1.msra.mxu0 0.0
        %2418 = vmatprep.subr.mxu0 0.0
        %2419 = vmatpush1.msra.mxu0 0.0
        %2420 = vmatprep.subr.mxu0 0.0
        %2421 = vmatpush1.msra.mxu0 0.0
        %2422 = vmatprep.subr.mxu0 0.0
        %2423 = vmatpush1.msra.mxu0 0.0
        %2424 = vmatprep.subr.mxu0 0.0
        %2425 = vmatpush1.msra.mxu0 0.0
        %2426 = vmatprep.subr.mxu0 0.0
        %2427 = vmatpush1.msra.mxu0 0.0
        %2428 = vmatprep.mubr.f32.mxu0 0.0
        %2429 = vmatmul.mubr.f32.gmra.mrb[0].mxu0 %v2362
        %v2430 = vpop.f32.mrb[0].mxu0
        %v2431 = vadd.f32 0.0, %v2430
        %v2432 = vpop.f32.mrb[0].mxu0
        %2433 = vdwg.mxu0
        %2434 = vrot.lane.b32.xlu0 %v1248, 112
        %v2435 = vpop.permute.xlu0 %2434
        %2436 = vrot.lane.b32.xlu0 %v1339, 112
        %v2437 = vpop.permute.xlu0 %2436
        %v2438 = vsel %vm1443, %v2435, 0
        %v2440 = vsel %vm1443, %v2437, 0
        %2442 = vmatprep.subr.mxu0 0.0
        %2443 = vmatpush1.xpose.msra.mxu0 %v2440
        %2444 = vmatprep.subr.mxu0 0.0
        %2445 = vmatpush1.xpose.msra.mxu0 0.0
        %2446 = vmatprep.subr.mxu0 0.0
        %2447 = vmatpush1.xpose.msra.mxu0 0.0
        %2448 = vmatprep.subr.mxu0 0.0
        %2449 = vmatpush1.xpose.msra.mxu0 0.0
        %2450 = vmatprep.subr.mxu0 0.0
        %2451 = vmatpush1.xpose.msra.mxu0 0.0
        %2452 = vmatprep.subr.mxu0 0.0
        %2453 = vmatpush1.xpose.msra.mxu0 0.0
        %2454 = vmatprep.subr.mxu0 0.0
        %2455 = vmatpush1.xpose.msra.mxu0 0.0
        %2456 = vmatprep.subr.mxu0 0.0
        %2457 = vmatpush1.xpose.msra.mxu0 0.0
        %2458 = vmatprep.subr.mxu0 0.0
        %2459 = vmatpush1.xpose.msra.mxu0 0.0
        %2460 = vmatprep.subr.mxu0 0.0
        %2461 = vmatpush1.xpose.msra.mxu0 0.0
        %2462 = vmatprep.subr.mxu0 0.0
        %2463 = vmatpush1.xpose.msra.mxu0 0.0
        %2464 = vmatprep.subr.mxu0 0.0
        %2465 = vmatpush1.xpose.msra.mxu0 0.0
        %2466 = vmatprep.subr.mxu0 0.0
        %2467 = vmatpush1.xpose.msra.mxu0 0.0
        %2468 = vmatprep.subr.mxu0 0.0
        %2469 = vmatpush1.xpose.msra.mxu0 0.0
        %2470 = vmatprep.subr.mxu0 0.0
        %2471 = vmatpush1.xpose.msra.mxu0 0.0
        %2472 = vmatprep.subr.mxu0 0.0
        %2473 = vmatpush1.xpose.msra.mxu0 0.0
        %2474 = vmatprep.subr.mxu0 0.0
        %2475 = vmatpush1.xpose.msra.mxu0 0.0
        %2476 = vmatprep.subr.mxu0 0.0
        %2477 = vmatpush1.xpose.msra.mxu0 0.0
        %2478 = vmatprep.subr.mxu0 0.0
        %2479 = vmatpush1.xpose.msra.mxu0 0.0
        %2480 = vmatprep.subr.mxu0 0.0
        %2481 = vmatpush1.xpose.msra.mxu0 0.0
        %2482 = vmatprep.subr.mxu0 0.0
        %2483 = vmatpush1.xpose.msra.mxu0 0.0
        %2484 = vmatprep.subr.mxu0 0.0
        %2485 = vmatpush1.xpose.msra.mxu0 0.0
        %2486 = vmatprep.subr.mxu0 0.0
        %2487 = vmatpush1.xpose.msra.mxu0 0.0
        %2488 = vmatprep.subr.mxu0 0.0
        %2489 = vmatpush1.xpose.msra.mxu0 0.0
        %2490 = vmatprep.subr.mxu0 0.0
        %2491 = vmatpush1.xpose.msra.mxu0 0.0
        %2492 = vmatprep.subr.mxu0 0.0
        %2493 = vmatpush1.xpose.msra.mxu0 0.0
        %2494 = vmatprep.subr.mxu0 0.0
        %2495 = vmatpush1.xpose.msra.mxu0 0.0
        %2496 = vmatprep.subr.mxu0 0.0
        %2497 = vmatpush1.xpose.msra.mxu0 0.0
        %2498 = vmatprep.subr.mxu0 0.0
        %2499 = vmatpush1.xpose.msra.mxu0 0.0
        %2500 = vmatprep.subr.mxu0 0.0
        %2501 = vmatpush1.xpose.msra.mxu0 0.0
        %2502 = vmatprep.subr.mxu0 0.0
        %2503 = vmatpush1.xpose.msra.mxu0 0.0
        %2504 = vmatprep.subr.mxu0 0.0
        %2505 = vmatpush1.xpose.msra.mxu0 0.0
        %2506 = vmatprep.mubr.f32.mxu0 0.0
        %2507 = vmatmul.mubr.f32.gmra.mrb[0].mxu0 %v2438
        %v2508 = vpop.f32.mrb[0].mxu0
        %v2509 = vadd.f32 0.0, %v2508
        %v2510 = vpop.f32.mrb[0].mxu0
        %2511 = vdwg.mxu0
        %2512 = vrot.lane.b32.xlu0 %v1253, 112
        %v2513 = vpop.permute.xlu0 %2512
        %2514 = vrot.lane.b32.xlu0 %v1344, 112
        %v2515 = vpop.permute.xlu0 %2514
        %v2516 = vsel %vm1443, %v2513, 0
        %v2518 = vsel %vm1443, %v2515, 0
        %2520 = vmatprep.subr.mxu0 0.0
        %2521 = vmatpush1.xpose.msra.mxu0 %v2518
        %2522 = vmatprep.subr.mxu0 0.0
        %2523 = vmatpush1.xpose.msra.mxu0 0.0
        %2524 = vmatprep.subr.mxu0 0.0
        %2525 = vmatpush1.xpose.msra.mxu0 0.0
        %2526 = vmatprep.subr.mxu0 0.0
        %2527 = vmatpush1.xpose.msra.mxu0 0.0
        %2528 = vmatprep.subr.mxu0 0.0
        %2529 = vmatpush1.xpose.msra.mxu0 0.0
        %2530 = vmatprep.subr.mxu0 0.0
        %2531 = vmatpush1.xpose.msra.mxu0 0.0
        %2532 = vmatprep.subr.mxu0 0.0
        %2533 = vmatpush1.xpose.msra.mxu0 0.0
        %2534 = vmatprep.subr.mxu0 0.0
        %2535 = vmatpush1.xpose.msra.mxu0 0.0
        %2536 = vmatprep.subr.mxu0 0.0
        %2537 = vmatpush1.xpose.msra.mxu0 0.0
        %2538 = vmatprep.subr.mxu0 0.0
        %2539 = vmatpush1.xpose.msra.mxu0 0.0
        %2540 = vmatprep.subr.mxu0 0.0
        %2541 = vmatpush1.xpose.msra.mxu0 0.0
        %2542 = vmatprep.subr.mxu0 0.0
        %2543 = vmatpush1.xpose.msra.mxu0 0.0
        %2544 = vmatprep.subr.mxu0 0.0
        %2545 = vmatpush1.xpose.msra.mxu0 0.0
        %2546 = vmatprep.subr.mxu0 0.0
        %2547 = vmatpush1.xpose.msra.mxu0 0.0
        %2548 = vmatprep.subr.mxu0 0.0
        %2549 = vmatpush1.xpose.msra.mxu0 0.0
        %2550 = vmatprep.subr.mxu0 0.0
        %2551 = vmatpush1.xpose.msra.mxu0 0.0
        %2552 = vmatprep.subr.mxu0 0.0
        %2553 = vmatpush1.xpose.msra.mxu0 0.0
        %2554 = vmatprep.subr.mxu0 0.0
        %2555 = vmatpush1.xpose.msra.mxu0 0.0
        %2556 = vmatprep.subr.mxu0 0.0
        %2557 = vmatpush1.xpose.msra.mxu0 0.0
        %2558 = vmatprep.subr.mxu0 0.0
        %2559 = vmatpush1.xpose.msra.mxu0 0.0
        %2560 = vmatprep.subr.mxu0 0.0
        %2561 = vmatpush1.xpose.msra.mxu0 0.0
        %2562 = vmatprep.subr.mxu0 0.0
        %2563 = vmatpush1.xpose.msra.mxu0 0.0
        %2564 = vmatprep.subr.mxu0 0.0
        %2565 = vmatpush1.xpose.msra.mxu0 0.0
        %2566 = vmatprep.subr.mxu0 0.0
        %2567 = vmatpush1.xpose.msra.mxu0 0.0
        %2568 = vmatprep.subr.mxu0 0.0
        %2569 = vmatpush1.xpose.msra.mxu0 0.0
        %2570 = vmatprep.subr.mxu0 0.0
        %2571 = vmatpush1.xpose.msra.mxu0 0.0
        %2572 = vmatprep.subr.mxu0 0.0
        %2573 = vmatpush1.xpose.msra.mxu0 0.0
        %2574 = vmatprep.subr.mxu0 0.0
        %2575 = vmatpush1.xpose.msra.mxu0 0.0
        %2576 = vmatprep.subr.mxu0 0.0
        %2577 = vmatpush1.xpose.msra.mxu0 0.0
        %2578 = vmatprep.subr.mxu0 0.0
        %2579 = vmatpush1.xpose.msra.mxu0 0.0
        %2580 = vmatprep.subr.mxu0 0.0
        %2581 = vmatpush1.xpose.msra.mxu0 0.0
        %2582 = vmatprep.subr.mxu0 0.0
        %2583 = vmatpush1.xpose.msra.mxu0 0.0
        %2584 = vmatprep.mubr.f32.mxu0 0.0
        %2585 = vmatmul.mubr.f32.gmra.mrb[0].mxu0 %v2516
        %v2586 = vpop.f32.mrb[0].mxu0
        %v2587 = vadd.f32 0.0, %v2586
        %v2588 = vpop.f32.mrb[0].mxu0
        %2589 = vdwg.mxu0
        %2590 = vrot.lane.b32.xlu0 %v1258, 112
        %v2591 = vpop.permute.xlu0 %2590
        %2592 = vrot.lane.b32.xlu0 %v1349, 112
        %v2593 = vpop.permute.xlu0 %2592
        %v2594 = vsel %vm1443, %v2591, 0
        %v2596 = vsel %vm1443, %v2593, 0
        %2598 = vmatprep.subr.mxu0 0.0
        %2599 = vmatpush1.xpose.msra.mxu0 %v2596
        %2600 = vmatprep.subr.mxu0 0.0
        %2601 = vmatpush1.xpose.msra.mxu0 0.0
        %2602 = vmatprep.subr.mxu0 0.0
        %2603 = vmatpush1.xpose.msra.mxu0 0.0
        %2604 = vmatprep.subr.mxu0 0.0
        %2605 = vmatpush1.xpose.msra.mxu0 0.0
        %2606 = vmatprep.subr.mxu0 0.0
        %2607 = vmatpush1.xpose.msra.mxu0 0.0
        %2608 = vmatprep.subr.mxu0 0.0
        %2609 = vmatpush1.xpose.msra.mxu0 0.0
        %2610 = vmatprep.subr.mxu0 0.0
        %2611 = vmatpush1.xpose.msra.mxu0 0.0
        %2612 = vmatprep.subr.mxu0 0.0
        %2613 = vmatpush1.xpose.msra.mxu0 0.0
        %2614 = vmatprep.subr.mxu0 0.0
        %2615 = vmatpush1.xpose.msra.mxu0 0.0
        %2616 = vmatprep.subr.mxu0 0.0
        %2617 = vmatpush1.xpose.msra.mxu0 0.0
        %2618 = vmatprep.subr.mxu0 0.0
        %2619 = vmatpush1.xpose.msra.mxu0 0.0
        %2620 = vmatprep.subr.mxu0 0.0
        %2621 = vmatpush1.xpose.msra.mxu0 0.0
        %2622 = vmatprep.subr.mxu0 0.0
        %2623 = vmatpush1.xpose.msra.mxu0 0.0
        %2624 = vmatprep.subr.mxu0 0.0
        %2625 = vmatpush1.xpose.msra.mxu0 0.0
        %2626 = vmatprep.subr.mxu0 0.0
        %2627 = vmatpush1.xpose.msra.mxu0 0.0
        %2628 = vmatprep.subr.mxu0 0.0
        %2629 = vmatpush1.xpose.msra.mxu0 0.0
        %2630 = vmatprep.subr.mxu0 0.0
        %2631 = vmatpush1.xpose.msra.mxu0 0.0
        %2632 = vmatprep.subr.mxu0 0.0
        %2633 = vmatpush1.xpose.msra.mxu0 0.0
        %2634 = vmatprep.subr.mxu0 0.0
        %2635 = vmatpush1.xpose.msra.mxu0 0.0
        %2636 = vmatprep.subr.mxu0 0.0
        %2637 = vmatpush1.xpose.msra.mxu0 0.0
        %2638 = vmatprep.subr.mxu0 0.0
        %2639 = vmatpush1.xpose.msra.mxu0 0.0
        %2640 = vmatprep.subr.mxu0 0.0
        %2641 = vmatpush1.xpose.msra.mxu0 0.0
        %2642 = vmatprep.subr.mxu0 0.0
        %2643 = vmatpush1.xpose.msra.mxu0 0.0
        %2644 = vmatprep.subr.mxu0 0.0
        %2645 = vmatpush1.xpose.msra.mxu0 0.0
        %2646 = vmatprep.subr.mxu0 0.0
        %2647 = vmatpush1.xpose.msra.mxu0 0.0
        %2648 = vmatprep.subr.mxu0 0.0
        %2649 = vmatpush1.xpose.msra.mxu0 0.0
        %2650 = vmatprep.subr.mxu0 0.0
        %2651 = vmatpush1.xpose.msra.mxu0 0.0
        %2652 = vmatprep.subr.mxu0 0.0
        %2653 = vmatpush1.xpose.msra.mxu0 0.0
        %2654 = vmatprep.subr.mxu0 0.0
        %2655 = vmatpush1.xpose.msra.mxu0 0.0
        %2656 = vmatprep.subr.mxu0 0.0
        %2657 = vmatpush1.xpose.msra.mxu0 0.0
        %2658 = vmatprep.subr.mxu0 0.0
        %2659 = vmatpush1.xpose.msra.mxu0 0.0
        %2660 = vmatprep.subr.mxu0 0.0
        %2661 = vmatpush1.xpose.msra.mxu0 0.0
        %2662 = vmatprep.mubr.f32.mxu0 0.0
        %2663 = vmatmul.mubr.f32.gmra.mrb[0].mxu0 %v2594
        %v2664 = vpop.f32.mrb[0].mxu0
        %v2665 = vadd.f32 0.0, %v2664
        %v2666 = vpop.f32.mrb[0].mxu0
        %2667 = vdwg.mxu0
        %v2668 = vmul.f32 %v2509, 0.35355338
        %v2669 = vmul.f32 %v2587, 0.35355338
        %v2670 = vmul.f32 %v2665, 0.35355338
        %v2671 = vadd.f32 %v2668, %v1157
        %v2672 = vadd.f32 %v2669, %v1158
        %v2673 = vadd.f32 %v2670, %v1159
        %v2674 = vsel %vm1443, %v2671, -inf
        %2675 = vmax.xlane.f32.xlu0 %v2674
        %v2676 = vpop.xlane.xlu0 %2675
        %v2677 = vsel %vm1443, %v2672, -inf
        %2678 = vmax.xlane.f32.xlu0 %v2677
        %v2679 = vpop.xlane.xlu0 %2678
        %v2680 = vsel %vm1443, %v2673, -inf
        %2681 = vmax.xlane.f32.xlu0 %v2680
        %v2682 = vpop.xlane.xlu0 %2681
        %v2683 = vsub.f32 %v2671, %v2676
        %v2684 = vsub.f32 %v2672, %v2679
        %v2685 = vsub.f32 %v2673, %v2682
        %v2686 = vmul.f32 %v2683, 1.442695
        %v2687 = vpow.pop %v2686
        %v2688 = vmul.f32 %v2684, 1.442695
        %v2689 = vpow.pop %v2688
        %v2690 = vmul.f32 %v2685, 1.442695
        %v2691 = vpow.pop %v2690
        %v2692 = vsel %vm1443, %v2687, 0.0
        %2693 = vadd.xlane.f32.xlu0 %v2692
        %v2694 = vpop.xlane.xlu0 %2693
        %v2695 = vsel %vm1443, %v2689, 0.0
        %2696 = vadd.xlane.f32.xlu0 %v2695
        %v2697 = vpop.xlane.xlu0 %2696
        %v2698 = vsel %vm1443, %v2691, 0.0
        %2699 = vadd.xlane.f32.xlu0 %v2698
        %v2700 = vpop.xlane.xlu0 %2699
        %v2701 = vrcp.pop %v2694
        %v2702 = vmul.f32 %v2687, %v2701
        %v2703 = vrcp.pop %v2697
        %v2704 = vmul.f32 %v2689, %v2703
        %v2705 = vrcp.pop %v2700
        %v2706 = vmul.f32 %v2691, %v2705
        %2707 = vrot.lane.b32.xlu0 %v1430, 112
        %v2708 = vpop.permute.xlu0 %2707
        %v2711 = vsel %vm1443, %v2702, 0
        %2713 = vmatprep.subr.mxu0 0.0
        %2714 = vmatpush1.msra.mxu0 %v2708
        %2715 = vmatprep.subr.mxu0 0.0
        %2716 = vmatpush1.msra.mxu0 0.0
        %2717 = vmatprep.subr.mxu0 0.0
        %2718 = vmatpush1.msra.mxu0 0.0
        %2719 = vmatprep.subr.mxu0 0.0
        %2720 = vmatpush1.msra.mxu0 0.0
        %2721 = vmatprep.subr.mxu0 0.0
        %2722 = vmatpush1.msra.mxu0 0.0
        %2723 = vmatprep.subr.mxu0 0.0
        %2724 = vmatpush1.msra.mxu0 0.0
        %2725 = vmatprep.subr.mxu0 0.0
        %2726 = vmatpush1.msra.mxu0 0.0
        %2727 = vmatprep.subr.mxu0 0.0
        %2728 = vmatpush1.msra.mxu0 0.0
        %2729 = vmatprep.subr.mxu0 0.0
        %2730 = vmatpush1.msra.mxu0 0.0
        %2731 = vmatprep.subr.mxu0 0.0
        %2732 = vmatpush1.msra.mxu0 0.0
        %2733 = vmatprep.subr.mxu0 0.0
        %2734 = vmatpush1.msra.mxu0 0.0
        %2735 = vmatprep.subr.mxu0 0.0
        %2736 = vmatpush1.msra.mxu0 0.0
        %2737 = vmatprep.subr.mxu0 0.0
        %2738 = vmatpush1.msra.mxu0 0.0
        %2739 = vmatprep.subr.mxu0 0.0
        %2740 = vmatpush1.msra.mxu0 0.0
        %2741 = vmatprep.subr.mxu0 0.0
        %2742 = vmatpush1.msra.mxu0 0.0
        %2743 = vmatprep.subr.mxu0 0.0
        %2744 = vmatpush1.msra.mxu0 0.0
        %2745 = vmatprep.subr.mxu0 0.0
        %2746 = vmatpush1.msra.mxu0 0.0
        %2747 = vmatprep.subr.mxu0 0.0
        %2748 = vmatpush1.msra.mxu0 0.0
        %2749 = vmatprep.subr.mxu0 0.0
        %2750 = vmatpush1.msra.mxu0 0.0
        %2751 = vmatprep.subr.mxu0 0.0
        %2752 = vmatpush1.msra.mxu0 0.0
        %2753 = vmatprep.subr.mxu0 0.0
        %2754 = vmatpush1.msra.mxu0 0.0
        %2755 = vmatprep.subr.mxu0 0.0
        %2756 = vmatpush1.msra.mxu0 0.0
        %2757 = vmatprep.subr.mxu0 0.0
        %2758 = vmatpush1.msra.mxu0 0.0
        %2759 = vmatprep.subr.mxu0 0.0
        %2760 = vmatpush1.msra.mxu0 0.0
        %2761 = vmatprep.subr.mxu0 0.0
        %2762 = vmatpush1.msra.mxu0 0.0
        %2763 = vmatprep.subr.mxu0 0.0
        %2764 = vmatpush1.msra.mxu0 0.0
        %2765 = vmatprep.subr.mxu0 0.0
        %2766 = vmatpush1.msra.mxu0 0.0
        %2767 = vmatprep.subr.mxu0 0.0
        %2768 = vmatpush1.msra.mxu0 0.0
        %2769 = vmatprep.subr.mxu0 0.0
        %2770 = vmatpush1.msra.mxu0 0.0
        %2771 = vmatprep.subr.mxu0 0.0
        %2772 = vmatpush1.msra.mxu0 0.0
        %2773 = vmatprep.subr.mxu0 0.0
        %2774 = vmatpush1.msra.mxu0 0.0
        %2775 = vmatprep.subr.mxu0 0.0
        %2776 = vmatpush1.msra.mxu0 0.0
        %2777 = vmatprep.mubr.f32.mxu0 0.0
        %2778 = vmatmul.mubr.f32.gmra.mrb[0].mxu0 %v2711
        %v2779 = vpop.f32.mrb[0].mxu0
        %v2780 = vadd.f32 0.0, %v2779
        %v2781 = vpop.f32.mrb[0].mxu0
        %2782 = vdwg.mxu0
        %2783 = vrot.lane.b32.xlu0 %v1435, 112
        %v2784 = vpop.permute.xlu0 %2783
        %v2787 = vsel %vm1443, %v2704, 0
        %2789 = vmatprep.subr.mxu0 0.0
        %2790 = vmatpush1.msra.mxu0 %v2784
        %2791 = vmatprep.subr.mxu0 0.0
        %2792 = vmatpush1.msra.mxu0 0.0
        %2793 = vmatprep.subr.mxu0 0.0
        %2794 = vmatpush1.msra.mxu0 0.0
        %2795 = vmatprep.subr.mxu0 0.0
        %2796 = vmatpush1.msra.mxu0 0.0
        %2797 = vmatprep.subr.mxu0 0.0
        %2798 = vmatpush1.msra.mxu0 0.0
        %2799 = vmatprep.subr.mxu0 0.0
        %2800 = vmatpush1.msra.mxu0 0.0
        %2801 = vmatprep.subr.mxu0 0.0
        %2802 = vmatpush1.msra.mxu0 0.0
        %2803 = vmatprep.subr.mxu0 0.0
        %2804 = vmatpush1.msra.mxu0 0.0
        %2805 = vmatprep.subr.mxu0 0.0
        %2806 = vmatpush1.msra.mxu0 0.0
        %2807 = vmatprep.subr.mxu0 0.0
        %2808 = vmatpush1.msra.mxu0 0.0
        %2809 = vmatprep.subr.mxu0 0.0
        %2810 = vmatpush1.msra.mxu0 0.0
        %2811 = vmatprep.subr.mxu0 0.0
        %2812 = vmatpush1.msra.mxu0 0.0
        %2813 = vmatprep.subr.mxu0 0.0
        %2814 = vmatpush1.msra.mxu0 0.0
        %2815 = vmatprep.subr.mxu0 0.0
        %2816 = vmatpush1.msra.mxu0 0.0
        %2817 = vmatprep.subr.mxu0 0.0
        %2818 = vmatpush1.msra.mxu0 0.0
        %2819 = vmatprep.subr.mxu0 0.0
        %2820 = vmatpush1.msra.mxu0 0.0
        %2821 = vmatprep.subr.mxu0 0.0
        %2822 = vmatpush1.msra.mxu0 0.0
        %2823 = vmatprep.subr.mxu0 0.0
        %2824 = vmatpush1.msra.mxu0 0.0
        %2825 = vmatprep.subr.mxu0 0.0
        %2826 = vmatpush1.msra.mxu0 0.0
        %2827 = vmatprep.subr.mxu0 0.0
        %2828 = vmatpush1.msra.mxu0 0.0
        %2829 = vmatprep.subr.mxu0 0.0
        %2830 = vmatpush1.msra.mxu0 0.0
        %2831 = vmatprep.subr.mxu0 0.0
        %2832 = vmatpush1.msra.mxu0 0.0
        %2833 = vmatprep.subr.mxu0 0.0
        %2834 = vmatpush1.msra.mxu0 0.0
        %2835 = vmatprep.subr.mxu0 0.0
        %2836 = vmatpush1.msra.mxu0 0.0
        %2837 = vmatprep.subr.mxu0 0.0
        %2838 = vmatpush1.msra.mxu0 0.0
        %2839 = vmatprep.subr.mxu0 0.0
        %2840 = vmatpush1.msra.mxu0 0.0
        %2841 = vmatprep.subr.mxu0 0.0
        %2842 = vmatpush1.msra.mxu0 0.0
        %2843 = vmatprep.subr.mxu0 0.0
        %2844 = vmatpush1.msra.mxu0 0.0
        %2845 = vmatprep.subr.mxu0 0.0
        %2846 = vmatpush1.msra.mxu0 0.0
        %2847 = vmatprep.subr.mxu0 0.0
        %2848 = vmatpush1.msra.mxu0 0.0
        %2849 = vmatprep.subr.mxu0 0.0
        %2850 = vmatpush1.msra.mxu0 0.0
        %2851 = vmatprep.subr.mxu0 0.0
        %2852 = vmatpush1.msra.mxu0 0.0
        %2853 = vmatprep.mubr.f32.mxu0 0.0
        %2854 = vmatmul.mubr.f32.gmra.mrb[0].mxu0 %v2787
        %v2855 = vpop.f32.mrb[0].mxu0
        %v2856 = vadd.f32 0.0, %v2855
        %v2857 = vpop.f32.mrb[0].mxu0
        %2858 = vdwg.mxu0
        %2859 = vrot.lane.b32.xlu0 %v1440, 112
        %v2860 = vpop.permute.xlu0 %2859
        %v2863 = vsel %vm1443, %v2706, 0
        %2865 = vmatprep.subr.mxu0 0.0
        %2866 = vmatpush1.msra.mxu0 %v2860
        %2867 = vmatprep.subr.mxu0 0.0
        %2868 = vmatpush1.msra.mxu0 0.0
        %2869 = vmatprep.subr.mxu0 0.0
        %2870 = vmatpush1.msra.mxu0 0.0
        %2871 = vmatprep.subr.mxu0 0.0
        %2872 = vmatpush1.msra.mxu0 0.0
        %2873 = vmatprep.subr.mxu0 0.0
        %2874 = vmatpush1.msra.mxu0 0.0
        %2875 = vmatprep.subr.mxu0 0.0
        %2876 = vmatpush1.msra.mxu0 0.0
        %2877 = vmatprep.subr.mxu0 0.0
        %2878 = vmatpush1.msra.mxu0 0.0
        %2879 = vmatprep.subr.mxu0 0.0
        %2880 = vmatpush1.msra.mxu0 0.0
        %2881 = vmatprep.subr.mxu0 0.0
        %2882 = vmatpush1.msra.mxu0 0.0
        %2883 = vmatprep.subr.mxu0 0.0
        %2884 = vmatpush1.msra.mxu0 0.0
        %2885 = vmatprep.subr.mxu0 0.0
        %2886 = vmatpush1.msra.mxu0 0.0
        %2887 = vmatprep.subr.mxu0 0.0
        %2888 = vmatpush1.msra.mxu0 0.0
        %2889 = vmatprep.subr.mxu0 0.0
        %2890 = vmatpush1.msra.mxu0 0.0
        %2891 = vmatprep.subr.mxu0 0.0
        %2892 = vmatpush1.msra.mxu0 0.0
        %2893 = vmatprep.subr.mxu0 0.0
        %2894 = vmatpush1.msra.mxu0 0.0
        %2895 = vmatprep.subr.mxu0 0.0
        %2896 = vmatpush1.msra.mxu0 0.0
        %2897 = vmatprep.subr.mxu0 0.0
        %2898 = vmatpush1.msra.mxu0 0.0
        %2899 = vmatprep.subr.mxu0 0.0
        %2900 = vmatpush1.msra.mxu0 0.0
        %2901 = vmatprep.subr.mxu0 0.0
        %2902 = vmatpush1.msra.mxu0 0.0
        %2903 = vmatprep.subr.mxu0 0.0
        %2904 = vmatpush1.msra.mxu0 0.0
        %2905 = vmatprep.subr.mxu0 0.0
        %2906 = vmatpush1.msra.mxu0 0.0
        %2907 = vmatprep.subr.mxu0 0.0
        %2908 = vmatpush1.msra.mxu0 0.0
        %2909 = vmatprep.subr.mxu0 0.0
        %2910 = vmatpush1.msra.mxu0 0.0
        %2911 = vmatprep.subr.mxu0 0.0
        %2912 = vmatpush1.msra.mxu0 0.0
        %2913 = vmatprep.subr.mxu0 0.0
        %2914 = vmatpush1.msra.mxu0 0.0
        %2915 = vmatprep.subr.mxu0 0.0
        %2916 = vmatpush1.msra.mxu0 0.0
        %2917 = vmatprep.subr.mxu0 0.0
        %2918 = vmatpush1.msra.mxu0 0.0
        %2919 = vmatprep.subr.mxu0 0.0
        %2920 = vmatpush1.msra.mxu0 0.0
        %2921 = vmatprep.subr.mxu0 0.0
        %2922 = vmatpush1.msra.mxu0 0.0
        %2923 = vmatprep.subr.mxu0 0.0
        %2924 = vmatpush1.msra.mxu0 0.0
        %2925 = vmatprep.subr.mxu0 0.0
        %2926 = vmatpush1.msra.mxu0 0.0
        %2927 = vmatprep.subr.mxu0 0.0
        %2928 = vmatpush1.msra.mxu0 0.0
        %2929 = vmatprep.mubr.f32.mxu0 0.0
        %2930 = vmatmul.mubr.f32.gmra.mrb[0].mxu0 %v2863
        %v2931 = vpop.f32.mrb[0].mxu0
        %v2932 = vadd.f32 0.0, %v2931
        %v2933 = vpop.f32.mrb[0].mxu0
        %2934 = vdwg.mxu0
        %2935 = vrot.lane.b32.xlu0 %v1248, 104
        %v2936 = vpop.permute.xlu0 %2935
        %2937 = vrot.lane.b32.xlu0 %v1339, 104
        %v2938 = vpop.permute.xlu0 %2937
        %v2939 = vsel %vm1443, %v2936, 0
        %v2941 = vsel %vm1443, %v2938, 0
        %2943 = vmatprep.subr.mxu0 0.0
        %2944 = vmatpush1.xpose.msra.mxu0 %v2941
        %2945 = vmatprep.subr.mxu0 0.0
        %2946 = vmatpush1.xpose.msra.mxu0 0.0
        %2947 = vmatprep.subr.mxu0 0.0
        %2948 = vmatpush1.xpose.msra.mxu0 0.0
        %2949 = vmatprep.subr.mxu0 0.0
        %2950 = vmatpush1.xpose.msra.mxu0 0.0
        %2951 = vmatprep.subr.mxu0 0.0
        %2952 = vmatpush1.xpose.msra.mxu0 0.0
        %2953 = vmatprep.subr.mxu0 0.0
        %2954 = vmatpush1.xpose.msra.mxu0 0.0
        %2955 = vmatprep.subr.mxu0 0.0
        %2956 = vmatpush1.xpose.msra.mxu0 0.0
        %2957 = vmatprep.subr.mxu0 0.0
        %2958 = vmatpush1.xpose.msra.mxu0 0.0
        %2959 = vmatprep.subr.mxu0 0.0
        %2960 = vmatpush1.xpose.msra.mxu0 0.0
        %2961 = vmatprep.subr.mxu0 0.0
        %2962 = vmatpush1.xpose.msra.mxu0 0.0
        %2963 = vmatprep.subr.mxu0 0.0
        %2964 = vmatpush1.xpose.msra.mxu0 0.0
        %2965 = vmatprep.subr.mxu0 0.0
        %2966 = vmatpush1.xpose.msra.mxu0 0.0
        %2967 = vmatprep.subr.mxu0 0.0
        %2968 = vmatpush1.xpose.msra.mxu0 0.0
        %2969 = vmatprep.subr.mxu0 0.0
        %2970 = vmatpush1.xpose.msra.mxu0 0.0
        %2971 = vmatprep.subr.mxu0 0.0
        %2972 = vmatpush1.xpose.msra.mxu0 0.0
        %2973 = vmatprep.subr.mxu0 0.0
        %2974 = vmatpush1.xpose.msra.mxu0 0.0
        %2975 = vmatprep.subr.mxu0 0.0
        %2976 = vmatpush1.xpose.msra.mxu0 0.0
        %2977 = vmatprep.subr.mxu0 0.0
        %2978 = vmatpush1.xpose.msra.mxu0 0.0
        %2979 = vmatprep.subr.mxu0 0.0
        %2980 = vmatpush1.xpose.msra.mxu0 0.0
        %2981 = vmatprep.subr.mxu0 0.0
        %2982 = vmatpush1.xpose.msra.mxu0 0.0
        %2983 = vmatprep.subr.mxu0 0.0
        %2984 = vmatpush1.xpose.msra.mxu0 0.0
        %2985 = vmatprep.subr.mxu0 0.0
        %2986 = vmatpush1.xpose.msra.mxu0 0.0
        %2987 = vmatprep.subr.mxu0 0.0
        %2988 = vmatpush1.xpose.msra.mxu0 0.0
        %2989 = vmatprep.subr.mxu0 0.0
        %2990 = vmatpush1.xpose.msra.mxu0 0.0
        %2991 = vmatprep.subr.mxu0 0.0
        %2992 = vmatpush1.xpose.msra.mxu0 0.0
        %2993 = vmatprep.subr.mxu0 0.0
        %2994 = vmatpush1.xpose.msra.mxu0 0.0
        %2995 = vmatprep.subr.mxu0 0.0
        %2996 = vmatpush1.xpose.msra.mxu0 0.0
        %2997 = vmatprep.subr.mxu0 0.0
        %2998 = vmatpush1.xpose.msra.mxu0 0.0
        %2999 = vmatprep.subr.mxu0 0.0
        %3000 = vmatpush1.xpose.msra.mxu0 0.0
        %3001 = vmatprep.subr.mxu0 0.0
        %3002 = vmatpush1.xpose.msra.mxu0 0.0
        %3003 = vmatprep.subr.mxu0 0.0
        %3004 = vmatpush1.xpose.msra.mxu0 0.0
        %3005 = vmatprep.subr.mxu0 0.0
        %3006 = vmatpush1.xpose.msra.mxu0 0.0
        %3007 = vmatprep.mubr.f32.mxu0 0.0
        %3008 = vmatmul.mubr.f32.gmra.mrb[0].mxu0 %v2939
        %v3009 = vpop.f32.mrb[0].mxu0
        %v3010 = vadd.f32 0.0, %v3009
        %v3011 = vpop.f32.mrb[0].mxu0
        %3012 = vdwg.mxu0
        %3013 = vrot.lane.b32.xlu0 %v1253, 104
        %v3014 = vpop.permute.xlu0 %3013
        %3015 = vrot.lane.b32.xlu0 %v1344, 104
        %v3016 = vpop.permute.xlu0 %3015
        %v3017 = vsel %vm1443, %v3014, 0
        %v3019 = vsel %vm1443, %v3016, 0
        %3021 = vmatprep.subr.mxu0 0.0
        %3022 = vmatpush1.xpose.msra.mxu0 %v3019
        %3023 = vmatprep.subr.mxu0 0.0
        %3024 = vmatpush1.xpose.msra.mxu0 0.0
        %3025 = vmatprep.subr.mxu0 0.0
        %3026 = vmatpush1.xpose.msra.mxu0 0.0
        %3027 = vmatprep.subr.mxu0 0.0
        %3028 = vmatpush1.xpose.msra.mxu0 0.0
        %3029 = vmatprep.subr.mxu0 0.0
        %3030 = vmatpush1.xpose.msra.mxu0 0.0
        %3031 = vmatprep.subr.mxu0 0.0
        %3032 = vmatpush1.xpose.msra.mxu0 0.0
        %3033 = vmatprep.subr.mxu0 0.0
        %3034 = vmatpush1.xpose.msra.mxu0 0.0
        %3035 = vmatprep.subr.mxu0 0.0
        %3036 = vmatpush1.xpose.msra.mxu0 0.0
        %3037 = vmatprep.subr.mxu0 0.0
        %3038 = vmatpush1.xpose.msra.mxu0 0.0
        %3039 = vmatprep.subr.mxu0 0.0
        %3040 = vmatpush1.xpose.msra.mxu0 0.0
        %3041 = vmatprep.subr.mxu0 0.0
        %3042 = vmatpush1.xpose.msra.mxu0 0.0
        %3043 = vmatprep.subr.mxu0 0.0
        %3044 = vmatpush1.xpose.msra.mxu0 0.0
        %3045 = vmatprep.subr.mxu0 0.0
        %3046 = vmatpush1.xpose.msra.mxu0 0.0
        %3047 = vmatprep.subr.mxu0 0.0
        %3048 = vmatpush1.xpose.msra.mxu0 0.0
        %3049 = vmatprep.subr.mxu0 0.0
        %3050 = vmatpush1.xpose.msra.mxu0 0.0
        %3051 = vmatprep.subr.mxu0 0.0
        %3052 = vmatpush1.xpose.msra.mxu0 0.0
        %3053 = vmatprep.subr.mxu0 0.0
        %3054 = vmatpush1.xpose.msra.mxu0 0.0
        %3055 = vmatprep.subr.mxu0 0.0
        %3056 = vmatpush1.xpose.msra.mxu0 0.0
        %3057 = vmatprep.subr.mxu0 0.0
        %3058 = vmatpush1.xpose.msra.mxu0 0.0
        %3059 = vmatprep.subr.mxu0 0.0
        %3060 = vmatpush1.xpose.msra.mxu0 0.0
        %3061 = vmatprep.subr.mxu0 0.0
        %3062 = vmatpush1.xpose.msra.mxu0 0.0
        %3063 = vmatprep.subr.mxu0 0.0
        %3064 = vmatpush1.xpose.msra.mxu0 0.0
        %3065 = vmatprep.subr.mxu0 0.0
        %3066 = vmatpush1.xpose.msra.mxu0 0.0
        %3067 = vmatprep.subr.mxu0 0.0
        %3068 = vmatpush1.xpose.msra.mxu0 0.0
        %3069 = vmatprep.subr.mxu0 0.0
        %3070 = vmatpush1.xpose.msra.mxu0 0.0
        %3071 = vmatprep.subr.mxu0 0.0
        %3072 = vmatpush1.xpose.msra.mxu0 0.0
        %3073 = vmatprep.subr.mxu0 0.0
        %3074 = vmatpush1.xpose.msra.mxu0 0.0
        %3075 = vmatprep.subr.mxu0 0.0
        %3076 = vmatpush1.xpose.msra.mxu0 0.0
        %3077 = vmatprep.subr.mxu0 0.0
        %3078 = vmatpush1.xpose.msra.mxu0 0.0
        %3079 = vmatprep.subr.mxu0 0.0
        %3080 = vmatpush1.xpose.msra.mxu0 0.0
        %3081 = vmatprep.subr.mxu0 0.0
        %3082 = vmatpush1.xpose.msra.mxu0 0.0
        %3083 = vmatprep.subr.mxu0 0.0
        %3084 = vmatpush1.xpose.msra.mxu0 0.0
        %3085 = vmatprep.mubr.f32.mxu0 0.0
        %3086 = vmatmul.mubr.f32.gmra.mrb[0].mxu0 %v3017
        %v3087 = vpop.f32.mrb[0].mxu0
        %v3088 = vadd.f32 0.0, %v3087
        %v3089 = vpop.f32.mrb[0].mxu0
        %3090 = vdwg.mxu0
        %3091 = vrot.lane.b32.xlu0 %v1258, 104
        %v3092 = vpop.permute.xlu0 %3091
        %3093 = vrot.lane.b32.xlu0 %v1349, 104
        %v3094 = vpop.permute.xlu0 %3093
        %v3095 = vsel %vm1443, %v3092, 0
        %v3097 = vsel %vm1443, %v3094, 0
        %3099 = vmatprep.subr.mxu0 0.0
        %3100 = vmatpush1.xpose.msra.mxu0 %v3097
        %3101 = vmatprep.subr.mxu0 0.0
        %3102 = vmatpush1.xpose.msra.mxu0 0.0
        %3103 = vmatprep.subr.mxu0 0.0
        %3104 = vmatpush1.xpose.msra.mxu0 0.0
        %3105 = vmatprep.subr.mxu0 0.0
        %3106 = vmatpush1.xpose.msra.mxu0 0.0
        %3107 = vmatprep.subr.mxu0 0.0
        %3108 = vmatpush1.xpose.msra.mxu0 0.0
        %3109 = vmatprep.subr.mxu0 0.0
        %3110 = vmatpush1.xpose.msra.mxu0 0.0
        %3111 = vmatprep.subr.mxu0 0.0
        %3112 = vmatpush1.xpose.msra.mxu0 0.0
        %3113 = vmatprep.subr.mxu0 0.0
        %3114 = vmatpush1.xpose.msra.mxu0 0.0
        %3115 = vmatprep.subr.mxu0 0.0
        %3116 = vmatpush1.xpose.msra.mxu0 0.0
        %3117 = vmatprep.subr.mxu0 0.0
        %3118 = vmatpush1.xpose.msra.mxu0 0.0
        %3119 = vmatprep.subr.mxu0 0.0
        %3120 = vmatpush1.xpose.msra.mxu0 0.0
        %3121 = vmatprep.subr.mxu0 0.0
        %3122 = vmatpush1.xpose.msra.mxu0 0.0
        %3123 = vmatprep.subr.mxu0 0.0
        %3124 = vmatpush1.xpose.msra.mxu0 0.0
        %3125 = vmatprep.subr.mxu0 0.0
        %3126 = vmatpush1.xpose.msra.mxu0 0.0
        %3127 = vmatprep.subr.mxu0 0.0
        %3128 = vmatpush1.xpose.msra.mxu0 0.0
        %3129 = vmatprep.subr.mxu0 0.0
        %3130 = vmatpush1.xpose.msra.mxu0 0.0
        %3131 = vmatprep.subr.mxu0 0.0
        %3132 = vmatpush1.xpose.msra.mxu0 0.0
        %3133 = vmatprep.subr.mxu0 0.0
        %3134 = vmatpush1.xpose.msra.mxu0 0.0
        %3135 = vmatprep.subr.mxu0 0.0
        %3136 = vmatpush1.xpose.msra.mxu0 0.0
        %3137 = vmatprep.subr.mxu0 0.0
        %3138 = vmatpush1.xpose.msra.mxu0 0.0
        %3139 = vmatprep.subr.mxu0 0.0
        %3140 = vmatpush1.xpose.msra.mxu0 0.0
        %3141 = vmatprep.subr.mxu0 0.0
        %3142 = vmatpush1.xpose.msra.mxu0 0.0
        %3143 = vmatprep.subr.mxu0 0.0
        %3144 = vmatpush1.xpose.msra.mxu0 0.0
        %3145 = vmatprep.subr.mxu0 0.0
        %3146 = vmatpush1.xpose.msra.mxu0 0.0
        %3147 = vmatprep.subr.mxu0 0.0
        %3148 = vmatpush1.xpose.msra.mxu0 0.0
        %3149 = vmatprep.subr.mxu0 0.0
        %3150 = vmatpush1.xpose.msra.mxu0 0.0
        %3151 = vmatprep.subr.mxu0 0.0
        %3152 = vmatpush1.xpose.msra.mxu0 0.0
        %3153 = vmatprep.subr.mxu0 0.0
        %3154 = vmatpush1.xpose.msra.mxu0 0.0
        %3155 = vmatprep.subr.mxu0 0.0
        %3156 = vmatpush1.xpose.msra.mxu0 0.0
        %3157 = vmatprep.subr.mxu0 0.0
        %3158 = vmatpush1.xpose.msra.mxu0 0.0
        %3159 = vmatprep.subr.mxu0 0.0
        %3160 = vmatpush1.xpose.msra.mxu0 0.0
        %3161 = vmatprep.subr.mxu0 0.0
        %3162 = vmatpush1.xpose.msra.mxu0 0.0
        %3163 = vmatprep.mubr.f32.mxu0 0.0
        %3164 = vmatmul.mubr.f32.gmra.mrb[0].mxu0 %v3095
        %v3165 = vpop.f32.mrb[0].mxu0
        %v3166 = vadd.f32 0.0, %v3165
        %v3167 = vpop.f32.mrb[0].mxu0
        %3168 = vdwg.mxu0
        %v3169 = vmul.f32 %v3010, 0.35355338
        %v3170 = vmul.f32 %v3088, 0.35355338
        %v3171 = vmul.f32 %v3166, 0.35355338
        %v3172 = vadd.f32 %v3169, %v1157
        %v3173 = vadd.f32 %v3170, %v1158
        %v3174 = vadd.f32 %v3171, %v1159
        %v3175 = vsel %vm1443, %v3172, -inf
        %3176 = vmax.xlane.f32.xlu0 %v3175
        %v3177 = vpop.xlane.xlu0 %3176
        %v3178 = vsel %vm1443, %v3173, -inf
        %3179 = vmax.xlane.f32.xlu0 %v3178
        %v3180 = vpop.xlane.xlu0 %3179
        %v3181 = vsel %vm1443, %v3174, -inf
        %3182 = vmax.xlane.f32.xlu0 %v3181
        %v3183 = vpop.xlane.xlu0 %3182
        %v3184 = vsub.f32 %v3172, %v3177
        %v3185 = vsub.f32 %v3173, %v3180
        %v3186 = vsub.f32 %v3174, %v3183
        %v3187 = vmul.f32 %v3184, 1.442695
        %v3188 = vpow.pop %v3187
        %v3189 = vmul.f32 %v3185, 1.442695
        %v3190 = vpow.pop %v3189
        %v3191 = vmul.f32 %v3186, 1.442695
        %v3192 = vpow.pop %v3191
        %v3193 = vsel %vm1443, %v3188, 0.0
        %3194 = vadd.xlane.f32.xlu0 %v3193
        %v3195 = vpop.xlane.xlu0 %3194
        %v3196 = vsel %vm1443, %v3190, 0.0
        %3197 = vadd.xlane.f32.xlu0 %v3196
        %v3198 = vpop.xlane.xlu0 %3197
        %v3199 = vsel %vm1443, %v3192, 0.0
        %3200 = vadd.xlane.f32.xlu0 %v3199
        %v3201 = vpop.xlane.xlu0 %3200
        %v3202 = vrcp.pop %v3195
        %v3203 = vmul.f32 %v3188, %v3202
        %v3204 = vrcp.pop %v3198
        %v3205 = vmul.f32 %v3190, %v3204
        %v3206 = vrcp.pop %v3201
        %v3207 = vmul.f32 %v3192, %v3206
        %3208 = vrot.lane.b32.xlu0 %v1430, 104
        %v3209 = vpop.permute.xlu0 %3208
        %v3212 = vsel %vm1443, %v3203, 0
        %3214 = vmatprep.subr.mxu0 0.0
        %3215 = vmatpush1.msra.mxu0 %v3209
        %3216 = vmatprep.subr.mxu0 0.0
        %3217 = vmatpush1.msra.mxu0 0.0
        %3218 = vmatprep.subr.mxu0 0.0
        %3219 = vmatpush1.msra.mxu0 0.0
        %3220 = vmatprep.subr.mxu0 0.0
        %3221 = vmatpush1.msra.mxu0 0.0
        %3222 = vmatprep.subr.mxu0 0.0
        %3223 = vmatpush1.msra.mxu0 0.0
        %3224 = vmatprep.subr.mxu0 0.0
        %3225 = vmatpush1.msra.mxu0 0.0
        %3226 = vmatprep.subr.mxu0 0.0
        %3227 = vmatpush1.msra.mxu0 0.0
        %3228 = vmatprep.subr.mxu0 0.0
        %3229 = vmatpush1.msra.mxu0 0.0
        %3230 = vmatprep.subr.mxu0 0.0
        %3231 = vmatpush1.msra.mxu0 0.0
        %3232 = vmatprep.subr.mxu0 0.0
        %3233 = vmatpush1.msra.mxu0 0.0
        %3234 = vmatprep.subr.mxu0 0.0
        %3235 = vmatpush1.msra.mxu0 0.0
        %3236 = vmatprep.subr.mxu0 0.0
        %3237 = vmatpush1.msra.mxu0 0.0
        %3238 = vmatprep.subr.mxu0 0.0
        %3239 = vmatpush1.msra.mxu0 0.0
        %3240 = vmatprep.subr.mxu0 0.0
        %3241 = vmatpush1.msra.mxu0 0.0
        %3242 = vmatprep.subr.mxu0 0.0
        %3243 = vmatpush1.msra.mxu0 0.0
        %3244 = vmatprep.subr.mxu0 0.0
        %3245 = vmatpush1.msra.mxu0 0.0
        %3246 = vmatprep.subr.mxu0 0.0
        %3247 = vmatpush1.msra.mxu0 0.0
        %3248 = vmatprep.subr.mxu0 0.0
        %3249 = vmatpush1.msra.mxu0 0.0
        %3250 = vmatprep.subr.mxu0 0.0
        %3251 = vmatpush1.msra.mxu0 0.0
        %3252 = vmatprep.subr.mxu0 0.0
        %3253 = vmatpush1.msra.mxu0 0.0
        %3254 = vmatprep.subr.mxu0 0.0
        %3255 = vmatpush1.msra.mxu0 0.0
        %3256 = vmatprep.subr.mxu0 0.0
        %3257 = vmatpush1.msra.mxu0 0.0
        %3258 = vmatprep.subr.mxu0 0.0
        %3259 = vmatpush1.msra.mxu0 0.0
        %3260 = vmatprep.subr.mxu0 0.0
        %3261 = vmatpush1.msra.mxu0 0.0
        %3262 = vmatprep.subr.mxu0 0.0
        %3263 = vmatpush1.msra.mxu0 0.0
        %3264 = vmatprep.subr.mxu0 0.0
        %3265 = vmatpush1.msra.mxu0 0.0
        %3266 = vmatprep.subr.mxu0 0.0
        %3267 = vmatpush1.msra.mxu0 0.0
        %3268 = vmatprep.subr.mxu0 0.0
        %3269 = vmatpush1.msra.mxu0 0.0
        %3270 = vmatprep.subr.mxu0 0.0
        %3271 = vmatpush1.msra.mxu0 0.0
        %3272 = vmatprep.subr.mxu0 0.0
        %3273 = vmatpush1.msra.mxu0 0.0
        %3274 = vmatprep.subr.mxu0 0.0
        %3275 = vmatpush1.msra.mxu0 0.0
        %3276 = vmatprep.subr.mxu0 0.0
        %3277 = vmatpush1.msra.mxu0 0.0
        %3278 = vmatprep.mubr.f32.mxu0 0.0
        %3279 = vmatmul.mubr.f32.gmra.mrb[0].mxu0 %v3212
        %v3280 = vpop.f32.mrb[0].mxu0
        %v3281 = vadd.f32 0.0, %v3280
        %v3282 = vpop.f32.mrb[0].mxu0
        %3283 = vdwg.mxu0
        %3284 = vrot.lane.b32.xlu0 %v1435, 104
        %v3285 = vpop.permute.xlu0 %3284
        %v3288 = vsel %vm1443, %v3205, 0
        %3290 = vmatprep.subr.mxu0 0.0
        %3291 = vmatpush1.msra.mxu0 %v3285
        %3292 = vmatprep.subr.mxu0 0.0
        %3293 = vmatpush1.msra.mxu0 0.0
        %3294 = vmatprep.subr.mxu0 0.0
        %3295 = vmatpush1.msra.mxu0 0.0
        %3296 = vmatprep.subr.mxu0 0.0
        %3297 = vmatpush1.msra.mxu0 0.0
        %3298 = vmatprep.subr.mxu0 0.0
        %3299 = vmatpush1.msra.mxu0 0.0
        %3300 = vmatprep.subr.mxu0 0.0
        %3301 = vmatpush1.msra.mxu0 0.0
        %3302 = vmatprep.subr.mxu0 0.0
        %3303 = vmatpush1.msra.mxu0 0.0
        %3304 = vmatprep.subr.mxu0 0.0
        %3305 = vmatpush1.msra.mxu0 0.0
        %3306 = vmatprep.subr.mxu0 0.0
        %3307 = vmatpush1.msra.mxu0 0.0
        %3308 = vmatprep.subr.mxu0 0.0
        %3309 = vmatpush1.msra.mxu0 0.0
        %3310 = vmatprep.subr.mxu0 0.0
        %3311 = vmatpush1.msra.mxu0 0.0
        %3312 = vmatprep.subr.mxu0 0.0
        %3313 = vmatpush1.msra.mxu0 0.0
        %3314 = vmatprep.subr.mxu0 0.0
        %3315 = vmatpush1.msra.mxu0 0.0
        %3316 = vmatprep.subr.mxu0 0.0
        %3317 = vmatpush1.msra.mxu0 0.0
        %3318 = vmatprep.subr.mxu0 0.0
        %3319 = vmatpush1.msra.mxu0 0.0
        %3320 = vmatprep.subr.mxu0 0.0
        %3321 = vmatpush1.msra.mxu0 0.0
        %3322 = vmatprep.subr.mxu0 0.0
        %3323 = vmatpush1.msra.mxu0 0.0
        %3324 = vmatprep.subr.mxu0 0.0
        %3325 = vmatpush1.msra.mxu0 0.0
        %3326 = vmatprep.subr.mxu0 0.0
        %3327 = vmatpush1.msra.mxu0 0.0
        %3328 = vmatprep.subr.mxu0 0.0
        %3329 = vmatpush1.msra.mxu0 0.0
        %3330 = vmatprep.subr.mxu0 0.0
        %3331 = vmatpush1.msra.mxu0 0.0
        %3332 = vmatprep.subr.mxu0 0.0
        %3333 = vmatpush1.msra.mxu0 0.0
        %3334 = vmatprep.subr.mxu0 0.0
        %3335 = vmatpush1.msra.mxu0 0.0
        %3336 = vmatprep.subr.mxu0 0.0
        %3337 = vmatpush1.msra.mxu0 0.0
        %3338 = vmatprep.subr.mxu0 0.0
        %3339 = vmatpush1.msra.mxu0 0.0
        %3340 = vmatprep.subr.mxu0 0.0
        %3341 = vmatpush1.msra.mxu0 0.0
        %3342 = vmatprep.subr.mxu0 0.0
        %3343 = vmatpush1.msra.mxu0 0.0
        %3344 = vmatprep.subr.mxu0 0.0
        %3345 = vmatpush1.msra.mxu0 0.0
        %3346 = vmatprep.subr.mxu0 0.0
        %3347 = vmatpush1.msra.mxu0 0.0
        %3348 = vmatprep.subr.mxu0 0.0
        %3349 = vmatpush1.msra.mxu0 0.0
        %3350 = vmatprep.subr.mxu0 0.0
        %3351 = vmatpush1.msra.mxu0 0.0
        %3352 = vmatprep.subr.mxu0 0.0
        %3353 = vmatpush1.msra.mxu0 0.0
        %3354 = vmatprep.mubr.f32.mxu0 0.0
        %3355 = vmatmul.mubr.f32.gmra.mrb[0].mxu0 %v3288
        %v3356 = vpop.f32.mrb[0].mxu0
        %v3357 = vadd.f32 0.0, %v3356
        %v3358 = vpop.f32.mrb[0].mxu0
        %3359 = vdwg.mxu0
        %3360 = vrot.lane.b32.xlu0 %v1440, 104
        %v3361 = vpop.permute.xlu0 %3360
        %v3364 = vsel %vm1443, %v3207, 0
        %3366 = vmatprep.subr.mxu0 0.0
        %3367 = vmatpush1.msra.mxu0 %v3361
        %3368 = vmatprep.subr.mxu0 0.0
        %3369 = vmatpush1.msra.mxu0 0.0
        %3370 = vmatprep.subr.mxu0 0.0
        %3371 = vmatpush1.msra.mxu0 0.0
        %3372 = vmatprep.subr.mxu0 0.0
        %3373 = vmatpush1.msra.mxu0 0.0
        %3374 = vmatprep.subr.mxu0 0.0
        %3375 = vmatpush1.msra.mxu0 0.0
        %3376 = vmatprep.subr.mxu0 0.0
        %3377 = vmatpush1.msra.mxu0 0.0
        %3378 = vmatprep.subr.mxu0 0.0
        %3379 = vmatpush1.msra.mxu0 0.0
        %3380 = vmatprep.subr.mxu0 0.0
        %3381 = vmatpush1.msra.mxu0 0.0
        %3382 = vmatprep.subr.mxu0 0.0
        %3383 = vmatpush1.msra.mxu0 0.0
        %3384 = vmatprep.subr.mxu0 0.0
        %3385 = vmatpush1.msra.mxu0 0.0
        %3386 = vmatprep.subr.mxu0 0.0
        %3387 = vmatpush1.msra.mxu0 0.0
        %3388 = vmatprep.subr.mxu0 0.0
        %3389 = vmatpush1.msra.mxu0 0.0
        %3390 = vmatprep.subr.mxu0 0.0
        %3391 = vmatpush1.msra.mxu0 0.0
        %3392 = vmatprep.subr.mxu0 0.0
        %3393 = vmatpush1.msra.mxu0 0.0
        %3394 = vmatprep.subr.mxu0 0.0
        %3395 = vmatpush1.msra.mxu0 0.0
        %3396 = vmatprep.subr.mxu0 0.0
        %3397 = vmatpush1.msra.mxu0 0.0
        %3398 = vmatprep.subr.mxu0 0.0
        %3399 = vmatpush1.msra.mxu0 0.0
        %3400 = vmatprep.subr.mxu0 0.0
        %3401 = vmatpush1.msra.mxu0 0.0
        %3402 = vmatprep.subr.mxu0 0.0
        %3403 = vmatpush1.msra.mxu0 0.0
        %3404 = vmatprep.subr.mxu0 0.0
        %3405 = vmatpush1.msra.mxu0 0.0
        %3406 = vmatprep.subr.mxu0 0.0
        %3407 = vmatpush1.msra.mxu0 0.0
        %3408 = vmatprep.subr.mxu0 0.0
        %3409 = vmatpush1.msra.mxu0 0.0
        %3410 = vmatprep.subr.mxu0 0.0
        %3411 = vmatpush1.msra.mxu0 0.0
        %3412 = vmatprep.subr.mxu0 0.0
        %3413 = vmatpush1.msra.mxu0 0.0
        %3414 = vmatprep.subr.mxu0 0.0
        %3415 = vmatpush1.msra.mxu0 0.0
        %3416 = vmatprep.subr.mxu0 0.0
        %3417 = vmatpush1.msra.mxu0 0.0
        %3418 = vmatprep.subr.mxu0 0.0
        %3419 = vmatpush1.msra.mxu0 0.0
        %3420 = vmatprep.subr.mxu0 0.0
        %3421 = vmatpush1.msra.mxu0 0.0
        %3422 = vmatprep.subr.mxu0 0.0
        %3423 = vmatpush1.msra.mxu0 0.0
        %3424 = vmatprep.subr.mxu0 0.0
        %3425 = vmatpush1.msra.mxu0 0.0
        %3426 = vmatprep.subr.mxu0 0.0
        %3427 = vmatpush1.msra.mxu0 0.0
        %3428 = vmatprep.subr.mxu0 0.0
        %3429 = vmatpush1.msra.mxu0 0.0
        %3430 = vmatprep.mubr.f32.mxu0 0.0
        %3431 = vmatmul.mubr.f32.gmra.mrb[0].mxu0 %v3364
        %v3432 = vpop.f32.mrb[0].mxu0
        %v3433 = vadd.f32 0.0, %v3432
        %v3434 = vpop.f32.mrb[0].mxu0
        %3435 = vdwg.mxu0
        %3439 = vrot.lane.b32.xlu0 %v2277, 8
        %v3440 = vpop.permute.xlu0 %3439
        %3441 = vrot.lane.b32.xlu0 %v2354, 8
        %v3442 = vpop.permute.xlu0 %3441
        %3443 = vrot.lane.b32.xlu0 %v2431, 8
        %v3444 = vpop.permute.xlu0 %3443
        %3451 = vrot.lane.b32.xlu0 %v2780, 16
        %v3452 = vpop.permute.xlu0 %3451
        %3453 = vrot.lane.b32.xlu0 %v2856, 16
        %v3454 = vpop.permute.xlu0 %3453
        %3455 = vrot.lane.b32.xlu0 %v2932, 16
        %v3456 = vpop.permute.xlu0 %3455
        %3463 = vrot.lane.b32.xlu0 %v3281, 24
        %v3464 = vpop.permute.xlu0 %3463
        %3465 = vrot.lane.b32.xlu0 %v3357, 24
        %v3466 = vpop.permute.xlu0 %3465
        %3467 = vrot.lane.b32.xlu0 %v3433, 24
        %v3468 = vpop.permute.xlu0 %3467
        %v3472 = vsel %vm1443, %v1781, %v3440
        %v3473 = vsel %vm1443, %v1854, %v3442
        %v3474 = vsel %vm1443, %v1927, %v3444
        %v3475 = vsel %vm1061, %v3472, %v3452
        %v3476 = vsel %vm1061, %v3473, %v3454
        %v3477 = vsel %vm1061, %v3474, %v3456
        %vm3478 = vcmask 195584
        %v3479 = vsel %vm3478, %v3475, %v3464
        %v3480 = vsel %vm3478, %v3476, %v3466
        %v3481 = vsel %vm3478, %v3477, %v3468
        %v3482 = vld [vmem:[%s27] sm:$0xff]
        %v3483 = vld [vmem:[%s27 + $0x8] sm:$0xff]
        %v3484 = vld [vmem:[%s27 + $0x10] sm:$0xff]
        %v3485 = vld [vmem:[%s27 + $0x18] sm:$0xff]
        %v3486 = vld [vmem:[%s29] sm:$0x1]
        %v3488 = vlaneseq
        %v3489 = vshrl.u32 %v3488, 7
        %v3490 = vsub.s32 0, %v3489
        %v3491 = vrot.slane %v3486, %v3490
        %v3494 = vsel %vm1171, %v3479, 0
        %v3497 = vsel %vm1171, %v3480, 0
        %v3500 = vsel %vm1171, %v3481, 0
        %3502 = vmatprep.subr.mxu0 0.0
        %3503 = vmatpush1.msra.mxu0 %v3482
        %3504 = vmatprep.subr.mxu0 0.0
        %3505 = vmatpush1.msra.mxu0 %v3483
        %3506 = vmatprep.subr.mxu0 0.0
        %3507 = vmatpush1.msra.mxu0 %v3484
        %3508 = vmatprep.subr.mxu0 0.0
        %3509 = vmatpush1.msra.mxu0 %v3485
        %3510 = vmatprep.subr.mxu0 0.0
        %3511 = vmatpush1.msra.mxu0 0.0
        %3512 = vmatprep.subr.mxu0 0.0
        %3513 = vmatpush1.msra.mxu0 0.0
        %3514 = vmatprep.subr.mxu0 0.0
        %3515 = vmatpush1.msra.mxu0 0.0
        %3516 = vmatprep.subr.mxu0 0.0
        %3517 = vmatpush1.msra.mxu0 0.0
        %3518 = vmatprep.subr.mxu0 0.0
        %3519 = vmatpush1.msra.mxu0 0.0
        %3520 = vmatprep.subr.mxu0 0.0
        %3521 = vmatpush1.msra.mxu0 0.0
        %3522 = vmatprep.subr.mxu0 0.0
        %3523 = vmatpush1.msra.mxu0 0.0
        %3524 = vmatprep.subr.mxu0 0.0
        %3525 = vmatpush1.msra.mxu0 0.0
        %3526 = vmatprep.subr.mxu0 0.0
        %3527 = vmatpush1.msra.mxu0 0.0
        %3528 = vmatprep.subr.mxu0 0.0
        %3529 = vmatpush1.msra.mxu0 0.0
        %3530 = vmatprep.subr.mxu0 0.0
        %3531 = vmatpush1.msra.mxu0 0.0
        %3532 = vmatprep.subr.mxu0 0.0
        %3533 = vmatpush1.msra.mxu0 0.0
        %3534 = vmatprep.subr.mxu0 0.0
        %3535 = vmatpush1.msra.mxu0 0.0
        %3536 = vmatprep.subr.mxu0 0.0
        %3537 = vmatpush1.msra.mxu0 0.0
        %3538 = vmatprep.subr.mxu0 0.0
        %3539 = vmatpush1.msra.mxu0 0.0
        %3540 = vmatprep.subr.mxu0 0.0
        %3541 = vmatpush1.msra.mxu0 0.0
        %3542 = vmatprep.subr.mxu0 0.0
        %3543 = vmatpush1.msra.mxu0 0.0
        %3544 = vmatprep.subr.mxu0 0.0
        %3545 = vmatpush1.msra.mxu0 0.0
        %3546 = vmatprep.subr.mxu0 0.0
        %3547 = vmatpush1.msra.mxu0 0.0
        %3548 = vmatprep.subr.mxu0 0.0
        %3549 = vmatpush1.msra.mxu0 0.0
        %3550 = vmatprep.subr.mxu0 0.0
        %3551 = vmatpush1.msra.mxu0 0.0
        %3552 = vmatprep.subr.mxu0 0.0
        %3553 = vmatpush1.msra.mxu0 0.0
        %3554 = vmatprep.subr.mxu0 0.0
        %3555 = vmatpush1.msra.mxu0 0.0
        %3556 = vmatprep.subr.mxu0 0.0
        %3557 = vmatpush1.msra.mxu0 0.0
        %3558 = vmatprep.subr.mxu0 0.0
        %3559 = vmatpush1.msra.mxu0 0.0
        %3560 = vmatprep.subr.mxu0 0.0
        %3561 = vmatpush1.msra.mxu0 0.0
        %3562 = vmatprep.subr.mxu0 0.0
        %3563 = vmatpush1.msra.mxu0 0.0
        %3564 = vmatprep.subr.mxu0 0.0
        %3565 = vmatpush1.msra.mxu0 0.0
        %3566 = vmatprep.mubr.f32.mxu0 0.0
        %3567 = vmatmul.mubr.f32.gmra.mrb[0].mxu0 %v3494
        %v3568 = vpop.f32.mrb[0].mxu0
        %v3569 = vadd.f32 %v3491, %v3568
        %v3570 = vpop.f32.mrb[0].mxu0
        %3571 = vmatprep.mubr.f32.mxu0 0.0
        %3572 = vmatmul.mubr.f32.gmra.mrb[0].mxu0 %v3497
        %v3573 = vpop.f32.mrb[0].mxu0
        %v3574 = vadd.f32 %v3491, %v3573
        %v3575 = vpop.f32.mrb[0].mxu0
        %3576 = vmatprep.mubr.f32.mxu0 0.0
        %3577 = vmatmul.mubr.f32.gmra.mrb[0].mxu0 %v3500
        %v3578 = vpop.f32.mrb[0].mxu0
        %v3579 = vadd.f32 %v3491, %v3578
        %v3580 = vpop.f32.mrb[0].mxu0
        %3581 = vdwg.mxu0
        %v3582 = vadd.f32 %v1151, %v3569
        %v3583 = vadd.f32 %v1152, %v3574
        %v3584 = vadd.f32 %v1153, %v3579
        %v3585 = vld [vmem:[%s39] sm:$0x1]
        %v3586 = vld [vmem:[%s41] sm:$0x1]
        %v3587 = vsel %vm1171, %v3582, 0.0
        %3588 = vadd.xlane.f32.xlu0 %v3587
        %v3589 = vpop.xlane.xlu0 %3588
        %v3590 = vsel %vm1171, %v3583, 0.0
        %3591 = vadd.xlane.f32.xlu0 %v3590
        %v3592 = vpop.xlane.xlu0 %3591
        %v3593 = vsel %vm1171, %v3584, 0.0
        %3594 = vadd.xlane.f32.xlu0 %v3593
        %v3595 = vpop.xlane.xlu0 %3594
        %v3596 = vrcp.pop 32.0
        %v3597 = vmul.f32 %v3589, %v3596
        %v3598 = vmul.f32 %v3592, %v3596
        %v3599 = vmul.f32 %v3595, %v3596
        %v3600 = vsub.f32 %v3582, %v3597
        %v3601 = vsub.f32 %v3583, %v3598
        %v3602 = vsub.f32 %v3584, %v3599
        %v3603 = vmul.f32 %v3600, %v3600
        %v3604 = vmul.f32 %v3601, %v3601
        %v3605 = vmul.f32 %v3602, %v3602
        %v3606 = vsel %vm1171, %v3603, 0.0
        %3607 = vadd.xlane.f32.xlu0 %v3606
        %v3608 = vpop.xlane.xlu0 %3607
        %v3609 = vsel %vm1171, %v3604, 0.0
        %3610 = vadd.xlane.f32.xlu0 %v3609
        %v3611 = vpop.xlane.xlu0 %3610
        %v3612 = vsel %vm1171, %v3605, 0.0
        %3613 = vadd.xlane.f32.xlu0 %v3612
        %v3614 = vpop.xlane.xlu0 %3613
        %v3615 = vmul.f32 %v3608, %v3596
        %v3616 = vmul.f32 %v3611, %v3596
        %v3617 = vmul.f32 %v3614, %v3596
        %v3618 = vadd.f32 %v3615, 1e-05
        %v3619 = vadd.f32 %v3616, 1e-05
        %v3620 = vadd.f32 %v3617, 1e-05
        %v3621 = vrsqrt.pop %v3618
        %v3622 = vrsqrt.pop %v3619
        %v3623 = vrsqrt.pop %v3620
        %v3624 = vmul.f32 %v3600, %v3621
        %v3625 = vmul.f32 %v3601, %v3622
        %v3626 = vmul.f32 %v3602, %v3623
        %v3628 = vlaneseq
        %v3629 = vshrl.u32 %v3628, 7
        %v3630 = vsub.s32 0, %v3629
        %v3631 = vrot.slane %v3585, %v3630
        %v3633 = vmul.f32 %v3624, %v3631
        %v3634 = vmul.f32 %v3625, %v3631
        %v3635 = vmul.f32 %v3626, %v3631
        %v3637 = vlaneseq
        %v3638 = vshrl.u32 %v3637, 7
        %v3639 = vsub.s32 0, %v3638
        %v3640 = vrot.slane %v3586, %v3639
        %v3642 = vadd.f32 %v3633, %v3640
        %v3643 = vadd.f32 %v3634, %v3640
        %v3644 = vadd.f32 %v3635, %v3640
        %v3645 = vld [vmem:[%s31] sm:$0xff]
        %v3646 = vld [vmem:[%s31 + $0x8] sm:$0xff]
        %v3647 = vld [vmem:[%s31 + $0x10] sm:$0xff]
        %v3648 = vld [vmem:[%s31 + $0x18] sm:$0xff]
        %v3649 = vld [vmem:[%s33] sm:$0x1]
        %v3651 = vlaneseq
        %v3652 = vshrl.u32 %v3651, 7
        %v3653 = vsub.s32 0, %v3652
        %v3654 = vrot.slane %v3649, %v3653
        %v3657 = vsel %vm1171, %v3642, 0
        %v3660 = vsel %vm1171, %v3643, 0
        %v3663 = vsel %vm1171, %v3644, 0
        %3665 = vmatprep.subr.mxu0 0.0
        %3666 = vmatpush1.msra.mxu0 %v3645
        %3667 = vmatprep.subr.mxu0 0.0
        %3668 = vmatpush1.msra.mxu0 %v3646
        %3669 = vmatprep.subr.mxu0 0.0
        %3670 = vmatpush1.msra.mxu0 %v3647
        %3671 = vmatprep.subr.mxu0 0.0
        %3672 = vmatpush1.msra.mxu0 %v3648
        %3673 = vmatprep.subr.mxu0 0.0
        %3674 = vmatpush1.msra.mxu0 0.0
        %3675 = vmatprep.subr.mxu0 0.0
        %3676 = vmatpush1.msra.mxu0 0.0
        %3677 = vmatprep.subr.mxu0 0.0
        %3678 = vmatpush1.msra.mxu0 0.0
        %3679 = vmatprep.subr.mxu0 0.0
        %3680 = vmatpush1.msra.mxu0 0.0
        %3681 = vmatprep.subr.mxu0 0.0
        %3682 = vmatpush1.msra.mxu0 0.0
        %3683 = vmatprep.subr.mxu0 0.0
        %3684 = vmatpush1.msra.mxu0 0.0
        %3685 = vmatprep.subr.mxu0 0.0
        %3686 = vmatpush1.msra.mxu0 0.0
        %3687 = vmatprep.subr.mxu0 0.0
        %3688 = vmatpush1.msra.mxu0 0.0
        %3689 = vmatprep.subr.mxu0 0.0
        %3690 = vmatpush1.msra.mxu0 0.0
        %3691 = vmatprep.subr.mxu0 0.0
        %3692 = vmatpush1.msra.mxu0 0.0
        %3693 = vmatprep.subr.mxu0 0.0
        %3694 = vmatpush1.msra.mxu0 0.0
        %3695 = vmatprep.subr.mxu0 0.0
        %3696 = vmatpush1.msra.mxu0 0.0
        %3697 = vmatprep.subr.mxu0 0.0
        %3698 = vmatpush1.msra.mxu0 0.0
        %3699 = vmatprep.subr.mxu0 0.0
        %3700 = vmatpush1.msra.mxu0 0.0
        %3701 = vmatprep.subr.mxu0 0.0
        %3702 = vmatpush1.msra.mxu0 0.0
        %3703 = vmatprep.subr.mxu0 0.0
        %3704 = vmatpush1.msra.mxu0 0.0
        %3705 = vmatprep.subr.mxu0 0.0
        %3706 = vmatpush1.msra.mxu0 0.0
        %3707 = vmatprep.subr.mxu0 0.0
        %3708 = vmatpush1.msra.mxu0 0.0
        %3709 = vmatprep.subr.mxu0 0.0
        %3710 = vmatpush1.msra.mxu0 0.0
        %3711 = vmatprep.subr.mxu0 0.0
        %3712 = vmatpush1.msra.mxu0 0.0
        %3713 = vmatprep.subr.mxu0 0.0
        %3714 = vmatpush1.msra.mxu0 0.0
        %3715 = vmatprep.subr.mxu0 0.0
        %3716 = vmatpush1.msra.mxu0 0.0
        %3717 = vmatprep.subr.mxu0 0.0
        %3718 = vmatpush1.msra.mxu0 0.0
        %3719 = vmatprep.subr.mxu0 0.0
        %3720 = vmatpush1.msra.mxu0 0.0
        %3721 = vmatprep.subr.mxu0 0.0
        %3722 = vmatpush1.msra.mxu0 0.0
        %3723 = vmatprep.subr.mxu0 0.0
        %3724 = vmatpush1.msra.mxu0 0.0
        %3725 = vmatprep.subr.mxu0 0.0
        %3726 = vmatpush1.msra.mxu0 0.0
        %3727 = vmatprep.subr.mxu0 0.0
        %3728 = vmatpush1.msra.mxu0 0.0
        %3729 = vmatprep.mubr.f32.mxu0 0.0
        %3730 = vmatmul.mubr.f32.gmra.mrb[0].mxu0 %v3657
        %v3731 = vpop.f32.mrb[0].mxu0
        %v3732 = vadd.f32 %v3654, %v3731
        %v3733 = vpop.f32.mrb[0].mxu0
        %3734 = vmatprep.mubr.f32.mxu0 0.0
        %3735 = vmatmul.mubr.f32.gmra.mrb[0].mxu0 %v3660
        %v3736 = vpop.f32.mrb[0].mxu0
        %v3737 = vadd.f32 %v3654, %v3736
        %v3738 = vpop.f32.mrb[0].mxu0
        %3739 = vmatprep.mubr.f32.mxu0 0.0
        %3740 = vmatmul.mubr.f32.gmra.mrb[0].mxu0 %v3663
        %v3741 = vpop.f32.mrb[0].mxu0
        %v3742 = vadd.f32 %v3654, %v3741
        %v3743 = vpop.f32.mrb[0].mxu0
        %3744 = vdwg.mxu0
        %v3745 = vmax.f32 %v3732, 0.0
        %v3746 = vmax.f32 %v3737, 0.0
        %v3747 = vmax.f32 %v3742, 0.0
        %v3748 = vld [vmem:[%s35] sm:$0xff]
        %v3749 = vld [vmem:[%s35 + $0x8] sm:$0xff]
        %v3750 = vld [vmem:[%s35 + $0x10] sm:$0xff]
        %v3751 = vld [vmem:[%s35 + $0x18] sm:$0xff]
        %v3752 = vld [vmem:[%s35 + $0x20] sm:$0xff]
        %v3753 = vld [vmem:[%s35 + $0x28] sm:$0xff]
        %v3754 = vld [vmem:[%s35 + $0x30] sm:$0xff]
        %v3755 = vld [vmem:[%s35 + $0x38] sm:$0xff]
        %v3756 = vld [vmem:[%s35 + $0x40] sm:$0xff]
        %v3757 = vld [vmem:[%s35 + $0x48] sm:$0xff]
        %v3758 = vld [vmem:[%s35 + $0x50] sm:$0xff]
        %v3759 = vld [vmem:[%s35 + $0x58] sm:$0xff]
        %v3760 = vld [vmem:[%s35 + $0x60] sm:$0xff]
        %v3761 = vld [vmem:[%s35 + $0x68] sm:$0xff]
        %v3762 = vld [vmem:[%s35 + $0x70] sm:$0xff]
        %v3763 = vld [vmem:[%s35 + $0x78] sm:$0xff]
        %v3764 = vld [vmem:[%s37] sm:$0x1]
        %v3766 = vlaneseq
        %v3767 = vshrl.u32 %v3766, 7
        %v3768 = vsub.s32 0, %v3767
        %v3769 = vrot.slane %v3764, %v3768
        %3771 = vmatprep.subr.mxu0 0.0
        %3772 = vmatpush1.msra.mxu0 %v3748
        %3773 = vmatprep.subr.mxu0 0.0
        %3774 = vmatpush1.msra.mxu0 %v3749
        %3775 = vmatprep.subr.mxu0 0.0
        %3776 = vmatpush1.msra.mxu0 %v3750
        %3777 = vmatprep.subr.mxu0 0.0
        %3778 = vmatpush1.msra.mxu0 %v3751
        %3779 = vmatprep.subr.mxu0 0.0
        %3780 = vmatpush1.msra.mxu0 %v3752
        %3781 = vmatprep.subr.mxu0 0.0
        %3782 = vmatpush1.msra.mxu0 %v3753
        %3783 = vmatprep.subr.mxu0 0.0
        %3784 = vmatpush1.msra.mxu0 %v3754
        %3785 = vmatprep.subr.mxu0 0.0
        %3786 = vmatpush1.msra.mxu0 %v3755
        %3787 = vmatprep.subr.mxu0 0.0
        %3788 = vmatpush1.msra.mxu0 %v3756
        %3789 = vmatprep.subr.mxu0 0.0
        %3790 = vmatpush1.msra.mxu0 %v3757
        %3791 = vmatprep.subr.mxu0 0.0
        %3792 = vmatpush1.msra.mxu0 %v3758
        %3793 = vmatprep.subr.mxu0 0.0
        %3794 = vmatpush1.msra.mxu0 %v3759
        %3795 = vmatprep.subr.mxu0 0.0
        %3796 = vmatpush1.msra.mxu0 %v3760
        %3797 = vmatprep.subr.mxu0 0.0
        %3798 = vmatpush1.msra.mxu0 %v3761
        %3799 = vmatprep.subr.mxu0 0.0
        %3800 = vmatpush1.msra.mxu0 %v3762
        %3801 = vmatprep.subr.mxu0 0.0
        %3802 = vmatpush1.msra.mxu0 %v3763
        %3803 = vmatprep.subr.mxu0 0.0
        %3804 = vmatpush1.msra.mxu0 0.0
        %3805 = vmatprep.subr.mxu0 0.0
        %3806 = vmatpush1.msra.mxu0 0.0
        %3807 = vmatprep.subr.mxu0 0.0
        %3808 = vmatpush1.msra.mxu0 0.0
        %3809 = vmatprep.subr.mxu0 0.0
        %3810 = vmatpush1.msra.mxu0 0.0
        %3811 = vmatprep.subr.mxu0 0.0
        %3812 = vmatpush1.msra.mxu0 0.0
        %3813 = vmatprep.subr.mxu0 0.0
        %3814 = vmatpush1.msra.mxu0 0.0
        %3815 = vmatprep.subr.mxu0 0.0
        %3816 = vmatpush1.msra.mxu0 0.0
        %3817 = vmatprep.subr.mxu0 0.0
        %3818 = vmatpush1.msra.mxu0 0.0
        %3819 = vmatprep.subr.mxu0 0.0
        %3820 = vmatpush1.msra.mxu0 0.0
        %3821 = vmatprep.subr.mxu0 0.0
        %3822 = vmatpush1.msra.mxu0 0.0
        %3823 = vmatprep.subr.mxu0 0.0
        %3824 = vmatpush1.msra.mxu0 0.0
        %3825 = vmatprep.subr.mxu0 0.0
        %3826 = vmatpush1.msra.mxu0 0.0
        %3827 = vmatprep.subr.mxu0 0.0
        %3828 = vmatpush1.msra.mxu0 0.0
        %3829 = vmatprep.subr.mxu0 0.0
        %3830 = vmatpush1.msra.mxu0 0.0
        %3831 = vmatprep.subr.mxu0 0.0
        %3832 = vmatpush1.msra.mxu0 0.0
        %3833 = vmatprep.subr.mxu0 0.0
        %3834 = vmatpush1.msra.mxu0 0.0
        %3835 = vmatprep.mubr.f32.mxu0 0.0
        %3836 = vmatmul.mubr.f32.gmra.mrb[0].mxu0 %v3745
        %v3837 = vpop.f32.mrb[0].mxu0
        %v3838 = vadd.f32 %v3769, %v3837
        %v3839 = vpop.f32.mrb[0].mxu0
        %3840 = vmatprep.mubr.f32.mxu0 0.0
        %3841 = vmatmul.mubr.f32.gmra.mrb[0].mxu0 %v3746
        %v3842 = vpop.f32.mrb[0].mxu0
        %v3843 = vadd.f32 %v3769, %v3842
        %v3844 = vpop.f32.mrb[0].mxu0
        %3845 = vmatprep.mubr.f32.mxu0 0.0
        %3846 = vmatmul.mubr.f32.gmra.mrb[0].mxu0 %v3747
        %v3847 = vpop.f32.mrb[0].mxu0
        %v3848 = vadd.f32 %v3769, %v3847
        %v3849 = vpop.f32.mrb[0].mxu0
        %3850 = vdwg.mxu0
        %v3851 = vadd.f32 %v3642, %v3838
        %v3852 = vadd.f32 %v3643, %v3843
        %v3853 = vadd.f32 %v3644, %v3848
        %v3854 = vld [vmem:[%s43] sm:$0x1]
        %v3855 = vld [vmem:[%s45] sm:$0x1]
        %v3856 = vsel %vm1171, %v3851, 0.0
        %3857 = vadd.xlane.f32.xlu0 %v3856
        %v3858 = vpop.xlane.xlu0 %3857
        %v3859 = vsel %vm1171, %v3852, 0.0
        %3860 = vadd.xlane.f32.xlu0 %v3859
        %v3861 = vpop.xlane.xlu0 %3860
        %v3862 = vsel %vm1171, %v3853, 0.0
        %3863 = vadd.xlane.f32.xlu0 %v3862
        %v3864 = vpop.xlane.xlu0 %3863
        %v3865 = vmul.f32 %v3858, %v3596
        %v3866 = vmul.f32 %v3861, %v3596
        %v3867 = vmul.f32 %v3864, %v3596
        %v3868 = vsub.f32 %v3851, %v3865
        %v3869 = vsub.f32 %v3852, %v3866
        %v3870 = vsub.f32 %v3853, %v3867
        %v3871 = vmul.f32 %v3868, %v3868
        %v3872 = vmul.f32 %v3869, %v3869
        %v3873 = vmul.f32 %v3870, %v3870
        %v3874 = vsel %vm1171, %v3871, 0.0
        %3875 = vadd.xlane.f32.xlu0 %v3874
        %v3876 = vpop.xlane.xlu0 %3875
        %v3877 = vsel %vm1171, %v3872, 0.0
        %3878 = vadd.xlane.f32.xlu0 %v3877
        %v3879 = vpop.xlane.xlu0 %3878
        %v3880 = vsel %vm1171, %v3873, 0.0
        %3881 = vadd.xlane.f32.xlu0 %v3880
        %v3882 = vpop.xlane.xlu0 %3881
        %v3883 = vmul.f32 %v3876, %v3596
        %v3884 = vmul.f32 %v3879, %v3596
        %v3885 = vmul.f32 %v3882, %v3596
        %v3886 = vadd.f32 %v3883, 1e-05
        %v3887 = vadd.f32 %v3884, 1e-05
        %v3888 = vadd.f32 %v3885, 1e-05
        %v3889 = vrsqrt.pop %v3886
        %v3890 = vrsqrt.pop %v3887
        %v3891 = vrsqrt.pop %v3888
        %v3892 = vmul.f32 %v3868, %v3889
        %v3893 = vmul.f32 %v3869, %v3890
        %v3894 = vmul.f32 %v3870, %v3891
        %v3896 = vlaneseq
        %v3897 = vshrl.u32 %v3896, 7
        %v3898 = vsub.s32 0, %v3897
        %v3899 = vrot.slane %v3854, %v3898
        %v3901 = vmul.f32 %v3892, %v3899
        %v3902 = vmul.f32 %v3893, %v3899
        %v3903 = vmul.f32 %v3894, %v3899
        %v3905 = vlaneseq
        %v3906 = vshrl.u32 %v3905, 7
        %v3907 = vsub.s32 0, %v3906
        %v3908 = vrot.slane %v3855, %v3907
        %v3910 = vadd.f32 %v3901, %v3908
        %v3911 = vadd.f32 %v3902, %v3908
        %v3912 = vadd.f32 %v3903, %v3908
        %s3913 = scalar_lea.vmem %s15, 32
        %v3914 = vld [vmem:[%s3913] sm:$0xff]
        %v3915 = vld [vmem:[%s3913 + $0x8] sm:$0xff]
        %v3916 = vld [vmem:[%s3913 + $0x10] sm:$0xff]
        %v3917 = vld [vmem:[%s3913 + $0x18] sm:$0xff]
        %s3918 = scalar_lea.vmem %s17, 1
        %v3919 = vld [vmem:[%s3918] sm:$0x1]
        %v3921 = vlaneseq
        %v3922 = vshrl.u32 %v3921, 7
        %v3923 = vsub.s32 0, %v3922
        %v3924 = vrot.slane %v3919, %v3923
        %v3927 = vsel %vm1171, %v3910, 0
        %v3930 = vsel %vm1171, %v3911, 0
        %v3933 = vsel %vm1171, %v3912, 0
        %3935 = vmatprep.subr.mxu0 0.0
        %3936 = vmatpush1.msra.mxu0 %v3914
        %3937 = vmatprep.subr.mxu0 0.0
        %3938 = vmatpush1.msra.mxu0 %v3915
        %3939 = vmatprep.subr.mxu0 0.0
        %3940 = vmatpush1.msra.mxu0 %v3916
        %3941 = vmatprep.subr.mxu0 0.0
        %3942 = vmatpush1.msra.mxu0 %v3917
        %3943 = vmatprep.subr.mxu0 0.0
        %3944 = vmatpush1.msra.mxu0 0.0
        %3945 = vmatprep.subr.mxu0 0.0
        %3946 = vmatpush1.msra.mxu0 0.0
        %3947 = vmatprep.subr.mxu0 0.0
        %3948 = vmatpush1.msra.mxu0 0.0
        %3949 = vmatprep.subr.mxu0 0.0
        %3950 = vmatpush1.msra.mxu0 0.0
        %3951 = vmatprep.subr.mxu0 0.0
        %3952 = vmatpush1.msra.mxu0 0.0
        %3953 = vmatprep.subr.mxu0 0.0
        %3954 = vmatpush1.msra.mxu0 0.0
        %3955 = vmatprep.subr.mxu0 0.0
        %3956 = vmatpush1.msra.mxu0 0.0
        %3957 = vmatprep.subr.mxu0 0.0
        %3958 = vmatpush1.msra.mxu0 0.0
        %3959 = vmatprep.subr.mxu0 0.0
        %3960 = vmatpush1.msra.mxu0 0.0
        %3961 = vmatprep.subr.mxu0 0.0
        %3962 = vmatpush1.msra.mxu0 0.0
        %3963 = vmatprep.subr.mxu0 0.0
        %3964 = vmatpush1.msra.mxu0 0.0
        %3965 = vmatprep.subr.mxu0 0.0
        %3966 = vmatpush1.msra.mxu0 0.0
        %3967 = vmatprep.subr.mxu0 0.0
        %3968 = vmatpush1.msra.mxu0 0.0
        %3969 = vmatprep.subr.mxu0 0.0
        %3970 = vmatpush1.msra.mxu0 0.0
        %3971 = vmatprep.subr.mxu0 0.0
        %3972 = vmatpush1.msra.mxu0 0.0
        %3973 = vmatprep.subr.mxu0 0.0
        %3974 = vmatpush1.msra.mxu0 0.0
        %3975 = vmatprep.subr.mxu0 0.0
        %3976 = vmatpush1.msra.mxu0 0.0
        %3977 = vmatprep.subr.mxu0 0.0
        %3978 = vmatpush1.msra.mxu0 0.0
        %3979 = vmatprep.subr.mxu0 0.0
        %3980 = vmatpush1.msra.mxu0 0.0
        %3981 = vmatprep.subr.mxu0 0.0
        %3982 = vmatpush1.msra.mxu0 0.0
        %3983 = vmatprep.subr.mxu0 0.0
        %3984 = vmatpush1.msra.mxu0 0.0
        %3985 = vmatprep.subr.mxu0 0.0
        %3986 = vmatpush1.msra.mxu0 0.0
        %3987 = vmatprep.subr.mxu0 0.0
        %3988 = vmatpush1.msra.mxu0 0.0
        %3989 = vmatprep.subr.mxu0 0.0
        %3990 = vmatpush1.msra.mxu0 0.0
        %3991 = vmatprep.subr.mxu0 0.0
        %3992 = vmatpush1.msra.mxu0 0.0
        %3993 = vmatprep.subr.mxu0 0.0
        %3994 = vmatpush1.msra.mxu0 0.0
        %3995 = vmatprep.subr.mxu0 0.0
        %3996 = vmatpush1.msra.mxu0 0.0
        %3997 = vmatprep.subr.mxu0 0.0
        %3998 = vmatpush1.msra.mxu0 0.0
        %3999 = vmatprep.mubr.f32.mxu0 0.0
        %4000 = vmatmul.mubr.f32.gmra.mrb[0].mxu0 %v3927
        %v4001 = vpop.f32.mrb[0].mxu0
        %v4002 = vadd.f32 %v3924, %v4001
        %v4003 = vpop.f32.mrb[0].mxu0
        %4004 = vmatprep.mubr.f32.mxu0 0.0
        %4005 = vmatmul.mubr.f32.gmra.mrb[0].mxu0 %v3930
        %v4006 = vpop.f32.mrb[0].mxu0
        %v4007 = vadd.f32 %v3924, %v4006
        %v4008 = vpop.f32.mrb[0].mxu0
        %4009 = vmatprep.mubr.f32.mxu0 0.0
        %4010 = vmatmul.mubr.f32.gmra.mrb[0].mxu0 %v3933
        %v4011 = vpop.f32.mrb[0].mxu0
        %v4012 = vadd.f32 %v3924, %v4011
        %v4013 = vpop.f32.mrb[0].mxu0
        %4014 = vdwg.mxu0
        %s4015 = scalar_lea.vmem %s19, 32
        %v4016 = vld [vmem:[%s4015] sm:$0xff]
        %v4017 = vld [vmem:[%s4015 + $0x8] sm:$0xff]
        %v4018 = vld [vmem:[%s4015 + $0x10] sm:$0xff]
        %v4019 = vld [vmem:[%s4015 + $0x18] sm:$0xff]
        %s4020 = scalar_lea.vmem %s21, 1
        %v4021 = vld [vmem:[%s4020] sm:$0x1]
        %v4023 = vlaneseq
        %v4024 = vshrl.u32 %v4023, 7
        %v4025 = vsub.s32 0, %v4024
        %v4026 = vrot.slane %v4021, %v4025
        %4028 = vmatprep.subr.mxu0 0.0
        %4029 = vmatpush1.msra.mxu0 %v4016
        %4030 = vmatprep.subr.mxu0 0.0
        %4031 = vmatpush1.msra.mxu0 %v4017
        %4032 = vmatprep.subr.mxu0 0.0
        %4033 = vmatpush1.msra.mxu0 %v4018
        %4034 = vmatprep.subr.mxu0 0.0
        %4035 = vmatpush1.msra.mxu0 %v4019
        %4036 = vmatprep.subr.mxu0 0.0
        %4037 = vmatpush1.msra.mxu0 0.0
        %4038 = vmatprep.subr.mxu0 0.0
        %4039 = vmatpush1.msra.mxu0 0.0
        %4040 = vmatprep.subr.mxu0 0.0
        %4041 = vmatpush1.msra.mxu0 0.0
        %4042 = vmatprep.subr.mxu0 0.0
        %4043 = vmatpush1.msra.mxu0 0.0
        %4044 = vmatprep.subr.mxu0 0.0
        %4045 = vmatpush1.msra.mxu0 0.0
        %4046 = vmatprep.subr.mxu0 0.0
        %4047 = vmatpush1.msra.mxu0 0.0
        %4048 = vmatprep.subr.mxu0 0.0
        %4049 = vmatpush1.msra.mxu0 0.0
        %4050 = vmatprep.subr.mxu0 0.0
        %4051 = vmatpush1.msra.mxu0 0.0
        %4052 = vmatprep.subr.mxu0 0.0
        %4053 = vmatpush1.msra.mxu0 0.0
        %4054 = vmatprep.subr.mxu0 0.0
        %4055 = vmatpush1.msra.mxu0 0.0
        %4056 = vmatprep.subr.mxu0 0.0
        %4057 = vmatpush1.msra.mxu0 0.0
        %4058 = vmatprep.subr.mxu0 0.0
        %4059 = vmatpush1.msra.mxu0 0.0
        %4060 = vmatprep.subr.mxu0 0.0
        %4061 = vmatpush1.msra.mxu0 0.0
        %4062 = vmatprep.subr.mxu0 0.0
        %4063 = vmatpush1.msra.mxu0 0.0
        %4064 = vmatprep.subr.mxu0 0.0
        %4065 = vmatpush1.msra.mxu0 0.0
        %4066 = vmatprep.subr.mxu0 0.0
        %4067 = vmatpush1.msra.mxu0 0.0
        %4068 = vmatprep.subr.mxu0 0.0
        %4069 = vmatpush1.msra.mxu0 0.0
        %4070 = vmatprep.subr.mxu0 0.0
        %4071 = vmatpush1.msra.mxu0 0.0
        %4072 = vmatprep.subr.mxu0 0.0
        %4073 = vmatpush1.msra.mxu0 0.0
        %4074 = vmatprep.subr.mxu0 0.0
        %4075 = vmatpush1.msra.mxu0 0.0
        %4076 = vmatprep.subr.mxu0 0.0
        %4077 = vmatpush1.msra.mxu0 0.0
        %4078 = vmatprep.subr.mxu0 0.0
        %4079 = vmatpush1.msra.mxu0 0.0
        %4080 = vmatprep.subr.mxu0 0.0
        %4081 = vmatpush1.msra.mxu0 0.0
        %4082 = vmatprep.subr.mxu0 0.0
        %4083 = vmatpush1.msra.mxu0 0.0
        %4084 = vmatprep.subr.mxu0 0.0
        %4085 = vmatpush1.msra.mxu0 0.0
        %4086 = vmatprep.subr.mxu0 0.0
        %4087 = vmatpush1.msra.mxu0 0.0
        %4088 = vmatprep.subr.mxu0 0.0
        %4089 = vmatpush1.msra.mxu0 0.0
        %4090 = vmatprep.subr.mxu0 0.0
        %4091 = vmatpush1.msra.mxu0 0.0
        %4092 = vmatprep.mubr.f32.mxu0 0.0
        %4093 = vmatmul.mubr.f32.gmra.mrb[0].mxu0 %v3927
        %v4094 = vpop.f32.mrb[0].mxu0
        %v4095 = vadd.f32 %v4026, %v4094
        %v4096 = vpop.f32.mrb[0].mxu0
        %4097 = vmatprep.mubr.f32.mxu0 0.0
        %4098 = vmatmul.mubr.f32.gmra.mrb[0].mxu0 %v3930
        %v4099 = vpop.f32.mrb[0].mxu0
        %v4100 = vadd.f32 %v4026, %v4099
        %v4101 = vpop.f32.mrb[0].mxu0
        %4102 = vmatprep.mubr.f32.mxu0 0.0
        %4103 = vmatmul.mubr.f32.gmra.mrb[0].mxu0 %v3933
        %v4104 = vpop.f32.mrb[0].mxu0
        %v4105 = vadd.f32 %v4026, %v4104
        %v4106 = vpop.f32.mrb[0].mxu0
        %4107 = vdwg.mxu0
        %s4108 = scalar_lea.vmem %s23, 32
        %v4109 = vld [vmem:[%s4108] sm:$0xff]
        %v4110 = vld [vmem:[%s4108 + $0x8] sm:$0xff]
        %v4111 = vld [vmem:[%s4108 + $0x10] sm:$0xff]
        %v4112 = vld [vmem:[%s4108 + $0x18] sm:$0xff]
        %s4113 = scalar_lea.vmem %s25, 1
        %v4114 = vld [vmem:[%s4113] sm:$0x1]
        %v4116 = vlaneseq
        %v4117 = vshrl.u32 %v4116, 7
        %v4118 = vsub.s32 0, %v4117
        %v4119 = vrot.slane %v4114, %v4118
        %4121 = vmatprep.subr.mxu0 0.0
        %4122 = vmatpush1.msra.mxu0 %v4109
        %4123 = vmatprep.subr.mxu0 0.0
        %4124 = vmatpush1.msra.mxu0 %v4110
        %4125 = vmatprep.subr.mxu0 0.0
        %4126 = vmatpush1.msra.mxu0 %v4111
        %4127 = vmatprep.subr.mxu0 0.0
        %4128 = vmatpush1.msra.mxu0 %v4112
        %4129 = vmatprep.subr.mxu0 0.0
        %4130 = vmatpush1.msra.mxu0 0.0
        %4131 = vmatprep.subr.mxu0 0.0
        %4132 = vmatpush1.msra.mxu0 0.0
        %4133 = vmatprep.subr.mxu0 0.0
        %4134 = vmatpush1.msra.mxu0 0.0
        %4135 = vmatprep.subr.mxu0 0.0
        %4136 = vmatpush1.msra.mxu0 0.0
        %4137 = vmatprep.subr.mxu0 0.0
        %4138 = vmatpush1.msra.mxu0 0.0
        %4139 = vmatprep.subr.mxu0 0.0
        %4140 = vmatpush1.msra.mxu0 0.0
        %4141 = vmatprep.subr.mxu0 0.0
        %4142 = vmatpush1.msra.mxu0 0.0
        %4143 = vmatprep.subr.mxu0 0.0
        %4144 = vmatpush1.msra.mxu0 0.0
        %4145 = vmatprep.subr.mxu0 0.0
        %4146 = vmatpush1.msra.mxu0 0.0
        %4147 = vmatprep.subr.mxu0 0.0
        %4148 = vmatpush1.msra.mxu0 0.0
        %4149 = vmatprep.subr.mxu0 0.0
        %4150 = vmatpush1.msra.mxu0 0.0
        %4151 = vmatprep.subr.mxu0 0.0
        %4152 = vmatpush1.msra.mxu0 0.0
        %4153 = vmatprep.subr.mxu0 0.0
        %4154 = vmatpush1.msra.mxu0 0.0
        %4155 = vmatprep.subr.mxu0 0.0
        %4156 = vmatpush1.msra.mxu0 0.0
        %4157 = vmatprep.subr.mxu0 0.0
        %4158 = vmatpush1.msra.mxu0 0.0
        %4159 = vmatprep.subr.mxu0 0.0
        %4160 = vmatpush1.msra.mxu0 0.0
        %4161 = vmatprep.subr.mxu0 0.0
        %4162 = vmatpush1.msra.mxu0 0.0
        %4163 = vmatprep.subr.mxu0 0.0
        %4164 = vmatpush1.msra.mxu0 0.0
        %4165 = vmatprep.subr.mxu0 0.0
        %4166 = vmatpush1.msra.mxu0 0.0
        %4167 = vmatprep.subr.mxu0 0.0
        %4168 = vmatpush1.msra.mxu0 0.0
        %4169 = vmatprep.subr.mxu0 0.0
        %4170 = vmatpush1.msra.mxu0 0.0
        %4171 = vmatprep.subr.mxu0 0.0
        %4172 = vmatpush1.msra.mxu0 0.0
        %4173 = vmatprep.subr.mxu0 0.0
        %4174 = vmatpush1.msra.mxu0 0.0
        %4175 = vmatprep.subr.mxu0 0.0
        %4176 = vmatpush1.msra.mxu0 0.0
        %4177 = vmatprep.subr.mxu0 0.0
        %4178 = vmatpush1.msra.mxu0 0.0
        %4179 = vmatprep.subr.mxu0 0.0
        %4180 = vmatpush1.msra.mxu0 0.0
        %4181 = vmatprep.subr.mxu0 0.0
        %4182 = vmatpush1.msra.mxu0 0.0
        %4183 = vmatprep.subr.mxu0 0.0
        %4184 = vmatpush1.msra.mxu0 0.0
        %4185 = vmatprep.mubr.f32.mxu0 0.0
        %4186 = vmatmul.mubr.f32.gmra.mrb[0].mxu0 %v3927
        %v4187 = vpop.f32.mrb[0].mxu0
        %v4188 = vadd.f32 %v4119, %v4187
        %v4189 = vpop.f32.mrb[0].mxu0
        %4190 = vmatprep.mubr.f32.mxu0 0.0
        %4191 = vmatmul.mubr.f32.gmra.mrb[0].mxu0 %v3930
        %v4192 = vpop.f32.mrb[0].mxu0
        %v4193 = vadd.f32 %v4119, %v4192
        %v4194 = vpop.f32.mrb[0].mxu0
        %4195 = vmatprep.mubr.f32.mxu0 0.0
        %4196 = vmatmul.mubr.f32.gmra.mrb[0].mxu0 %v3933
        %v4197 = vpop.f32.mrb[0].mxu0
        %v4198 = vadd.f32 %v4119, %v4197
        %v4199 = vpop.f32.mrb[0].mxu0
        %4200 = vdwg.mxu0
        %v4202 = vsel %vm1443, %v4002, 0
        %v4205 = vsel %vm1443, %v4095, 0
        %4207 = vmatprep.subr.mxu0 0.0
        %4208 = vmatpush1.xpose.msra.mxu0 %v4205
        %4209 = vmatprep.subr.mxu0 0.0
        %4210 = vmatpush1.xpose.msra.mxu0 0.0
        %4211 = vmatprep.subr.mxu0 0.0
        %4212 = vmatpush1.xpose.msra.mxu0 0.0
        %4213 = vmatprep.subr.mxu0 0.0
        %4214 = vmatpush1.xpose.msra.mxu0 0.0
        %4215 = vmatprep.subr.mxu0 0.0
        %4216 = vmatpush1.xpose.msra.mxu0 0.0
        %4217 = vmatprep.subr.mxu0 0.0
        %4218 = vmatpush1.xpose.msra.mxu0 0.0
        %4219 = vmatprep.subr.mxu0 0.0
        %4220 = vmatpush1.xpose.msra.mxu0 0.0
        %4221 = vmatprep.subr.mxu0 0.0
        %4222 = vmatpush1.xpose.msra.mxu0 0.0
        %4223 = vmatprep.subr.mxu0 0.0
        %4224 = vmatpush1.xpose.msra.mxu0 0.0
        %4225 = vmatprep.subr.mxu0 0.0
        %4226 = vmatpush1.xpose.msra.mxu0 0.0
        %4227 = vmatprep.subr.mxu0 0.0
        %4228 = vmatpush1.xpose.msra.mxu0 0.0
        %4229 = vmatprep.subr.mxu0 0.0
        %4230 = vmatpush1.xpose.msra.mxu0 0.0
        %4231 = vmatprep.subr.mxu0 0.0
        %4232 = vmatpush1.xpose.msra.mxu0 0.0
        %4233 = vmatprep.subr.mxu0 0.0
        %4234 = vmatpush1.xpose.msra.mxu0 0.0
        %4235 = vmatprep.subr.mxu0 0.0
        %4236 = vmatpush1.xpose.msra.mxu0 0.0
        %4237 = vmatprep.subr.mxu0 0.0
        %4238 = vmatpush1.xpose.msra.mxu0 0.0
        %4239 = vmatprep.subr.mxu0 0.0
        %4240 = vmatpush1.xpose.msra.mxu0 0.0
        %4241 = vmatprep.subr.mxu0 0.0
        %4242 = vmatpush1.xpose.msra.mxu0 0.0
        %4243 = vmatprep.subr.mxu0 0.0
        %4244 = vmatpush1.xpose.msra.mxu0 0.0
        %4245 = vmatprep.subr.mxu0 0.0
        %4246 = vmatpush1.xpose.msra.mxu0 0.0
        %4247 = vmatprep.subr.mxu0 0.0
        %4248 = vmatpush1.xpose.msra.mxu0 0.0
        %4249 = vmatprep.subr.mxu0 0.0
        %4250 = vmatpush1.xpose.msra.mxu0 0.0
        %4251 = vmatprep.subr.mxu0 0.0
        %4252 = vmatpush1.xpose.msra.mxu0 0.0
        %4253 = vmatprep.subr.mxu0 0.0
        %4254 = vmatpush1.xpose.msra.mxu0 0.0
        %4255 = vmatprep.subr.mxu0 0.0
        %4256 = vmatpush1.xpose.msra.mxu0 0.0
        %4257 = vmatprep.subr.mxu0 0.0
        %4258 = vmatpush1.xpose.msra.mxu0 0.0
        %4259 = vmatprep.subr.mxu0 0.0
        %4260 = vmatpush1.xpose.msra.mxu0 0.0
        %4261 = vmatprep.subr.mxu0 0.0
        %4262 = vmatpush1.xpose.msra.mxu0 0.0
        %4263 = vmatprep.subr.mxu0 0.0
        %4264 = vmatpush1.xpose.msra.mxu0 0.0
        %4265 = vmatprep.subr.mxu0 0.0
        %4266 = vmatpush1.xpose.msra.mxu0 0.0
        %4267 = vmatprep.subr.mxu0 0.0
        %4268 = vmatpush1.xpose.msra.mxu0 0.0
        %4269 = vmatprep.subr.mxu0 0.0
        %4270 = vmatpush1.xpose.msra.mxu0 0.0
        %4271 = vmatprep.mubr.f32.mxu0 0.0
        %4272 = vmatmul.mubr.f32.gmra.mrb[0].mxu0 %v4202
        %v4273 = vpop.f32.mrb[0].mxu0
        %v4274 = vadd.f32 0.0, %v4273
        %v4275 = vpop.f32.mrb[0].mxu0
        %4276 = vdwg.mxu0
        %v4278 = vsel %vm1443, %v4007, 0
        %v4281 = vsel %vm1443, %v4100, 0
        %4283 = vmatprep.subr.mxu0 0.0
        %4284 = vmatpush1.xpose.msra.mxu0 %v4281
        %4285 = vmatprep.subr.mxu0 0.0
        %4286 = vmatpush1.xpose.msra.mxu0 0.0
        %4287 = vmatprep.subr.mxu0 0.0
        %4288 = vmatpush1.xpose.msra.mxu0 0.0
        %4289 = vmatprep.subr.mxu0 0.0
        %4290 = vmatpush1.xpose.msra.mxu0 0.0
        %4291 = vmatprep.subr.mxu0 0.0
        %4292 = vmatpush1.xpose.msra.mxu0 0.0
        %4293 = vmatprep.subr.mxu0 0.0
        %4294 = vmatpush1.xpose.msra.mxu0 0.0
        %4295 = vmatprep.subr.mxu0 0.0
        %4296 = vmatpush1.xpose.msra.mxu0 0.0
        %4297 = vmatprep.subr.mxu0 0.0
        %4298 = vmatpush1.xpose.msra.mxu0 0.0
        %4299 = vmatprep.subr.mxu0 0.0
        %4300 = vmatpush1.xpose.msra.mxu0 0.0
        %4301 = vmatprep.subr.mxu0 0.0
        %4302 = vmatpush1.xpose.msra.mxu0 0.0
        %4303 = vmatprep.subr.mxu0 0.0
        %4304 = vmatpush1.xpose.msra.mxu0 0.0
        %4305 = vmatprep.subr.mxu0 0.0
        %4306 = vmatpush1.xpose.msra.mxu0 0.0
        %4307 = vmatprep.subr.mxu0 0.0
        %4308 = vmatpush1.xpose.msra.mxu0 0.0
        %4309 = vmatprep.subr.mxu0 0.0
        %4310 = vmatpush1.xpose.msra.mxu0 0.0
        %4311 = vmatprep.subr.mxu0 0.0
        %4312 = vmatpush1.xpose.msra.mxu0 0.0
        %4313 = vmatprep.subr.mxu0 0.0
        %4314 = vmatpush1.xpose.msra.mxu0 0.0
        %4315 = vmatprep.subr.mxu0 0.0
        %4316 = vmatpush1.xpose.msra.mxu0 0.0
        %4317 = vmatprep.subr.mxu0 0.0
        %4318 = vmatpush1.xpose.msra.mxu0 0.0
        %4319 = vmatprep.subr.mxu0 0.0
        %4320 = vmatpush1.xpose.msra.mxu0 0.0
        %4321 = vmatprep.subr.mxu0 0.0
        %4322 = vmatpush1.xpose.msra.mxu0 0.0
        %4323 = vmatprep.subr.mxu0 0.0
        %4324 = vmatpush1.xpose.msra.mxu0 0.0
        %4325 = vmatprep.subr.mxu0 0.0
        %4326 = vmatpush1.xpose.msra.mxu0 0.0
        %4327 = vmatprep.subr.mxu0 0.0
        %4328 = vmatpush1.xpose.msra.mxu0 0.0
        %4329 = vmatprep.subr.mxu0 0.0
        %4330 = vmatpush1.xpose.msra.mxu0 0.0
        %4331 = vmatprep.subr.mxu0 0.0
        %4332 = vmatpush1.xpose.msra.mxu0 0.0
        %4333 = vmatprep.subr.mxu0 0.0
        %4334 = vmatpush1.xpose.msra.mxu0 0.0
        %4335 = vmatprep.subr.mxu0 0.0
        %4336 = vmatpush1.xpose.msra.mxu0 0.0
        %4337 = vmatprep.subr.mxu0 0.0
        %4338 = vmatpush1.xpose.msra.mxu0 0.0
        %4339 = vmatprep.subr.mxu0 0.0
        %4340 = vmatpush1.xpose.msra.mxu0 0.0
        %4341 = vmatprep.subr.mxu0 0.0
        %4342 = vmatpush1.xpose.msra.mxu0 0.0
        %4343 = vmatprep.subr.mxu0 0.0
        %4344 = vmatpush1.xpose.msra.mxu0 0.0
        %4345 = vmatprep.subr.mxu0 0.0
        %4346 = vmatpush1.xpose.msra.mxu0 0.0
        %4347 = vmatprep.mubr.f32.mxu0 0.0
        %4348 = vmatmul.mubr.f32.gmra.mrb[0].mxu0 %v4278
        %v4349 = vpop.f32.mrb[0].mxu0
        %v4350 = vadd.f32 0.0, %v4349
        %v4351 = vpop.f32.mrb[0].mxu0
        %4352 = vdwg.mxu0
        %v4354 = vsel %vm1443, %v4012, 0
        %v4357 = vsel %vm1443, %v4105, 0
        %4359 = vmatprep.subr.mxu0 0.0
        %4360 = vmatpush1.xpose.msra.mxu0 %v4357
        %4361 = vmatprep.subr.mxu0 0.0
        %4362 = vmatpush1.xpose.msra.mxu0 0.0
        %4363 = vmatprep.subr.mxu0 0.0
        %4364 = vmatpush1.xpose.msra.mxu0 0.0
        %4365 = vmatprep.subr.mxu0 0.0
        %4366 = vmatpush1.xpose.msra.mxu0 0.0
        %4367 = vmatprep.subr.mxu0 0.0
        %4368 = vmatpush1.xpose.msra.mxu0 0.0
        %4369 = vmatprep.subr.mxu0 0.0
        %4370 = vmatpush1.xpose.msra.mxu0 0.0
        %4371 = vmatprep.subr.mxu0 0.0
        %4372 = vmatpush1.xpose.msra.mxu0 0.0
        %4373 = vmatprep.subr.mxu0 0.0
        %4374 = vmatpush1.xpose.msra.mxu0 0.0
        %4375 = vmatprep.subr.mxu0 0.0
        %4376 = vmatpush1.xpose.msra.mxu0 0.0
        %4377 = vmatprep.subr.mxu0 0.0
        %4378 = vmatpush1.xpose.msra.mxu0 0.0
        %4379 = vmatprep.subr.mxu0 0.0
        %4380 = vmatpush1.xpose.msra.mxu0 0.0
        %4381 = vmatprep.subr.mxu0 0.0
        %4382 = vmatpush1.xpose.msra.mxu0 0.0
        %4383 = vmatprep.subr.mxu0 0.0
        %4384 = vmatpush1.xpose.msra.mxu0 0.0
        %4385 = vmatprep.subr.mxu0 0.0
        %4386 = vmatpush1.xpose.msra.mxu0 0.0
        %4387 = vmatprep.subr.mxu0 0.0
        %4388 = vmatpush1.xpose.msra.mxu0 0.0
        %4389 = vmatprep.subr.mxu0 0.0
        %4390 = vmatpush1.xpose.msra.mxu0 0.0
        %4391 = vmatprep.subr.mxu0 0.0
        %4392 = vmatpush1.xpose.msra.mxu0 0.0
        %4393 = vmatprep.subr.mxu0 0.0
        %4394 = vmatpush1.xpose.msra.mxu0 0.0
        %4395 = vmatprep.subr.mxu0 0.0
        %4396 = vmatpush1.xpose.msra.mxu0 0.0
        %4397 = vmatprep.subr.mxu0 0.0
        %4398 = vmatpush1.xpose.msra.mxu0 0.0
        %4399 = vmatprep.subr.mxu0 0.0
        %4400 = vmatpush1.xpose.msra.mxu0 0.0
        %4401 = vmatprep.subr.mxu0 0.0
        %4402 = vmatpush1.xpose.msra.mxu0 0.0
        %4403 = vmatprep.subr.mxu0 0.0
        %4404 = vmatpush1.xpose.msra.mxu0 0.0
        %4405 = vmatprep.subr.mxu0 0.0
        %4406 = vmatpush1.xpose.msra.mxu0 0.0
        %4407 = vmatprep.subr.mxu0 0.0
        %4408 = vmatpush1.xpose.msra.mxu0 0.0
        %4409 = vmatprep.subr.mxu0 0.0
        %4410 = vmatpush1.xpose.msra.mxu0 0.0
        %4411 = vmatprep.subr.mxu0 0.0
        %4412 = vmatpush1.xpose.msra.mxu0 0.0
        %4413 = vmatprep.subr.mxu0 0.0
        %4414 = vmatpush1.xpose.msra.mxu0 0.0
        %4415 = vmatprep.subr.mxu0 0.0
        %4416 = vmatpush1.xpose.msra.mxu0 0.0
        %4417 = vmatprep.subr.mxu0 0.0
        %4418 = vmatpush1.xpose.msra.mxu0 0.0
        %4419 = vmatprep.subr.mxu0 0.0
        %4420 = vmatpush1.xpose.msra.mxu0 0.0
        %4421 = vmatprep.subr.mxu0 0.0
        %4422 = vmatpush1.xpose.msra.mxu0 0.0
        %4423 = vmatprep.mubr.f32.mxu0 0.0
        %4424 = vmatmul.mubr.f32.gmra.mrb[0].mxu0 %v4354
        %v4425 = vpop.f32.mrb[0].mxu0
        %v4426 = vadd.f32 0.0, %v4425
        %v4427 = vpop.f32.mrb[0].mxu0
        %4428 = vdwg.mxu0
        %v4429 = vmul.f32 %v4274, 0.35355338
        %v4430 = vmul.f32 %v4350, 0.35355338
        %v4431 = vmul.f32 %v4426, 0.35355338
        %v4432 = vadd.f32 %v4429, %v1157
        %v4433 = vadd.f32 %v4430, %v1158
        %v4434 = vadd.f32 %v4431, %v1159
        %v4435 = vsel %vm1443, %v4432, -inf
        %4436 = vmax.xlane.f32.xlu0 %v4435
        %v4437 = vpop.xlane.xlu0 %4436
        %v4438 = vsel %vm1443, %v4433, -inf
        %4439 = vmax.xlane.f32.xlu0 %v4438
        %v4440 = vpop.xlane.xlu0 %4439
        %v4441 = vsel %vm1443, %v4434, -inf
        %4442 = vmax.xlane.f32.xlu0 %v4441
        %v4443 = vpop.xlane.xlu0 %4442
        %v4444 = vsub.f32 %v4432, %v4437
        %v4445 = vsub.f32 %v4433, %v4440
        %v4446 = vsub.f32 %v4434, %v4443
        %v4447 = vmul.f32 %v4444, 1.442695
        %v4448 = vpow.pop %v4447
        %v4449 = vmul.f32 %v4445, 1.442695
        %v4450 = vpow.pop %v4449
        %v4451 = vmul.f32 %v4446, 1.442695
        %v4452 = vpow.pop %v4451
        %v4453 = vsel %vm1443, %v4448, 0.0
        %4454 = vadd.xlane.f32.xlu0 %v4453
        %v4455 = vpop.xlane.xlu0 %4454
        %v4456 = vsel %vm1443, %v4450, 0.0
        %4457 = vadd.xlane.f32.xlu0 %v4456
        %v4458 = vpop.xlane.xlu0 %4457
        %v4459 = vsel %vm1443, %v4452, 0.0
        %4460 = vadd.xlane.f32.xlu0 %v4459
        %v4461 = vpop.xlane.xlu0 %4460
        %v4462 = vrcp.pop %v4455
        %v4463 = vmul.f32 %v4448, %v4462
        %v4464 = vrcp.pop %v4458
        %v4465 = vmul.f32 %v4450, %v4464
        %v4466 = vrcp.pop %v4461
        %v4467 = vmul.f32 %v4452, %v4466
        %v4469 = vsel %vm1443, %v4463, 0
        %4471 = vmatprep.subr.mxu0 0.0
        %4472 = vmatpush1.msra.mxu0 %v4188
        %4473 = vmatprep.subr.mxu0 0.0
        %4474 = vmatpush1.msra.mxu0 0.0
        %4475 = vmatprep.subr.mxu0 0.0
        %4476 = vmatpush1.msra.mxu0 0.0
        %4477 = vmatprep.subr.mxu0 0.0
        %4478 = vmatpush1.msra.mxu0 0.0
        %4479 = vmatprep.subr.mxu0 0.0
        %4480 = vmatpush1.msra.mxu0 0.0
        %4481 = vmatprep.subr.mxu0 0.0
        %4482 = vmatpush1.msra.mxu0 0.0
        %4483 = vmatprep.subr.mxu0 0.0
        %4484 = vmatpush1.msra.mxu0 0.0
        %4485 = vmatprep.subr.mxu0 0.0
        %4486 = vmatpush1.msra.mxu0 0.0
        %4487 = vmatprep.subr.mxu0 0.0
        %4488 = vmatpush1.msra.mxu0 0.0
        %4489 = vmatprep.subr.mxu0 0.0
        %4490 = vmatpush1.msra.mxu0 0.0
        %4491 = vmatprep.subr.mxu0 0.0
        %4492 = vmatpush1.msra.mxu0 0.0
        %4493 = vmatprep.subr.mxu0 0.0
        %4494 = vmatpush1.msra.mxu0 0.0
        %4495 = vmatprep.subr.mxu0 0.0
        %4496 = vmatpush1.msra.mxu0 0.0
        %4497 = vmatprep.subr.mxu0 0.0
        %4498 = vmatpush1.msra.mxu0 0.0
        %4499 = vmatprep.subr.mxu0 0.0
        %4500 = vmatpush1.msra.mxu0 0.0
        %4501 = vmatprep.subr.mxu0 0.0
        %4502 = vmatpush1.msra.mxu0 0.0
        %4503 = vmatprep.subr.mxu0 0.0
        %4504 = vmatpush1.msra.mxu0 0.0
        %4505 = vmatprep.subr.mxu0 0.0
        %4506 = vmatpush1.msra.mxu0 0.0
        %4507 = vmatprep.subr.mxu0 0.0
        %4508 = vmatpush1.msra.mxu0 0.0
        %4509 = vmatprep.subr.mxu0 0.0
        %4510 = vmatpush1.msra.mxu0 0.0
        %4511 = vmatprep.subr.mxu0 0.0
        %4512 = vmatpush1.msra.mxu0 0.0
        %4513 = vmatprep.subr.mxu0 0.0
        %4514 = vmatpush1.msra.mxu0 0.0
        %4515 = vmatprep.subr.mxu0 0.0
        %4516 = vmatpush1.msra.mxu0 0.0
        %4517 = vmatprep.subr.mxu0 0.0
        %4518 = vmatpush1.msra.mxu0 0.0
        %4519 = vmatprep.subr.mxu0 0.0
        %4520 = vmatpush1.msra.mxu0 0.0
        %4521 = vmatprep.subr.mxu0 0.0
        %4522 = vmatpush1.msra.mxu0 0.0
        %4523 = vmatprep.subr.mxu0 0.0
        %4524 = vmatpush1.msra.mxu0 0.0
        %4525 = vmatprep.subr.mxu0 0.0
        %4526 = vmatpush1.msra.mxu0 0.0
        %4527 = vmatprep.subr.mxu0 0.0
        %4528 = vmatpush1.msra.mxu0 0.0
        %4529 = vmatprep.subr.mxu0 0.0
        %4530 = vmatpush1.msra.mxu0 0.0
        %4531 = vmatprep.subr.mxu0 0.0
        %4532 = vmatpush1.msra.mxu0 0.0
        %4533 = vmatprep.subr.mxu0 0.0
        %4534 = vmatpush1.msra.mxu0 0.0
        %4535 = vmatprep.mubr.f32.mxu0 0.0
        %4536 = vmatmul.mubr.f32.gmra.mrb[0].mxu0 %v4469
        %v4537 = vpop.f32.mrb[0].mxu0
        %v4538 = vadd.f32 0.0, %v4537
        %v4539 = vpop.f32.mrb[0].mxu0
        %4540 = vdwg.mxu0
        %v4542 = vsel %vm1443, %v4465, 0
        %4544 = vmatprep.subr.mxu0 0.0
        %4545 = vmatpush1.msra.mxu0 %v4193
        %4546 = vmatprep.subr.mxu0 0.0
        %4547 = vmatpush1.msra.mxu0 0.0
        %4548 = vmatprep.subr.mxu0 0.0
        %4549 = vmatpush1.msra.mxu0 0.0
        %4550 = vmatprep.subr.mxu0 0.0
        %4551 = vmatpush1.msra.mxu0 0.0
        %4552 = vmatprep.subr.mxu0 0.0
        %4553 = vmatpush1.msra.mxu0 0.0
        %4554 = vmatprep.subr.mxu0 0.0
        %4555 = vmatpush1.msra.mxu0 0.0
        %4556 = vmatprep.subr.mxu0 0.0
        %4557 = vmatpush1.msra.mxu0 0.0
        %4558 = vmatprep.subr.mxu0 0.0
        %4559 = vmatpush1.msra.mxu0 0.0
        %4560 = vmatprep.subr.mxu0 0.0
        %4561 = vmatpush1.msra.mxu0 0.0
        %4562 = vmatprep.subr.mxu0 0.0
        %4563 = vmatpush1.msra.mxu0 0.0
        %4564 = vmatprep.subr.mxu0 0.0
        %4565 = vmatpush1.msra.mxu0 0.0
        %4566 = vmatprep.subr.mxu0 0.0
        %4567 = vmatpush1.msra.mxu0 0.0
        %4568 = vmatprep.subr.mxu0 0.0
        %4569 = vmatpush1.msra.mxu0 0.0
        %4570 = vmatprep.subr.mxu0 0.0
        %4571 = vmatpush1.msra.mxu0 0.0
        %4572 = vmatprep.subr.mxu0 0.0
        %4573 = vmatpush1.msra.mxu0 0.0
        %4574 = vmatprep.subr.mxu0 0.0
        %4575 = vmatpush1.msra.mxu0 0.0
        %4576 = vmatprep.subr.mxu0 0.0
        %4577 = vmatpush1.msra.mxu0 0.0
        %4578 = vmatprep.subr.mxu0 0.0
        %4579 = vmatpush1.msra.mxu0 0.0
        %4580 = vmatprep.subr.mxu0 0.0
        %4581 = vmatpush1.msra.mxu0 0.0
        %4582 = vmatprep.subr.mxu0 0.0
        %4583 = vmatpush1.msra.mxu0 0.0
        %4584 = vmatprep.subr.mxu0 0.0
        %4585 = vmatpush1.msra.mxu0 0.0
        %4586 = vmatprep.subr.mxu0 0.0
        %4587 = vmatpush1.msra.mxu0 0.0
        %4588 = vmatprep.subr.mxu0 0.0
        %4589 = vmatpush1.msra.mxu0 0.0
        %4590 = vmatprep.subr.mxu0 0.0
        %4591 = vmatpush1.msra.mxu0 0.0
        %4592 = vmatprep.subr.mxu0 0.0
        %4593 = vmatpush1.msra.mxu0 0.0
        %4594 = vmatprep.subr.mxu0 0.0
        %4595 = vmatpush1.msra.mxu0 0.0
        %4596 = vmatprep.subr.mxu0 0.0
        %4597 = vmatpush1.msra.mxu0 0.0
        %4598 = vmatprep.subr.mxu0 0.0
        %4599 = vmatpush1.msra.mxu0 0.0
        %4600 = vmatprep.subr.mxu0 0.0
        %4601 = vmatpush1.msra.mxu0 0.0
        %4602 = vmatprep.subr.mxu0 0.0
        %4603 = vmatpush1.msra.mxu0 0.0
        %4604 = vmatprep.subr.mxu0 0.0
        %4605 = vmatpush1.msra.mxu0 0.0
        %4606 = vmatprep.subr.mxu0 0.0
        %4607 = vmatpush1.msra.mxu0 0.0
        %4608 = vmatprep.mubr.f32.mxu0 0.0
        %4609 = vmatmul.mubr.f32.gmra.mrb[0].mxu0 %v4542
        %v4610 = vpop.f32.mrb[0].mxu0
        %v4611 = vadd.f32 0.0, %v4610
        %v4612 = vpop.f32.mrb[0].mxu0
        %4613 = vdwg.mxu0
        %v4615 = vsel %vm1443, %v4467, 0
        %4617 = vmatprep.subr.mxu0 0.0
        %4618 = vmatpush1.msra.mxu0 %v4198
        %4619 = vmatprep.subr.mxu0 0.0
        %4620 = vmatpush1.msra.mxu0 0.0
        %4621 = vmatprep.subr.mxu0 0.0
        %4622 = vmatpush1.msra.mxu0 0.0
        %4623 = vmatprep.subr.mxu0 0.0
        %4624 = vmatpush1.msra.mxu0 0.0
        %4625 = vmatprep.subr.mxu0 0.0
        %4626 = vmatpush1.msra.mxu0 0.0
        %4627 = vmatprep.subr.mxu0 0.0
        %4628 = vmatpush1.msra.mxu0 0.0
        %4629 = vmatprep.subr.mxu0 0.0
        %4630 = vmatpush1.msra.mxu0 0.0
        %4631 = vmatprep.subr.mxu0 0.0
        %4632 = vmatpush1.msra.mxu0 0.0
        %4633 = vmatprep.subr.mxu0 0.0
        %4634 = vmatpush1.msra.mxu0 0.0
        %4635 = vmatprep.subr.mxu0 0.0
        %4636 = vmatpush1.msra.mxu0 0.0
        %4637 = vmatprep.subr.mxu0 0.0
        %4638 = vmatpush1.msra.mxu0 0.0
        %4639 = vmatprep.subr.mxu0 0.0
        %4640 = vmatpush1.msra.mxu0 0.0
        %4641 = vmatprep.subr.mxu0 0.0
        %4642 = vmatpush1.msra.mxu0 0.0
        %4643 = vmatprep.subr.mxu0 0.0
        %4644 = vmatpush1.msra.mxu0 0.0
        %4645 = vmatprep.subr.mxu0 0.0
        %4646 = vmatpush1.msra.mxu0 0.0
        %4647 = vmatprep.subr.mxu0 0.0
        %4648 = vmatpush1.msra.mxu0 0.0
        %4649 = vmatprep.subr.mxu0 0.0
        %4650 = vmatpush1.msra.mxu0 0.0
        %4651 = vmatprep.subr.mxu0 0.0
        %4652 = vmatpush1.msra.mxu0 0.0
        %4653 = vmatprep.subr.mxu0 0.0
        %4654 = vmatpush1.msra.mxu0 0.0
        %4655 = vmatprep.subr.mxu0 0.0
        %4656 = vmatpush1.msra.mxu0 0.0
        %4657 = vmatprep.subr.mxu0 0.0
        %4658 = vmatpush1.msra.mxu0 0.0
        %4659 = vmatprep.subr.mxu0 0.0
        %4660 = vmatpush1.msra.mxu0 0.0
        %4661 = vmatprep.subr.mxu0 0.0
        %4662 = vmatpush1.msra.mxu0 0.0
        %4663 = vmatprep.subr.mxu0 0.0
        %4664 = vmatpush1.msra.mxu0 0.0
        %4665 = vmatprep.subr.mxu0 0.0
        %4666 = vmatpush1.msra.mxu0 0.0
        %4667 = vmatprep.subr.mxu0 0.0
        %4668 = vmatpush1.msra.mxu0 0.0
        %4669 = vmatprep.subr.mxu0 0.0
        %4670 = vmatpush1.msra.mxu0 0.0
        %4671 = vmatprep.subr.mxu0 0.0
        %4672 = vmatpush1.msra.mxu0 0.0
        %4673 = vmatprep.subr.mxu0 0.0
        %4674 = vmatpush1.msra.mxu0 0.0
        %4675 = vmatprep.subr.mxu0 0.0
        %4676 = vmatpush1.msra.mxu0 0.0
        %4677 = vmatprep.subr.mxu0 0.0
        %4678 = vmatpush1.msra.mxu0 0.0
        %4679 = vmatprep.subr.mxu0 0.0
        %4680 = vmatpush1.msra.mxu0 0.0
        %4681 = vmatprep.mubr.f32.mxu0 0.0
        %4682 = vmatmul.mubr.f32.gmra.mrb[0].mxu0 %v4615
        %v4683 = vpop.f32.mrb[0].mxu0
        %v4684 = vadd.f32 0.0, %v4683
        %v4685 = vpop.f32.mrb[0].mxu0
        %4686 = vdwg.mxu0
        %4687 = vrot.lane.b32.xlu0 %v4002, 120
        %v4688 = vpop.permute.xlu0 %4687
        %4689 = vrot.lane.b32.xlu0 %v4095, 120
        %v4690 = vpop.permute.xlu0 %4689
        %v4691 = vsel %vm1443, %v4688, 0
        %v4693 = vsel %vm1443, %v4690, 0
        %4695 = vmatprep.subr.mxu0 0.0
        %4696 = vmatpush1.xpose.msra.mxu0 %v4693
        %4697 = vmatprep.subr.mxu0 0.0
        %4698 = vmatpush1.xpose.msra.mxu0 0.0
        %4699 = vmatprep.subr.mxu0 0.0
        %4700 = vmatpush1.xpose.msra.mxu0 0.0
        %4701 = vmatprep.subr.mxu0 0.0
        %4702 = vmatpush1.xpose.msra.mxu0 0.0
        %4703 = vmatprep.subr.mxu0 0.0
        %4704 = vmatpush1.xpose.msra.mxu0 0.0
        %4705 = vmatprep.subr.mxu0 0.0
        %4706 = vmatpush1.xpose.msra.mxu0 0.0
        %4707 = vmatprep.subr.mxu0 0.0
        %4708 = vmatpush1.xpose.msra.mxu0 0.0
        %4709 = vmatprep.subr.mxu0 0.0
        %4710 = vmatpush1.xpose.msra.mxu0 0.0
        %4711 = vmatprep.subr.mxu0 0.0
        %4712 = vmatpush1.xpose.msra.mxu0 0.0
        %4713 = vmatprep.subr.mxu0 0.0
        %4714 = vmatpush1.xpose.msra.mxu0 0.0
        %4715 = vmatprep.subr.mxu0 0.0
        %4716 = vmatpush1.xpose.msra.mxu0 0.0
        %4717 = vmatprep.subr.mxu0 0.0
        %4718 = vmatpush1.xpose.msra.mxu0 0.0
        %4719 = vmatprep.subr.mxu0 0.0
        %4720 = vmatpush1.xpose.msra.mxu0 0.0
        %4721 = vmatprep.subr.mxu0 0.0
        %4722 = vmatpush1.xpose.msra.mxu0 0.0
        %4723 = vmatprep.subr.mxu0 0.0
        %4724 = vmatpush1.xpose.msra.mxu0 0.0
        %4725 = vmatprep.subr.mxu0 0.0
        %4726 = vmatpush1.xpose.msra.mxu0 0.0
        %4727 = vmatprep.subr.mxu0 0.0
        %4728 = vmatpush1.xpose.msra.mxu0 0.0
        %4729 = vmatprep.subr.mxu0 0.0
        %4730 = vmatpush1.xpose.msra.mxu0 0.0
        %4731 = vmatprep.subr.mxu0 0.0
        %4732 = vmatpush1.xpose.msra.mxu0 0.0
        %4733 = vmatprep.subr.mxu0 0.0
        %4734 = vmatpush1.xpose.msra.mxu0 0.0
        %4735 = vmatprep.subr.mxu0 0.0
        %4736 = vmatpush1.xpose.msra.mxu0 0.0
        %4737 = vmatprep.subr.mxu0 0.0
        %4738 = vmatpush1.xpose.msra.mxu0 0.0
        %4739 = vmatprep.subr.mxu0 0.0
        %4740 = vmatpush1.xpose.msra.mxu0 0.0
        %4741 = vmatprep.subr.mxu0 0.0
        %4742 = vmatpush1.xpose.msra.mxu0 0.0
        %4743 = vmatprep.subr.mxu0 0.0
        %4744 = vmatpush1.xpose.msra.mxu0 0.0
        %4745 = vmatprep.subr.mxu0 0.0
        %4746 = vmatpush1.xpose.msra.mxu0 0.0
        %4747 = vmatprep.subr.mxu0 0.0
        %4748 = vmatpush1.xpose.msra.mxu0 0.0
        %4749 = vmatprep.subr.mxu0 0.0
        %4750 = vmatpush1.xpose.msra.mxu0 0.0
        %4751 = vmatprep.subr.mxu0 0.0
        %4752 = vmatpush1.xpose.msra.mxu0 0.0
        %4753 = vmatprep.subr.mxu0 0.0
        %4754 = vmatpush1.xpose.msra.mxu0 0.0
        %4755 = vmatprep.subr.mxu0 0.0
        %4756 = vmatpush1.xpose.msra.mxu0 0.0
        %4757 = vmatprep.subr.mxu0 0.0
        %4758 = vmatpush1.xpose.msra.mxu0 0.0
        %4759 = vmatprep.mubr.f32.mxu0 0.0
        %4760 = vmatmul.mubr.f32.gmra.mrb[0].mxu0 %v4691
        %v4761 = vpop.f32.mrb[0].mxu0
        %v4762 = vadd.f32 0.0, %v4761
        %v4763 = vpop.f32.mrb[0].mxu0
        %4764 = vdwg.mxu0
        %4765 = vrot.lane.b32.xlu0 %v4007, 120
        %v4766 = vpop.permute.xlu0 %4765
        %4767 = vrot.lane.b32.xlu0 %v4100, 120
        %v4768 = vpop.permute.xlu0 %4767
        %v4769 = vsel %vm1443, %v4766, 0
        %v4771 = vsel %vm1443, %v4768, 0
        %4773 = vmatprep.subr.mxu0 0.0
        %4774 = vmatpush1.xpose.msra.mxu0 %v4771
        %4775 = vmatprep.subr.mxu0 0.0
        %4776 = vmatpush1.xpose.msra.mxu0 0.0
        %4777 = vmatprep.subr.mxu0 0.0
        %4778 = vmatpush1.xpose.msra.mxu0 0.0
        %4779 = vmatprep.subr.mxu0 0.0
        %4780 = vmatpush1.xpose.msra.mxu0 0.0
        %4781 = vmatprep.subr.mxu0 0.0
        %4782 = vmatpush1.xpose.msra.mxu0 0.0
        %4783 = vmatprep.subr.mxu0 0.0
        %4784 = vmatpush1.xpose.msra.mxu0 0.0
        %4785 = vmatprep.subr.mxu0 0.0
        %4786 = vmatpush1.xpose.msra.mxu0 0.0
        %4787 = vmatprep.subr.mxu0 0.0
        %4788 = vmatpush1.xpose.msra.mxu0 0.0
        %4789 = vmatprep.subr.mxu0 0.0
        %4790 = vmatpush1.xpose.msra.mxu0 0.0
        %4791 = vmatprep.subr.mxu0 0.0
        %4792 = vmatpush1.xpose.msra.mxu0 0.0
        %4793 = vmatprep.subr.mxu0 0.0
        %4794 = vmatpush1.xpose.msra.mxu0 0.0
        %4795 = vmatprep.subr.mxu0 0.0
        %4796 = vmatpush1.xpose.msra.mxu0 0.0
        %4797 = vmatprep.subr.mxu0 0.0
        %4798 = vmatpush1.xpose.msra.mxu0 0.0
        %4799 = vmatprep.subr.mxu0 0.0
        %4800 = vmatpush1.xpose.msra.mxu0 0.0
        %4801 = vmatprep.subr.mxu0 0.0
        %4802 = vmatpush1.xpose.msra.mxu0 0.0
        %4803 = vmatprep.subr.mxu0 0.0
        %4804 = vmatpush1.xpose.msra.mxu0 0.0
        %4805 = vmatprep.subr.mxu0 0.0
        %4806 = vmatpush1.xpose.msra.mxu0 0.0
        %4807 = vmatprep.subr.mxu0 0.0
        %4808 = vmatpush1.xpose.msra.mxu0 0.0
        %4809 = vmatprep.subr.mxu0 0.0
        %4810 = vmatpush1.xpose.msra.mxu0 0.0
        %4811 = vmatprep.subr.mxu0 0.0
        %4812 = vmatpush1.xpose.msra.mxu0 0.0
        %4813 = vmatprep.subr.mxu0 0.0
        %4814 = vmatpush1.xpose.msra.mxu0 0.0
        %4815 = vmatprep.subr.mxu0 0.0
        %4816 = vmatpush1.xpose.msra.mxu0 0.0
        %4817 = vmatprep.subr.mxu0 0.0
        %4818 = vmatpush1.xpose.msra.mxu0 0.0
        %4819 = vmatprep.subr.mxu0 0.0
        %4820 = vmatpush1.xpose.msra.mxu0 0.0
        %4821 = vmatprep.subr.mxu0 0.0
        %4822 = vmatpush1.xpose.msra.mxu0 0.0
        %4823 = vmatprep.subr.mxu0 0.0
        %4824 = vmatpush1.xpose.msra.mxu0 0.0
        %4825 = vmatprep.subr.mxu0 0.0
        %4826 = vmatpush1.xpose.msra.mxu0 0.0
        %4827 = vmatprep.subr.mxu0 0.0
        %4828 = vmatpush1.xpose.msra.mxu0 0.0
        %4829 = vmatprep.subr.mxu0 0.0
        %4830 = vmatpush1.xpose.msra.mxu0 0.0
        %4831 = vmatprep.subr.mxu0 0.0
        %4832 = vmatpush1.xpose.msra.mxu0 0.0
        %4833 = vmatprep.subr.mxu0 0.0
        %4834 = vmatpush1.xpose.msra.mxu0 0.0
        %4835 = vmatprep.subr.mxu0 0.0
        %4836 = vmatpush1.xpose.msra.mxu0 0.0
        %4837 = vmatprep.mubr.f32.mxu0 0.0
        %4838 = vmatmul.mubr.f32.gmra.mrb[0].mxu0 %v4769
        %v4839 = vpop.f32.mrb[0].mxu0
        %v4840 = vadd.f32 0.0, %v4839
        %v4841 = vpop.f32.mrb[0].mxu0
        %4842 = vdwg.mxu0
        %4843 = vrot.lane.b32.xlu0 %v4012, 120
        %v4844 = vpop.permute.xlu0 %4843
        %4845 = vrot.lane.b32.xlu0 %v4105, 120
        %v4846 = vpop.permute.xlu0 %4845
        %v4847 = vsel %vm1443, %v4844, 0
        %v4849 = vsel %vm1443, %v4846, 0
        %4851 = vmatprep.subr.mxu0 0.0
        %4852 = vmatpush1.xpose.msra.mxu0 %v4849
        %4853 = vmatprep.subr.mxu0 0.0
        %4854 = vmatpush1.xpose.msra.mxu0 0.0
        %4855 = vmatprep.subr.mxu0 0.0
        %4856 = vmatpush1.xpose.msra.mxu0 0.0
        %4857 = vmatprep.subr.mxu0 0.0
        %4858 = vmatpush1.xpose.msra.mxu0 0.0
        %4859 = vmatprep.subr.mxu0 0.0
        %4860 = vmatpush1.xpose.msra.mxu0 0.0
        %4861 = vmatprep.subr.mxu0 0.0
        %4862 = vmatpush1.xpose.msra.mxu0 0.0
        %4863 = vmatprep.subr.mxu0 0.0
        %4864 = vmatpush1.xpose.msra.mxu0 0.0
        %4865 = vmatprep.subr.mxu0 0.0
        %4866 = vmatpush1.xpose.msra.mxu0 0.0
        %4867 = vmatprep.subr.mxu0 0.0
        %4868 = vmatpush1.xpose.msra.mxu0 0.0
        %4869 = vmatprep.subr.mxu0 0.0
        %4870 = vmatpush1.xpose.msra.mxu0 0.0
        %4871 = vmatprep.subr.mxu0 0.0
        %4872 = vmatpush1.xpose.msra.mxu0 0.0
        %4873 = vmatprep.subr.mxu0 0.0
        %4874 = vmatpush1.xpose.msra.mxu0 0.0
        %4875 = vmatprep.subr.mxu0 0.0
        %4876 = vmatpush1.xpose.msra.mxu0 0.0
        %4877 = vmatprep.subr.mxu0 0.0
        %4878 = vmatpush1.xpose.msra.mxu0 0.0
        %4879 = vmatprep.subr.mxu0 0.0
        %4880 = vmatpush1.xpose.msra.mxu0 0.0
        %4881 = vmatprep.subr.mxu0 0.0
        %4882 = vmatpush1.xpose.msra.mxu0 0.0
        %4883 = vmatprep.subr.mxu0 0.0
        %4884 = vmatpush1.xpose.msra.mxu0 0.0
        %4885 = vmatprep.subr.mxu0 0.0
        %4886 = vmatpush1.xpose.msra.mxu0 0.0
        %4887 = vmatprep.subr.mxu0 0.0
        %4888 = vmatpush1.xpose.msra.mxu0 0.0
        %4889 = vmatprep.subr.mxu0 0.0
        %4890 = vmatpush1.xpose.msra.mxu0 0.0
        %4891 = vmatprep.subr.mxu0 0.0
        %4892 = vmatpush1.xpose.msra.mxu0 0.0
        %4893 = vmatprep.subr.mxu0 0.0
        %4894 = vmatpush1.xpose.msra.mxu0 0.0
        %4895 = vmatprep.subr.mxu0 0.0
        %4896 = vmatpush1.xpose.msra.mxu0 0.0
        %4897 = vmatprep.subr.mxu0 0.0
        %4898 = vmatpush1.xpose.msra.mxu0 0.0
        %4899 = vmatprep.subr.mxu0 0.0
        %4900 = vmatpush1.xpose.msra.mxu0 0.0
        %4901 = vmatprep.subr.mxu0 0.0
        %4902 = vmatpush1.xpose.msra.mxu0 0.0
        %4903 = vmatprep.subr.mxu0 0.0
        %4904 = vmatpush1.xpose.msra.mxu0 0.0
        %4905 = vmatprep.subr.mxu0 0.0
        %4906 = vmatpush1.xpose.msra.mxu0 0.0
        %4907 = vmatprep.subr.mxu0 0.0
        %4908 = vmatpush1.xpose.msra.mxu0 0.0
        %4909 = vmatprep.subr.mxu0 0.0
        %4910 = vmatpush1.xpose.msra.mxu0 0.0
        %4911 = vmatprep.subr.mxu0 0.0
        %4912 = vmatpush1.xpose.msra.mxu0 0.0
        %4913 = vmatprep.subr.mxu0 0.0
        %4914 = vmatpush1.xpose.msra.mxu0 0.0
        %4915 = vmatprep.mubr.f32.mxu0 0.0
        %4916 = vmatmul.mubr.f32.gmra.mrb[0].mxu0 %v4847
        %v4917 = vpop.f32.mrb[0].mxu0
        %v4918 = vadd.f32 0.0, %v4917
        %v4919 = vpop.f32.mrb[0].mxu0
        %4920 = vdwg.mxu0
        %v4921 = vmul.f32 %v4762, 0.35355338
        %v4922 = vmul.f32 %v4840, 0.35355338
        %v4923 = vmul.f32 %v4918, 0.35355338
        %v4924 = vadd.f32 %v4921, %v1157
        %v4925 = vadd.f32 %v4922, %v1158
        %v4926 = vadd.f32 %v4923, %v1159
        %v4927 = vsel %vm1443, %v4924, -inf
        %4928 = vmax.xlane.f32.xlu0 %v4927
        %v4929 = vpop.xlane.xlu0 %4928
        %v4930 = vsel %vm1443, %v4925, -inf
        %4931 = vmax.xlane.f32.xlu0 %v4930
        %v4932 = vpop.xlane.xlu0 %4931
        %v4933 = vsel %vm1443, %v4926, -inf
        %4934 = vmax.xlane.f32.xlu0 %v4933
        %v4935 = vpop.xlane.xlu0 %4934
        %v4936 = vsub.f32 %v4924, %v4929
        %v4937 = vsub.f32 %v4925, %v4932
        %v4938 = vsub.f32 %v4926, %v4935
        %v4939 = vmul.f32 %v4936, 1.442695
        %v4940 = vpow.pop %v4939
        %v4941 = vmul.f32 %v4937, 1.442695
        %v4942 = vpow.pop %v4941
        %v4943 = vmul.f32 %v4938, 1.442695
        %v4944 = vpow.pop %v4943
        %v4945 = vsel %vm1443, %v4940, 0.0
        %4946 = vadd.xlane.f32.xlu0 %v4945
        %v4947 = vpop.xlane.xlu0 %4946
        %v4948 = vsel %vm1443, %v4942, 0.0
        %4949 = vadd.xlane.f32.xlu0 %v4948
        %v4950 = vpop.xlane.xlu0 %4949
        %v4951 = vsel %vm1443, %v4944, 0.0
        %4952 = vadd.xlane.f32.xlu0 %v4951
        %v4953 = vpop.xlane.xlu0 %4952
        %v4954 = vrcp.pop %v4947
        %v4955 = vmul.f32 %v4940, %v4954
        %v4956 = vrcp.pop %v4950
        %v4957 = vmul.f32 %v4942, %v4956
        %v4958 = vrcp.pop %v4953
        %v4959 = vmul.f32 %v4944, %v4958
        %4961 = vrot.lane.b32.xlu0 %v4188, 120
        %v4962 = vpop.permute.xlu0 %4961
        %v4965 = vsel %vm1443, %v4955, 0
        %4967 = vmatprep.subr.mxu0 0.0
        %4968 = vmatpush1.msra.mxu0 %v4962
        %4969 = vmatprep.subr.mxu0 0.0
        %4970 = vmatpush1.msra.mxu0 0.0
        %4971 = vmatprep.subr.mxu0 0.0
        %4972 = vmatpush1.msra.mxu0 0.0
        %4973 = vmatprep.subr.mxu0 0.0
        %4974 = vmatpush1.msra.mxu0 0.0
        %4975 = vmatprep.subr.mxu0 0.0
        %4976 = vmatpush1.msra.mxu0 0.0
        %4977 = vmatprep.subr.mxu0 0.0
        %4978 = vmatpush1.msra.mxu0 0.0
        %4979 = vmatprep.subr.mxu0 0.0
        %4980 = vmatpush1.msra.mxu0 0.0
        %4981 = vmatprep.subr.mxu0 0.0
        %4982 = vmatpush1.msra.mxu0 0.0
        %4983 = vmatprep.subr.mxu0 0.0
        %4984 = vmatpush1.msra.mxu0 0.0
        %4985 = vmatprep.subr.mxu0 0.0
        %4986 = vmatpush1.msra.mxu0 0.0
        %4987 = vmatprep.subr.mxu0 0.0
        %4988 = vmatpush1.msra.mxu0 0.0
        %4989 = vmatprep.subr.mxu0 0.0
        %4990 = vmatpush1.msra.mxu0 0.0
        %4991 = vmatprep.subr.mxu0 0.0
        %4992 = vmatpush1.msra.mxu0 0.0
        %4993 = vmatprep.subr.mxu0 0.0
        %4994 = vmatpush1.msra.mxu0 0.0
        %4995 = vmatprep.subr.mxu0 0.0
        %4996 = vmatpush1.msra.mxu0 0.0
        %4997 = vmatprep.subr.mxu0 0.0
        %4998 = vmatpush1.msra.mxu0 0.0
        %4999 = vmatprep.subr.mxu0 0.0
        %5000 = vmatpush1.msra.mxu0 0.0
        %5001 = vmatprep.subr.mxu0 0.0
        %5002 = vmatpush1.msra.mxu0 0.0
        %5003 = vmatprep.subr.mxu0 0.0
        %5004 = vmatpush1.msra.mxu0 0.0
        %5005 = vmatprep.subr.mxu0 0.0
        %5006 = vmatpush1.msra.mxu0 0.0
        %5007 = vmatprep.subr.mxu0 0.0
        %5008 = vmatpush1.msra.mxu0 0.0
        %5009 = vmatprep.subr.mxu0 0.0
        %5010 = vmatpush1.msra.mxu0 0.0
        %5011 = vmatprep.subr.mxu0 0.0
        %5012 = vmatpush1.msra.mxu0 0.0
        %5013 = vmatprep.subr.mxu0 0.0
        %5014 = vmatpush1.msra.mxu0 0.0
        %5015 = vmatprep.subr.mxu0 0.0
        %5016 = vmatpush1.msra.mxu0 0.0
        %5017 = vmatprep.subr.mxu0 0.0
        %5018 = vmatpush1.msra.mxu0 0.0
        %5019 = vmatprep.subr.mxu0 0.0
        %5020 = vmatpush1.msra.mxu0 0.0
        %5021 = vmatprep.subr.mxu0 0.0
        %5022 = vmatpush1.msra.mxu0 0.0
        %5023 = vmatprep.subr.mxu0 0.0
        %5024 = vmatpush1.msra.mxu0 0.0
        %5025 = vmatprep.subr.mxu0 0.0
        %5026 = vmatpush1.msra.mxu0 0.0
        %5027 = vmatprep.subr.mxu0 0.0
        %5028 = vmatpush1.msra.mxu0 0.0
        %5029 = vmatprep.subr.mxu0 0.0
        %5030 = vmatpush1.msra.mxu0 0.0
        %5031 = vmatprep.mubr.f32.mxu0 0.0
        %5032 = vmatmul.mubr.f32.gmra.mrb[0].mxu0 %v4965
        %v5033 = vpop.f32.mrb[0].mxu0
        %v5034 = vadd.f32 0.0, %v5033
        %v5035 = vpop.f32.mrb[0].mxu0
        %5036 = vdwg.mxu0
        %5038 = vrot.lane.b32.xlu0 %v4193, 120
        %v5039 = vpop.permute.xlu0 %5038
        %v5042 = vsel %vm1443, %v4957, 0
        %5044 = vmatprep.subr.mxu0 0.0
        %5045 = vmatpush1.msra.mxu0 %v5039
        %5046 = vmatprep.subr.mxu0 0.0
        %5047 = vmatpush1.msra.mxu0 0.0
        %5048 = vmatprep.subr.mxu0 0.0
        %5049 = vmatpush1.msra.mxu0 0.0
        %5050 = vmatprep.subr.mxu0 0.0
        %5051 = vmatpush1.msra.mxu0 0.0
        %5052 = vmatprep.subr.mxu0 0.0
        %5053 = vmatpush1.msra.mxu0 0.0
        %5054 = vmatprep.subr.mxu0 0.0
        %5055 = vmatpush1.msra.mxu0 0.0
        %5056 = vmatprep.subr.mxu0 0.0
        %5057 = vmatpush1.msra.mxu0 0.0
        %5058 = vmatprep.subr.mxu0 0.0
        %5059 = vmatpush1.msra.mxu0 0.0
        %5060 = vmatprep.subr.mxu0 0.0
        %5061 = vmatpush1.msra.mxu0 0.0
        %5062 = vmatprep.subr.mxu0 0.0
        %5063 = vmatpush1.msra.mxu0 0.0
        %5064 = vmatprep.subr.mxu0 0.0
        %5065 = vmatpush1.msra.mxu0 0.0
        %5066 = vmatprep.subr.mxu0 0.0
        %5067 = vmatpush1.msra.mxu0 0.0
        %5068 = vmatprep.subr.mxu0 0.0
        %5069 = vmatpush1.msra.mxu0 0.0
        %5070 = vmatprep.subr.mxu0 0.0
        %5071 = vmatpush1.msra.mxu0 0.0
        %5072 = vmatprep.subr.mxu0 0.0
        %5073 = vmatpush1.msra.mxu0 0.0
        %5074 = vmatprep.subr.mxu0 0.0
        %5075 = vmatpush1.msra.mxu0 0.0
        %5076 = vmatprep.subr.mxu0 0.0
        %5077 = vmatpush1.msra.mxu0 0.0
        %5078 = vmatprep.subr.mxu0 0.0
        %5079 = vmatpush1.msra.mxu0 0.0
        %5080 = vmatprep.subr.mxu0 0.0
        %5081 = vmatpush1.msra.mxu0 0.0
        %5082 = vmatprep.subr.mxu0 0.0
        %5083 = vmatpush1.msra.mxu0 0.0
        %5084 = vmatprep.subr.mxu0 0.0
        %5085 = vmatpush1.msra.mxu0 0.0
        %5086 = vmatprep.subr.mxu0 0.0
        %5087 = vmatpush1.msra.mxu0 0.0
        %5088 = vmatprep.subr.mxu0 0.0
        %5089 = vmatpush1.msra.mxu0 0.0
        %5090 = vmatprep.subr.mxu0 0.0
        %5091 = vmatpush1.msra.mxu0 0.0
        %5092 = vmatprep.subr.mxu0 0.0
        %5093 = vmatpush1.msra.mxu0 0.0
        %5094 = vmatprep.subr.mxu0 0.0
        %5095 = vmatpush1.msra.mxu0 0.0
        %5096 = vmatprep.subr.mxu0 0.0
        %5097 = vmatpush1.msra.mxu0 0.0
        %5098 = vmatprep.subr.mxu0 0.0
        %5099 = vmatpush1.msra.mxu0 0.0
        %5100 = vmatprep.subr.mxu0 0.0
        %5101 = vmatpush1.msra.mxu0 0.0
        %5102 = vmatprep.subr.mxu0 0.0
        %5103 = vmatpush1.msra.mxu0 0.0
        %5104 = vmatprep.subr.mxu0 0.0
        %5105 = vmatpush1.msra.mxu0 0.0
        %5106 = vmatprep.subr.mxu0 0.0
        %5107 = vmatpush1.msra.mxu0 0.0
        %5108 = vmatprep.mubr.f32.mxu0 0.0
        %5109 = vmatmul.mubr.f32.gmra.mrb[0].mxu0 %v5042
        %v5110 = vpop.f32.mrb[0].mxu0
        %v5111 = vadd.f32 0.0, %v5110
        %v5112 = vpop.f32.mrb[0].mxu0
        %5113 = vdwg.mxu0
        %5115 = vrot.lane.b32.xlu0 %v4198, 120
        %v5116 = vpop.permute.xlu0 %5115
        %v5119 = vsel %vm1443, %v4959, 0
        %5121 = vmatprep.subr.mxu0 0.0
        %5122 = vmatpush1.msra.mxu0 %v5116
        %5123 = vmatprep.subr.mxu0 0.0
        %5124 = vmatpush1.msra.mxu0 0.0
        %5125 = vmatprep.subr.mxu0 0.0
        %5126 = vmatpush1.msra.mxu0 0.0
        %5127 = vmatprep.subr.mxu0 0.0
        %5128 = vmatpush1.msra.mxu0 0.0
        %5129 = vmatprep.subr.mxu0 0.0
        %5130 = vmatpush1.msra.mxu0 0.0
        %5131 = vmatprep.subr.mxu0 0.0
        %5132 = vmatpush1.msra.mxu0 0.0
        %5133 = vmatprep.subr.mxu0 0.0
        %5134 = vmatpush1.msra.mxu0 0.0
        %5135 = vmatprep.subr.mxu0 0.0
        %5136 = vmatpush1.msra.mxu0 0.0
        %5137 = vmatprep.subr.mxu0 0.0
        %5138 = vmatpush1.msra.mxu0 0.0
        %5139 = vmatprep.subr.mxu0 0.0
        %5140 = vmatpush1.msra.mxu0 0.0
        %5141 = vmatprep.subr.mxu0 0.0
        %5142 = vmatpush1.msra.mxu0 0.0
        %5143 = vmatprep.subr.mxu0 0.0
        %5144 = vmatpush1.msra.mxu0 0.0
        %5145 = vmatprep.subr.mxu0 0.0
        %5146 = vmatpush1.msra.mxu0 0.0
        %5147 = vmatprep.subr.mxu0 0.0
        %5148 = vmatpush1.msra.mxu0 0.0
        %5149 = vmatprep.subr.mxu0 0.0
        %5150 = vmatpush1.msra.mxu0 0.0
        %5151 = vmatprep.subr.mxu0 0.0
        %5152 = vmatpush1.msra.mxu0 0.0
        %5153 = vmatprep.subr.mxu0 0.0
        %5154 = vmatpush1.msra.mxu0 0.0
        %5155 = vmatprep.subr.mxu0 0.0
        %5156 = vmatpush1.msra.mxu0 0.0
        %5157 = vmatprep.subr.mxu0 0.0
        %5158 = vmatpush1.msra.mxu0 0.0
        %5159 = vmatprep.subr.mxu0 0.0
        %5160 = vmatpush1.msra.mxu0 0.0
        %5161 = vmatprep.subr.mxu0 0.0
        %5162 = vmatpush1.msra.mxu0 0.0
        %5163 = vmatprep.subr.mxu0 0.0
        %5164 = vmatpush1.msra.mxu0 0.0
        %5165 = vmatprep.subr.mxu0 0.0
        %5166 = vmatpush1.msra.mxu0 0.0
        %5167 = vmatprep.subr.mxu0 0.0
        %5168 = vmatpush1.msra.mxu0 0.0
        %5169 = vmatprep.subr.mxu0 0.0
        %5170 = vmatpush1.msra.mxu0 0.0
        %5171 = vmatprep.subr.mxu0 0.0
        %5172 = vmatpush1.msra.mxu0 0.0
        %5173 = vmatprep.subr.mxu0 0.0
        %5174 = vmatpush1.msra.mxu0 0.0
        %5175 = vmatprep.subr.mxu0 0.0
        %5176 = vmatpush1.msra.mxu0 0.0
        %5177 = vmatprep.subr.mxu0 0.0
        %5178 = vmatpush1.msra.mxu0 0.0
        %5179 = vmatprep.subr.mxu0 0.0
        %5180 = vmatpush1.msra.mxu0 0.0
        %5181 = vmatprep.subr.mxu0 0.0
        %5182 = vmatpush1.msra.mxu0 0.0
        %5183 = vmatprep.subr.mxu0 0.0
        %5184 = vmatpush1.msra.mxu0 0.0
        %5185 = vmatprep.mubr.f32.mxu0 0.0
        %5186 = vmatmul.mubr.f32.gmra.mrb[0].mxu0 %v5119
        %v5187 = vpop.f32.mrb[0].mxu0
        %v5188 = vadd.f32 0.0, %v5187
        %v5189 = vpop.f32.mrb[0].mxu0
        %5190 = vdwg.mxu0
        %5191 = vrot.lane.b32.xlu0 %v4002, 112
        %v5192 = vpop.permute.xlu0 %5191
        %5193 = vrot.lane.b32.xlu0 %v4095, 112
        %v5194 = vpop.permute.xlu0 %5193
        %v5195 = vsel %vm1443, %v5192, 0
        %v5197 = vsel %vm1443, %v5194, 0
        %5199 = vmatprep.subr.mxu0 0.0
        %5200 = vmatpush1.xpose.msra.mxu0 %v5197
        %5201 = vmatprep.subr.mxu0 0.0
        %5202 = vmatpush1.xpose.msra.mxu0 0.0
        %5203 = vmatprep.subr.mxu0 0.0
        %5204 = vmatpush1.xpose.msra.mxu0 0.0
        %5205 = vmatprep.subr.mxu0 0.0
        %5206 = vmatpush1.xpose.msra.mxu0 0.0
        %5207 = vmatprep.subr.mxu0 0.0
        %5208 = vmatpush1.xpose.msra.mxu0 0.0
        %5209 = vmatprep.subr.mxu0 0.0
        %5210 = vmatpush1.xpose.msra.mxu0 0.0
        %5211 = vmatprep.subr.mxu0 0.0
        %5212 = vmatpush1.xpose.msra.mxu0 0.0
        %5213 = vmatprep.subr.mxu0 0.0
        %5214 = vmatpush1.xpose.msra.mxu0 0.0
        %5215 = vmatprep.subr.mxu0 0.0
        %5216 = vmatpush1.xpose.msra.mxu0 0.0
        %5217 = vmatprep.subr.mxu0 0.0
        %5218 = vmatpush1.xpose.msra.mxu0 0.0
        %5219 = vmatprep.subr.mxu0 0.0
        %5220 = vmatpush1.xpose.msra.mxu0 0.0
        %5221 = vmatprep.subr.mxu0 0.0
        %5222 = vmatpush1.xpose.msra.mxu0 0.0
        %5223 = vmatprep.subr.mxu0 0.0
        %5224 = vmatpush1.xpose.msra.mxu0 0.0
        %5225 = vmatprep.subr.mxu0 0.0
        %5226 = vmatpush1.xpose.msra.mxu0 0.0
        %5227 = vmatprep.subr.mxu0 0.0
        %5228 = vmatpush1.xpose.msra.mxu0 0.0
        %5229 = vmatprep.subr.mxu0 0.0
        %5230 = vmatpush1.xpose.msra.mxu0 0.0
        %5231 = vmatprep.subr.mxu0 0.0
        %5232 = vmatpush1.xpose.msra.mxu0 0.0
        %5233 = vmatprep.subr.mxu0 0.0
        %5234 = vmatpush1.xpose.msra.mxu0 0.0
        %5235 = vmatprep.subr.mxu0 0.0
        %5236 = vmatpush1.xpose.msra.mxu0 0.0
        %5237 = vmatprep.subr.mxu0 0.0
        %5238 = vmatpush1.xpose.msra.mxu0 0.0
        %5239 = vmatprep.subr.mxu0 0.0
        %5240 = vmatpush1.xpose.msra.mxu0 0.0
        %5241 = vmatprep.subr.mxu0 0.0
        %5242 = vmatpush1.xpose.msra.mxu0 0.0
        %5243 = vmatprep.subr.mxu0 0.0
        %5244 = vmatpush1.xpose.msra.mxu0 0.0
        %5245 = vmatprep.subr.mxu0 0.0
        %5246 = vmatpush1.xpose.msra.mxu0 0.0
        %5247 = vmatprep.subr.mxu0 0.0
        %5248 = vmatpush1.xpose.msra.mxu0 0.0
        %5249 = vmatprep.subr.mxu0 0.0
        %5250 = vmatpush1.xpose.msra.mxu0 0.0
        %5251 = vmatprep.subr.mxu0 0.0
        %5252 = vmatpush1.xpose.msra.mxu0 0.0
        %5253 = vmatprep.subr.mxu0 0.0
        %5254 = vmatpush1.xpose.msra.mxu0 0.0
        %5255 = vmatprep.subr.mxu0 0.0
        %5256 = vmatpush1.xpose.msra.mxu0 0.0
        %5257 = vmatprep.subr.mxu0 0.0
        %5258 = vmatpush1.xpose.msra.mxu0 0.0
        %5259 = vmatprep.subr.mxu0 0.0
        %5260 = vmatpush1.xpose.msra.mxu0 0.0
        %5261 = vmatprep.subr.mxu0 0.0
        %5262 = vmatpush1.xpose.msra.mxu0 0.0
        %5263 = vmatprep.mubr.f32.mxu0 0.0
        %5264 = vmatmul.mubr.f32.gmra.mrb[0].mxu0 %v5195
        %v5265 = vpop.f32.mrb[0].mxu0
        %v5266 = vadd.f32 0.0, %v5265
        %v5267 = vpop.f32.mrb[0].mxu0
        %5268 = vdwg.mxu0
        %5269 = vrot.lane.b32.xlu0 %v4007, 112
        %v5270 = vpop.permute.xlu0 %5269
        %5271 = vrot.lane.b32.xlu0 %v4100, 112
        %v5272 = vpop.permute.xlu0 %5271
        %v5273 = vsel %vm1443, %v5270, 0
        %v5275 = vsel %vm1443, %v5272, 0
        %5277 = vmatprep.subr.mxu0 0.0
        %5278 = vmatpush1.xpose.msra.mxu0 %v5275
        %5279 = vmatprep.subr.mxu0 0.0
        %5280 = vmatpush1.xpose.msra.mxu0 0.0
        %5281 = vmatprep.subr.mxu0 0.0
        %5282 = vmatpush1.xpose.msra.mxu0 0.0
        %5283 = vmatprep.subr.mxu0 0.0
        %5284 = vmatpush1.xpose.msra.mxu0 0.0
        %5285 = vmatprep.subr.mxu0 0.0
        %5286 = vmatpush1.xpose.msra.mxu0 0.0
        %5287 = vmatprep.subr.mxu0 0.0
        %5288 = vmatpush1.xpose.msra.mxu0 0.0
        %5289 = vmatprep.subr.mxu0 0.0
        %5290 = vmatpush1.xpose.msra.mxu0 0.0
        %5291 = vmatprep.subr.mxu0 0.0
        %5292 = vmatpush1.xpose.msra.mxu0 0.0
        %5293 = vmatprep.subr.mxu0 0.0
        %5294 = vmatpush1.xpose.msra.mxu0 0.0
        %5295 = vmatprep.subr.mxu0 0.0
        %5296 = vmatpush1.xpose.msra.mxu0 0.0
        %5297 = vmatprep.subr.mxu0 0.0
        %5298 = vmatpush1.xpose.msra.mxu0 0.0
        %5299 = vmatprep.subr.mxu0 0.0
        %5300 = vmatpush1.xpose.msra.mxu0 0.0
        %5301 = vmatprep.subr.mxu0 0.0
        %5302 = vmatpush1.xpose.msra.mxu0 0.0
        %5303 = vmatprep.subr.mxu0 0.0
        %5304 = vmatpush1.xpose.msra.mxu0 0.0
        %5305 = vmatprep.subr.mxu0 0.0
        %5306 = vmatpush1.xpose.msra.mxu0 0.0
        %5307 = vmatprep.subr.mxu0 0.0
        %5308 = vmatpush1.xpose.msra.mxu0 0.0
        %5309 = vmatprep.subr.mxu0 0.0
        %5310 = vmatpush1.xpose.msra.mxu0 0.0
        %5311 = vmatprep.subr.mxu0 0.0
        %5312 = vmatpush1.xpose.msra.mxu0 0.0
        %5313 = vmatprep.subr.mxu0 0.0
        %5314 = vmatpush1.xpose.msra.mxu0 0.0
        %5315 = vmatprep.subr.mxu0 0.0
        %5316 = vmatpush1.xpose.msra.mxu0 0.0
        %5317 = vmatprep.subr.mxu0 0.0
        %5318 = vmatpush1.xpose.msra.mxu0 0.0
        %5319 = vmatprep.subr.mxu0 0.0
        %5320 = vmatpush1.xpose.msra.mxu0 0.0
        %5321 = vmatprep.subr.mxu0 0.0
        %5322 = vmatpush1.xpose.msra.mxu0 0.0
        %5323 = vmatprep.subr.mxu0 0.0
        %5324 = vmatpush1.xpose.msra.mxu0 0.0
        %5325 = vmatprep.subr.mxu0 0.0
        %5326 = vmatpush1.xpose.msra.mxu0 0.0
        %5327 = vmatprep.subr.mxu0 0.0
        %5328 = vmatpush1.xpose.msra.mxu0 0.0
        %5329 = vmatprep.subr.mxu0 0.0
        %5330 = vmatpush1.xpose.msra.mxu0 0.0
        %5331 = vmatprep.subr.mxu0 0.0
        %5332 = vmatpush1.xpose.msra.mxu0 0.0
        %5333 = vmatprep.subr.mxu0 0.0
        %5334 = vmatpush1.xpose.msra.mxu0 0.0
        %5335 = vmatprep.subr.mxu0 0.0
        %5336 = vmatpush1.xpose.msra.mxu0 0.0
        %5337 = vmatprep.subr.mxu0 0.0
        %5338 = vmatpush1.xpose.msra.mxu0 0.0
        %5339 = vmatprep.subr.mxu0 0.0
        %5340 = vmatpush1.xpose.msra.mxu0 0.0
        %5341 = vmatprep.mubr.f32.mxu0 0.0
        %5342 = vmatmul.mubr.f32.gmra.mrb[0].mxu0 %v5273
        %v5343 = vpop.f32.mrb[0].mxu0
        %v5344 = vadd.f32 0.0, %v5343
        %v5345 = vpop.f32.mrb[0].mxu0
        %5346 = vdwg.mxu0
        %5347 = vrot.lane.b32.xlu0 %v4012, 112
        %v5348 = vpop.permute.xlu0 %5347
        %5349 = vrot.lane.b32.xlu0 %v4105, 112
        %v5350 = vpop.permute.xlu0 %5349
        %v5351 = vsel %vm1443, %v5348, 0
        %v5353 = vsel %vm1443, %v5350, 0
        %5355 = vmatprep.subr.mxu0 0.0
        %5356 = vmatpush1.xpose.msra.mxu0 %v5353
        %5357 = vmatprep.subr.mxu0 0.0
        %5358 = vmatpush1.xpose.msra.mxu0 0.0
        %5359 = vmatprep.subr.mxu0 0.0
        %5360 = vmatpush1.xpose.msra.mxu0 0.0
        %5361 = vmatprep.subr.mxu0 0.0
        %5362 = vmatpush1.xpose.msra.mxu0 0.0
        %5363 = vmatprep.subr.mxu0 0.0
        %5364 = vmatpush1.xpose.msra.mxu0 0.0
        %5365 = vmatprep.subr.mxu0 0.0
        %5366 = vmatpush1.xpose.msra.mxu0 0.0
        %5367 = vmatprep.subr.mxu0 0.0
        %5368 = vmatpush1.xpose.msra.mxu0 0.0
        %5369 = vmatprep.subr.mxu0 0.0
        %5370 = vmatpush1.xpose.msra.mxu0 0.0
        %5371 = vmatprep.subr.mxu0 0.0
        %5372 = vmatpush1.xpose.msra.mxu0 0.0
        %5373 = vmatprep.subr.mxu0 0.0
        %5374 = vmatpush1.xpose.msra.mxu0 0.0
        %5375 = vmatprep.subr.mxu0 0.0
        %5376 = vmatpush1.xpose.msra.mxu0 0.0
        %5377 = vmatprep.subr.mxu0 0.0
        %5378 = vmatpush1.xpose.msra.mxu0 0.0
        %5379 = vmatprep.subr.mxu0 0.0
        %5380 = vmatpush1.xpose.msra.mxu0 0.0
        %5381 = vmatprep.subr.mxu0 0.0
        %5382 = vmatpush1.xpose.msra.mxu0 0.0
        %5383 = vmatprep.subr.mxu0 0.0
        %5384 = vmatpush1.xpose.msra.mxu0 0.0
        %5385 = vmatprep.subr.mxu0 0.0
        %5386 = vmatpush1.xpose.msra.mxu0 0.0
        %5387 = vmatprep.subr.mxu0 0.0
        %5388 = vmatpush1.xpose.msra.mxu0 0.0
        %5389 = vmatprep.subr.mxu0 0.0
        %5390 = vmatpush1.xpose.msra.mxu0 0.0
        %5391 = vmatprep.subr.mxu0 0.0
        %5392 = vmatpush1.xpose.msra.mxu0 0.0
        %5393 = vmatprep.subr.mxu0 0.0
        %5394 = vmatpush1.xpose.msra.mxu0 0.0
        %5395 = vmatprep.subr.mxu0 0.0
        %5396 = vmatpush1.xpose.msra.mxu0 0.0
        %5397 = vmatprep.subr.mxu0 0.0
        %5398 = vmatpush1.xpose.msra.mxu0 0.0
        %5399 = vmatprep.subr.mxu0 0.0
        %5400 = vmatpush1.xpose.msra.mxu0 0.0
        %5401 = vmatprep.subr.mxu0 0.0
        %5402 = vmatpush1.xpose.msra.mxu0 0.0
        %5403 = vmatprep.subr.mxu0 0.0
        %5404 = vmatpush1.xpose.msra.mxu0 0.0
        %5405 = vmatprep.subr.mxu0 0.0
        %5406 = vmatpush1.xpose.msra.mxu0 0.0
        %5407 = vmatprep.subr.mxu0 0.0
        %5408 = vmatpush1.xpose.msra.mxu0 0.0
        %5409 = vmatprep.subr.mxu0 0.0
        %5410 = vmatpush1.xpose.msra.mxu0 0.0
        %5411 = vmatprep.subr.mxu0 0.0
        %5412 = vmatpush1.xpose.msra.mxu0 0.0
        %5413 = vmatprep.subr.mxu0 0.0
        %5414 = vmatpush1.xpose.msra.mxu0 0.0
        %5415 = vmatprep.subr.mxu0 0.0
        %5416 = vmatpush1.xpose.msra.mxu0 0.0
        %5417 = vmatprep.subr.mxu0 0.0
        %5418 = vmatpush1.xpose.msra.mxu0 0.0
        %5419 = vmatprep.mubr.f32.mxu0 0.0
        %5420 = vmatmul.mubr.f32.gmra.mrb[0].mxu0 %v5351
        %v5421 = vpop.f32.mrb[0].mxu0
        %v5422 = vadd.f32 0.0, %v5421
        %v5423 = vpop.f32.mrb[0].mxu0
        %5424 = vdwg.mxu0
        %v5425 = vmul.f32 %v5266, 0.35355338
        %v5426 = vmul.f32 %v5344, 0.35355338
        %v5427 = vmul.f32 %v5422, 0.35355338
        %v5428 = vadd.f32 %v5425, %v1157
        %v5429 = vadd.f32 %v5426, %v1158
        %v5430 = vadd.f32 %v5427, %v1159
        %v5431 = vsel %vm1443, %v5428, -inf
        %5432 = vmax.xlane.f32.xlu0 %v5431
        %v5433 = vpop.xlane.xlu0 %5432
        %v5434 = vsel %vm1443, %v5429, -inf
        %5435 = vmax.xlane.f32.xlu0 %v5434
        %v5436 = vpop.xlane.xlu0 %5435
        %v5437 = vsel %vm1443, %v5430, -inf
        %5438 = vmax.xlane.f32.xlu0 %v5437
        %v5439 = vpop.xlane.xlu0 %5438
        %v5440 = vsub.f32 %v5428, %v5433
        %v5441 = vsub.f32 %v5429, %v5436
        %v5442 = vsub.f32 %v5430, %v5439
        %v5443 = vmul.f32 %v5440, 1.442695
        %v5444 = vpow.pop %v5443
        %v5445 = vmul.f32 %v5441, 1.442695
        %v5446 = vpow.pop %v5445
        %v5447 = vmul.f32 %v5442, 1.442695
        %v5448 = vpow.pop %v5447
        %v5449 = vsel %vm1443, %v5444, 0.0
        %5450 = vadd.xlane.f32.xlu0 %v5449
        %v5451 = vpop.xlane.xlu0 %5450
        %v5452 = vsel %vm1443, %v5446, 0.0
        %5453 = vadd.xlane.f32.xlu0 %v5452
        %v5454 = vpop.xlane.xlu0 %5453
        %v5455 = vsel %vm1443, %v5448, 0.0
        %5456 = vadd.xlane.f32.xlu0 %v5455
        %v5457 = vpop.xlane.xlu0 %5456
        %v5458 = vrcp.pop %v5451
        %v5459 = vmul.f32 %v5444, %v5458
        %v5460 = vrcp.pop %v5454
        %v5461 = vmul.f32 %v5446, %v5460
        %v5462 = vrcp.pop %v5457
        %v5463 = vmul.f32 %v5448, %v5462
        %5464 = vrot.lane.b32.xlu0 %v4188, 112
        %v5465 = vpop.permute.xlu0 %5464
        %v5468 = vsel %vm1443, %v5459, 0
        %5470 = vmatprep.subr.mxu0 0.0
        %5471 = vmatpush1.msra.mxu0 %v5465
        %5472 = vmatprep.subr.mxu0 0.0
        %5473 = vmatpush1.msra.mxu0 0.0
        %5474 = vmatprep.subr.mxu0 0.0
        %5475 = vmatpush1.msra.mxu0 0.0
        %5476 = vmatprep.subr.mxu0 0.0
        %5477 = vmatpush1.msra.mxu0 0.0
        %5478 = vmatprep.subr.mxu0 0.0
        %5479 = vmatpush1.msra.mxu0 0.0
        %5480 = vmatprep.subr.mxu0 0.0
        %5481 = vmatpush1.msra.mxu0 0.0
        %5482 = vmatprep.subr.mxu0 0.0
        %5483 = vmatpush1.msra.mxu0 0.0
        %5484 = vmatprep.subr.mxu0 0.0
        %5485 = vmatpush1.msra.mxu0 0.0
        %5486 = vmatprep.subr.mxu0 0.0
        %5487 = vmatpush1.msra.mxu0 0.0
        %5488 = vmatprep.subr.mxu0 0.0
        %5489 = vmatpush1.msra.mxu0 0.0
        %5490 = vmatprep.subr.mxu0 0.0
        %5491 = vmatpush1.msra.mxu0 0.0
        %5492 = vmatprep.subr.mxu0 0.0
        %5493 = vmatpush1.msra.mxu0 0.0
        %5494 = vmatprep.subr.mxu0 0.0
        %5495 = vmatpush1.msra.mxu0 0.0
        %5496 = vmatprep.subr.mxu0 0.0
        %5497 = vmatpush1.msra.mxu0 0.0
        %5498 = vmatprep.subr.mxu0 0.0
        %5499 = vmatpush1.msra.mxu0 0.0
        %5500 = vmatprep.subr.mxu0 0.0
        %5501 = vmatpush1.msra.mxu0 0.0
        %5502 = vmatprep.subr.mxu0 0.0
        %5503 = vmatpush1.msra.mxu0 0.0
        %5504 = vmatprep.subr.mxu0 0.0
        %5505 = vmatpush1.msra.mxu0 0.0
        %5506 = vmatprep.subr.mxu0 0.0
        %5507 = vmatpush1.msra.mxu0 0.0
        %5508 = vmatprep.subr.mxu0 0.0
        %5509 = vmatpush1.msra.mxu0 0.0
        %5510 = vmatprep.subr.mxu0 0.0
        %5511 = vmatpush1.msra.mxu0 0.0
        %5512 = vmatprep.subr.mxu0 0.0
        %5513 = vmatpush1.msra.mxu0 0.0
        %5514 = vmatprep.subr.mxu0 0.0
        %5515 = vmatpush1.msra.mxu0 0.0
        %5516 = vmatprep.subr.mxu0 0.0
        %5517 = vmatpush1.msra.mxu0 0.0
        %5518 = vmatprep.subr.mxu0 0.0
        %5519 = vmatpush1.msra.mxu0 0.0
        %5520 = vmatprep.subr.mxu0 0.0
        %5521 = vmatpush1.msra.mxu0 0.0
        %5522 = vmatprep.subr.mxu0 0.0
        %5523 = vmatpush1.msra.mxu0 0.0
        %5524 = vmatprep.subr.mxu0 0.0
        %5525 = vmatpush1.msra.mxu0 0.0
        %5526 = vmatprep.subr.mxu0 0.0
        %5527 = vmatpush1.msra.mxu0 0.0
        %5528 = vmatprep.subr.mxu0 0.0
        %5529 = vmatpush1.msra.mxu0 0.0
        %5530 = vmatprep.subr.mxu0 0.0
        %5531 = vmatpush1.msra.mxu0 0.0
        %5532 = vmatprep.subr.mxu0 0.0
        %5533 = vmatpush1.msra.mxu0 0.0
        %5534 = vmatprep.mubr.f32.mxu0 0.0
        %5535 = vmatmul.mubr.f32.gmra.mrb[0].mxu0 %v5468
        %v5536 = vpop.f32.mrb[0].mxu0
        %v5537 = vadd.f32 0.0, %v5536
        %v5538 = vpop.f32.mrb[0].mxu0
        %5539 = vdwg.mxu0
        %5540 = vrot.lane.b32.xlu0 %v4193, 112
        %v5541 = vpop.permute.xlu0 %5540
        %v5544 = vsel %vm1443, %v5461, 0
        %5546 = vmatprep.subr.mxu0 0.0
        %5547 = vmatpush1.msra.mxu0 %v5541
        %5548 = vmatprep.subr.mxu0 0.0
        %5549 = vmatpush1.msra.mxu0 0.0
        %5550 = vmatprep.subr.mxu0 0.0
        %5551 = vmatpush1.msra.mxu0 0.0
        %5552 = vmatprep.subr.mxu0 0.0
        %5553 = vmatpush1.msra.mxu0 0.0
        %5554 = vmatprep.subr.mxu0 0.0
        %5555 = vmatpush1.msra.mxu0 0.0
        %5556 = vmatprep.subr.mxu0 0.0
        %5557 = vmatpush1.msra.mxu0 0.0
        %5558 = vmatprep.subr.mxu0 0.0
        %5559 = vmatpush1.msra.mxu0 0.0
        %5560 = vmatprep.subr.mxu0 0.0
        %5561 = vmatpush1.msra.mxu0 0.0
        %5562 = vmatprep.subr.mxu0 0.0
        %5563 = vmatpush1.msra.mxu0 0.0
        %5564 = vmatprep.subr.mxu0 0.0
        %5565 = vmatpush1.msra.mxu0 0.0
        %5566 = vmatprep.subr.mxu0 0.0
        %5567 = vmatpush1.msra.mxu0 0.0
        %5568 = vmatprep.subr.mxu0 0.0
        %5569 = vmatpush1.msra.mxu0 0.0
        %5570 = vmatprep.subr.mxu0 0.0
        %5571 = vmatpush1.msra.mxu0 0.0
        %5572 = vmatprep.subr.mxu0 0.0
        %5573 = vmatpush1.msra.mxu0 0.0
        %5574 = vmatprep.subr.mxu0 0.0
        %5575 = vmatpush1.msra.mxu0 0.0
        %5576 = vmatprep.subr.mxu0 0.0
        %5577 = vmatpush1.msra.mxu0 0.0
        %5578 = vmatprep.subr.mxu0 0.0
        %5579 = vmatpush1.msra.mxu0 0.0
        %5580 = vmatprep.subr.mxu0 0.0
        %5581 = vmatpush1.msra.mxu0 0.0
        %5582 = vmatprep.subr.mxu0 0.0
        %5583 = vmatpush1.msra.mxu0 0.0
        %5584 = vmatprep.subr.mxu0 0.0
        %5585 = vmatpush1.msra.mxu0 0.0
        %5586 = vmatprep.subr.mxu0 0.0
        %5587 = vmatpush1.msra.mxu0 0.0
        %5588 = vmatprep.subr.mxu0 0.0
        %5589 = vmatpush1.msra.mxu0 0.0
        %5590 = vmatprep.subr.mxu0 0.0
        %5591 = vmatpush1.msra.mxu0 0.0
        %5592 = vmatprep.subr.mxu0 0.0
        %5593 = vmatpush1.msra.mxu0 0.0
        %5594 = vmatprep.subr.mxu0 0.0
        %5595 = vmatpush1.msra.mxu0 0.0
        %5596 = vmatprep.subr.mxu0 0.0
        %5597 = vmatpush1.msra.mxu0 0.0
        %5598 = vmatprep.subr.mxu0 0.0
        %5599 = vmatpush1.msra.mxu0 0.0
        %5600 = vmatprep.subr.mxu0 0.0
        %5601 = vmatpush1.msra.mxu0 0.0
        %5602 = vmatprep.subr.mxu0 0.0
        %5603 = vmatpush1.msra.mxu0 0.0
        %5604 = vmatprep.subr.mxu0 0.0
        %5605 = vmatpush1.msra.mxu0 0.0
        %5606 = vmatprep.subr.mxu0 0.0
        %5607 = vmatpush1.msra.mxu0 0.0
        %5608 = vmatprep.subr.mxu0 0.0
        %5609 = vmatpush1.msra.mxu0 0.0
        %5610 = vmatprep.mubr.f32.mxu0 0.0
        %5611 = vmatmul.mubr.f32.gmra.mrb[0].mxu0 %v5544
        %v5612 = vpop.f32.mrb[0].mxu0
        %v5613 = vadd.f32 0.0, %v5612
        %v5614 = vpop.f32.mrb[0].mxu0
        %5615 = vdwg.mxu0
        %5616 = vrot.lane.b32.xlu0 %v4198, 112
        %v5617 = vpop.permute.xlu0 %5616
        %v5620 = vsel %vm1443, %v5463, 0
        %5622 = vmatprep.subr.mxu0 0.0
        %5623 = vmatpush1.msra.mxu0 %v5617
        %5624 = vmatprep.subr.mxu0 0.0
        %5625 = vmatpush1.msra.mxu0 0.0
        %5626 = vmatprep.subr.mxu0 0.0
        %5627 = vmatpush1.msra.mxu0 0.0
        %5628 = vmatprep.subr.mxu0 0.0
        %5629 = vmatpush1.msra.mxu0 0.0
        %5630 = vmatprep.subr.mxu0 0.0
        %5631 = vmatpush1.msra.mxu0 0.0
        %5632 = vmatprep.subr.mxu0 0.0
        %5633 = vmatpush1.msra.mxu0 0.0
        %5634 = vmatprep.subr.mxu0 0.0
        %5635 = vmatpush1.msra.mxu0 0.0
        %5636 = vmatprep.subr.mxu0 0.0
        %5637 = vmatpush1.msra.mxu0 0.0
        %5638 = vmatprep.subr.mxu0 0.0
        %5639 = vmatpush1.msra.mxu0 0.0
        %5640 = vmatprep.subr.mxu0 0.0
        %5641 = vmatpush1.msra.mxu0 0.0
        %5642 = vmatprep.subr.mxu0 0.0
        %5643 = vmatpush1.msra.mxu0 0.0
        %5644 = vmatprep.subr.mxu0 0.0
        %5645 = vmatpush1.msra.mxu0 0.0
        %5646 = vmatprep.subr.mxu0 0.0
        %5647 = vmatpush1.msra.mxu0 0.0
        %5648 = vmatprep.subr.mxu0 0.0
        %5649 = vmatpush1.msra.mxu0 0.0
        %5650 = vmatprep.subr.mxu0 0.0
        %5651 = vmatpush1.msra.mxu0 0.0
        %5652 = vmatprep.subr.mxu0 0.0
        %5653 = vmatpush1.msra.mxu0 0.0
        %5654 = vmatprep.subr.mxu0 0.0
        %5655 = vmatpush1.msra.mxu0 0.0
        %5656 = vmatprep.subr.mxu0 0.0
        %5657 = vmatpush1.msra.mxu0 0.0
        %5658 = vmatprep.subr.mxu0 0.0
        %5659 = vmatpush1.msra.mxu0 0.0
        %5660 = vmatprep.subr.mxu0 0.0
        %5661 = vmatpush1.msra.mxu0 0.0
        %5662 = vmatprep.subr.mxu0 0.0
        %5663 = vmatpush1.msra.mxu0 0.0
        %5664 = vmatprep.subr.mxu0 0.0
        %5665 = vmatpush1.msra.mxu0 0.0
        %5666 = vmatprep.subr.mxu0 0.0
        %5667 = vmatpush1.msra.mxu0 0.0
        %5668 = vmatprep.subr.mxu0 0.0
        %5669 = vmatpush1.msra.mxu0 0.0
        %5670 = vmatprep.subr.mxu0 0.0
        %5671 = vmatpush1.msra.mxu0 0.0
        %5672 = vmatprep.subr.mxu0 0.0
        %5673 = vmatpush1.msra.mxu0 0.0
        %5674 = vmatprep.subr.mxu0 0.0
        %5675 = vmatpush1.msra.mxu0 0.0
        %5676 = vmatprep.subr.mxu0 0.0
        %5677 = vmatpush1.msra.mxu0 0.0
        %5678 = vmatprep.subr.mxu0 0.0
        %5679 = vmatpush1.msra.mxu0 0.0
        %5680 = vmatprep.subr.mxu0 0.0
        %5681 = vmatpush1.msra.mxu0 0.0
        %5682 = vmatprep.subr.mxu0 0.0
        %5683 = vmatpush1.msra.mxu0 0.0
        %5684 = vmatprep.subr.mxu0 0.0
        %5685 = vmatpush1.msra.mxu0 0.0
        %5686 = vmatprep.mubr.f32.mxu0 0.0
        %5687 = vmatmul.mubr.f32.gmra.mrb[0].mxu0 %v5620
        %v5688 = vpop.f32.mrb[0].mxu0
        %v5689 = vadd.f32 0.0, %v5688
        %v5690 = vpop.f32.mrb[0].mxu0
        %5691 = vdwg.mxu0
        %5692 = vrot.lane.b32.xlu0 %v4002, 104
        %v5693 = vpop.permute.xlu0 %5692
        %5694 = vrot.lane.b32.xlu0 %v4095, 104
        %v5695 = vpop.permute.xlu0 %5694
        %v5696 = vsel %vm1443, %v5693, 0
        %v5698 = vsel %vm1443, %v5695, 0
        %5700 = vmatprep.subr.mxu0 0.0
        %5701 = vmatpush1.xpose.msra.mxu0 %v5698
        %5702 = vmatprep.subr.mxu0 0.0
        %5703 = vmatpush1.xpose.msra.mxu0 0.0
        %5704 = vmatprep.subr.mxu0 0.0
        %5705 = vmatpush1.xpose.msra.mxu0 0.0
        %5706 = vmatprep.subr.mxu0 0.0
        %5707 = vmatpush1.xpose.msra.mxu0 0.0
        %5708 = vmatprep.subr.mxu0 0.0
        %5709 = vmatpush1.xpose.msra.mxu0 0.0
        %5710 = vmatprep.subr.mxu0 0.0
        %5711 = vmatpush1.xpose.msra.mxu0 0.0
        %5712 = vmatprep.subr.mxu0 0.0
        %5713 = vmatpush1.xpose.msra.mxu0 0.0
        %5714 = vmatprep.subr.mxu0 0.0
        %5715 = vmatpush1.xpose.msra.mxu0 0.0
        %5716 = vmatprep.subr.mxu0 0.0
        %5717 = vmatpush1.xpose.msra.mxu0 0.0
        %5718 = vmatprep.subr.mxu0 0.0
        %5719 = vmatpush1.xpose.msra.mxu0 0.0
        %5720 = vmatprep.subr.mxu0 0.0
        %5721 = vmatpush1.xpose.msra.mxu0 0.0
        %5722 = vmatprep.subr.mxu0 0.0
        %5723 = vmatpush1.xpose.msra.mxu0 0.0
        %5724 = vmatprep.subr.mxu0 0.0
        %5725 = vmatpush1.xpose.msra.mxu0 0.0
        %5726 = vmatprep.subr.mxu0 0.0
        %5727 = vmatpush1.xpose.msra.mxu0 0.0
        %5728 = vmatprep.subr.mxu0 0.0
        %5729 = vmatpush1.xpose.msra.mxu0 0.0
        %5730 = vmatprep.subr.mxu0 0.0
        %5731 = vmatpush1.xpose.msra.mxu0 0.0
        %5732 = vmatprep.subr.mxu0 0.0
        %5733 = vmatpush1.xpose.msra.mxu0 0.0
        %5734 = vmatprep.subr.mxu0 0.0
        %5735 = vmatpush1.xpose.msra.mxu0 0.0
        %5736 = vmatprep.subr.mxu0 0.0
        %5737 = vmatpush1.xpose.msra.mxu0 0.0
        %5738 = vmatprep.subr.mxu0 0.0
        %5739 = vmatpush1.xpose.msra.mxu0 0.0
        %5740 = vmatprep.subr.mxu0 0.0
        %5741 = vmatpush1.xpose.msra.mxu0 0.0
        %5742 = vmatprep.subr.mxu0 0.0
        %5743 = vmatpush1.xpose.msra.mxu0 0.0
        %5744 = vmatprep.subr.mxu0 0.0
        %5745 = vmatpush1.xpose.msra.mxu0 0.0
        %5746 = vmatprep.subr.mxu0 0.0
        %5747 = vmatpush1.xpose.msra.mxu0 0.0
        %5748 = vmatprep.subr.mxu0 0.0
        %5749 = vmatpush1.xpose.msra.mxu0 0.0
        %5750 = vmatprep.subr.mxu0 0.0
        %5751 = vmatpush1.xpose.msra.mxu0 0.0
        %5752 = vmatprep.subr.mxu0 0.0
        %5753 = vmatpush1.xpose.msra.mxu0 0.0
        %5754 = vmatprep.subr.mxu0 0.0
        %5755 = vmatpush1.xpose.msra.mxu0 0.0
        %5756 = vmatprep.subr.mxu0 0.0
        %5757 = vmatpush1.xpose.msra.mxu0 0.0
        %5758 = vmatprep.subr.mxu0 0.0
        %5759 = vmatpush1.xpose.msra.mxu0 0.0
        %5760 = vmatprep.subr.mxu0 0.0
        %5761 = vmatpush1.xpose.msra.mxu0 0.0
        %5762 = vmatprep.subr.mxu0 0.0
        %5763 = vmatpush1.xpose.msra.mxu0 0.0
        %5764 = vmatprep.mubr.f32.mxu0 0.0
        %5765 = vmatmul.mubr.f32.gmra.mrb[0].mxu0 %v5696
        %v5766 = vpop.f32.mrb[0].mxu0
        %v5767 = vadd.f32 0.0, %v5766
        %v5768 = vpop.f32.mrb[0].mxu0
        %5769 = vdwg.mxu0
        %5770 = vrot.lane.b32.xlu0 %v4007, 104
        %v5771 = vpop.permute.xlu0 %5770
        %5772 = vrot.lane.b32.xlu0 %v4100, 104
        %v5773 = vpop.permute.xlu0 %5772
        %v5774 = vsel %vm1443, %v5771, 0
        %v5776 = vsel %vm1443, %v5773, 0
        %5778 = vmatprep.subr.mxu0 0.0
        %5779 = vmatpush1.xpose.msra.mxu0 %v5776
        %5780 = vmatprep.subr.mxu0 0.0
        %5781 = vmatpush1.xpose.msra.mxu0 0.0
        %5782 = vmatprep.subr.mxu0 0.0
        %5783 = vmatpush1.xpose.msra.mxu0 0.0
        %5784 = vmatprep.subr.mxu0 0.0
        %5785 = vmatpush1.xpose.msra.mxu0 0.0
        %5786 = vmatprep.subr.mxu0 0.0
        %5787 = vmatpush1.xpose.msra.mxu0 0.0
        %5788 = vmatprep.subr.mxu0 0.0
        %5789 = vmatpush1.xpose.msra.mxu0 0.0
        %5790 = vmatprep.subr.mxu0 0.0
        %5791 = vmatpush1.xpose.msra.mxu0 0.0
        %5792 = vmatprep.subr.mxu0 0.0
        %5793 = vmatpush1.xpose.msra.mxu0 0.0
        %5794 = vmatprep.subr.mxu0 0.0
        %5795 = vmatpush1.xpose.msra.mxu0 0.0
        %5796 = vmatprep.subr.mxu0 0.0
        %5797 = vmatpush1.xpose.msra.mxu0 0.0
        %5798 = vmatprep.subr.mxu0 0.0
        %5799 = vmatpush1.xpose.msra.mxu0 0.0
        %5800 = vmatprep.subr.mxu0 0.0
        %5801 = vmatpush1.xpose.msra.mxu0 0.0
        %5802 = vmatprep.subr.mxu0 0.0
        %5803 = vmatpush1.xpose.msra.mxu0 0.0
        %5804 = vmatprep.subr.mxu0 0.0
        %5805 = vmatpush1.xpose.msra.mxu0 0.0
        %5806 = vmatprep.subr.mxu0 0.0
        %5807 = vmatpush1.xpose.msra.mxu0 0.0
        %5808 = vmatprep.subr.mxu0 0.0
        %5809 = vmatpush1.xpose.msra.mxu0 0.0
        %5810 = vmatprep.subr.mxu0 0.0
        %5811 = vmatpush1.xpose.msra.mxu0 0.0
        %5812 = vmatprep.subr.mxu0 0.0
        %5813 = vmatpush1.xpose.msra.mxu0 0.0
        %5814 = vmatprep.subr.mxu0 0.0
        %5815 = vmatpush1.xpose.msra.mxu0 0.0
        %5816 = vmatprep.subr.mxu0 0.0
        %5817 = vmatpush1.xpose.msra.mxu0 0.0
        %5818 = vmatprep.subr.mxu0 0.0
        %5819 = vmatpush1.xpose.msra.mxu0 0.0
        %5820 = vmatprep.subr.mxu0 0.0
        %5821 = vmatpush1.xpose.msra.mxu0 0.0
        %5822 = vmatprep.subr.mxu0 0.0
        %5823 = vmatpush1.xpose.msra.mxu0 0.0
        %5824 = vmatprep.subr.mxu0 0.0
        %5825 = vmatpush1.xpose.msra.mxu0 0.0
        %5826 = vmatprep.subr.mxu0 0.0
        %5827 = vmatpush1.xpose.msra.mxu0 0.0
        %5828 = vmatprep.subr.mxu0 0.0
        %5829 = vmatpush1.xpose.msra.mxu0 0.0
        %5830 = vmatprep.subr.mxu0 0.0
        %5831 = vmatpush1.xpose.msra.mxu0 0.0
        %5832 = vmatprep.subr.mxu0 0.0
        %5833 = vmatpush1.xpose.msra.mxu0 0.0
        %5834 = vmatprep.subr.mxu0 0.0
        %5835 = vmatpush1.xpose.msra.mxu0 0.0
        %5836 = vmatprep.subr.mxu0 0.0
        %5837 = vmatpush1.xpose.msra.mxu0 0.0
        %5838 = vmatprep.subr.mxu0 0.0
        %5839 = vmatpush1.xpose.msra.mxu0 0.0
        %5840 = vmatprep.subr.mxu0 0.0
        %5841 = vmatpush1.xpose.msra.mxu0 0.0
        %5842 = vmatprep.mubr.f32.mxu0 0.0
        %5843 = vmatmul.mubr.f32.gmra.mrb[0].mxu0 %v5774
        %v5844 = vpop.f32.mrb[0].mxu0
        %v5845 = vadd.f32 0.0, %v5844
        %v5846 = vpop.f32.mrb[0].mxu0
        %5847 = vdwg.mxu0
        %5848 = vrot.lane.b32.xlu0 %v4012, 104
        %v5849 = vpop.permute.xlu0 %5848
        %5850 = vrot.lane.b32.xlu0 %v4105, 104
        %v5851 = vpop.permute.xlu0 %5850
        %v5852 = vsel %vm1443, %v5849, 0
        %v5854 = vsel %vm1443, %v5851, 0
        %5856 = vmatprep.subr.mxu0 0.0
        %5857 = vmatpush1.xpose.msra.mxu0 %v5854
        %5858 = vmatprep.subr.mxu0 0.0
        %5859 = vmatpush1.xpose.msra.mxu0 0.0
        %5860 = vmatprep.subr.mxu0 0.0
        %5861 = vmatpush1.xpose.msra.mxu0 0.0
        %5862 = vmatprep.subr.mxu0 0.0
        %5863 = vmatpush1.xpose.msra.mxu0 0.0
        %5864 = vmatprep.subr.mxu0 0.0
        %5865 = vmatpush1.xpose.msra.mxu0 0.0
        %5866 = vmatprep.subr.mxu0 0.0
        %5867 = vmatpush1.xpose.msra.mxu0 0.0
        %5868 = vmatprep.subr.mxu0 0.0
        %5869 = vmatpush1.xpose.msra.mxu0 0.0
        %5870 = vmatprep.subr.mxu0 0.0
        %5871 = vmatpush1.xpose.msra.mxu0 0.0
        %5872 = vmatprep.subr.mxu0 0.0
        %5873 = vmatpush1.xpose.msra.mxu0 0.0
        %5874 = vmatprep.subr.mxu0 0.0
        %5875 = vmatpush1.xpose.msra.mxu0 0.0
        %5876 = vmatprep.subr.mxu0 0.0
        %5877 = vmatpush1.xpose.msra.mxu0 0.0
        %5878 = vmatprep.subr.mxu0 0.0
        %5879 = vmatpush1.xpose.msra.mxu0 0.0
        %5880 = vmatprep.subr.mxu0 0.0
        %5881 = vmatpush1.xpose.msra.mxu0 0.0
        %5882 = vmatprep.subr.mxu0 0.0
        %5883 = vmatpush1.xpose.msra.mxu0 0.0
        %5884 = vmatprep.subr.mxu0 0.0
        %5885 = vmatpush1.xpose.msra.mxu0 0.0
        %5886 = vmatprep.subr.mxu0 0.0
        %5887 = vmatpush1.xpose.msra.mxu0 0.0
        %5888 = vmatprep.subr.mxu0 0.0
        %5889 = vmatpush1.xpose.msra.mxu0 0.0
        %5890 = vmatprep.subr.mxu0 0.0
        %5891 = vmatpush1.xpose.msra.mxu0 0.0
        %5892 = vmatprep.subr.mxu0 0.0
        %5893 = vmatpush1.xpose.msra.mxu0 0.0
        %5894 = vmatprep.subr.mxu0 0.0
        %5895 = vmatpush1.xpose.msra.mxu0 0.0
        %5896 = vmatprep.subr.mxu0 0.0
        %5897 = vmatpush1.xpose.msra.mxu0 0.0
        %5898 = vmatprep.subr.mxu0 0.0
        %5899 = vmatpush1.xpose.msra.mxu0 0.0
        %5900 = vmatprep.subr.mxu0 0.0
        %5901 = vmatpush1.xpose.msra.mxu0 0.0
        %5902 = vmatprep.subr.mxu0 0.0
        %5903 = vmatpush1.xpose.msra.mxu0 0.0
        %5904 = vmatprep.subr.mxu0 0.0
        %5905 = vmatpush1.xpose.msra.mxu0 0.0
        %5906 = vmatprep.subr.mxu0 0.0
        %5907 = vmatpush1.xpose.msra.mxu0 0.0
        %5908 = vmatprep.subr.mxu0 0.0
        %5909 = vmatpush1.xpose.msra.mxu0 0.0
        %5910 = vmatprep.subr.mxu0 0.0
        %5911 = vmatpush1.xpose.msra.mxu0 0.0
        %5912 = vmatprep.subr.mxu0 0.0
        %5913 = vmatpush1.xpose.msra.mxu0 0.0
        %5914 = vmatprep.subr.mxu0 0.0
        %5915 = vmatpush1.xpose.msra.mxu0 0.0
        %5916 = vmatprep.subr.mxu0 0.0
        %5917 = vmatpush1.xpose.msra.mxu0 0.0
        %5918 = vmatprep.subr.mxu0 0.0
        %5919 = vmatpush1.xpose.msra.mxu0 0.0
        %5920 = vmatprep.mubr.f32.mxu0 0.0
        %5921 = vmatmul.mubr.f32.gmra.mrb[0].mxu0 %v5852
        %v5922 = vpop.f32.mrb[0].mxu0
        %v5923 = vadd.f32 0.0, %v5922
        %v5924 = vpop.f32.mrb[0].mxu0
        %5925 = vdwg.mxu0
        %v5926 = vmul.f32 %v5767, 0.35355338
        %v5927 = vmul.f32 %v5845, 0.35355338
        %v5928 = vmul.f32 %v5923, 0.35355338
        %v5929 = vadd.f32 %v5926, %v1157
        %v5930 = vadd.f32 %v5927, %v1158
        %v5931 = vadd.f32 %v5928, %v1159
        %v5932 = vsel %vm1443, %v5929, -inf
        %5933 = vmax.xlane.f32.xlu0 %v5932
        %v5934 = vpop.xlane.xlu0 %5933
        %v5935 = vsel %vm1443, %v5930, -inf
        %5936 = vmax.xlane.f32.xlu0 %v5935
        %v5937 = vpop.xlane.xlu0 %5936
        %v5938 = vsel %vm1443, %v5931, -inf
        %5939 = vmax.xlane.f32.xlu0 %v5938
        %v5940 = vpop.xlane.xlu0 %5939
        %v5941 = vsub.f32 %v5929, %v5934
        %v5942 = vsub.f32 %v5930, %v5937
        %v5943 = vsub.f32 %v5931, %v5940
        %v5944 = vmul.f32 %v5941, 1.442695
        %v5945 = vpow.pop %v5944
        %v5946 = vmul.f32 %v5942, 1.442695
        %v5947 = vpow.pop %v5946
        %v5948 = vmul.f32 %v5943, 1.442695
        %v5949 = vpow.pop %v5948
        %v5950 = vsel %vm1443, %v5945, 0.0
        %5951 = vadd.xlane.f32.xlu0 %v5950
        %v5952 = vpop.xlane.xlu0 %5951
        %v5953 = vsel %vm1443, %v5947, 0.0
        %5954 = vadd.xlane.f32.xlu0 %v5953
        %v5955 = vpop.xlane.xlu0 %5954
        %v5956 = vsel %vm1443, %v5949, 0.0
        %5957 = vadd.xlane.f32.xlu0 %v5956
        %v5958 = vpop.xlane.xlu0 %5957
        %v5959 = vrcp.pop %v5952
        %v5960 = vmul.f32 %v5945, %v5959
        %v5961 = vrcp.pop %v5955
        %v5962 = vmul.f32 %v5947, %v5961
        %v5963 = vrcp.pop %v5958
        %v5964 = vmul.f32 %v5949, %v5963
        %5965 = vrot.lane.b32.xlu0 %v4188, 104
        %v5966 = vpop.permute.xlu0 %5965
        %v5969 = vsel %vm1443, %v5960, 0
        %5971 = vmatprep.subr.mxu0 0.0
        %5972 = vmatpush1.msra.mxu0 %v5966
        %5973 = vmatprep.subr.mxu0 0.0
        %5974 = vmatpush1.msra.mxu0 0.0
        %5975 = vmatprep.subr.mxu0 0.0
        %5976 = vmatpush1.msra.mxu0 0.0
        %5977 = vmatprep.subr.mxu0 0.0
        %5978 = vmatpush1.msra.mxu0 0.0
        %5979 = vmatprep.subr.mxu0 0.0
        %5980 = vmatpush1.msra.mxu0 0.0
        %5981 = vmatprep.subr.mxu0 0.0
        %5982 = vmatpush1.msra.mxu0 0.0
        %5983 = vmatprep.subr.mxu0 0.0
        %5984 = vmatpush1.msra.mxu0 0.0
        %5985 = vmatprep.subr.mxu0 0.0
        %5986 = vmatpush1.msra.mxu0 0.0
        %5987 = vmatprep.subr.mxu0 0.0
        %5988 = vmatpush1.msra.mxu0 0.0
        %5989 = vmatprep.subr.mxu0 0.0
        %5990 = vmatpush1.msra.mxu0 0.0
        %5991 = vmatprep.subr.mxu0 0.0
        %5992 = vmatpush1.msra.mxu0 0.0
        %5993 = vmatprep.subr.mxu0 0.0
        %5994 = vmatpush1.msra.mxu0 0.0
        %5995 = vmatprep.subr.mxu0 0.0
        %5996 = vmatpush1.msra.mxu0 0.0
        %5997 = vmatprep.subr.mxu0 0.0
        %5998 = vmatpush1.msra.mxu0 0.0
        %5999 = vmatprep.subr.mxu0 0.0
        %6000 = vmatpush1.msra.mxu0 0.0
        %6001 = vmatprep.subr.mxu0 0.0
        %6002 = vmatpush1.msra.mxu0 0.0
        %6003 = vmatprep.subr.mxu0 0.0
        %6004 = vmatpush1.msra.mxu0 0.0
        %6005 = vmatprep.subr.mxu0 0.0
        %6006 = vmatpush1.msra.mxu0 0.0
        %6007 = vmatprep.subr.mxu0 0.0
        %6008 = vmatpush1.msra.mxu0 0.0
        %6009 = vmatprep.subr.mxu0 0.0
        %6010 = vmatpush1.msra.mxu0 0.0
        %6011 = vmatprep.subr.mxu0 0.0
        %6012 = vmatpush1.msra.mxu0 0.0
        %6013 = vmatprep.subr.mxu0 0.0
        %6014 = vmatpush1.msra.mxu0 0.0
        %6015 = vmatprep.subr.mxu0 0.0
        %6016 = vmatpush1.msra.mxu0 0.0
        %6017 = vmatprep.subr.mxu0 0.0
        %6018 = vmatpush1.msra.mxu0 0.0
        %6019 = vmatprep.subr.mxu0 0.0
        %6020 = vmatpush1.msra.mxu0 0.0
        %6021 = vmatprep.subr.mxu0 0.0
        %6022 = vmatpush1.msra.mxu0 0.0
        %6023 = vmatprep.subr.mxu0 0.0
        %6024 = vmatpush1.msra.mxu0 0.0
        %6025 = vmatprep.subr.mxu0 0.0
        %6026 = vmatpush1.msra.mxu0 0.0
        %6027 = vmatprep.subr.mxu0 0.0
        %6028 = vmatpush1.msra.mxu0 0.0
        %6029 = vmatprep.subr.mxu0 0.0
        %6030 = vmatpush1.msra.mxu0 0.0
        %6031 = vmatprep.subr.mxu0 0.0
        %6032 = vmatpush1.msra.mxu0 0.0
        %6033 = vmatprep.subr.mxu0 0.0
        %6034 = vmatpush1.msra.mxu0 0.0
        %6035 = vmatprep.mubr.f32.mxu0 0.0
        %6036 = vmatmul.mubr.f32.gmra.mrb[0].mxu0 %v5969
        %v6037 = vpop.f32.mrb[0].mxu0
        %v6038 = vadd.f32 0.0, %v6037
        %v6039 = vpop.f32.mrb[0].mxu0
        %6040 = vdwg.mxu0
        %6041 = vrot.lane.b32.xlu0 %v4193, 104
        %v6042 = vpop.permute.xlu0 %6041
        %v6045 = vsel %vm1443, %v5962, 0
        %6047 = vmatprep.subr.mxu0 0.0
        %6048 = vmatpush1.msra.mxu0 %v6042
        %6049 = vmatprep.subr.mxu0 0.0
        %6050 = vmatpush1.msra.mxu0 0.0
        %6051 = vmatprep.subr.mxu0 0.0
        %6052 = vmatpush1.msra.mxu0 0.0
        %6053 = vmatprep.subr.mxu0 0.0
        %6054 = vmatpush1.msra.mxu0 0.0
        %6055 = vmatprep.subr.mxu0 0.0
        %6056 = vmatpush1.msra.mxu0 0.0
        %6057 = vmatprep.subr.mxu0 0.0
        %6058 = vmatpush1.msra.mxu0 0.0
        %6059 = vmatprep.subr.mxu0 0.0
        %6060 = vmatpush1.msra.mxu0 0.0
        %6061 = vmatprep.subr.mxu0 0.0
        %6062 = vmatpush1.msra.mxu0 0.0
        %6063 = vmatprep.subr.mxu0 0.0
        %6064 = vmatpush1.msra.mxu0 0.0
        %6065 = vmatprep.subr.mxu0 0.0
        %6066 = vmatpush1.msra.mxu0 0.0
        %6067 = vmatprep.subr.mxu0 0.0
        %6068 = vmatpush1.msra.mxu0 0.0
        %6069 = vmatprep.subr.mxu0 0.0
        %6070 = vmatpush1.msra.mxu0 0.0
        %6071 = vmatprep.subr.mxu0 0.0
        %6072 = vmatpush1.msra.mxu0 0.0
        %6073 = vmatprep.subr.mxu0 0.0
        %6074 = vmatpush1.msra.mxu0 0.0
        %6075 = vmatprep.subr.mxu0 0.0
        %6076 = vmatpush1.msra.mxu0 0.0
        %6077 = vmatprep.subr.mxu0 0.0
        %6078 = vmatpush1.msra.mxu0 0.0
        %6079 = vmatprep.subr.mxu0 0.0
        %6080 = vmatpush1.msra.mxu0 0.0
        %6081 = vmatprep.subr.mxu0 0.0
        %6082 = vmatpush1.msra.mxu0 0.0
        %6083 = vmatprep.subr.mxu0 0.0
        %6084 = vmatpush1.msra.mxu0 0.0
        %6085 = vmatprep.subr.mxu0 0.0
        %6086 = vmatpush1.msra.mxu0 0.0
        %6087 = vmatprep.subr.mxu0 0.0
        %6088 = vmatpush1.msra.mxu0 0.0
        %6089 = vmatprep.subr.mxu0 0.0
        %6090 = vmatpush1.msra.mxu0 0.0
        %6091 = vmatprep.subr.mxu0 0.0
        %6092 = vmatpush1.msra.mxu0 0.0
        %6093 = vmatprep.subr.mxu0 0.0
        %6094 = vmatpush1.msra.mxu0 0.0
        %6095 = vmatprep.subr.mxu0 0.0
        %6096 = vmatpush1.msra.mxu0 0.0
        %6097 = vmatprep.subr.mxu0 0.0
        %6098 = vmatpush1.msra.mxu0 0.0
        %6099 = vmatprep.subr.mxu0 0.0
        %6100 = vmatpush1.msra.mxu0 0.0
        %6101 = vmatprep.subr.mxu0 0.0
        %6102 = vmatpush1.msra.mxu0 0.0
        %6103 = vmatprep.subr.mxu0 0.0
        %6104 = vmatpush1.msra.mxu0 0.0
        %6105 = vmatprep.subr.mxu0 0.0
        %6106 = vmatpush1.msra.mxu0 0.0
        %6107 = vmatprep.subr.mxu0 0.0
        %6108 = vmatpush1.msra.mxu0 0.0
        %6109 = vmatprep.subr.mxu0 0.0
        %6110 = vmatpush1.msra.mxu0 0.0
        %6111 = vmatprep.mubr.f32.mxu0 0.0
        %6112 = vmatmul.mubr.f32.gmra.mrb[0].mxu0 %v6045
        %v6113 = vpop.f32.mrb[0].mxu0
        %v6114 = vadd.f32 0.0, %v6113
        %v6115 = vpop.f32.mrb[0].mxu0
        %6116 = vdwg.mxu0
        %6117 = vrot.lane.b32.xlu0 %v4198, 104
        %v6118 = vpop.permute.xlu0 %6117
        %v6121 = vsel %vm1443, %v5964, 0
        %6123 = vmatprep.subr.mxu0 0.0
        %6124 = vmatpush1.msra.mxu0 %v6118
        %6125 = vmatprep.subr.mxu0 0.0
        %6126 = vmatpush1.msra.mxu0 0.0
        %6127 = vmatprep.subr.mxu0 0.0
        %6128 = vmatpush1.msra.mxu0 0.0
        %6129 = vmatprep.subr.mxu0 0.0
        %6130 = vmatpush1.msra.mxu0 0.0
        %6131 = vmatprep.subr.mxu0 0.0
        %6132 = vmatpush1.msra.mxu0 0.0
        %6133 = vmatprep.subr.mxu0 0.0
        %6134 = vmatpush1.msra.mxu0 0.0
        %6135 = vmatprep.subr.mxu0 0.0
        %6136 = vmatpush1.msra.mxu0 0.0
        %6137 = vmatprep.subr.mxu0 0.0
        %6138 = vmatpush1.msra.mxu0 0.0
        %6139 = vmatprep.subr.mxu0 0.0
        %6140 = vmatpush1.msra.mxu0 0.0
        %6141 = vmatprep.subr.mxu0 0.0
        %6142 = vmatpush1.msra.mxu0 0.0
        %6143 = vmatprep.subr.mxu0 0.0
        %6144 = vmatpush1.msra.mxu0 0.0
        %6145 = vmatprep.subr.mxu0 0.0
        %6146 = vmatpush1.msra.mxu0 0.0
        %6147 = vmatprep.subr.mxu0 0.0
        %6148 = vmatpush1.msra.mxu0 0.0
        %6149 = vmatprep.subr.mxu0 0.0
        %6150 = vmatpush1.msra.mxu0 0.0
        %6151 = vmatprep.subr.mxu0 0.0
        %6152 = vmatpush1.msra.mxu0 0.0
        %6153 = vmatprep.subr.mxu0 0.0
        %6154 = vmatpush1.msra.mxu0 0.0
        %6155 = vmatprep.subr.mxu0 0.0
        %6156 = vmatpush1.msra.mxu0 0.0
        %6157 = vmatprep.subr.mxu0 0.0
        %6158 = vmatpush1.msra.mxu0 0.0
        %6159 = vmatprep.subr.mxu0 0.0
        %6160 = vmatpush1.msra.mxu0 0.0
        %6161 = vmatprep.subr.mxu0 0.0
        %6162 = vmatpush1.msra.mxu0 0.0
        %6163 = vmatprep.subr.mxu0 0.0
        %6164 = vmatpush1.msra.mxu0 0.0
        %6165 = vmatprep.subr.mxu0 0.0
        %6166 = vmatpush1.msra.mxu0 0.0
        %6167 = vmatprep.subr.mxu0 0.0
        %6168 = vmatpush1.msra.mxu0 0.0
        %6169 = vmatprep.subr.mxu0 0.0
        %6170 = vmatpush1.msra.mxu0 0.0
        %6171 = vmatprep.subr.mxu0 0.0
        %6172 = vmatpush1.msra.mxu0 0.0
        %6173 = vmatprep.subr.mxu0 0.0
        %6174 = vmatpush1.msra.mxu0 0.0
        %6175 = vmatprep.subr.mxu0 0.0
        %6176 = vmatpush1.msra.mxu0 0.0
        %6177 = vmatprep.subr.mxu0 0.0
        %6178 = vmatpush1.msra.mxu0 0.0
        %6179 = vmatprep.subr.mxu0 0.0
        %6180 = vmatpush1.msra.mxu0 0.0
        %6181 = vmatprep.subr.mxu0 0.0
        %6182 = vmatpush1.msra.mxu0 0.0
        %6183 = vmatprep.subr.mxu0 0.0
        %6184 = vmatpush1.msra.mxu0 0.0
        %6185 = vmatprep.subr.mxu0 0.0
        %6186 = vmatpush1.msra.mxu0 0.0
        %6187 = vmatprep.mubr.f32.mxu0 0.0
        %6188 = vmatmul.mubr.f32.gmra.mrb[0].mxu0 %v6121
        %v6189 = vpop.f32.mrb[0].mxu0
        %v6190 = vadd.f32 0.0, %v6189
        %v6191 = vpop.f32.mrb[0].mxu0
        %6192 = vdwg.mxu0
        %6196 = vrot.lane.b32.xlu0 %v5034, 8
        %v6197 = vpop.permute.xlu0 %6196
        %6198 = vrot.lane.b32.xlu0 %v5111, 8
        %v6199 = vpop.permute.xlu0 %6198
        %6200 = vrot.lane.b32.xlu0 %v5188, 8
        %v6201 = vpop.permute.xlu0 %6200
        %6208 = vrot.lane.b32.xlu0 %v5537, 16
        %v6209 = vpop.permute.xlu0 %6208
        %6210 = vrot.lane.b32.xlu0 %v5613, 16
        %v6211 = vpop.permute.xlu0 %6210
        %6212 = vrot.lane.b32.xlu0 %v5689, 16
        %v6213 = vpop.permute.xlu0 %6212
        %6220 = vrot.lane.b32.xlu0 %v6038, 24
        %v6221 = vpop.permute.xlu0 %6220
        %6222 = vrot.lane.b32.xlu0 %v6114, 24
        %v6223 = vpop.permute.xlu0 %6222
        %6224 = vrot.lane.b32.xlu0 %v6190, 24
        %v6225 = vpop.permute.xlu0 %6224
        %v6229 = vsel %vm1443, %v4538, %v6197
        %v6230 = vsel %vm1443, %v4611, %v6199
        %v6231 = vsel %vm1443, %v4684, %v6201
        %v6232 = vsel %vm1061, %v6229, %v6209
        %v6233 = vsel %vm1061, %v6230, %v6211
        %v6234 = vsel %vm1061, %v6231, %v6213
        %v6235 = vsel %vm3478, %v6232, %v6221
        %v6236 = vsel %vm3478, %v6233, %v6223
        %v6237 = vsel %vm3478, %v6234, %v6225
        %s6238 = scalar_lea.vmem %s27, 32
        %v6239 = vld [vmem:[%s6238] sm:$0xff]
        %v6240 = vld [vmem:[%s6238 + $0x8] sm:$0xff]
        %v6241 = vld [vmem:[%s6238 + $0x10] sm:$0xff]
        %v6242 = vld [vmem:[%s6238 + $0x18] sm:$0xff]
        %s6243 = scalar_lea.vmem %s29, 1
        %v6244 = vld [vmem:[%s6243] sm:$0x1]
        %v6246 = vlaneseq
        %v6247 = vshrl.u32 %v6246, 7
        %v6248 = vsub.s32 0, %v6247
        %v6249 = vrot.slane %v6244, %v6248
        %v6252 = vsel %vm1171, %v6235, 0
        %v6255 = vsel %vm1171, %v6236, 0
        %v6258 = vsel %vm1171, %v6237, 0
        %6260 = vmatprep.subr.mxu0 0.0
        %6261 = vmatpush1.msra.mxu0 %v6239
        %6262 = vmatprep.subr.mxu0 0.0
        %6263 = vmatpush1.msra.mxu0 %v6240
        %6264 = vmatprep.subr.mxu0 0.0
        %6265 = vmatpush1.msra.mxu0 %v6241
        %6266 = vmatprep.subr.mxu0 0.0
        %6267 = vmatpush1.msra.mxu0 %v6242
        %6268 = vmatprep.subr.mxu0 0.0
        %6269 = vmatpush1.msra.mxu0 0.0
        %6270 = vmatprep.subr.mxu0 0.0
        %6271 = vmatpush1.msra.mxu0 0.0
        %6272 = vmatprep.subr.mxu0 0.0
        %6273 = vmatpush1.msra.mxu0 0.0
        %6274 = vmatprep.subr.mxu0 0.0
        %6275 = vmatpush1.msra.mxu0 0.0
        %6276 = vmatprep.subr.mxu0 0.0
        %6277 = vmatpush1.msra.mxu0 0.0
        %6278 = vmatprep.subr.mxu0 0.0
        %6279 = vmatpush1.msra.mxu0 0.0
        %6280 = vmatprep.subr.mxu0 0.0
        %6281 = vmatpush1.msra.mxu0 0.0
        %6282 = vmatprep.subr.mxu0 0.0
        %6283 = vmatpush1.msra.mxu0 0.0
        %6284 = vmatprep.subr.mxu0 0.0
        %6285 = vmatpush1.msra.mxu0 0.0
        %6286 = vmatprep.subr.mxu0 0.0
        %6287 = vmatpush1.msra.mxu0 0.0
        %6288 = vmatprep.subr.mxu0 0.0
        %6289 = vmatpush1.msra.mxu0 0.0
        %6290 = vmatprep.subr.mxu0 0.0
        %6291 = vmatpush1.msra.mxu0 0.0
        %6292 = vmatprep.subr.mxu0 0.0
        %6293 = vmatpush1.msra.mxu0 0.0
        %6294 = vmatprep.subr.mxu0 0.0
        %6295 = vmatpush1.msra.mxu0 0.0
        %6296 = vmatprep.subr.mxu0 0.0
        %6297 = vmatpush1.msra.mxu0 0.0
        %6298 = vmatprep.subr.mxu0 0.0
        %6299 = vmatpush1.msra.mxu0 0.0
        %6300 = vmatprep.subr.mxu0 0.0
        %6301 = vmatpush1.msra.mxu0 0.0
        %6302 = vmatprep.subr.mxu0 0.0
        %6303 = vmatpush1.msra.mxu0 0.0
        %6304 = vmatprep.subr.mxu0 0.0
        %6305 = vmatpush1.msra.mxu0 0.0
        %6306 = vmatprep.subr.mxu0 0.0
        %6307 = vmatpush1.msra.mxu0 0.0
        %6308 = vmatprep.subr.mxu0 0.0
        %6309 = vmatpush1.msra.mxu0 0.0
        %6310 = vmatprep.subr.mxu0 0.0
        %6311 = vmatpush1.msra.mxu0 0.0
        %6312 = vmatprep.subr.mxu0 0.0
        %6313 = vmatpush1.msra.mxu0 0.0
        %6314 = vmatprep.subr.mxu0 0.0
        %6315 = vmatpush1.msra.mxu0 0.0
        %6316 = vmatprep.subr.mxu0 0.0
        %6317 = vmatpush1.msra.mxu0 0.0
        %6318 = vmatprep.subr.mxu0 0.0
        %6319 = vmatpush1.msra.mxu0 0.0
        %6320 = vmatprep.subr.mxu0 0.0
        %6321 = vmatpush1.msra.mxu0 0.0
        %6322 = vmatprep.subr.mxu0 0.0
        %6323 = vmatpush1.msra.mxu0 0.0
        %6324 = vmatprep.mubr.f32.mxu0 0.0
        %6325 = vmatmul.mubr.f32.gmra.mrb[0].mxu0 %v6252
        %v6326 = vpop.f32.mrb[0].mxu0
        %v6327 = vadd.f32 %v6249, %v6326
        %v6328 = vpop.f32.mrb[0].mxu0
        %6329 = vmatprep.mubr.f32.mxu0 0.0
        %6330 = vmatmul.mubr.f32.gmra.mrb[0].mxu0 %v6255
        %v6331 = vpop.f32.mrb[0].mxu0
        %v6332 = vadd.f32 %v6249, %v6331
        %v6333 = vpop.f32.mrb[0].mxu0
        %6334 = vmatprep.mubr.f32.mxu0 0.0
        %6335 = vmatmul.mubr.f32.gmra.mrb[0].mxu0 %v6258
        %v6336 = vpop.f32.mrb[0].mxu0
        %v6337 = vadd.f32 %v6249, %v6336
        %v6338 = vpop.f32.mrb[0].mxu0
        %6339 = vdwg.mxu0
        %v6340 = vadd.f32 %v3910, %v6327
        %v6341 = vadd.f32 %v3911, %v6332
        %v6342 = vadd.f32 %v3912, %v6337
        %s6343 = scalar_lea.vmem %s39, 1
        %v6344 = vld [vmem:[%s6343] sm:$0x1]
        %s6345 = scalar_lea.vmem %s41, 1
        %v6346 = vld [vmem:[%s6345] sm:$0x1]
        %v6347 = vsel %vm1171, %v6340, 0.0
        %6348 = vadd.xlane.f32.xlu0 %v6347
        %v6349 = vpop.xlane.xlu0 %6348
        %v6350 = vsel %vm1171, %v6341, 0.0
        %6351 = vadd.xlane.f32.xlu0 %v6350
        %v6352 = vpop.xlane.xlu0 %6351
        %v6353 = vsel %vm1171, %v6342, 0.0
        %6354 = vadd.xlane.f32.xlu0 %v6353
        %v6355 = vpop.xlane.xlu0 %6354
        %v6356 = vmul.f32 %v6349, %v3596
        %v6357 = vmul.f32 %v6352, %v3596
        %v6358 = vmul.f32 %v6355, %v3596
        %v6359 = vsub.f32 %v6340, %v6356
        %v6360 = vsub.f32 %v6341, %v6357
        %v6361 = vsub.f32 %v6342, %v6358
        %v6362 = vmul.f32 %v6359, %v6359
        %v6363 = vmul.f32 %v6360, %v6360
        %v6364 = vmul.f32 %v6361, %v6361
        %v6365 = vsel %vm1171, %v6362, 0.0
        %6366 = vadd.xlane.f32.xlu0 %v6365
        %v6367 = vpop.xlane.xlu0 %6366
        %v6368 = vsel %vm1171, %v6363, 0.0
        %6369 = vadd.xlane.f32.xlu0 %v6368
        %v6370 = vpop.xlane.xlu0 %6369
        %v6371 = vsel %vm1171, %v6364, 0.0
        %6372 = vadd.xlane.f32.xlu0 %v6371
        %v6373 = vpop.xlane.xlu0 %6372
        %v6374 = vmul.f32 %v6367, %v3596
        %v6375 = vmul.f32 %v6370, %v3596
        %v6376 = vmul.f32 %v6373, %v3596
        %v6377 = vadd.f32 %v6374, 1e-05
        %v6378 = vadd.f32 %v6375, 1e-05
        %v6379 = vadd.f32 %v6376, 1e-05
        %v6380 = vrsqrt.pop %v6377
        %v6381 = vrsqrt.pop %v6378
        %v6382 = vrsqrt.pop %v6379
        %v6383 = vmul.f32 %v6359, %v6380
        %v6384 = vmul.f32 %v6360, %v6381
        %v6385 = vmul.f32 %v6361, %v6382
        %v6387 = vlaneseq
        %v6388 = vshrl.u32 %v6387, 7
        %v6389 = vsub.s32 0, %v6388
        %v6390 = vrot.slane %v6344, %v6389
        %v6392 = vmul.f32 %v6383, %v6390
        %v6393 = vmul.f32 %v6384, %v6390
        %v6394 = vmul.f32 %v6385, %v6390
        %v6396 = vlaneseq
        %v6397 = vshrl.u32 %v6396, 7
        %v6398 = vsub.s32 0, %v6397
        %v6399 = vrot.slane %v6346, %v6398
        %v6401 = vadd.f32 %v6392, %v6399
        %v6402 = vadd.f32 %v6393, %v6399
        %v6403 = vadd.f32 %v6394, %v6399
        %s6404 = scalar_lea.vmem %s31, 32
        %v6405 = vld [vmem:[%s6404] sm:$0xff]
        %v6406 = vld [vmem:[%s6404 + $0x8] sm:$0xff]
        %v6407 = vld [vmem:[%s6404 + $0x10] sm:$0xff]
        %v6408 = vld [vmem:[%s6404 + $0x18] sm:$0xff]
        %s6409 = scalar_lea.vmem %s33, 1
        %v6410 = vld [vmem:[%s6409] sm:$0x1]
        %v6412 = vlaneseq
        %v6413 = vshrl.u32 %v6412, 7
        %v6414 = vsub.s32 0, %v6413
        %v6415 = vrot.slane %v6410, %v6414
        %v6418 = vsel %vm1171, %v6401, 0
        %v6421 = vsel %vm1171, %v6402, 0
        %v6424 = vsel %vm1171, %v6403, 0
        %6426 = vmatprep.subr.mxu0 0.0
        %6427 = vmatpush1.msra.mxu0 %v6405
        %6428 = vmatprep.subr.mxu0 0.0
        %6429 = vmatpush1.msra.mxu0 %v6406
        %6430 = vmatprep.subr.mxu0 0.0
        %6431 = vmatpush1.msra.mxu0 %v6407
        %6432 = vmatprep.subr.mxu0 0.0
        %6433 = vmatpush1.msra.mxu0 %v6408
        %6434 = vmatprep.subr.mxu0 0.0
        %6435 = vmatpush1.msra.mxu0 0.0
        %6436 = vmatprep.subr.mxu0 0.0
        %6437 = vmatpush1.msra.mxu0 0.0
        %6438 = vmatprep.subr.mxu0 0.0
        %6439 = vmatpush1.msra.mxu0 0.0
        %6440 = vmatprep.subr.mxu0 0.0
        %6441 = vmatpush1.msra.mxu0 0.0
        %6442 = vmatprep.subr.mxu0 0.0
        %6443 = vmatpush1.msra.mxu0 0.0
        %6444 = vmatprep.subr.mxu0 0.0
        %6445 = vmatpush1.msra.mxu0 0.0
        %6446 = vmatprep.subr.mxu0 0.0
        %6447 = vmatpush1.msra.mxu0 0.0
        %6448 = vmatprep.subr.mxu0 0.0
        %6449 = vmatpush1.msra.mxu0 0.0
        %6450 = vmatprep.subr.mxu0 0.0
        %6451 = vmatpush1.msra.mxu0 0.0
        %6452 = vmatprep.subr.mxu0 0.0
        %6453 = vmatpush1.msra.mxu0 0.0
        %6454 = vmatprep.subr.mxu0 0.0
        %6455 = vmatpush1.msra.mxu0 0.0
        %6456 = vmatprep.subr.mxu0 0.0
        %6457 = vmatpush1.msra.mxu0 0.0
        %6458 = vmatprep.subr.mxu0 0.0
        %6459 = vmatpush1.msra.mxu0 0.0
        %6460 = vmatprep.subr.mxu0 0.0
        %6461 = vmatpush1.msra.mxu0 0.0
        %6462 = vmatprep.subr.mxu0 0.0
        %6463 = vmatpush1.msra.mxu0 0.0
        %6464 = vmatprep.subr.mxu0 0.0
        %6465 = vmatpush1.msra.mxu0 0.0
        %6466 = vmatprep.subr.mxu0 0.0
        %6467 = vmatpush1.msra.mxu0 0.0
        %6468 = vmatprep.subr.mxu0 0.0
        %6469 = vmatpush1.msra.mxu0 0.0
        %6470 = vmatprep.subr.mxu0 0.0
        %6471 = vmatpush1.msra.mxu0 0.0
        %6472 = vmatprep.subr.mxu0 0.0
        %6473 = vmatpush1.msra.mxu0 0.0
        %6474 = vmatprep.subr.mxu0 0.0
        %6475 = vmatpush1.msra.mxu0 0.0
        %6476 = vmatprep.subr.mxu0 0.0
        %6477 = vmatpush1.msra.mxu0 0.0
        %6478 = vmatprep.subr.mxu0 0.0
        %6479 = vmatpush1.msra.mxu0 0.0
        %6480 = vmatprep.subr.mxu0 0.0
        %6481 = vmatpush1.msra.mxu0 0.0
        %6482 = vmatprep.subr.mxu0 0.0
        %6483 = vmatpush1.msra.mxu0 0.0
        %6484 = vmatprep.subr.mxu0 0.0
        %6485 = vmatpush1.msra.mxu0 0.0
        %6486 = vmatprep.subr.mxu0 0.0
        %6487 = vmatpush1.msra.mxu0 0.0
        %6488 = vmatprep.subr.mxu0 0.0
        %6489 = vmatpush1.msra.mxu0 0.0
        %6490 = vmatprep.mubr.f32.mxu0 0.0
        %6491 = vmatmul.mubr.f32.gmra.mrb[0].mxu0 %v6418
        %v6492 = vpop.f32.mrb[0].mxu0
        %v6493 = vadd.f32 %v6415, %v6492
        %v6494 = vpop.f32.mrb[0].mxu0
        %6495 = vmatprep.mubr.f32.mxu0 0.0
        %6496 = vmatmul.mubr.f32.gmra.mrb[0].mxu0 %v6421
        %v6497 = vpop.f32.mrb[0].mxu0
        %v6498 = vadd.f32 %v6415, %v6497
        %v6499 = vpop.f32.mrb[0].mxu0
        %6500 = vmatprep.mubr.f32.mxu0 0.0
        %6501 = vmatmul.mubr.f32.gmra.mrb[0].mxu0 %v6424
        %v6502 = vpop.f32.mrb[0].mxu0
        %v6503 = vadd.f32 %v6415, %v6502
        %v6504 = vpop.f32.mrb[0].mxu0
        %6505 = vdwg.mxu0
        %v6506 = vmax.f32 %v6493, 0.0
        %v6507 = vmax.f32 %v6498, 0.0
        %v6508 = vmax.f32 %v6503, 0.0
        %s6509 = scalar_lea.vmem %s35, 128
        %v6510 = vld [vmem:[%s6509] sm:$0xff]
        %v6511 = vld [vmem:[%s6509 + $0x8] sm:$0xff]
        %v6512 = vld [vmem:[%s6509 + $0x10] sm:$0xff]
        %v6513 = vld [vmem:[%s6509 + $0x18] sm:$0xff]
        %v6514 = vld [vmem:[%s6509 + $0x20] sm:$0xff]
        %v6515 = vld [vmem:[%s6509 + $0x28] sm:$0xff]
        %v6516 = vld [vmem:[%s6509 + $0x30] sm:$0xff]
        %v6517 = vld [vmem:[%s6509 + $0x38] sm:$0xff]
        %v6518 = vld [vmem:[%s6509 + $0x40] sm:$0xff]
        %v6519 = vld [vmem:[%s6509 + $0x48] sm:$0xff]
        %v6520 = vld [vmem:[%s6509 + $0x50] sm:$0xff]
        %v6521 = vld [vmem:[%s6509 + $0x58] sm:$0xff]
        %v6522 = vld [vmem:[%s6509 + $0x60] sm:$0xff]
        %v6523 = vld [vmem:[%s6509 + $0x68] sm:$0xff]
        %v6524 = vld [vmem:[%s6509 + $0x70] sm:$0xff]
        %v6525 = vld [vmem:[%s6509 + $0x78] sm:$0xff]
        %s6526 = scalar_lea.vmem %s37, 1
        %v6527 = vld [vmem:[%s6526] sm:$0x1]
        %v6529 = vlaneseq
        %v6530 = vshrl.u32 %v6529, 7
        %v6531 = vsub.s32 0, %v6530
        %v6532 = vrot.slane %v6527, %v6531
        %6534 = vmatprep.subr.mxu0 0.0
        %6535 = vmatpush1.msra.mxu0 %v6510
        %6536 = vmatprep.subr.mxu0 0.0
        %6537 = vmatpush1.msra.mxu0 %v6511
        %6538 = vmatprep.subr.mxu0 0.0
        %6539 = vmatpush1.msra.mxu0 %v6512
        %6540 = vmatprep.subr.mxu0 0.0
        %6541 = vmatpush1.msra.mxu0 %v6513
        %6542 = vmatprep.subr.mxu0 0.0
        %6543 = vmatpush1.msra.mxu0 %v6514
        %6544 = vmatprep.subr.mxu0 0.0
        %6545 = vmatpush1.msra.mxu0 %v6515
        %6546 = vmatprep.subr.mxu0 0.0
        %6547 = vmatpush1.msra.mxu0 %v6516
        %6548 = vmatprep.subr.mxu0 0.0
        %6549 = vmatpush1.msra.mxu0 %v6517
        %6550 = vmatprep.subr.mxu0 0.0
        %6551 = vmatpush1.msra.mxu0 %v6518
        %6552 = vmatprep.subr.mxu0 0.0
        %6553 = vmatpush1.msra.mxu0 %v6519
        %6554 = vmatprep.subr.mxu0 0.0
        %6555 = vmatpush1.msra.mxu0 %v6520
        %6556 = vmatprep.subr.mxu0 0.0
        %6557 = vmatpush1.msra.mxu0 %v6521
        %6558 = vmatprep.subr.mxu0 0.0
        %6559 = vmatpush1.msra.mxu0 %v6522
        %6560 = vmatprep.subr.mxu0 0.0
        %6561 = vmatpush1.msra.mxu0 %v6523
        %6562 = vmatprep.subr.mxu0 0.0
        %6563 = vmatpush1.msra.mxu0 %v6524
        %6564 = vmatprep.subr.mxu0 0.0
        %6565 = vmatpush1.msra.mxu0 %v6525
        %6566 = vmatprep.subr.mxu0 0.0
        %6567 = vmatpush1.msra.mxu0 0.0
        %6568 = vmatprep.subr.mxu0 0.0
        %6569 = vmatpush1.msra.mxu0 0.0
        %6570 = vmatprep.subr.mxu0 0.0
        %6571 = vmatpush1.msra.mxu0 0.0
        %6572 = vmatprep.subr.mxu0 0.0
        %6573 = vmatpush1.msra.mxu0 0.0
        %6574 = vmatprep.subr.mxu0 0.0
        %6575 = vmatpush1.msra.mxu0 0.0
        %6576 = vmatprep.subr.mxu0 0.0
        %6577 = vmatpush1.msra.mxu0 0.0
        %6578 = vmatprep.subr.mxu0 0.0
        %6579 = vmatpush1.msra.mxu0 0.0
        %6580 = vmatprep.subr.mxu0 0.0
        %6581 = vmatpush1.msra.mxu0 0.0
        %6582 = vmatprep.subr.mxu0 0.0
        %6583 = vmatpush1.msra.mxu0 0.0
        %6584 = vmatprep.subr.mxu0 0.0
        %6585 = vmatpush1.msra.mxu0 0.0
        %6586 = vmatprep.subr.mxu0 0.0
        %6587 = vmatpush1.msra.mxu0 0.0
        %6588 = vmatprep.subr.mxu0 0.0
        %6589 = vmatpush1.msra.mxu0 0.0
        %6590 = vmatprep.subr.mxu0 0.0
        %6591 = vmatpush1.msra.mxu0 0.0
        %6592 = vmatprep.subr.mxu0 0.0
        %6593 = vmatpush1.msra.mxu0 0.0
        %6594 = vmatprep.subr.mxu0 0.0
        %6595 = vmatpush1.msra.mxu0 0.0
        %6596 = vmatprep.subr.mxu0 0.0
        %6597 = vmatpush1.msra.mxu0 0.0
        %6598 = vmatprep.mubr.f32.mxu0 0.0
        %6599 = vmatmul.mubr.f32.gmra.mrb[0].mxu0 %v6506
        %v6600 = vpop.f32.mrb[0].mxu0
        %v6601 = vadd.f32 %v6532, %v6600
        %v6602 = vpop.f32.mrb[0].mxu0
        %6603 = vmatprep.mubr.f32.mxu0 0.0
        %6604 = vmatmul.mubr.f32.gmra.mrb[0].mxu0 %v6507
        %v6605 = vpop.f32.mrb[0].mxu0
        %v6606 = vadd.f32 %v6532, %v6605
        %v6607 = vpop.f32.mrb[0].mxu0
        %6608 = vmatprep.mubr.f32.mxu0 0.0
        %6609 = vmatmul.mubr.f32.gmra.mrb[0].mxu0 %v6508
        %v6610 = vpop.f32.mrb[0].mxu0
        %v6611 = vadd.f32 %v6532, %v6610
        %v6612 = vpop.f32.mrb[0].mxu0
        %6613 = vdwg.mxu0
        %v6614 = vadd.f32 %v6401, %v6601
        %v6615 = vadd.f32 %v6402, %v6606
        %v6616 = vadd.f32 %v6403, %v6611
        %s6617 = scalar_lea.vmem %s43, 1
        %v6618 = vld [vmem:[%s6617] sm:$0x1]
        %s6619 = scalar_lea.vmem %s45, 1
        %v6620 = vld [vmem:[%s6619] sm:$0x1]
        %v6621 = vsel %vm1171, %v6614, 0.0
        %6622 = vadd.xlane.f32.xlu0 %v6621
        %v6623 = vpop.xlane.xlu0 %6622
        %v6624 = vsel %vm1171, %v6615, 0.0
        %6625 = vadd.xlane.f32.xlu0 %v6624
        %v6626 = vpop.xlane.xlu0 %6625
        %v6627 = vsel %vm1171, %v6616, 0.0
        %6628 = vadd.xlane.f32.xlu0 %v6627
        %v6629 = vpop.xlane.xlu0 %6628
        %v6630 = vmul.f32 %v6623, %v3596
        %v6631 = vmul.f32 %v6626, %v3596
        %v6632 = vmul.f32 %v6629, %v3596
        %v6633 = vsub.f32 %v6614, %v6630
        %v6634 = vsub.f32 %v6615, %v6631
        %v6635 = vsub.f32 %v6616, %v6632
        %v6636 = vmul.f32 %v6633, %v6633
        %v6637 = vmul.f32 %v6634, %v6634
        %v6638 = vmul.f32 %v6635, %v6635
        %v6639 = vsel %vm1171, %v6636, 0.0
        %6640 = vadd.xlane.f32.xlu0 %v6639
        %v6641 = vpop.xlane.xlu0 %6640
        %v6642 = vsel %vm1171, %v6637, 0.0
        %6643 = vadd.xlane.f32.xlu0 %v6642
        %v6644 = vpop.xlane.xlu0 %6643
        %v6645 = vsel %vm1171, %v6638, 0.0
        %6646 = vadd.xlane.f32.xlu0 %v6645
        %v6647 = vpop.xlane.xlu0 %6646
        %v6648 = vmul.f32 %v6641, %v3596
        %v6649 = vmul.f32 %v6644, %v3596
        %v6650 = vmul.f32 %v6647, %v3596
        %v6651 = vadd.f32 %v6648, 1e-05
        %v6652 = vadd.f32 %v6649, 1e-05
        %v6653 = vadd.f32 %v6650, 1e-05
        %v6654 = vrsqrt.pop %v6651
        %v6655 = vrsqrt.pop %v6652
        %v6656 = vrsqrt.pop %v6653
        %v6657 = vmul.f32 %v6633, %v6654
        %v6658 = vmul.f32 %v6634, %v6655
        %v6659 = vmul.f32 %v6635, %v6656
        %v6661 = vlaneseq
        %v6662 = vshrl.u32 %v6661, 7
        %v6663 = vsub.s32 0, %v6662
        %v6664 = vrot.slane %v6618, %v6663
        %v6666 = vmul.f32 %v6657, %v6664
        %v6667 = vmul.f32 %v6658, %v6664
        %v6668 = vmul.f32 %v6659, %v6664
        %v6670 = vlaneseq
        %v6671 = vshrl.u32 %v6670, 7
        %v6672 = vsub.s32 0, %v6671
        %v6673 = vrot.slane %v6620, %v6672
        %v6675 = vadd.f32 %v6666, %v6673
        %v6676 = vadd.f32 %v6667, %v6673
        %v6677 = vadd.f32 %v6668, %v6673
        %v6678 = vld [vmem:[%s1034] sm:$0xff]
        %v6679 = vld [vmem:[%s1034 + $0x8] sm:$0xff]
        %v6680 = vld [vmem:[%s1034 + $0x10] sm:$0xff]
        %vm6681 = vcmp.gt.f32.partialorder %v6678, 0.5
        %vm6682 = vcmp.gt.f32.partialorder %v6679, 0.5
        %vm6683 = vcmp.gt.f32.partialorder %v6680, 0.5
        %v6684 = vsel %vm6681, 1, 0
        %v6685 = vsel %vm6682, 1, 0
        %v6686 = vsel %vm6683, 1, 0
        %6687 = vset.pattern.permute.xlu0 0
        %6688 = vperm.xlu0 %6687, %v6684
        %v6689 = vpop.permute.xlu0 %6688
        %6690 = vset.pattern.permute.xlu0 0
        %6691 = vperm.xlu0 %6690, %v6685
        %v6692 = vpop.permute.xlu0 %6691
        %6693 = vset.pattern.permute.xlu0 0
        %6694 = vperm.xlu0 %6693, %v6686
        %v6695 = vpop.permute.xlu0 %6694
        %vm6696 = vcmp.eq.s32.totalorder %v6689, 1
        %vm6697 = vcmp.eq.s32.totalorder %v6692, 1
        %vm6698 = vcmp.eq.s32.totalorder %v6695, 1
        %v6699 = vsel %vm6696, 0.0, %v6675
        %v6700 = vsel %vm6697, 0.0, %v6676
        %v6701 = vsel %vm6698, 0.0, %v6677
        %v6702 = vld [vmem:[%s47] sm:$0xff]
        %v6703 = vld [vmem:[%s47 + $0x8] sm:$0xff]
        %v6704 = vld [vmem:[%s47 + $0x10] sm:$0xff]
        %v6705 = vld [vmem:[%s47 + $0x18] sm:$0xff]
        %v6706 = vld [vmem:[%s49] sm:$0x1]
        %v6708 = vlaneseq
        %v6709 = vshrl.u32 %v6708, 7
        %v6710 = vsub.s32 0, %v6709
        %v6711 = vrot.slane %v6706, %v6710
        %v6714 = vsel %vm1171, %v6699, 0
        %v6717 = vsel %vm1171, %v6700, 0
        %v6720 = vsel %vm1171, %v6701, 0
        %6722 = vmatprep.subr.mxu0 0.0
        %6723 = vmatpush1.msra.mxu0 %v6702
        %6724 = vmatprep.subr.mxu0 0.0
        %6725 = vmatpush1.msra.mxu0 %v6703
        %6726 = vmatprep.subr.mxu0 0.0
        %6727 = vmatpush1.msra.mxu0 %v6704
        %6728 = vmatprep.subr.mxu0 0.0
        %6729 = vmatpush1.msra.mxu0 %v6705
        %6730 = vmatprep.subr.mxu0 0.0
        %6731 = vmatpush1.msra.mxu0 0.0
        %6732 = vmatprep.subr.mxu0 0.0
        %6733 = vmatpush1.msra.mxu0 0.0
        %6734 = vmatprep.subr.mxu0 0.0
        %6735 = vmatpush1.msra.mxu0 0.0
        %6736 = vmatprep.subr.mxu0 0.0
        %6737 = vmatpush1.msra.mxu0 0.0
        %6738 = vmatprep.subr.mxu0 0.0
        %6739 = vmatpush1.msra.mxu0 0.0
        %6740 = vmatprep.subr.mxu0 0.0
        %6741 = vmatpush1.msra.mxu0 0.0
        %6742 = vmatprep.subr.mxu0 0.0
        %6743 = vmatpush1.msra.mxu0 0.0
        %6744 = vmatprep.subr.mxu0 0.0
        %6745 = vmatpush1.msra.mxu0 0.0
        %6746 = vmatprep.subr.mxu0 0.0
        %6747 = vmatpush1.msra.mxu0 0.0
        %6748 = vmatprep.subr.mxu0 0.0
        %6749 = vmatpush1.msra.mxu0 0.0
        %6750 = vmatprep.subr.mxu0 0.0
        %6751 = vmatpush1.msra.mxu0 0.0
        %6752 = vmatprep.subr.mxu0 0.0
        %6753 = vmatpush1.msra.mxu0 0.0
        %6754 = vmatprep.subr.mxu0 0.0
        %6755 = vmatpush1.msra.mxu0 0.0
        %6756 = vmatprep.subr.mxu0 0.0
        %6757 = vmatpush1.msra.mxu0 0.0
        %6758 = vmatprep.subr.mxu0 0.0
        %6759 = vmatpush1.msra.mxu0 0.0
        %6760 = vmatprep.subr.mxu0 0.0
        %6761 = vmatpush1.msra.mxu0 0.0
        %6762 = vmatprep.subr.mxu0 0.0
        %6763 = vmatpush1.msra.mxu0 0.0
        %6764 = vmatprep.subr.mxu0 0.0
        %6765 = vmatpush1.msra.mxu0 0.0
        %6766 = vmatprep.subr.mxu0 0.0
        %6767 = vmatpush1.msra.mxu0 0.0
        %6768 = vmatprep.subr.mxu0 0.0
        %6769 = vmatpush1.msra.mxu0 0.0
        %6770 = vmatprep.subr.mxu0 0.0
        %6771 = vmatpush1.msra.mxu0 0.0
        %6772 = vmatprep.subr.mxu0 0.0
        %6773 = vmatpush1.msra.mxu0 0.0
        %6774 = vmatprep.subr.mxu0 0.0
        %6775 = vmatpush1.msra.mxu0 0.0
        %6776 = vmatprep.subr.mxu0 0.0
        %6777 = vmatpush1.msra.mxu0 0.0
        %6778 = vmatprep.subr.mxu0 0.0
        %6779 = vmatpush1.msra.mxu0 0.0
        %6780 = vmatprep.subr.mxu0 0.0
        %6781 = vmatpush1.msra.mxu0 0.0
        %6782 = vmatprep.subr.mxu0 0.0
        %6783 = vmatpush1.msra.mxu0 0.0
        %6784 = vmatprep.subr.mxu0 0.0
        %6785 = vmatpush1.msra.mxu0 0.0
        %6786 = vmatprep.mubr.f32.mxu0 0.0
        %6787 = vmatmul.mubr.f32.gmra.mrb[0].mxu0 %v6714
        %v6788 = vpop.f32.mrb[0].mxu0
        %v6789 = vadd.f32 %v6711, %v6788
        %v6790 = vpop.f32.mrb[0].mxu0
        %6791 = vmatprep.mubr.f32.mxu0 0.0
        %6792 = vmatmul.mubr.f32.gmra.mrb[0].mxu0 %v6717
        %v6793 = vpop.f32.mrb[0].mxu0
        %v6794 = vadd.f32 %v6711, %v6793
        %v6795 = vpop.f32.mrb[0].mxu0
        %6796 = vmatprep.mubr.f32.mxu0 0.0
        %6797 = vmatmul.mubr.f32.gmra.mrb[0].mxu0 %v6720
        %v6798 = vpop.f32.mrb[0].mxu0
        %v6799 = vadd.f32 %v6711, %v6798
        %v6800 = vpop.f32.mrb[0].mxu0
        %6801 = vdwg.mxu0
        %v6802 = vmax.f32 %v6789, 0.0
        %v6803 = vmax.f32 %v6794, 0.0
        %v6804 = vmax.f32 %v6799, 0.0
        %v6805 = vld [vmem:[%s51] sm:$0xff]
        %v6806 = vld [vmem:[%s51 + $0x8] sm:$0xff]
        %v6807 = vld [vmem:[%s51 + $0x10] sm:$0xff]
        %v6808 = vld [vmem:[%s51 + $0x18] sm:$0xff]
        %v6809 = vld [vmem:[%s53] sm:$0x1]
        %v6811 = vlaneseq
        %v6812 = vshrl.u32 %v6811, 7
        %v6813 = vsub.s32 0, %v6812
        %v6814 = vrot.slane %v6809, %v6813
        %v6817 = vsel %vm1171, %v6802, 0
        %v6820 = vsel %vm1171, %v6803, 0
        %v6823 = vsel %vm1171, %v6804, 0
        %6825 = vmatprep.subr.mxu0 0.0
        %6826 = vmatpush1.msra.mxu0 %v6805
        %6827 = vmatprep.subr.mxu0 0.0
        %6828 = vmatpush1.msra.mxu0 %v6806
        %6829 = vmatprep.subr.mxu0 0.0
        %6830 = vmatpush1.msra.mxu0 %v6807
        %6831 = vmatprep.subr.mxu0 0.0
        %6832 = vmatpush1.msra.mxu0 %v6808
        %6833 = vmatprep.subr.mxu0 0.0
        %6834 = vmatpush1.msra.mxu0 0.0
        %6835 = vmatprep.subr.mxu0 0.0
        %6836 = vmatpush1.msra.mxu0 0.0
        %6837 = vmatprep.subr.mxu0 0.0
        %6838 = vmatpush1.msra.mxu0 0.0
        %6839 = vmatprep.subr.mxu0 0.0
        %6840 = vmatpush1.msra.mxu0 0.0
        %6841 = vmatprep.subr.mxu0 0.0
        %6842 = vmatpush1.msra.mxu0 0.0
        %6843 = vmatprep.subr.mxu0 0.0
        %6844 = vmatpush1.msra.mxu0 0.0
        %6845 = vmatprep.subr.mxu0 0.0
        %6846 = vmatpush1.msra.mxu0 0.0
        %6847 = vmatprep.subr.mxu0 0.0
        %6848 = vmatpush1.msra.mxu0 0.0
        %6849 = vmatprep.subr.mxu0 0.0
        %6850 = vmatpush1.msra.mxu0 0.0
        %6851 = vmatprep.subr.mxu0 0.0
        %6852 = vmatpush1.msra.mxu0 0.0
        %6853 = vmatprep.subr.mxu0 0.0
        %6854 = vmatpush1.msra.mxu0 0.0
        %6855 = vmatprep.subr.mxu0 0.0
        %6856 = vmatpush1.msra.mxu0 0.0
        %6857 = vmatprep.subr.mxu0 0.0
        %6858 = vmatpush1.msra.mxu0 0.0
        %6859 = vmatprep.subr.mxu0 0.0
        %6860 = vmatpush1.msra.mxu0 0.0
        %6861 = vmatprep.subr.mxu0 0.0
        %6862 = vmatpush1.msra.mxu0 0.0
        %6863 = vmatprep.subr.mxu0 0.0
        %6864 = vmatpush1.msra.mxu0 0.0
        %6865 = vmatprep.subr.mxu0 0.0
        %6866 = vmatpush1.msra.mxu0 0.0
        %6867 = vmatprep.subr.mxu0 0.0
        %6868 = vmatpush1.msra.mxu0 0.0
        %6869 = vmatprep.subr.mxu0 0.0
        %6870 = vmatpush1.msra.mxu0 0.0
        %6871 = vmatprep.subr.mxu0 0.0
        %6872 = vmatpush1.msra.mxu0 0.0
        %6873 = vmatprep.subr.mxu0 0.0
        %6874 = vmatpush1.msra.mxu0 0.0
        %6875 = vmatprep.subr.mxu0 0.0
        %6876 = vmatpush1.msra.mxu0 0.0
        %6877 = vmatprep.subr.mxu0 0.0
        %6878 = vmatpush1.msra.mxu0 0.0
        %6879 = vmatprep.subr.mxu0 0.0
        %6880 = vmatpush1.msra.mxu0 0.0
        %6881 = vmatprep.subr.mxu0 0.0
        %6882 = vmatpush1.msra.mxu0 0.0
        %6883 = vmatprep.subr.mxu0 0.0
        %6884 = vmatpush1.msra.mxu0 0.0
        %6885 = vmatprep.subr.mxu0 0.0
        %6886 = vmatpush1.msra.mxu0 0.0
        %6887 = vmatprep.subr.mxu0 0.0
        %6888 = vmatpush1.msra.mxu0 0.0
        %6889 = vmatprep.mubr.f32.mxu0 0.0
        %6890 = vmatmul.mubr.f32.gmra.mrb[0].mxu0 %v6817
        %v6891 = vpop.f32.mrb[0].mxu0
        %v6892 = vadd.f32 %v6814, %v6891
        %v6893 = vpop.f32.mrb[0].mxu0
        %6894 = vmatprep.mubr.f32.mxu0 0.0
        %6895 = vmatmul.mubr.f32.gmra.mrb[0].mxu0 %v6820
        %v6896 = vpop.f32.mrb[0].mxu0
        %v6897 = vadd.f32 %v6814, %v6896
        %v6898 = vpop.f32.mrb[0].mxu0
        %6899 = vmatprep.mubr.f32.mxu0 0.0
        %6900 = vmatmul.mubr.f32.gmra.mrb[0].mxu0 %v6823
        %v6901 = vpop.f32.mrb[0].mxu0
        %v6902 = vadd.f32 %v6814, %v6901
        %v6903 = vpop.f32.mrb[0].mxu0
        %6904 = vdwg.mxu0
        %v6905 = vld [vmem:[%s1043] sm:$0x7]
        %v6906 = vld [vmem:[%s55] sm:$0xff]
        %v6907 = vld [vmem:[%s55 + $0x8] sm:$0xff]
        %v6908 = vld [vmem:[%s55 + $0x10] sm:$0xff]
        %v6909 = vld [vmem:[%s55 + $0x18] sm:$0xff]
        %v6910 = vld [vmem:[%s57] sm:$0x1]
        %v6912 = vlaneseq
        %v6913 = vshrl.u32 %v6912, 7
        %v6914 = vsub.s32 0, %v6913
        %v6915 = vrot.slane %v6910, %v6914
        %v6918 = vsel %vm1171, %v6905, 0
        %6920 = vmatprep.subr.mxu0 0.0
        %6921 = vmatpush1.msra.mxu0 %v6906
        %6922 = vmatprep.subr.mxu0 0.0
        %6923 = vmatpush1.msra.mxu0 %v6907
        %6924 = vmatprep.subr.mxu0 0.0
        %6925 = vmatpush1.msra.mxu0 %v6908
        %6926 = vmatprep.subr.mxu0 0.0
        %6927 = vmatpush1.msra.mxu0 %v6909
        %6928 = vmatprep.subr.mxu0 0.0
        %6929 = vmatpush1.msra.mxu0 0.0
        %6930 = vmatprep.subr.mxu0 0.0
        %6931 = vmatpush1.msra.mxu0 0.0
        %6932 = vmatprep.subr.mxu0 0.0
        %6933 = vmatpush1.msra.mxu0 0.0
        %6934 = vmatprep.subr.mxu0 0.0
        %6935 = vmatpush1.msra.mxu0 0.0
        %6936 = vmatprep.subr.mxu0 0.0
        %6937 = vmatpush1.msra.mxu0 0.0
        %6938 = vmatprep.subr.mxu0 0.0
        %6939 = vmatpush1.msra.mxu0 0.0
        %6940 = vmatprep.subr.mxu0 0.0
        %6941 = vmatpush1.msra.mxu0 0.0
        %6942 = vmatprep.subr.mxu0 0.0
        %6943 = vmatpush1.msra.mxu0 0.0
        %6944 = vmatprep.subr.mxu0 0.0
        %6945 = vmatpush1.msra.mxu0 0.0
        %6946 = vmatprep.subr.mxu0 0.0
        %6947 = vmatpush1.msra.mxu0 0.0
        %6948 = vmatprep.subr.mxu0 0.0
        %6949 = vmatpush1.msra.mxu0 0.0
        %6950 = vmatprep.subr.mxu0 0.0
        %6951 = vmatpush1.msra.mxu0 0.0
        %6952 = vmatprep.subr.mxu0 0.0
        %6953 = vmatpush1.msra.mxu0 0.0
        %6954 = vmatprep.subr.mxu0 0.0
        %6955 = vmatpush1.msra.mxu0 0.0
        %6956 = vmatprep.subr.mxu0 0.0
        %6957 = vmatpush1.msra.mxu0 0.0
        %6958 = vmatprep.subr.mxu0 0.0
        %6959 = vmatpush1.msra.mxu0 0.0
        %6960 = vmatprep.subr.mxu0 0.0
        %6961 = vmatpush1.msra.mxu0 0.0
        %6962 = vmatprep.subr.mxu0 0.0
        %6963 = vmatpush1.msra.mxu0 0.0
        %6964 = vmatprep.subr.mxu0 0.0
        %6965 = vmatpush1.msra.mxu0 0.0
        %6966 = vmatprep.subr.mxu0 0.0
        %6967 = vmatpush1.msra.mxu0 0.0
        %6968 = vmatprep.subr.mxu0 0.0
        %6969 = vmatpush1.msra.mxu0 0.0
        %6970 = vmatprep.subr.mxu0 0.0
        %6971 = vmatpush1.msra.mxu0 0.0
        %6972 = vmatprep.subr.mxu0 0.0
        %6973 = vmatpush1.msra.mxu0 0.0
        %6974 = vmatprep.subr.mxu0 0.0
        %6975 = vmatpush1.msra.mxu0 0.0
        %6976 = vmatprep.subr.mxu0 0.0
        %6977 = vmatpush1.msra.mxu0 0.0
        %6978 = vmatprep.subr.mxu0 0.0
        %6979 = vmatpush1.msra.mxu0 0.0
        %6980 = vmatprep.subr.mxu0 0.0
        %6981 = vmatpush1.msra.mxu0 0.0
        %6982 = vmatprep.subr.mxu0 0.0
        %6983 = vmatpush1.msra.mxu0 0.0
        %6984 = vmatprep.mubr.f32.mxu0 0.0
        %6985 = vmatmul.mubr.f32.gmra.mrb[0].mxu0 %v6918
        %v6986 = vpop.f32.mrb[0].mxu0
        %v6987 = vadd.f32 %v6915, %v6986
        %v6988 = vpop.f32.mrb[0].mxu0
        %6989 = vdwg.mxu0
        %v6990 = vadd.f32 %v6892, %v6987
        %v6991 = vxor.u32 %v6990, 2147483648
        %v6992 = vmul.f32 %v6991, 1.442695
        %v6993 = vpow.pop %v6992
        %v6994 = vadd.f32 %v6993, 1.0
        %v6995 = vrcp.pop %v6994
        %v6996 = vmul.f32 1.0, %v6995
        %6998 = vrot.lane.b32.xlu0 %v6987, 64
        %v6999 = vpop.permute.xlu0 %6998
        %v7001 = vmul.f32 %v6996, %v6999
        %7003 = vrot.lane.b32.xlu0 %v7001, 64
        %v7004 = vpop.permute.xlu0 %7003
        %v7006 = vadd.f32 %v6892, %v7004
        %v7007 = vtanh.pop %v7006
        %v7008 = vsub.f32 1.0, %v6996
        %7010 = vrot.lane.b32.xlu0 %v7007, 96
        %v7011 = vpop.permute.xlu0 %7010
        %v7013 = vmul.f32 %v7008, %v7011
        %7014 = vrot.lane.b32.xlu0 %v6905, 32
        %v7015 = vpop.permute.xlu0 %7014
        %v7017 = vmul.f32 %v6996, %v7015
        %v7018 = vadd.f32 %v7013, %v7017
        %7020 = vrot.lane.b32.xlu0 %v7018, 96
        %v7021 = vpop.permute.xlu0 %7020
        %v7022 = vsel %vm1171, %v7021, 0
        %7024 = vmatprep.subr.mxu0 0.0
        %7025 = vmatpush1.msra.mxu0 %v6906
        %7026 = vmatprep.subr.mxu0 0.0
        %7027 = vmatpush1.msra.mxu0 %v6907
        %7028 = vmatprep.subr.mxu0 0.0
        %7029 = vmatpush1.msra.mxu0 %v6908
        %7030 = vmatprep.subr.mxu0 0.0
        %7031 = vmatpush1.msra.mxu0 %v6909
        %7032 = vmatprep.subr.mxu0 0.0
        %7033 = vmatpush1.msra.mxu0 0.0
        %7034 = vmatprep.subr.mxu0 0.0
        %7035 = vmatpush1.msra.mxu0 0.0
        %7036 = vmatprep.subr.mxu0 0.0
        %7037 = vmatpush1.msra.mxu0 0.0
        %7038 = vmatprep.subr.mxu0 0.0
        %7039 = vmatpush1.msra.mxu0 0.0
        %7040 = vmatprep.subr.mxu0 0.0
        %7041 = vmatpush1.msra.mxu0 0.0
        %7042 = vmatprep.subr.mxu0 0.0
        %7043 = vmatpush1.msra.mxu0 0.0
        %7044 = vmatprep.subr.mxu0 0.0
        %7045 = vmatpush1.msra.mxu0 0.0
        %7046 = vmatprep.subr.mxu0 0.0
        %7047 = vmatpush1.msra.mxu0 0.0
        %7048 = vmatprep.subr.mxu0 0.0
        %7049 = vmatpush1.msra.mxu0 0.0
        %7050 = vmatprep.subr.mxu0 0.0
        %7051 = vmatpush1.msra.mxu0 0.0
        %7052 = vmatprep.subr.mxu0 0.0
        %7053 = vmatpush1.msra.mxu0 0.0
        %7054 = vmatprep.subr.mxu0 0.0
        %7055 = vmatpush1.msra.mxu0 0.0
        %7056 = vmatprep.subr.mxu0 0.0
        %7057 = vmatpush1.msra.mxu0 0.0
        %7058 = vmatprep.subr.mxu0 0.0
        %7059 = vmatpush1.msra.mxu0 0.0
        %7060 = vmatprep.subr.mxu0 0.0
        %7061 = vmatpush1.msra.mxu0 0.0
        %7062 = vmatprep.subr.mxu0 0.0
        %7063 = vmatpush1.msra.mxu0 0.0
        %7064 = vmatprep.subr.mxu0 0.0
        %7065 = vmatpush1.msra.mxu0 0.0
        %7066 = vmatprep.subr.mxu0 0.0
        %7067 = vmatpush1.msra.mxu0 0.0
        %7068 = vmatprep.subr.mxu0 0.0
        %7069 = vmatpush1.msra.mxu0 0.0
        %7070 = vmatprep.subr.mxu0 0.0
        %7071 = vmatpush1.msra.mxu0 0.0
        %7072 = vmatprep.subr.mxu0 0.0
        %7073 = vmatpush1.msra.mxu0 0.0
        %7074 = vmatprep.subr.mxu0 0.0
        %7075 = vmatpush1.msra.mxu0 0.0
        %7076 = vmatprep.subr.mxu0 0.0
        %7077 = vmatpush1.msra.mxu0 0.0
        %7078 = vmatprep.subr.mxu0 0.0
        %7079 = vmatpush1.msra.mxu0 0.0
        %7080 = vmatprep.subr.mxu0 0.0
        %7081 = vmatpush1.msra.mxu0 0.0
        %7082 = vmatprep.subr.mxu0 0.0
        %7083 = vmatpush1.msra.mxu0 0.0
        %7084 = vmatprep.subr.mxu0 0.0
        %7085 = vmatpush1.msra.mxu0 0.0
        %7086 = vmatprep.subr.mxu0 0.0
        %7087 = vmatpush1.msra.mxu0 0.0
        %7088 = vmatprep.mubr.f32.mxu0 0.0
        %7089 = vmatmul.mubr.f32.gmra.mrb[0].mxu0 %v7022
        %v7090 = vpop.f32.mrb[0].mxu0
        %v7091 = vadd.f32 %v6915, %v7090
        %v7092 = vpop.f32.mrb[0].mxu0
        %7093 = vdwg.mxu0
        %v7094 = vadd.f32 %v6897, %v7091
        %v7095 = vxor.u32 %v7094, 2147483648
        %v7096 = vmul.f32 %v7095, 1.442695
        %v7097 = vpow.pop %v7096
        %v7098 = vadd.f32 %v7097, 1.0
        %v7099 = vrcp.pop %v7098
        %v7100 = vmul.f32 1.0, %v7099
        %7102 = vrot.lane.b32.xlu0 %v7091, 64
        %v7103 = vpop.permute.xlu0 %7102
        %v7105 = vmul.f32 %v7100, %v7103
        %7107 = vrot.lane.b32.xlu0 %v7105, 64
        %v7108 = vpop.permute.xlu0 %7107
        %v7110 = vadd.f32 %v6897, %v7108
        %v7111 = vtanh.pop %v7110
        %v7112 = vsub.f32 1.0, %v7100
        %7114 = vrot.lane.b32.xlu0 %v7111, 96
        %v7115 = vpop.permute.xlu0 %7114
        %v7117 = vmul.f32 %v7112, %v7115
        %v7118 = vmul.f32 %v7100, %v7018
        %v7119 = vadd.f32 %v7117, %v7118
        %7121 = vrot.lane.b32.xlu0 %v7119, 96
        %v7122 = vpop.permute.xlu0 %7121
        %v7123 = vsel %vm1171, %v7122, 0
        %7125 = vmatprep.subr.mxu0 0.0
        %7126 = vmatpush1.msra.mxu0 %v6906
        %7127 = vmatprep.subr.mxu0 0.0
        %7128 = vmatpush1.msra.mxu0 %v6907
        %7129 = vmatprep.subr.mxu0 0.0
        %7130 = vmatpush1.msra.mxu0 %v6908
        %7131 = vmatprep.subr.mxu0 0.0
        %7132 = vmatpush1.msra.mxu0 %v6909
        %7133 = vmatprep.subr.mxu0 0.0
        %7134 = vmatpush1.msra.mxu0 0.0
        %7135 = vmatprep.subr.mxu0 0.0
        %7136 = vmatpush1.msra.mxu0 0.0
        %7137 = vmatprep.subr.mxu0 0.0
        %7138 = vmatpush1.msra.mxu0 0.0
        %7139 = vmatprep.subr.mxu0 0.0
        %7140 = vmatpush1.msra.mxu0 0.0
        %7141 = vmatprep.subr.mxu0 0.0
        %7142 = vmatpush1.msra.mxu0 0.0
        %7143 = vmatprep.subr.mxu0 0.0
        %7144 = vmatpush1.msra.mxu0 0.0
        %7145 = vmatprep.subr.mxu0 0.0
        %7146 = vmatpush1.msra.mxu0 0.0
        %7147 = vmatprep.subr.mxu0 0.0
        %7148 = vmatpush1.msra.mxu0 0.0
        %7149 = vmatprep.subr.mxu0 0.0
        %7150 = vmatpush1.msra.mxu0 0.0
        %7151 = vmatprep.subr.mxu0 0.0
        %7152 = vmatpush1.msra.mxu0 0.0
        %7153 = vmatprep.subr.mxu0 0.0
        %7154 = vmatpush1.msra.mxu0 0.0
        %7155 = vmatprep.subr.mxu0 0.0
        %7156 = vmatpush1.msra.mxu0 0.0
        %7157 = vmatprep.subr.mxu0 0.0
        %7158 = vmatpush1.msra.mxu0 0.0
        %7159 = vmatprep.subr.mxu0 0.0
        %7160 = vmatpush1.msra.mxu0 0.0
        %7161 = vmatprep.subr.mxu0 0.0
        %7162 = vmatpush1.msra.mxu0 0.0
        %7163 = vmatprep.subr.mxu0 0.0
        %7164 = vmatpush1.msra.mxu0 0.0
        %7165 = vmatprep.subr.mxu0 0.0
        %7166 = vmatpush1.msra.mxu0 0.0
        %7167 = vmatprep.subr.mxu0 0.0
        %7168 = vmatpush1.msra.mxu0 0.0
        %7169 = vmatprep.subr.mxu0 0.0
        %7170 = vmatpush1.msra.mxu0 0.0
        %7171 = vmatprep.subr.mxu0 0.0
        %7172 = vmatpush1.msra.mxu0 0.0
        %7173 = vmatprep.subr.mxu0 0.0
        %7174 = vmatpush1.msra.mxu0 0.0
        %7175 = vmatprep.subr.mxu0 0.0
        %7176 = vmatpush1.msra.mxu0 0.0
        %7177 = vmatprep.subr.mxu0 0.0
        %7178 = vmatpush1.msra.mxu0 0.0
        %7179 = vmatprep.subr.mxu0 0.0
        %7180 = vmatpush1.msra.mxu0 0.0
        %7181 = vmatprep.subr.mxu0 0.0
        %7182 = vmatpush1.msra.mxu0 0.0
        %7183 = vmatprep.subr.mxu0 0.0
        %7184 = vmatpush1.msra.mxu0 0.0
        %7185 = vmatprep.subr.mxu0 0.0
        %7186 = vmatpush1.msra.mxu0 0.0
        %7187 = vmatprep.subr.mxu0 0.0
        %7188 = vmatpush1.msra.mxu0 0.0
        %7189 = vmatprep.mubr.f32.mxu0 0.0
        %7190 = vmatmul.mubr.f32.gmra.mrb[0].mxu0 %v7123
        %v7191 = vpop.f32.mrb[0].mxu0
        %v7192 = vadd.f32 %v6915, %v7191
        %v7193 = vpop.f32.mrb[0].mxu0
        %7194 = vdwg.mxu0
        %v7195 = vadd.f32 %v6902, %v7192
        %v7196 = vxor.u32 %v7195, 2147483648
        %v7197 = vmul.f32 %v7196, 1.442695
        %v7198 = vpow.pop %v7197
        %v7199 = vadd.f32 %v7198, 1.0
        %v7200 = vrcp.pop %v7199
        %v7201 = vmul.f32 1.0, %v7200
        %7203 = vrot.lane.b32.xlu0 %v7192, 64
        %v7204 = vpop.permute.xlu0 %7203
        %v7206 = vmul.f32 %v7201, %v7204
        %7208 = vrot.lane.b32.xlu0 %v7206, 64
        %v7209 = vpop.permute.xlu0 %7208
        %v7211 = vadd.f32 %v6902, %v7209
        %v7212 = vtanh.pop %v7211
        %v7213 = vsub.f32 1.0, %v7201
        %7215 = vrot.lane.b32.xlu0 %v7212, 96
        %v7216 = vpop.permute.xlu0 %7215
        %v7218 = vmul.f32 %v7213, %v7216
        %v7219 = vmul.f32 %v7201, %v7119
        %v7220 = vadd.f32 %v7218, %v7219
        %v7221 = vrot.slane %v7119, 5
        %v7224 = vrot.slane %v7220, 2
        %vm7226 = vcmask 1042432
        %v7227 = vsel %vm7226, %v7018, %v7221
        %vm7228 = vcmask 1045504
        %v7229 = vsel %vm7228, %v7227, %v7224
        %v7230 = vld [vmem:[%s59] sm:$0xff]
        %v7231 = vld [vmem:[%s59 + $0x8] sm:$0xff]
        %v7232 = vld [vmem:[%s59 + $0x10] sm:$0xff]
        %v7233 = vld [vmem:[%s59 + $0x18] sm:$0xff]
        %v7234 = vld [vmem:[%s61] sm:$0x1]
        %v7236 = vlaneseq
        %v7237 = vshrl.u32 %v7236, 7
        %v7238 = vsub.s32 0, %v7237
        %v7239 = vrot.slane %v7234, %v7238
        %7242 = vrot.lane.b32.xlu0 %v7229, 96
        %v7243 = vpop.permute.xlu0 %7242
        %7244 = vrot.lane.b32.xlu0 %v7224, 96
        %v7245 = vpop.permute.xlu0 %7244
        %v7246 = vsel %vm1171, %v7243, 0
        %v7248 = vsel %vm1171, %v7245, 0
        %7250 = vmatprep.subr.mxu0 0.0
        %7251 = vmatpush1.msra.mxu0 %v7230
        %7252 = vmatprep.subr.mxu0 0.0
        %7253 = vmatpush1.msra.mxu0 %v7231
        %7254 = vmatprep.subr.mxu0 0.0
        %7255 = vmatpush1.msra.mxu0 %v7232
        %7256 = vmatprep.subr.mxu0 0.0
        %7257 = vmatpush1.msra.mxu0 %v7233
        %7258 = vmatprep.subr.mxu0 0.0
        %7259 = vmatpush1.msra.mxu0 0.0
        %7260 = vmatprep.subr.mxu0 0.0
        %7261 = vmatpush1.msra.mxu0 0.0
        %7262 = vmatprep.subr.mxu0 0.0
        %7263 = vmatpush1.msra.mxu0 0.0
        %7264 = vmatprep.subr.mxu0 0.0
        %7265 = vmatpush1.msra.mxu0 0.0
        %7266 = vmatprep.subr.mxu0 0.0
        %7267 = vmatpush1.msra.mxu0 0.0
        %7268 = vmatprep.subr.mxu0 0.0
        %7269 = vmatpush1.msra.mxu0 0.0
        %7270 = vmatprep.subr.mxu0 0.0
        %7271 = vmatpush1.msra.mxu0 0.0
        %7272 = vmatprep.subr.mxu0 0.0
        %7273 = vmatpush1.msra.mxu0 0.0
        %7274 = vmatprep.subr.mxu0 0.0
        %7275 = vmatpush1.msra.mxu0 0.0
        %7276 = vmatprep.subr.mxu0 0.0
        %7277 = vmatpush1.msra.mxu0 0.0
        %7278 = vmatprep.subr.mxu0 0.0
        %7279 = vmatpush1.msra.mxu0 0.0
        %7280 = vmatprep.subr.mxu0 0.0
        %7281 = vmatpush1.msra.mxu0 0.0
        %7282 = vmatprep.subr.mxu0 0.0
        %7283 = vmatpush1.msra.mxu0 0.0
        %7284 = vmatprep.subr.mxu0 0.0
        %7285 = vmatpush1.msra.mxu0 0.0
        %7286 = vmatprep.subr.mxu0 0.0
        %7287 = vmatpush1.msra.mxu0 0.0
        %7288 = vmatprep.subr.mxu0 0.0
        %7289 = vmatpush1.msra.mxu0 0.0
        %7290 = vmatprep.subr.mxu0 0.0
        %7291 = vmatpush1.msra.mxu0 0.0
        %7292 = vmatprep.subr.mxu0 0.0
        %7293 = vmatpush1.msra.mxu0 0.0
        %7294 = vmatprep.subr.mxu0 0.0
        %7295 = vmatpush1.msra.mxu0 0.0
        %7296 = vmatprep.subr.mxu0 0.0
        %7297 = vmatpush1.msra.mxu0 0.0
        %7298 = vmatprep.subr.mxu0 0.0
        %7299 = vmatpush1.msra.mxu0 0.0
        %7300 = vmatprep.subr.mxu0 0.0
        %7301 = vmatpush1.msra.mxu0 0.0
        %7302 = vmatprep.subr.mxu0 0.0
        %7303 = vmatpush1.msra.mxu0 0.0
        %7304 = vmatprep.subr.mxu0 0.0
        %7305 = vmatpush1.msra.mxu0 0.0
        %7306 = vmatprep.subr.mxu0 0.0
        %7307 = vmatpush1.msra.mxu0 0.0
        %7308 = vmatprep.subr.mxu0 0.0
        %7309 = vmatpush1.msra.mxu0 0.0
        %7310 = vmatprep.subr.mxu0 0.0
        %7311 = vmatpush1.msra.mxu0 0.0
        %7312 = vmatprep.subr.mxu0 0.0
        %7313 = vmatpush1.msra.mxu0 0.0
        %7314 = vmatprep.mubr.f32.mxu0 0.0
        %7315 = vmatmul.mubr.f32.gmra.mrb[0].mxu0 %v7246
        %v7316 = vpop.f32.mrb[0].mxu0
        %v7317 = vadd.f32 %v7239, %v7316
        %v7318 = vpop.f32.mrb[0].mxu0
        %7319 = vmatprep.mubr.f32.mxu0 0.0
        %7320 = vmatmul.mubr.f32.gmra.mrb[0].mxu0 %v7248
        %v7321 = vpop.f32.mrb[0].mxu0
        %v7322 = vadd.f32 %v7239, %v7321
        %v7323 = vpop.f32.mrb[0].mxu0
        %7324 = vdwg.mxu0
        %v7325 = vld [vmem:[%s1039] sm:$0xff]
        %v7326 = vld [vmem:[%s1039 + $0x8] sm:$0x1]
        %vm7327 = vcmp.gt.f32.partialorder %v7325, 0.5
        %vm7328 = vcmp.gt.f32.partialorder %v7326, 0.5
        %v7329 = vsel %vm7327, 1, 0
        %v7330 = vsel %vm7328, 1, 0
        %7331 = vset.pattern.permute.xlu0 0
        %7332 = vperm.xlu0 %7331, %v7329
        %v7333 = vpop.permute.xlu0 %7332
        %7334 = vset.pattern.permute.xlu0 0
        %7335 = vperm.xlu0 %7334, %v7330
        %v7336 = vpop.permute.xlu0 %7335
        %vm7337 = vcmp.eq.s32.totalorder %v7333, 1
        %vm7338 = vcmp.eq.s32.totalorder %v7336, 1
        %v7339 = vsel %vm7337, 0.0, %v7317
        %v7340 = vsel %vm7338, 0.0, %v7322
        %7345 = vrot.lane.b32.xlu0 %v7339, 32
        %v7346 = vpop.permute.xlu0 %7345
        %7347 = vrot.lane.b32.xlu0 %v7340, 32
        %v7348 = vpop.permute.xlu0 %7347
        %v7351 = vsel %vm1171, %v7243, %v7346
        %v7352 = vsel %vm1171, %v7245, %v7348
        %vm7353 = vcmask 326656
        %7354 = vst.msk [vmem:[%s1048] sm:$0xff] %vm7353, %v7351
        %vm7355 = vcmask 319488
        %7356 = vst.msk [vmem:[%s1048 + $0x8] sm:$0x1] %vm7355, %v7352
        %p7357 = scmp.lt.s32.totalorder %s75, 1
        %s7358 = scalar_select %p7357, %s75, 1
        %s7359 = smul.addr %s7358, 2
        %s7360 = smul.addr %s7359, 8
        %s7361 = scalar_lea.vmem %s63, %s7360
        // Predicated region
        $region149: #{tpu_custom_call.1} parent=143 // pred_check
          %p7362 = pneg %p769
        $region150: #{tpu_custom_call.1} parent=143 // pred_check_branch
          %7364 = sbr.rel (%p7362) target = $region152
        $region151: #{tpu_custom_call.1} parent=143 // pred_region
          _
        $region152: #{tpu_custom_call.1} parent=143 // pred_fallthru
          _
      $region144: #{tpu_custom_call.1} parent=5 // pred_fallthru
        _
      %p7365 = scmp.le.s32.totalorder 2, %s70
      // Predicated region
      $region153: #{tpu_custom_call.1} parent=5 // pred_check
        %p7366 = pneg %p7365
      $region154: #{tpu_custom_call.1} parent=5 // pred_check_branch
        %7368 = sbr.rel (%p7366) target = $region156
      $region155: #{tpu_custom_call.1} parent=5 // pred_region
        %s7369 = ssub.s32 %s70, 2
        // Predicated region
        $region157: #{tpu_custom_call.1} parent=155 // pred_check
          %p7370 = pneg %p775
        $region158: #{tpu_custom_call.1} parent=155 // pred_check_branch
          %7372 = sbr.rel (%p7370) target = $region160
        $region159: #{tpu_custom_call.1} parent=155 // pred_region
          %p7373 = scmp.lt.s32.totalorder %s76, 1
          %s7374 = scalar_select %p7373, %s76, 1
          %s7375 = smul.addr %s7374, 2
          %s7376 = smul.addr %s7375, 8
          %s7377 = scalar_lea.vmem %s63, %s7376
        $region160: #{tpu_custom_call.1} parent=155 // pred_fallthru
          _
      $region156: #{tpu_custom_call.1} parent=5 // pred_fallthru
        _
    $region6: #{tpu_custom_call.1} parent=1 // loop_footer
      %s74 = sadd.s32 1, %s70
    $region7: #{tpu_custom_call.1} parent=1 // loop_footer_branch
      %69 = sbr.rel target = $region3
    $region8: #{tpu_custom_call.1} parent=1 // loop_exit
      _
    %7378 = vsyncpa [#allocation3], 1
    %s7379 = scalar_lea.sflag [#allocation3], 1
    %7380 = vsyncpa %s7379, 1

</llo_original>
